<compile_context>
chip_gen: v7x
topology: tpu7x:2x2x1
jax: 0.10.0
libtpu: 0.0.40
codegen_flags: <defaults>
</compile_context>

<pallas_src>
import numpy as np
import jax
import jax.numpy as jnp
from jax.experimental import pallas as pl
from jax.experimental.pallas import tpu as pltpu

D = 784    # feature dim implied by get_mask() (28 x 28)
H = 1024   # coupling MLP hidden size (n_hidden in the reference)


def get_mask(size=D):
    w = int(np.sqrt(size))
    i = np.arange(w)[:, None]
    j = np.arange(w)[None, :]
    mask = ((i + j) % 2 == 0).astype(np.float32)
    return mask.reshape(1, w * w)            # (1, D) numpy f32


_MASK0 = get_mask().reshape(-1)
_IDX_E = np.where(_MASK0 == 1.0)[0].astype(np.int32)   # "even" (mask==1) features
_IDX_O = np.where(_MASK0 == 0.0)[0].astype(np.int32)   # "odd"  (mask==0) features
_PERM = np.concatenate([_IDX_E, _IDX_O])
_INV_PERM = np.argsort(_PERM).astype(np.int32)
DH = int(_IDX_E.shape[0])                               # 392


def _merge_halves(y_e, y_o):
    """Undo the parity permutation: halves -> original feature order."""
    return jnp.take(jnp.concatenate([y_e, y_o], axis=1), _INV_PERM, axis=1)


# ------------------------- shared coupling-MLP math ------------------------ #
def _coupling_st(zc, w1, b1, w2q, w2s, b2, wsq, wss, bs, wtq, wts, bt):
    """Compacted coupling MLP; s, t restricted to the updated half.
    bf16 MXU dots with f32 accumulation; int8 weights dequantized to bf16 right
    before the dot, per-output-column scales applied to the f32 accumulation;
    all elementwise epilogue math stays f32."""
    zb = zc.astype(jnp.bfloat16)
    a1 = jnp.maximum(jnp.dot(zb, w1, preferred_element_type=jnp.float32) + b1, 0.0)

    w2b = w2q.astype(jnp.float32).astype(jnp.bfloat16)
    a2 = jnp.maximum(
        jnp.dot(a1.astype(jnp.bfloat16), w2b, preferred_element_type=jnp.float32) * w2s + b2,
        0.0)
    a2b = a2.astype(jnp.bfloat16)

    wsb = wsq.astype(jnp.float32).astype(jnp.bfloat16)
    wtb = wtq.astype(jnp.float32).astype(jnp.bfloat16)
    s = jnp.tanh(jnp.dot(a2b, wsb, preferred_element_type=jnp.float32) * wss + bs)
    t = jnp.dot(a2b, wtb, preferred_element_type=jnp.float32) * wts + bt
    return s, t


# ----------------------------- Pallas kernels ------------------------------ #
def flow_fwd_kernel(ze_ref, zo_ref, w1_ref, b1_ref, w2q_ref, w2s_ref, b2_ref,
                    wstq_ref, wsts_ref, bst_ref, ye_ref, yo_ref, ldj_ref):
    l = pl.program_id(0)

    @pl.when(l == 0)
    def _():
        ye_ref[...] = ze_ref[...]                 # load the input halves once
        yo_ref[...] = zo_ref[...]
        ldj_ref[...] = jnp.zeros_like(ldj_ref)    # lane-dense ldj accumulator

    def side_st(cond, side):                      # side is a static Python int
        return _coupling_st(
            cond,
            w1_ref[0, side], b1_ref[0, side],
            w2q_ref[0, side], w2s_ref[0, side], b2_ref[0, side],
            wstq_ref[0, 2 * side + 0], wsts_ref[0, 2 * side + 0], bst_ref[0, 2 * side + 0],
            wstq_ref[0, 2 * side + 1], wsts_ref[0, 2 * side + 1], bst_ref[0, 2 * side + 1])

    # Even-mask coupling layer: conditioner = mask==1 half, updates mask==0 half.
    s, t = side_st(ye_ref[...], 0)
    yo_ref[...] = yo_ref[...] * jnp.exp(s) + t
    ldj_ref[...] = ldj_ref[...] + jnp.sum(s, axis=1, keepdims=True)

    # Odd-mask coupling layer: conditioner = mask==0 half, updates mask==1 half.
    s, t = side_st(yo_ref[...], 1)
    ye_ref[...] = ye_ref[...] * jnp.exp(s) + t
    ldj_ref[...] = ldj_ref[...] + jnp.sum(s, axis=1, keepdims=True)


def flow_rev_kernel(ze_ref, zo_ref, w1_ref, b1_ref, w2q_ref, w2s_ref, b2_ref,
                    wstq_ref, wsts_ref, bst_ref, ye_ref, yo_ref):
    l = pl.program_id(0)

    @pl.when(l == 0)
    def _():
        ye_ref[...] = ze_ref[...]
        yo_ref[...] = zo_ref[...]

    def side_st(cond, side):
        return _coupling_st(
            cond,
            w1_ref[0, side], b1_ref[0, side],
            w2q_ref[0, side], w2s_ref[0, side], b2_ref[0, side],
            wstq_ref[0, 2 * side + 0], wsts_ref[0, 2 * side + 0], bst_ref[0, 2 * side + 0],
            wstq_ref[0, 2 * side + 1], wsts_ref[0, 2 * side + 1], bst_ref[0, 2 * side + 1])

    # Undo the odd-mask layer first (it was applied last in the forward pair), then
    # the even-mask layer.  Pair order is reversed via the BlockSpec index_map.
    s, t = side_st(yo_ref[...], 1)
    ye_ref[...] = (ye_ref[...] - t) * jnp.exp(-s)

    s, t = side_st(ye_ref[...], 0)
    yo_ref[...] = (yo_ref[...] - t) * jnp.exp(-s)
    # ldj is a pure passthrough in reverse (matches reference) — handled in wrapper.


# --------------------------------- wrapper --------------------------------- #
def _slab_spec(arr, reverse, nsteps):
    """Per-layer-pair weight slab: block (1, ...), layer order reversed in the
    index_map for the inverse pass (no HBM flip of the weight stack)."""
    n_rest = arr.ndim - 1
    if reverse:
        idx = lambda l, _L=nsteps, _n=n_rest: (_L - 1 - l,) + (0,) * _n
    else:
        idx = lambda l, _n=n_rest: (l,) + (0,) * _n
    return pl.BlockSpec((1,) + arr.shape[1:], idx)


def flow_apply(params, z, logdet, reverse=False):
    """Matches Flow.forward: z (B, D) f32, logdet (B,) f32."""
    B = z.shape[0]
    P = params["w1"].shape[0]                 # n_flows (pairs of coupling layers)

    z_e = jnp.take(z, _IDX_E, axis=1)         # (B, DH) mask==1 half
    z_o = jnp.take(z, _IDX_O, axis=1)         # (B, DH) mask==0 half

    weight_names = ("w1", "b1", "w2q", "w2s", "b2", "wstq", "wsts", "bst")
    slabs = [params[k] for k in weight_names]
    ins = (z_e, z_o, *slabs)

    act_spec = pl.BlockSpec((B, DH), lambda l: (0, 0))
    in_specs = [act_spec, act_spec] + [_slab_spec(a, reverse, P) for a in slabs]

    weight_bytes = int(sum(int(a.size) * a.dtype.itemsize for a in slabs))
    cost = pl.CostEstimate(
        flops=int(2 * B * 2 * P * (DH * H + H * H + 2 * H * DH)),
        transcendentals=int(B * 2 * P * 2 * DH),
        bytes_accessed=weight_bytes + 2 * int(z.size) * 4,
    )
    cp = pltpu.CompilerParams(
        dimension_semantics=("arbitrary",),        # the layer axis carries state
        vmem_limit_bytes=40 * 1024 * 1024,         # fits v7x's 64 MiB physical VMEM
    )

    if not reverse:
        y_e, y_o, ldj_pad = pl.pallas_call(
            flow_fwd_kernel,
            grid=(P,),
            out_shape=(jax.ShapeDtypeStruct((B, DH), jnp.float32),
                       jax.ShapeDtypeStruct((B, DH), jnp.float32),
                       jax.ShapeDtypeStruct((B, 128), jnp.float32)),
            in_specs=in_specs,
            out_specs=(act_spec, act_spec, pl.BlockSpec((B, 128), lambda l: (0, 0))),
            compiler_params=cp,
            cost_estimate=cost,
        )(*ins)
        return _merge_halves(y_e, y_o), logdet + ldj_pad[:, 0]
    else:
        y_e, y_o = pl.pallas_call(
            flow_rev_kernel,
            grid=(P,),
            out_shape=(jax.ShapeDtypeStruct((B, DH), jnp.float32),
                       jax.ShapeDtypeStruct((B, DH), jnp.float32)),
            in_specs=in_specs,
            out_specs=(act_spec, act_spec),
            compiler_params=cp,
            cost_estimate=cost,
        )(*ins)
        return _merge_halves(y_e, y_o), logdet     # ldj passthrough in reverse


# ------------------------- parameter construction ------------------------- #
def _init_linear(key, fan_in, fan_out, scale=None):
    kw, kb = jax.random.split(key)
    if scale is None:
        scale = 1.0 / np.sqrt(fan_in)   # PyTorch Linear default bound
    w = jax.random.uniform(kw, (fan_in, fan_out), jnp.float32, -scale, scale)
    b = jax.random.uniform(kb, (1, fan_out), jnp.float32, -scale, scale)
    return w, b


def _quant_per_col(w):
    """Symmetric int8 quantization with a per-output-column f32 scale."""
    amax = jnp.max(jnp.abs(w), axis=0, keepdims=True)
    scale = jnp.maximum(amax, 1e-8) / 127.0
    q = jnp.clip(jnp.round(w / scale), -127.0, 127.0).astype(jnp.int8)
    return q, scale.astype(jnp.float32)


def init_flow_params(key, n_flows=4):
    """Stacked per-pair slabs.  Layer 2p uses the checkerboard mask, layer 2p+1 its
    complement (matching Flow.__init__).  Weights are compacted to the live 392
    rows/columns; W2/Ws/Wt are int8 + per-column scales, W1 is bf16."""
    keys = jax.random.split(key, 2 * n_flows)
    per_layer = []
    for i in range(2 * n_flows):
        cond_idx = _IDX_E if i % 2 == 0 else _IDX_O     # mask == 1 (unchanged) features
        upd_idx = _IDX_O if i % 2 == 0 else _IDX_E      # mask == 0 (updated) features
        k1, k2, k3 = jax.random.split(keys[i], 3)
        w1, b1 = _init_linear(k1, D, H)
        w2, b2 = _init_linear(k2, H, H)
        # TODO(synk): reference zero-inits the final Linear (identity flow at init);
        # a small random init is used instead so the s/t path is actually exercised.
        w3, b3 = _init_linear(k3, H, 2 * D, scale=0.01)

        w1c = jnp.asarray(w1)[cond_idx, :].astype(jnp.bfloat16)     # (DH, H)
        w2q, w2s = _quant_per_col(w2)                               # (H, H) i8, (1, H)
        wsq, wss = _quant_per_col(jnp.asarray(w3)[:, upd_idx])      # (H, DH) i8
        wtq, wts = _quant_per_col(jnp.asarray(w3)[:, D + upd_idx])  # (H, DH) i8
        per_layer.append(dict(
            w1=w1c, b1=b1, w2q=w2q, w2s=w2s, b2=b2,
            wstq=jnp.stack([wsq, wtq], axis=0),                     # (2, H, DH)
            wsts=jnp.stack([wss, wts], axis=0),                     # (2, 1, DH)
            bst=jnp.stack([jnp.asarray(b3)[:, upd_idx],
                           jnp.asarray(b3)[:, D + upd_idx]], axis=0),   # (2, 1, DH)
        ))

    out = {}
    for name in per_layer[0]:
        stacked = jnp.stack([lay[name] for lay in per_layer], axis=0)   # (2n, ...)
        inner = stacked.shape[1:]
        if name in ("wstq", "wsts", "bst"):
            # merge the (even/odd layer, s/t) axes -> index = 2*side + {s:0, t:1}
            out[name] = stacked.reshape((n_flows, 2 * inner[0]) + inner[1:])
        else:
            out[name] = stacked.reshape((n_flows, 2) + inner)
    return out


# --------------------------- pure-JAX reference ---------------------------- #
def flow_ref(params, z, logdet, reverse=False):
    """Reference using the exact same compacted/quantized slabs and bf16 dot path."""
    P = params["w1"].shape[0]
    z_e = jnp.take(z, _IDX_E, axis=1)
    z_o = jnp.take(z, _IDX_O, axis=1)
    ldj = logdet

    def st(cond, p, side):
        return _coupling_st(
            cond,
            params["w1"][p, side], params["b1"][p, side],
            params["w2q"][p, side], params["w2s"][p, side], params["b2"][p, side],
            params["wstq"][p, 2 * side + 0], params["wsts"][p, 2 * side + 0],
            params["bst"][p, 2 * side + 0],
            params["wstq"][p, 2 * side + 1], params["wsts"][p, 2 * side + 1],
            params["bst"][p, 2 * side + 1])

    if not reverse:
        for p in range(P):
            s, t = st(z_e, p, 0)
            z_o = z_o * jnp.exp(s) + t
            ldj = ldj + jnp.sum(s, axis=1)
            s, t = st(z_o, p, 1)
            z_e = z_e * jnp.exp(s) + t
            ldj = ldj + jnp.sum(s, axis=1)
    else:
        for p in range(P - 1, -1, -1):
            s, t = st(z_o, p, 1)
            z_e = (z_e - t) * jnp.exp(-s)
            s, t = st(z_e, p, 0)
            z_o = (z_o - t) * jnp.exp(-s)
    return _merge_halves(z_e, z_o), ldj


# ---------------------------------- main ----------------------------------- #
if __name__ == "__main__":
    key = jax.random.PRNGKey(0)
    k_param, k_z = jax.random.split(key)

    B = 8
    params = init_flow_params(k_param, n_flows=4)
    z = jax.random.normal(k_z, (B, D), dtype=jnp.float32)
    logdet = jnp.zeros((B,), dtype=jnp.float32)

    # forward pass
    y, ldj = flow_apply(params, z, logdet, reverse=False)
    y, ldj = jax.block_until_ready(y), jax.block_until_ready(ldj)

    y_ref, ldj_ref = flow_ref(params, z, logdet, reverse=False)
    np.testing.assert_allclose(np.asarray(y), np.asarray(y_ref), rtol=2e-3, atol=2e-3)
    np.testing.assert_allclose(np.asarray(ldj), np.asarray(ldj_ref), rtol=2e-3, atol=2e-3)

    # reverse pass: invertibility round-trip should recover z
    z_rec, _ = flow_apply(params, y, jnp.zeros((B,), jnp.float32), reverse=True)
    z_rec = jax.block_until_ready(z_rec)
    np.testing.assert_allclose(np.asarray(z_rec), np.asarray(z), rtol=1e-3, atol=1e-3)

    print("KERNEL_OK")
</pallas_src>

<mosaic_0001>
module attributes {stable_mosaic.version = 11 : i64} {
  func.func @flow_fwd_kernel(%arg0: i32, %arg1: memref<8x392xf32, #tpu.memory_space<vmem>>, %arg2: memref<8x392xf32, #tpu.memory_space<vmem>>, %arg3: memref<1x2x392x1024xbf16, #tpu.memory_space<vmem>>, %arg4: memref<1x2x1x1024xf32, #tpu.memory_space<vmem>>, %arg5: memref<1x2x1024x1024xi8, #tpu.memory_space<vmem>>, %arg6: memref<1x2x1x1024xf32, #tpu.memory_space<vmem>>, %arg7: memref<1x2x1x1024xf32, #tpu.memory_space<vmem>>, %arg8: memref<1x4x1024x392xi8, #tpu.memory_space<vmem>>, %arg9: memref<1x4x1x392xf32, #tpu.memory_space<vmem>>, %arg10: memref<1x4x1x392xf32, #tpu.memory_space<vmem>>, %arg11: memref<8x392xf32, #tpu.memory_space<vmem>>, %arg12: memref<8x392xf32, #tpu.memory_space<vmem>>, %arg13: memref<8x128xf32, #tpu.memory_space<vmem>>) attributes {dimension_semantics = [#tpu.dimension_semantics<arbitrary>], iteration_bounds = array<i64: 4>, scalar_prefetch = 0 : i64, scratch_operands = 0 : i64, tpu.core_type = #tpu.core_type<tc>, window_params = [{pipeline_mode = #tpu.pipeline_mode<synchronous>, transform_indices = @transform_0, window_bounds = array<i64: 8, 392>}, {pipeline_mode = #tpu.pipeline_mode<synchronous>, transform_indices = @transform_1, window_bounds = array<i64: 8, 392>}, {transform_indices = @transform_2, window_bounds = array<i64: 1, 2, 392, 1024>}, {transform_indices = @transform_3, window_bounds = array<i64: 1, 2, 1, 1024>}, {transform_indices = @transform_4, window_bounds = array<i64: 1, 2, 1024, 1024>}, {transform_indices = @transform_5, window_bounds = array<i64: 1, 2, 1, 1024>}, {transform_indices = @transform_6, window_bounds = array<i64: 1, 2, 1, 1024>}, {transform_indices = @transform_7, window_bounds = array<i64: 1, 4, 1024, 392>}, {transform_indices = @transform_8, window_bounds = array<i64: 1, 4, 1, 392>}, {transform_indices = @transform_9, window_bounds = array<i64: 1, 4, 1, 392>}, {pipeline_mode = #tpu.pipeline_mode<synchronous>, transform_indices = @transform_10, window_bounds = array<i64: 8, 392>}, {pipeline_mode = #tpu.pipeline_mode<synchronous>, transform_indices = @transform_11, window_bounds = array<i64: 8, 392>}, {pipeline_mode = #tpu.pipeline_mode<synchronous>, transform_indices = @transform_12, window_bounds = array<i64: 8, 128>}]} {
    %c0_i32 = arith.constant 0 : i32
    %0 = arith.cmpi eq, %arg0, %c0_i32 : i32
    %1 = arith.extui %0 : i1 to i32
    %c0_i32_0 = arith.constant 0 : i32
    %2 = arith.cmpi ne, %1, %c0_i32_0 : i32
    scf.if %2 {
      %c0_118 = arith.constant 0 : index
      %c0_119 = arith.constant 0 : index
      %135 = vector.load %arg1[%c0_118, %c0_119] : memref<8x392xf32, #tpu.memory_space<vmem>>, vector<8x392xf32>
      %c0_120 = arith.constant 0 : index
      %c0_121 = arith.constant 0 : index
      %136 = vector.load %arg11[%c0_120, %c0_121] : memref<8x392xf32, #tpu.memory_space<vmem>>, vector<8x392xf32>
      tpu.vector_store %arg11[%c0_120, %c0_121], %135 {strides = array<i32>} : memref<8x392xf32, #tpu.memory_space<vmem>>, vector<8x392xf32>,
      %c0_122 = arith.constant 0 : index
      %c0_123 = arith.constant 0 : index
      %137 = vector.load %arg2[%c0_122, %c0_123] : memref<8x392xf32, #tpu.memory_space<vmem>>, vector<8x392xf32>
      %c0_124 = arith.constant 0 : index
      %c0_125 = arith.constant 0 : index
      %138 = vector.load %arg12[%c0_124, %c0_125] : memref<8x392xf32, #tpu.memory_space<vmem>>, vector<8x392xf32>
      tpu.vector_store %arg12[%c0_124, %c0_125], %137 {strides = array<i32>} : memref<8x392xf32, #tpu.memory_space<vmem>>, vector<8x392xf32>,
      %cst_126 = arith.constant 0.000000e+00 : f32
      %139 = vector.broadcast %cst_126 : f32 to vector<8x128xf32>
      %c0_127 = arith.constant 0 : index
      %c0_128 = arith.constant 0 : index
      %140 = vector.load %arg13[%c0_127, %c0_128] : memref<8x128xf32, #tpu.memory_space<vmem>>, vector<8x128xf32>
      tpu.vector_store %arg13[%c0_127, %c0_128], %139 {strides = array<i32>} : memref<8x128xf32, #tpu.memory_space<vmem>>, vector<8x128xf32>,
    } else {
    }
    %c0 = arith.constant 0 : index
    %c0_1 = arith.constant 0 : index
    %3 = vector.load %arg11[%c0, %c0_1] : memref<8x392xf32, #tpu.memory_space<vmem>>, vector<8x392xf32>
    %c0_2 = arith.constant 0 : index
    %c0_3 = arith.constant 0 : index
    %c0_4 = arith.constant 0 : index
    %c0_5 = arith.constant 0 : index
    %4 = vector.load %arg3[%c0_2, %c0_3, %c0_4, %c0_5] : memref<1x2x392x1024xbf16, #tpu.memory_space<vmem>>, vector<1x1x392x1024xbf16>
    %5 = vector.shape_cast %4 : vector<1x1x392x1024xbf16> to vector<392x1024xbf16>
    %c0_6 = arith.constant 0 : index
    %c0_7 = arith.constant 0 : index
    %c0_8 = arith.constant 0 : index
    %c0_9 = arith.constant 0 : index
    %6 = vector.load %arg4[%c0_6, %c0_7, %c0_8, %c0_9] : memref<1x2x1x1024xf32, #tpu.memory_space<vmem>>, vector<1x1x1x1024xf32>
    %7 = vector.shape_cast %6 : vector<1x1x1x1024xf32> to vector<1x1024xf32>
    %c0_10 = arith.constant 0 : index
    %c0_11 = arith.constant 0 : index
    %c0_12 = arith.constant 0 : index
    %c0_13 = arith.constant 0 : index
    %8 = vector.load %arg5[%c0_10, %c0_11, %c0_12, %c0_13] : memref<1x2x1024x1024xi8, #tpu.memory_space<vmem>>, vector<1x1x1024x1024xi8>
    %9 = vector.shape_cast %8 : vector<1x1x1024x1024xi8> to vector<1024x1024xi8>
    %c0_14 = arith.constant 0 : index
    %c0_15 = arith.constant 0 : index
    %c0_16 = arith.constant 0 : index
    %c0_17 = arith.constant 0 : index
    %10 = vector.load %arg6[%c0_14, %c0_15, %c0_16, %c0_17] : memref<1x2x1x1024xf32, #tpu.memory_space<vmem>>, vector<1x1x1x1024xf32>
    %11 = vector.shape_cast %10 : vector<1x1x1x1024xf32> to vector<1x1024xf32>
    %c0_18 = arith.constant 0 : index
    %c0_19 = arith.constant 0 : index
    %c0_20 = arith.constant 0 : index
    %c0_21 = arith.constant 0 : index
    %12 = vector.load %arg7[%c0_18, %c0_19, %c0_20, %c0_21] : memref<1x2x1x1024xf32, #tpu.memory_space<vmem>>, vector<1x1x1x1024xf32>
    %13 = vector.shape_cast %12 : vector<1x1x1x1024xf32> to vector<1x1024xf32>
    %c0_22 = arith.constant 0 : index
    %c0_23 = arith.constant 0 : index
    %c0_24 = arith.constant 0 : index
    %c0_25 = arith.constant 0 : index
    %14 = vector.load %arg8[%c0_22, %c0_23, %c0_24, %c0_25] : memref<1x4x1024x392xi8, #tpu.memory_space<vmem>>, vector<1x1x1024x392xi8>
    %15 = vector.shape_cast %14 : vector<1x1x1024x392xi8> to vector<1024x392xi8>
    %c0_26 = arith.constant 0 : index
    %c0_27 = arith.constant 0 : index
    %c0_28 = arith.constant 0 : index
    %c0_29 = arith.constant 0 : index
    %16 = vector.load %arg9[%c0_26, %c0_27, %c0_28, %c0_29] : memref<1x4x1x392xf32, #tpu.memory_space<vmem>>, vector<1x1x1x392xf32>
    %17 = vector.shape_cast %16 : vector<1x1x1x392xf32> to vector<1x392xf32>
    %c0_30 = arith.constant 0 : index
    %c0_31 = arith.constant 0 : index
    %c0_32 = arith.constant 0 : index
    %c0_33 = arith.constant 0 : index
    %18 = vector.load %arg10[%c0_30, %c0_31, %c0_32, %c0_33] : memref<1x4x1x392xf32, #tpu.memory_space<vmem>>, vector<1x1x1x392xf32>
    %19 = vector.shape_cast %18 : vector<1x1x1x392xf32> to vector<1x392xf32>
    %c0_34 = arith.constant 0 : index
    %c1 = arith.constant 1 : index
    %c0_35 = arith.constant 0 : index
    %c0_36 = arith.constant 0 : index
    %20 = vector.load %arg8[%c0_34, %c1, %c0_35, %c0_36] : memref<1x4x1024x392xi8, #tpu.memory_space<vmem>>, vector<1x1x1024x392xi8>
    %21 = vector.shape_cast %20 : vector<1x1x1024x392xi8> to vector<1024x392xi8>
    %c0_37 = arith.constant 0 : index
    %c1_38 = arith.constant 1 : index
    %c0_39 = arith.constant 0 : index
    %c0_40 = arith.constant 0 : index
    %22 = vector.load %arg9[%c0_37, %c1_38, %c0_39, %c0_40] : memref<1x4x1x392xf32, #tpu.memory_space<vmem>>, vector<1x1x1x392xf32>
    %23 = vector.shape_cast %22 : vector<1x1x1x392xf32> to vector<1x392xf32>
    %c0_41 = arith.constant 0 : index
    %c1_42 = arith.constant 1 : index
    %c0_43 = arith.constant 0 : index
    %c0_44 = arith.constant 0 : index
    %24 = vector.load %arg10[%c0_41, %c1_42, %c0_43, %c0_44] : memref<1x4x1x392xf32, #tpu.memory_space<vmem>>, vector<1x1x1x392xf32>
    %25 = vector.shape_cast %24 : vector<1x1x1x392xf32> to vector<1x392xf32>
    %26 = arith.truncf %3 : vector<8x392xf32> to vector<8x392xbf16>
    %cst = arith.constant dense<0.000000e+00> : vector<8x1024xf32>
    %27 = tpu.matmul %26, %5, %cst {dimension_numbers = #tpu.dot_dimension_numbers<[1], [0], [0], [1], [0, 0, 1, 1], [], []>} : vector<8x392xbf16>, vector<392x1024xbf16>, vector<8x1024xf32> -> vector<8x1024xf32>
    %28 = vector.broadcast %7 : vector<1x1024xf32> to vector<8x1024xf32>
    %29 = arith.addf %27, %28 : vector<8x1024xf32>
    %cst_45 = arith.constant 0.000000e+00 : f32
    %30 = vector.broadcast %cst_45 : f32 to vector<8x1024xf32>
    %31 = arith.maximumf %29, %30 : vector<8x1024xf32>
    %32 = arith.sitofp %9 : vector<1024x1024xi8> to vector<1024x1024xf32>
    %33 = arith.truncf %32 : vector<1024x1024xf32> to vector<1024x1024xbf16>
    %34 = arith.truncf %31 : vector<8x1024xf32> to vector<8x1024xbf16>
    %cst_46 = arith.constant dense<0.000000e+00> : vector<8x1024xf32>
    %35 = tpu.matmul %34, %33, %cst_46 {dimension_numbers = #tpu.dot_dimension_numbers<[1], [0], [0], [1], [0, 0, 1, 1], [], []>} : vector<8x1024xbf16>, vector<1024x1024xbf16>, vector<8x1024xf32> -> vector<8x1024xf32>
    %36 = vector.broadcast %11 : vector<1x1024xf32> to vector<8x1024xf32>
    %37 = arith.mulf %35, %36 : vector<8x1024xf32>
    %38 = vector.broadcast %13 : vector<1x1024xf32> to vector<8x1024xf32>
    %39 = arith.addf %37, %38 : vector<8x1024xf32>
    %cst_47 = arith.constant 0.000000e+00 : f32
    %40 = vector.broadcast %cst_47 : f32 to vector<8x1024xf32>
    %41 = arith.maximumf %39, %40 : vector<8x1024xf32>
    %42 = arith.truncf %41 : vector<8x1024xf32> to vector<8x1024xbf16>
    %43 = arith.sitofp %15 : vector<1024x392xi8> to vector<1024x392xf32>
    %44 = arith.truncf %43 : vector<1024x392xf32> to vector<1024x392xbf16>
    %45 = arith.sitofp %21 : vector<1024x392xi8> to vector<1024x392xf32>
    %46 = arith.truncf %45 : vector<1024x392xf32> to vector<1024x392xbf16>
    %cst_48 = arith.constant dense<0.000000e+00> : vector<8x392xf32>
    %47 = tpu.matmul %42, %44, %cst_48 {dimension_numbers = #tpu.dot_dimension_numbers<[1], [0], [0], [1], [0, 0, 1, 1], [], []>} : vector<8x1024xbf16>, vector<1024x392xbf16>, vector<8x392xf32> -> vector<8x392xf32>
    %48 = vector.broadcast %17 : vector<1x392xf32> to vector<8x392xf32>
    %49 = arith.mulf %47, %48 : vector<8x392xf32>
    %50 = vector.broadcast %19 : vector<1x392xf32> to vector<8x392xf32>
    %51 = arith.addf %49, %50 : vector<8x392xf32>
    %52 = math.tanh %51 : vector<8x392xf32>
    %cst_49 = arith.constant dense<0.000000e+00> : vector<8x392xf32>
    %53 = tpu.matmul %42, %46, %cst_49 {dimension_numbers = #tpu.dot_dimension_numbers<[1], [0], [0], [1], [0, 0, 1, 1], [], []>} : vector<8x1024xbf16>, vector<1024x392xbf16>, vector<8x392xf32> -> vector<8x392xf32>
    %54 = vector.broadcast %23 : vector<1x392xf32> to vector<8x392xf32>
    %55 = arith.mulf %53, %54 : vector<8x392xf32>
    %56 = vector.broadcast %25 : vector<1x392xf32> to vector<8x392xf32>
    %57 = arith.addf %55, %56 : vector<8x392xf32>
    %c0_50 = arith.constant 0 : index
    %c0_51 = arith.constant 0 : index
    %58 = vector.load %arg12[%c0_50, %c0_51] : memref<8x392xf32, #tpu.memory_space<vmem>>, vector<8x392xf32>
    %59 = math.exp %52 : vector<8x392xf32>
    %60 = arith.mulf %58, %59 : vector<8x392xf32>
    %61 = arith.addf %60, %57 : vector<8x392xf32>
    %c0_52 = arith.constant 0 : index
    %c0_53 = arith.constant 0 : index
    %62 = vector.load %arg12[%c0_52, %c0_53] : memref<8x392xf32, #tpu.memory_space<vmem>>, vector<8x392xf32>
    tpu.vector_store %arg12[%c0_52, %c0_53], %61 {strides = array<i32>} : memref<8x392xf32, #tpu.memory_space<vmem>>, vector<8x392xf32>,
    %c0_54 = arith.constant 0 : index
    %c0_55 = arith.constant 0 : index
    %63 = vector.load %arg13[%c0_54, %c0_55] : memref<8x128xf32, #tpu.memory_space<vmem>>, vector<8x128xf32>
    %cst_56 = arith.constant dense<0.000000e+00> : vector<8xf32>
    %64 = vector.multi_reduction <add>, %52, %cst_56 [1] : vector<8x392xf32> to vector<8xf32>
    %65 = vector.shape_cast %64 : vector<8xf32> to vector<8x1xf32>
    %66 = vector.broadcast %65 : vector<8x1xf32> to vector<8x128xf32>
    %67 = arith.addf %63, %66 : vector<8x128xf32>
    %c0_57 = arith.constant 0 : index
    %c0_58 = arith.constant 0 : index
    %68 = vector.load %arg13[%c0_57, %c0_58] : memref<8x128xf32, #tpu.memory_space<vmem>>, vector<8x128xf32>
    tpu.vector_store %arg13[%c0_57, %c0_58], %67 {strides = array<i32>} : memref<8x128xf32, #tpu.memory_space<vmem>>, vector<8x128xf32>,
    %c0_59 = arith.constant 0 : index
    %c0_60 = arith.constant 0 : index
    %69 = vector.load %arg12[%c0_59, %c0_60] : memref<8x392xf32, #tpu.memory_space<vmem>>, vector<8x392xf32>
    %c0_61 = arith.constant 0 : index
    %c1_62 = arith.constant 1 : index
    %c0_63 = arith.constant 0 : index
    %c0_64 = arith.constant 0 : index
    %70 = vector.load %arg3[%c0_61, %c1_62, %c0_63, %c0_64] : memref<1x2x392x1024xbf16, #tpu.memory_space<vmem>>, vector<1x1x392x1024xbf16>
    %71 = vector.shape_cast %70 : vector<1x1x392x1024xbf16> to vector<392x1024xbf16>
    %c0_65 = arith.constant 0 : index
    %c1_66 = arith.constant 1 : index
    %c0_67 = arith.constant 0 : index
    %c0_68 = arith.constant 0 : index
    %72 = vector.load %arg4[%c0_65, %c1_66, %c0_67, %c0_68] : memref<1x2x1x1024xf32, #tpu.memory_space<vmem>>, vector<1x1x1x1024xf32>
    %73 = vector.shape_cast %72 : vector<1x1x1x1024xf32> to vector<1x1024xf32>
    %c0_69 = arith.constant 0 : index
    %c1_70 = arith.constant 1 : index
    %c0_71 = arith.constant 0 : index
    %c0_72 = arith.constant 0 : index
    %74 = vector.load %arg5[%c0_69, %c1_70, %c0_71, %c0_72] : memref<1x2x1024x1024xi8, #tpu.memory_space<vmem>>, vector<1x1x1024x1024xi8>
    %75 = vector.shape_cast %74 : vector<1x1x1024x1024xi8> to vector<1024x1024xi8>
    %c0_73 = arith.constant 0 : index
    %c1_74 = arith.constant 1 : index
    %c0_75 = arith.constant 0 : index
    %c0_76 = arith.constant 0 : index
    %76 = vector.load %arg6[%c0_73, %c1_74, %c0_75, %c0_76] : memref<1x2x1x1024xf32, #tpu.memory_space<vmem>>, vector<1x1x1x1024xf32>
    %77 = vector.shape_cast %76 : vector<1x1x1x1024xf32> to vector<1x1024xf32>
    %c0_77 = arith.constant 0 : index
    %c1_78 = arith.constant 1 : index
    %c0_79 = arith.constant 0 : index
    %c0_80 = arith.constant 0 : index
    %78 = vector.load %arg7[%c0_77, %c1_78, %c0_79, %c0_80] : memref<1x2x1x1024xf32, #tpu.memory_space<vmem>>, vector<1x1x1x1024xf32>
    %79 = vector.shape_cast %78 : vector<1x1x1x1024xf32> to vector<1x1024xf32>
    %c0_81 = arith.constant 0 : index
    %c2 = arith.constant 2 : index
    %c0_82 = arith.constant 0 : index
    %c0_83 = arith.constant 0 : index
    %80 = vector.load %arg8[%c0_81, %c2, %c0_82, %c0_83] : memref<1x4x1024x392xi8, #tpu.memory_space<vmem>>, vector<1x1x1024x392xi8>
    %81 = vector.shape_cast %80 : vector<1x1x1024x392xi8> to vector<1024x392xi8>
    %c0_84 = arith.constant 0 : index
    %c2_85 = arith.constant 2 : index
    %c0_86 = arith.constant 0 : index
    %c0_87 = arith.constant 0 : index
    %82 = vector.load %arg9[%c0_84, %c2_85, %c0_86, %c0_87] : memref<1x4x1x392xf32, #tpu.memory_space<vmem>>, vector<1x1x1x392xf32>
    %83 = vector.shape_cast %82 : vector<1x1x1x392xf32> to vector<1x392xf32>
    %c0_88 = arith.constant 0 : index
    %c2_89 = arith.constant 2 : index
    %c0_90 = arith.constant 0 : index
    %c0_91 = arith.constant 0 : index
    %84 = vector.load %arg10[%c0_88, %c2_89, %c0_90, %c0_91] : memref<1x4x1x392xf32, #tpu.memory_space<vmem>>, vector<1x1x1x392xf32>
    %85 = vector.shape_cast %84 : vector<1x1x1x392xf32> to vector<1x392xf32>
    %c0_92 = arith.constant 0 : index
    %c3 = arith.constant 3 : index
    %c0_93 = arith.constant 0 : index
    %c0_94 = arith.constant 0 : index
    %86 = vector.load %arg8[%c0_92, %c3, %c0_93, %c0_94] : memref<1x4x1024x392xi8, #tpu.memory_space<vmem>>, vector<1x1x1024x392xi8>
    %87 = vector.shape_cast %86 : vector<1x1x1024x392xi8> to vector<1024x392xi8>
    %c0_95 = arith.constant 0 : index
    %c3_96 = arith.constant 3 : index
    %c0_97 = arith.constant 0 : index
    %c0_98 = arith.constant 0 : index
    %88 = vector.load %arg9[%c0_95, %c3_96, %c0_97, %c0_98] : memref<1x4x1x392xf32, #tpu.memory_space<vmem>>, vector<1x1x1x392xf32>
    %89 = vector.shape_cast %88 : vector<1x1x1x392xf32> to vector<1x392xf32>
    %c0_99 = arith.constant 0 : index
    %c3_100 = arith.constant 3 : index
    %c0_101 = arith.constant 0 : index
    %c0_102 = arith.constant 0 : index
    %90 = vector.load %arg10[%c0_99, %c3_100, %c0_101, %c0_102] : memref<1x4x1x392xf32, #tpu.memory_space<vmem>>, vector<1x1x1x392xf32>
    %91 = vector.shape_cast %90 : vector<1x1x1x392xf32> to vector<1x392xf32>
    %92 = arith.truncf %69 : vector<8x392xf32> to vector<8x392xbf16>
    %cst_103 = arith.constant dense<0.000000e+00> : vector<8x1024xf32>
    %93 = tpu.matmul %92, %71, %cst_103 {dimension_numbers = #tpu.dot_dimension_numbers<[1], [0], [0], [1], [0, 0, 1, 1], [], []>} : vector<8x392xbf16>, vector<392x1024xbf16>, vector<8x1024xf32> -> vector<8x1024xf32>
    %94 = vector.broadcast %73 : vector<1x1024xf32> to vector<8x1024xf32>
    %95 = arith.addf %93, %94 : vector<8x1024xf32>
    %cst_104 = arith.constant 0.000000e+00 : f32
    %96 = vector.broadcast %cst_104 : f32 to vector<8x1024xf32>
    %97 = arith.maximumf %95, %96 : vector<8x1024xf32>
    %98 = arith.sitofp %75 : vector<1024x1024xi8> to vector<1024x1024xf32>
    %99 = arith.truncf %98 : vector<1024x1024xf32> to vector<1024x1024xbf16>
    %100 = arith.truncf %97 : vector<8x1024xf32> to vector<8x1024xbf16>
    %cst_105 = arith.constant dense<0.000000e+00> : vector<8x1024xf32>
    %101 = tpu.matmul %100, %99, %cst_105 {dimension_numbers = #tpu.dot_dimension_numbers<[1], [0], [0], [1], [0, 0, 1, 1], [], []>} : vector<8x1024xbf16>, vector<1024x1024xbf16>, vector<8x1024xf32> -> vector<8x1024xf32>
    %102 = vector.broadcast %77 : vector<1x1024xf32> to vector<8x1024xf32>
    %103 = arith.mulf %101, %102 : vector<8x1024xf32>
    %104 = vector.broadcast %79 : vector<1x1024xf32> to vector<8x1024xf32>
    %105 = arith.addf %103, %104 : vector<8x1024xf32>
    %cst_106 = arith.constant 0.000000e+00 : f32
    %106 = vector.broadcast %cst_106 : f32 to vector<8x1024xf32>
    %107 = arith.maximumf %105, %106 : vector<8x1024xf32>
    %108 = arith.truncf %107 : vector<8x1024xf32> to vector<8x1024xbf16>
    %109 = arith.sitofp %81 : vector<1024x392xi8> to vector<1024x392xf32>
    %110 = arith.truncf %109 : vector<1024x392xf32> to vector<1024x392xbf16>
    %111 = arith.sitofp %87 : vector<1024x392xi8> to vector<1024x392xf32>
    %112 = arith.truncf %111 : vector<1024x392xf32> to vector<1024x392xbf16>
    %cst_107 = arith.constant dense<0.000000e+00> : vector<8x392xf32>
    %113 = tpu.matmul %108, %110, %cst_107 {dimension_numbers = #tpu.dot_dimension_numbers<[1], [0], [0], [1], [0, 0, 1, 1], [], []>} : vector<8x1024xbf16>, vector<1024x392xbf16>, vector<8x392xf32> -> vector<8x392xf32>
    %114 = vector.broadcast %83 : vector<1x392xf32> to vector<8x392xf32>
    %115 = arith.mulf %113, %114 : vector<8x392xf32>
    %116 = vector.broadcast %85 : vector<1x392xf32> to vector<8x392xf32>
    %117 = arith.addf %115, %116 : vector<8x392xf32>
    %118 = math.tanh %117 : vector<8x392xf32>
    %cst_108 = arith.constant dense<0.000000e+00> : vector<8x392xf32>
    %119 = tpu.matmul %108, %112, %cst_108 {dimension_numbers = #tpu.dot_dimension_numbers<[1], [0], [0], [1], [0, 0, 1, 1], [], []>} : vector<8x1024xbf16>, vector<1024x392xbf16>, vector<8x392xf32> -> vector<8x392xf32>
    %120 = vector.broadcast %89 : vector<1x392xf32> to vector<8x392xf32>
    %121 = arith.mulf %119, %120 : vector<8x392xf32>
    %122 = vector.broadcast %91 : vector<1x392xf32> to vector<8x392xf32>
    %123 = arith.addf %121, %122 : vector<8x392xf32>
    %c0_109 = arith.constant 0 : index
    %c0_110 = arith.constant 0 : index
    %124 = vector.load %arg11[%c0_109, %c0_110] : memref<8x392xf32, #tpu.memory_space<vmem>>, vector<8x392xf32>
    %125 = math.exp %118 : vector<8x392xf32>
    %126 = arith.mulf %124, %125 : vector<8x392xf32>
    %127 = arith.addf %126, %123 : vector<8x392xf32>
    %c0_111 = arith.constant 0 : index
    %c0_112 = arith.constant 0 : index
    %128 = vector.load %arg11[%c0_111, %c0_112] : memref<8x392xf32, #tpu.memory_space<vmem>>, vector<8x392xf32>
    tpu.vector_store %arg11[%c0_111, %c0_112], %127 {strides = array<i32>} : memref<8x392xf32, #tpu.memory_space<vmem>>, vector<8x392xf32>,
    %c0_113 = arith.constant 0 : index
    %c0_114 = arith.constant 0 : index
    %129 = vector.load %arg13[%c0_113, %c0_114] : memref<8x128xf32, #tpu.memory_space<vmem>>, vector<8x128xf32>
    %cst_115 = arith.constant dense<0.000000e+00> : vector<8xf32>
    %130 = vector.multi_reduction <add>, %118, %cst_115 [1] : vector<8x392xf32> to vector<8xf32>
    %131 = vector.shape_cast %130 : vector<8xf32> to vector<8x1xf32>
    %132 = vector.broadcast %131 : vector<8x1xf32> to vector<8x128xf32>
    %133 = arith.addf %129, %132 : vector<8x128xf32>
    %c0_116 = arith.constant 0 : index
    %c0_117 = arith.constant 0 : index
    %134 = vector.load %arg13[%c0_116, %c0_117] : memref<8x128xf32, #tpu.memory_space<vmem>>, vector<8x128xf32>
    tpu.vector_store %arg13[%c0_116, %c0_117], %133 {strides = array<i32>} : memref<8x128xf32, #tpu.memory_space<vmem>>, vector<8x128xf32>,
    return
  }
  func.func @transform_0(%arg0: i32) -> (i32, i32) {
    %c0_i32 = arith.constant 0 : i32
    %c0_i32_0 = arith.constant 0 : i32
    %c0_i32_1 = arith.constant 0 : i32
    return %c0_i32, %c0_i32_0 : i32, i32
  }
  func.func @transform_1(%arg0: i32) -> (i32, i32) {
    %c0_i32 = arith.constant 0 : i32
    %c0_i32_0 = arith.constant 0 : i32
    %c0_i32_1 = arith.constant 0 : i32
    return %c0_i32, %c0_i32_0 : i32, i32
  }
  func.func @transform_2(%arg0: i32) -> (i32, i32, i32, i32) {
    %c0_i32 = arith.constant 0 : i32
    %c0_i32_0 = arith.constant 0 : i32
    %c0_i32_1 = arith.constant 0 : i32
    %c0_i32_2 = arith.constant 0 : i32
    return %arg0, %c0_i32, %c0_i32_0, %c0_i32_1 : i32, i32, i32, i32
  }
  func.func @transform_3(%arg0: i32) -> (i32, i32, i32, i32) {
    %c0_i32 = arith.constant 0 : i32
    %c0_i32_0 = arith.constant 0 : i32
    %c0_i32_1 = arith.constant 0 : i32
    %c0_i32_2 = arith.constant 0 : i32
    return %arg0, %c0_i32, %c0_i32_0, %c0_i32_1 : i32, i32, i32, i32
  }
  func.func @transform_4(%arg0: i32) -> (i32, i32, i32, i32) {
    %c0_i32 = arith.constant 0 : i32
    %c0_i32_0 = arith.constant 0 : i32
    %c0_i32_1 = arith.constant 0 : i32
    %c0_i32_2 = arith.constant 0 : i32
    return %arg0, %c0_i32, %c0_i32_0, %c0_i32_1 : i32, i32, i32, i32
  }
  func.func @transform_5(%arg0: i32) -> (i32, i32, i32, i32) {
    %c0_i32 = arith.constant 0 : i32
    %c0_i32_0 = arith.constant 0 : i32
    %c0_i32_1 = arith.constant 0 : i32
    %c0_i32_2 = arith.constant 0 : i32
    return %arg0, %c0_i32, %c0_i32_0, %c0_i32_1 : i32, i32, i32, i32
  }
  func.func @transform_6(%arg0: i32) -> (i32, i32, i32, i32) {
    %c0_i32 = arith.constant 0 : i32
    %c0_i32_0 = arith.constant 0 : i32
    %c0_i32_1 = arith.constant 0 : i32
    %c0_i32_2 = arith.constant 0 : i32
    return %arg0, %c0_i32, %c0_i32_0, %c0_i32_1 : i32, i32, i32, i32
  }
  func.func @transform_7(%arg0: i32) -> (i32, i32, i32, i32) {
    %c0_i32 = arith.constant 0 : i32
    %c0_i32_0 = arith.constant 0 : i32
    %c0_i32_1 = arith.constant 0 : i32
    %c0_i32_2 = arith.constant 0 : i32
    return %arg0, %c0_i32, %c0_i32_0, %c0_i32_1 : i32, i32, i32, i32
  }
  func.func @transform_8(%arg0: i32) -> (i32, i32, i32, i32) {
    %c0_i32 = arith.constant 0 : i32
    %c0_i32_0 = arith.constant 0 : i32
    %c0_i32_1 = arith.constant 0 : i32
    %c0_i32_2 = arith.constant 0 : i32
    return %arg0, %c0_i32, %c0_i32_0, %c0_i32_1 : i32, i32, i32, i32
  }
  func.func @transform_9(%arg0: i32) -> (i32, i32, i32, i32) {
    %c0_i32 = arith.constant 0 : i32
    %c0_i32_0 = arith.constant 0 : i32
    %c0_i32_1 = arith.constant 0 : i32
    %c0_i32_2 = arith.constant 0 : i32
    return %arg0, %c0_i32, %c0_i32_0, %c0_i32_1 : i32, i32, i32, i32
  }
  func.func @transform_10(%arg0: i32) -> (i32, i32) {
    %c0_i32 = arith.constant 0 : i32
    %c0_i32_0 = arith.constant 0 : i32
    %c0_i32_1 = arith.constant 0 : i32
    return %c0_i32, %c0_i32_0 : i32, i32
  }
  func.func @transform_11(%arg0: i32) -> (i32, i32) {
    %c0_i32 = arith.constant 0 : i32
    %c0_i32_0 = arith.constant 0 : i32
    %c0_i32_1 = arith.constant 0 : i32
    return %c0_i32, %c0_i32_0 : i32, i32
  }
  func.func @transform_12(%arg0: i32) -> (i32, i32) {
    %c0_i32 = arith.constant 0 : i32
    %c0_i32_0 = arith.constant 0 : i32
    %c0_i32_1 = arith.constant 0 : i32
    return %c0_i32, %c0_i32_0 : i32, i32
  }
}

</mosaic_0001>

<llo_original>
// kernel: tpu_custom_call.1
$region0: #{tpu_custom_call.1}
  #allocation0 [shape = 'u32[]', space=smem, size = 0x4, offset = 0x4, fixed_abs, tag = 'smem constant byte address 0x4 - core index']
  #allocation1 [shape = 'u32[144,128]{1,0:T(1,128)}', space=vmem, size = 0x12000, scoped, tag = 'internal scratch']
  %s0 = inlined_call_operand.hbm [shape: f32[8,392], index: 0, kind: input, shape index: {}]
  %s1 = inlined_call_operand.hbm [shape: f32[8,392], index: 1, kind: input, shape index: {}]
  %s2 = inlined_call_operand.vmem [shape: bf16[4,2,392,1024], index: 2, kind: input, shape index: {}]
  %s3 = inlined_call_operand.hbm [shape: f32[4,2,1,1024], index: 3, kind: input, shape index: {}]
  %s4 = inlined_call_operand.vmem [shape: s8[4,2,1024,1024], index: 4, kind: input, shape index: {}]
  %s5 = inlined_call_operand.hbm [shape: f32[4,2,1,1024], index: 5, kind: input, shape index: {}]
  %s6 = inlined_call_operand.hbm [shape: f32[4,2,1,1024], index: 6, kind: input, shape index: {}]
  %s7 = inlined_call_operand.vmem [shape: s8[4,4,1024,392], index: 7, kind: input, shape index: {}]
  %s8 = inlined_call_operand.hbm [shape: f32[4,4,1,392], index: 8, kind: input, shape index: {}]
  %s9 = inlined_call_operand.hbm [shape: f32[4,4,1,392], index: 9, kind: input, shape index: {}]
  %s10 = inlined_call_operand.hbm [shape: f32[8,392], index: 10, kind: output, shape index: {0}]
  %s11 = inlined_call_operand.hbm [shape: f32[8,392], index: 11, kind: output, shape index: {1}]
  %s12 = inlined_call_operand.hbm [shape: f32[8,128], index: 12, kind: output, shape index: {2}]
  %13 = xla_tuple %s10, %s11, %s12
  %s14 = sld [smem:[#allocation0]]
  $region121: #{tpu_custom_call.1} parent=0
    _
  %s16 = ssub.s32 1, %s14
  %s17 = scalar_select 0, %s16, %s14
  $region1: #{tpu_custom_call.1} parent=0
    #allocation2 [shape = 'u8[16384]{0}', space=vmem, size = 0x4000, scoped, tag = 'input window, operand 0, single buffered']
    #allocation3 [shape = 's32[2]{0}', space=sflag, size = 0x8, scoped, tag = 'scoped memory for tpu_custom_call.1']
    #allocation4 [shape = 's32[2]{0}', space=sflag, size = 0x8, scoped, tag = 'scoped memory for tpu_custom_call.1']
    #allocation5 [shape = 'u8[16384]{0}', space=vmem, size = 0x4000, scoped, tag = 'input window, operand 1, single buffered']
    #allocation6 [shape = 's32[1]{0}', space=sflag, size = 0x4, scoped, tag = 'scoped memory for tpu_custom_call.1']
    #allocation7 [shape = 'u8[16384]{0}', space=vmem, size = 0x4000, scoped, tag = 'input window, operand 3']
    #allocation8 [shape = 'u8[16384]{0}', space=vmem, size = 0x4000, scoped, tag = 'input window, operand 5']
    #allocation9 [shape = 'u8[16384]{0}', space=vmem, size = 0x4000, scoped, tag = 'input window, operand 6']
    #allocation10 [shape = 'u8[16384]{0}', space=vmem, size = 0x4000, scoped, tag = 'input window, operand 8']
    #allocation11 [shape = 'u8[16384]{0}', space=vmem, size = 0x4000, scoped, tag = 'input window, operand 9']
    #allocation12 [shape = 'u8[16384]{0}', space=vmem, size = 0x4000, scoped, tag = 'output window, operand 0, single buffered']
    #allocation13 [shape = 'u8[16384]{0}', space=vmem, size = 0x4000, scoped, tag = 'output window, operand 1, single buffered']
    #allocation14 [shape = 's32[1]{0}', space=sflag, size = 0x4, scoped, tag = 'scoped memory for tpu_custom_call.1']
    #allocation15 [shape = 'u8[4096]{0}', space=vmem, size = 0x1000, scoped, tag = 'output window, operand 2, single buffered']
    %18 = vsyncpa [#allocation3], 0
    %19 = vsyncpa [#allocation6], 0
    %20 = vsyncpa [#allocation4], 0
    %21 = vsyncpa [#allocation14], 0
    loop: start=0, step=1, limit=6
    $region2: #{tpu_custom_call.1} parent=1 // loop_pre_header
      _
    $region3: #{tpu_custom_call.1} parent=1 // loop_header
      %s23 = sphi 0, %s27
      %p24 = scmp.ge.s32.totalorder %s23, 6
      %s31 = sphi 0, %s31
      %s33 = sphi 0, %s31
      %s34 = sphi 0, %s33
      %s48 = sphi 0, %s34
      %s52 = sphi 0, %s52
      %s54 = sphi 0, %s52
      %s55 = sphi 0, %s54
      %s69 = sphi 0, %s55
      %s75 = sphi 0, %s77
      %s78 = sphi 0, %s75
      %s79 = sphi 0, %s78
      %s95 = sphi 0, %s79
      %s101 = sphi 0, %s103
      %s104 = sphi 0, %s101
      %s105 = sphi 0, %s104
      %s121 = sphi 0, %s105
      %s127 = sphi 0, %s129
      %s130 = sphi 0, %s127
      %s131 = sphi 0, %s130
      %s147 = sphi 0, %s131
      %s153 = sphi 0, %s155
      %s156 = sphi 0, %s153
      %s157 = sphi 0, %s156
      %s173 = sphi 0, %s157
      %s179 = sphi 0, %s181
      %s182 = sphi 0, %s179
      %s183 = sphi 0, %s182
      %s199 = sphi 0, %s183
      %s205 = sphi 0, %s207
      %s208 = sphi 0, %s205
      %s209 = sphi 0, %s208
      %s225 = sphi 0, %s209
      %s231 = sphi 0, %s233
      %s234 = sphi 0, %s231
      %s235 = sphi 0, %s234
      %s251 = sphi 0, %s235
      %s257 = sphi 0, %s259
      %s260 = sphi 0, %s257
      %s261 = sphi 0, %s260
      %s277 = sphi 0, %s261
      %s281 = sphi 0, %s281
      %s283 = sphi 0, %s281
      %s284 = sphi 0, %s283
      %s298 = sphi 0, %s284
      %s302 = sphi 0, %s302
      %s304 = sphi 0, %s302
      %s305 = sphi 0, %s304
      %s319 = sphi 0, %s305
      %s323 = sphi 0, %s323
      %s325 = sphi 0, %s323
      %s326 = sphi 0, %s325
      %s340 = sphi 0, %s326
    $region4: #{tpu_custom_call.1} parent=1 // loop_header_branch
      %26 = sbr.rel (%p24) target = $region8
    $region5: #{tpu_custom_call.1} parent=1 // loop_body
      %s28 = ssub.s32 %s23, 1
      %s29 = ssub.s32 %s23, 2
      %s30 = sadd.s32 %s23, 1
      %s32 = sadd.s32 %s31, 1
      %p35 = scmp.eq.s32.totalorder %s23, 3
      %p36 = scmp.ne.s32.totalorder %s31, %s33
      %p37 = scmp.eq.s32.totalorder %s23, 0
      %p38 = por %p36, %p37
      %p39 = scmp.ne.s32.totalorder %s31, %s33
      %p40 = scmp.eq.s32.totalorder %s28, 3
      %p41 = por %p39, %p40
      %p42 = scmp.ne.s32.totalorder %s33, %s34
      %p43 = scmp.eq.s32.totalorder %s28, 0
      %p44 = por %p42, %p43
      %p45 = scmp.ne.s32.totalorder %s33, %s34
      %p46 = scmp.eq.s32.totalorder %s29, 3
      %p47 = por %p45, %p46
      %p49 = scmp.ne.s32.totalorder %s34, %s48
      %p50 = scmp.eq.s32.totalorder %s29, 0
      %p51 = por %p49, %p50
      %s53 = sadd.s32 %s52, 1
      %p56 = scmp.eq.s32.totalorder %s23, 3
      %p57 = scmp.ne.s32.totalorder %s52, %s54
      %p58 = scmp.eq.s32.totalorder %s23, 0
      %p59 = por %p57, %p58
      %p60 = scmp.ne.s32.totalorder %s52, %s54
      %p61 = scmp.eq.s32.totalorder %s28, 3
      %p62 = por %p60, %p61
      %p63 = scmp.ne.s32.totalorder %s54, %s55
      %p64 = scmp.eq.s32.totalorder %s28, 0
      %p65 = por %p63, %p64
      %p66 = scmp.ne.s32.totalorder %s54, %s55
      %p67 = scmp.eq.s32.totalorder %s29, 3
      %p68 = por %p66, %p67
      %p70 = scmp.ne.s32.totalorder %s55, %s69
      %p71 = scmp.eq.s32.totalorder %s29, 0
      %p72 = por %p70, %p71
      %s73 = ssub.s32 %s23, %s30
      %p74 = scmp.eq.s32.totalorder %s73, 0
      %s76 = sadd.s32 %s75, 1
      %s77 = scalar_select %p74, %s75, %s76
      %p80 = pneg %p74
      %p81 = scmp.eq.s32.totalorder %s23, 3
      %p82 = por %p80, %p81
      %p83 = scmp.ne.s32.totalorder %s75, %s78
      %p84 = scmp.eq.s32.totalorder %s23, 0
      %p85 = por %p83, %p84
      %p86 = scmp.ne.s32.totalorder %s75, %s78
      %p87 = scmp.eq.s32.totalorder %s28, 3
      %p88 = por %p86, %p87
      %p89 = scmp.ne.s32.totalorder %s78, %s79
      %p90 = scmp.eq.s32.totalorder %s28, 0
      %p91 = por %p89, %p90
      %p92 = scmp.ne.s32.totalorder %s78, %s79
      %p93 = scmp.eq.s32.totalorder %s29, 3
      %p94 = por %p92, %p93
      %p96 = scmp.ne.s32.totalorder %s79, %s95
      %p97 = scmp.eq.s32.totalorder %s29, 0
      %p98 = por %p96, %p97
      %s99 = ssub.s32 %s23, %s30
      %p100 = scmp.eq.s32.totalorder %s99, 0
      %s102 = sadd.s32 %s101, 1
      %s103 = scalar_select %p100, %s101, %s102
      %p106 = pneg %p100
      %p107 = scmp.eq.s32.totalorder %s23, 3
      %p108 = por %p106, %p107
      %p109 = scmp.ne.s32.totalorder %s101, %s104
      %p110 = scmp.eq.s32.totalorder %s23, 0
      %p111 = por %p109, %p110
      %p112 = scmp.ne.s32.totalorder %s101, %s104
      %p113 = scmp.eq.s32.totalorder %s28, 3
      %p114 = por %p112, %p113
      %p115 = scmp.ne.s32.totalorder %s104, %s105
      %p116 = scmp.eq.s32.totalorder %s28, 0
      %p117 = por %p115, %p116
      %p118 = scmp.ne.s32.totalorder %s104, %s105
      %p119 = scmp.eq.s32.totalorder %s29, 3
      %p120 = por %p118, %p119
      %p122 = scmp.ne.s32.totalorder %s105, %s121
      %p123 = scmp.eq.s32.totalorder %s29, 0
      %p124 = por %p122, %p123
      %s125 = ssub.s32 %s23, %s30
      %p126 = scmp.eq.s32.totalorder %s125, 0
      %s128 = sadd.s32 %s127, 1
      %s129 = scalar_select %p126, %s127, %s128
      %p132 = pneg %p126
      %p133 = scmp.eq.s32.totalorder %s23, 3
      %p134 = por %p132, %p133
      %p135 = scmp.ne.s32.totalorder %s127, %s130
      %p136 = scmp.eq.s32.totalorder %s23, 0
      %p137 = por %p135, %p136
      %p138 = scmp.ne.s32.totalorder %s127, %s130
      %p139 = scmp.eq.s32.totalorder %s28, 3
      %p140 = por %p138, %p139
      %p141 = scmp.ne.s32.totalorder %s130, %s131
      %p142 = scmp.eq.s32.totalorder %s28, 0
      %p143 = por %p141, %p142
      %p144 = scmp.ne.s32.totalorder %s130, %s131
      %p145 = scmp.eq.s32.totalorder %s29, 3
      %p146 = por %p144, %p145
      %p148 = scmp.ne.s32.totalorder %s131, %s147
      %p149 = scmp.eq.s32.totalorder %s29, 0
      %p150 = por %p148, %p149
      %s151 = ssub.s32 %s23, %s30
      %p152 = scmp.eq.s32.totalorder %s151, 0
      %s154 = sadd.s32 %s153, 1
      %s155 = scalar_select %p152, %s153, %s154
      %p158 = pneg %p152
      %p159 = scmp.eq.s32.totalorder %s23, 3
      %p160 = por %p158, %p159
      %p161 = scmp.ne.s32.totalorder %s153, %s156
      %p162 = scmp.eq.s32.totalorder %s23, 0
      %p163 = por %p161, %p162
      %p164 = scmp.ne.s32.totalorder %s153, %s156
      %p165 = scmp.eq.s32.totalorder %s28, 3
      %p166 = por %p164, %p165
      %p167 = scmp.ne.s32.totalorder %s156, %s157
      %p168 = scmp.eq.s32.totalorder %s28, 0
      %p169 = por %p167, %p168
      %p170 = scmp.ne.s32.totalorder %s156, %s157
      %p171 = scmp.eq.s32.totalorder %s29, 3
      %p172 = por %p170, %p171
      %p174 = scmp.ne.s32.totalorder %s157, %s173
      %p175 = scmp.eq.s32.totalorder %s29, 0
      %p176 = por %p174, %p175
      %s177 = ssub.s32 %s23, %s30
      %p178 = scmp.eq.s32.totalorder %s177, 0
      %s180 = sadd.s32 %s179, 1
      %s181 = scalar_select %p178, %s179, %s180
      %p184 = pneg %p178
      %p185 = scmp.eq.s32.totalorder %s23, 3
      %p186 = por %p184, %p185
      %p187 = scmp.ne.s32.totalorder %s179, %s182
      %p188 = scmp.eq.s32.totalorder %s23, 0
      %p189 = por %p187, %p188
      %p190 = scmp.ne.s32.totalorder %s179, %s182
      %p191 = scmp.eq.s32.totalorder %s28, 3
      %p192 = por %p190, %p191
      %p193 = scmp.ne.s32.totalorder %s182, %s183
      %p194 = scmp.eq.s32.totalorder %s28, 0
      %p195 = por %p193, %p194
      %p196 = scmp.ne.s32.totalorder %s182, %s183
      %p197 = scmp.eq.s32.totalorder %s29, 3
      %p198 = por %p196, %p197
      %p200 = scmp.ne.s32.totalorder %s183, %s199
      %p201 = scmp.eq.s32.totalorder %s29, 0
      %p202 = por %p200, %p201
      %s203 = ssub.s32 %s23, %s30
      %p204 = scmp.eq.s32.totalorder %s203, 0
      %s206 = sadd.s32 %s205, 1
      %s207 = scalar_select %p204, %s205, %s206
      %p210 = pneg %p204
      %p211 = scmp.eq.s32.totalorder %s23, 3
      %p212 = por %p210, %p211
      %p213 = scmp.ne.s32.totalorder %s205, %s208
      %p214 = scmp.eq.s32.totalorder %s23, 0
      %p215 = por %p213, %p214
      %p216 = scmp.ne.s32.totalorder %s205, %s208
      %p217 = scmp.eq.s32.totalorder %s28, 3
      %p218 = por %p216, %p217
      %p219 = scmp.ne.s32.totalorder %s208, %s209
      %p220 = scmp.eq.s32.totalorder %s28, 0
      %p221 = por %p219, %p220
      %p222 = scmp.ne.s32.totalorder %s208, %s209
      %p223 = scmp.eq.s32.totalorder %s29, 3
      %p224 = por %p222, %p223
      %p226 = scmp.ne.s32.totalorder %s209, %s225
      %p227 = scmp.eq.s32.totalorder %s29, 0
      %p228 = por %p226, %p227
      %s229 = ssub.s32 %s23, %s30
      %p230 = scmp.eq.s32.totalorder %s229, 0
      %s232 = sadd.s32 %s231, 1
      %s233 = scalar_select %p230, %s231, %s232
      %p236 = pneg %p230
      %p237 = scmp.eq.s32.totalorder %s23, 3
      %p238 = por %p236, %p237
      %p239 = scmp.ne.s32.totalorder %s231, %s234
      %p240 = scmp.eq.s32.totalorder %s23, 0
      %p241 = por %p239, %p240
      %p242 = scmp.ne.s32.totalorder %s231, %s234
      %p243 = scmp.eq.s32.totalorder %s28, 3
      %p244 = por %p242, %p243
      %p245 = scmp.ne.s32.totalorder %s234, %s235
      %p246 = scmp.eq.s32.totalorder %s28, 0
      %p247 = por %p245, %p246
      %p248 = scmp.ne.s32.totalorder %s234, %s235
      %p249 = scmp.eq.s32.totalorder %s29, 3
      %p250 = por %p248, %p249
      %p252 = scmp.ne.s32.totalorder %s235, %s251
      %p253 = scmp.eq.s32.totalorder %s29, 0
      %p254 = por %p252, %p253
      %s255 = ssub.s32 %s23, %s30
      %p256 = scmp.eq.s32.totalorder %s255, 0
      %s258 = sadd.s32 %s257, 1
      %s259 = scalar_select %p256, %s257, %s258
      %p262 = pneg %p256
      %p263 = scmp.eq.s32.totalorder %s23, 3
      %p264 = por %p262, %p263
      %p265 = scmp.ne.s32.totalorder %s257, %s260
      %p266 = scmp.eq.s32.totalorder %s23, 0
      %p267 = por %p265, %p266
      %p268 = scmp.ne.s32.totalorder %s257, %s260
      %p269 = scmp.eq.s32.totalorder %s28, 3
      %p270 = por %p268, %p269
      %p271 = scmp.ne.s32.totalorder %s260, %s261
      %p272 = scmp.eq.s32.totalorder %s28, 0
      %p273 = por %p271, %p272
      %p274 = scmp.ne.s32.totalorder %s260, %s261
      %p275 = scmp.eq.s32.totalorder %s29, 3
      %p276 = por %p274, %p275
      %p278 = scmp.ne.s32.totalorder %s261, %s277
      %p279 = scmp.eq.s32.totalorder %s29, 0
      %p280 = por %p278, %p279
      %s282 = sadd.s32 %s281, 1
      %p285 = scmp.eq.s32.totalorder %s23, 3
      %p286 = scmp.ne.s32.totalorder %s281, %s283
      %p287 = scmp.eq.s32.totalorder %s23, 0
      %p288 = por %p286, %p287
      %p289 = scmp.ne.s32.totalorder %s281, %s283
      %p290 = scmp.eq.s32.totalorder %s28, 3
      %p291 = por %p289, %p290
      %p292 = scmp.ne.s32.totalorder %s283, %s284
      %p293 = scmp.eq.s32.totalorder %s28, 0
      %p294 = por %p292, %p293
      %p295 = scmp.ne.s32.totalorder %s283, %s284
      %p296 = scmp.eq.s32.totalorder %s29, 3
      %p297 = por %p295, %p296
      %p299 = scmp.ne.s32.totalorder %s284, %s298
      %p300 = scmp.eq.s32.totalorder %s29, 0
      %p301 = por %p299, %p300
      %s303 = sadd.s32 %s302, 1
      %p306 = scmp.eq.s32.totalorder %s23, 3
      %p307 = scmp.ne.s32.totalorder %s302, %s304
      %p308 = scmp.eq.s32.totalorder %s23, 0
      %p309 = por %p307, %p308
      %p310 = scmp.ne.s32.totalorder %s302, %s304
      %p311 = scmp.eq.s32.totalorder %s28, 3
      %p312 = por %p310, %p311
      %p313 = scmp.ne.s32.totalorder %s304, %s305
      %p314 = scmp.eq.s32.totalorder %s28, 0
      %p315 = por %p313, %p314
      %p316 = scmp.ne.s32.totalorder %s304, %s305
      %p317 = scmp.eq.s32.totalorder %s29, 3
      %p318 = por %p316, %p317
      %p320 = scmp.ne.s32.totalorder %s305, %s319
      %p321 = scmp.eq.s32.totalorder %s29, 0
      %p322 = por %p320, %p321
      %s324 = sadd.s32 %s323, 1
      %p327 = scmp.eq.s32.totalorder %s23, 3
      %p328 = scmp.ne.s32.totalorder %s323, %s325
      %p329 = scmp.eq.s32.totalorder %s23, 0
      %p330 = por %p328, %p329
      %p331 = scmp.ne.s32.totalorder %s323, %s325
      %p332 = scmp.eq.s32.totalorder %s28, 3
      %p333 = por %p331, %p332
      %p334 = scmp.ne.s32.totalorder %s325, %s326
      %p335 = scmp.eq.s32.totalorder %s28, 0
      %p336 = por %p334, %p335
      %p337 = scmp.ne.s32.totalorder %s325, %s326
      %p338 = scmp.eq.s32.totalorder %s29, 3
      %p339 = por %p337, %p338
      %p341 = scmp.ne.s32.totalorder %s326, %s340
      %p342 = scmp.eq.s32.totalorder %s29, 0
      %p343 = por %p341, %p342
      %p344 = scmp.le.s32.totalorder 1, %s23
      %p345 = scmp.lt.s32.totalorder %s23, 5
      %p346 = pnand %p344, %p345
      %p347 = pneg %p346
      // Predicated region
      $region9: #{tpu_custom_call.1} parent=5 // pred_check
        _
      $region10: #{tpu_custom_call.1} parent=5 // pred_check_branch
        %349 = sbr.rel (%p346) target = $region12
      $region11: #{tpu_custom_call.1} parent=5 // pred_region
        %s350 = ssub.s32 %s23, 1
        // Predicated region
        $region13: #{tpu_custom_call.1} parent=11 // pred_check
          %p351 = pneg %p44
        $region14: #{tpu_custom_call.1} parent=11 // pred_check_branch
          %353 = sbr.rel (%p351) target = $region16
        $region15: #{tpu_custom_call.1} parent=11 // pred_region
          %s355 = ssub.s32 512, 512
          %356 = vsyncadd [#allocation3], %s355
          %s358 = sshll.u32 [#allocation2], 4
          %s359 = int_to_ptr.vmem [resolvable:$true] %s358
          %361 = dma.hbm_to_vmem [thread:$0]  %s0, 512, %s359, [#allocation3]
        $region16: #{tpu_custom_call.1} parent=11 // pred_fallthru
          _
        // Predicated region
        $region17: #{tpu_custom_call.1} parent=11 // pred_check
          %p362 = pneg %p65
        $region18: #{tpu_custom_call.1} parent=11 // pred_check_branch
          %364 = sbr.rel (%p362) target = $region20
        $region19: #{tpu_custom_call.1} parent=11 // pred_region
          %s366 = ssub.s32 512, 512
          %367 = vsyncadd [#allocation6], %s366
          %s369 = sshll.u32 [#allocation5], 4
          %s370 = int_to_ptr.vmem [resolvable:$true] %s369
          %372 = dma.hbm_to_vmem [thread:$0]  %s1, 512, %s370, [#allocation6]
        $region20: #{tpu_custom_call.1} parent=11 // pred_fallthru
          _
      $region12: #{tpu_custom_call.1} parent=5 // pred_fallthru
        _
      %p373 = scmp.lt.s32.totalorder %s23, 4
      // Predicated region
      $region21: #{tpu_custom_call.1} parent=5 // pred_check
        %p374 = pneg %p373
      $region22: #{tpu_custom_call.1} parent=5 // pred_check_branch
        %376 = sbr.rel (%p374) target = $region24
      $region23: #{tpu_custom_call.1} parent=5 // pred_region
        // Predicated region
        $region25: #{tpu_custom_call.1} parent=23 // pred_check
          %p377 = pneg %p85
        $region26: #{tpu_custom_call.1} parent=23 // pred_check_branch
          %379 = sbr.rel (%p377) target = $region28
        $region27: #{tpu_custom_call.1} parent=23 // pred_region
          %p380 = scmp.lt.s32.totalorder %s23, 3
          %s381 = scalar_select %p380, %s23, 3
          %s382 = smul.addr %s381, 784
          %s383 = smul.addr %s382, 4
          %s384 = scalar_lea.vmem %s2, %s383
        $region28: #{tpu_custom_call.1} parent=23 // pred_fallthru
          _
        // Predicated region
        $region29: #{tpu_custom_call.1} parent=23 // pred_check
          %p385 = pneg %p111
        $region30: #{tpu_custom_call.1} parent=23 // pred_check_branch
          %387 = sbr.rel (%p385) target = $region32
        $region31: #{tpu_custom_call.1} parent=23 // pred_region
          %s388 = sand.u32 %s23, 1
          %s389 = scalar_lea.sflag [#allocation3], %s388
          %s390 = sand.u32 %s101, 1
          %s391 = smul.addr %s390, 16
          %s392 = scalar_lea.vmem [#allocation7], %s391
          %s394 = ssub.s32 256, 256
          %395 = vsyncadd %s389, %s394
          %s396 = smul.addr %s23, 16
          %s397 = smul.addr %s396, 16
          %s398 = scalar_lea.hbm %s3, %s397
          %s399 = sshll.u32 %s392, 4
          %s400 = int_to_ptr.vmem [resolvable:$true] %s399
          %405 = dma.hbm_to_vmem [thread:$0]  %s398, 256, %s400, %s389, 128, 128, 8
        $region32: #{tpu_custom_call.1} parent=23 // pred_fallthru
          _
        // Predicated region
        $region33: #{tpu_custom_call.1} parent=23 // pred_check
          %p406 = pneg %p137
        $region34: #{tpu_custom_call.1} parent=23 // pred_check_branch
          %408 = sbr.rel (%p406) target = $region36
        $region35: #{tpu_custom_call.1} parent=23 // pred_region
          %p409 = scmp.lt.s32.totalorder %s23, 3
          %s410 = scalar_select %p409, %s23, 3
          %s411 = smul.addr %s410, 512
          %s412 = smul.addr %s411, 8
          %s413 = scalar_lea.vmem %s4, %s412
        $region36: #{tpu_custom_call.1} parent=23 // pred_fallthru
          _
        // Predicated region
        $region37: #{tpu_custom_call.1} parent=23 // pred_check
          %p414 = pneg %p163
        $region38: #{tpu_custom_call.1} parent=23 // pred_check_branch
          %416 = sbr.rel (%p414) target = $region40
        $region39: #{tpu_custom_call.1} parent=23 // pred_region
          %s417 = sand.u32 %s23, 1
          %s418 = scalar_lea.sflag [#allocation3], %s417
          %s419 = sand.u32 %s153, 1
          %s420 = smul.addr %s419, 16
          %s421 = scalar_lea.vmem [#allocation8], %s420
          %s423 = ssub.s32 256, 256
          %424 = vsyncadd %s418, %s423
          %s425 = smul.addr %s23, 16
          %s426 = smul.addr %s425, 16
          %s427 = scalar_lea.hbm %s5, %s426
          %s428 = sshll.u32 %s421, 4
          %s429 = int_to_ptr.vmem [resolvable:$true] %s428
          %434 = dma.hbm_to_vmem [thread:$0]  %s427, 256, %s429, %s418, 128, 128, 8
        $region40: #{tpu_custom_call.1} parent=23 // pred_fallthru
          _
        // Predicated region
        $region41: #{tpu_custom_call.1} parent=23 // pred_check
          %p435 = pneg %p189
        $region42: #{tpu_custom_call.1} parent=23 // pred_check_branch
          %437 = sbr.rel (%p435) target = $region44
        $region43: #{tpu_custom_call.1} parent=23 // pred_region
          %s438 = sand.u32 %s23, 1
          %s439 = scalar_lea.sflag [#allocation3], %s438
          %s440 = sand.u32 %s179, 1
          %s441 = smul.addr %s440, 16
          %s442 = scalar_lea.vmem [#allocation9], %s441
          %s444 = ssub.s32 256, 256
          %445 = vsyncadd %s439, %s444
          %s446 = smul.addr %s23, 16
          %s447 = smul.addr %s446, 16
          %s448 = scalar_lea.hbm %s6, %s447
          %s449 = sshll.u32 %s442, 4
          %s450 = int_to_ptr.vmem [resolvable:$true] %s449
          %455 = dma.hbm_to_vmem [thread:$0]  %s448, 256, %s450, %s439, 128, 128, 8
        $region44: #{tpu_custom_call.1} parent=23 // pred_fallthru
          _
        // Predicated region
        $region45: #{tpu_custom_call.1} parent=23 // pred_check
          %p456 = pneg %p215
        $region46: #{tpu_custom_call.1} parent=23 // pred_check_branch
          %458 = sbr.rel (%p456) target = $region48
        $region47: #{tpu_custom_call.1} parent=23 // pred_region
          %p459 = scmp.lt.s32.totalorder %s23, 3
          %s460 = scalar_select %p459, %s23, 3
          %s461 = smul.addr %s460, 512
          %s462 = smul.addr %s461, 8
          %s463 = scalar_lea.vmem %s7, %s462
        $region48: #{tpu_custom_call.1} parent=23 // pred_fallthru
          _
        // Predicated region
        $region49: #{tpu_custom_call.1} parent=23 // pred_check
          %p464 = pneg %p241
        $region50: #{tpu_custom_call.1} parent=23 // pred_check_branch
          %466 = sbr.rel (%p464) target = $region52
        $region51: #{tpu_custom_call.1} parent=23 // pred_region
          %s467 = sand.u32 %s23, 1
          %s468 = scalar_lea.sflag [#allocation3], %s467
          %s469 = sand.u32 %s231, 1
          %s470 = smul.addr %s469, 16
          %s471 = scalar_lea.vmem [#allocation10], %s470
          %s473 = ssub.s32 256, 256
          %474 = vsyncadd %s468, %s473
          %s475 = smul.addr %s23, 16
          %s476 = smul.addr %s475, 16
          %s477 = scalar_lea.hbm %s8, %s476
          %s478 = sshll.u32 %s471, 4
          %s479 = int_to_ptr.vmem [resolvable:$true] %s478
          %484 = dma.hbm_to_vmem [thread:$0]  %s477, 256, %s479, %s468, 64, 64, 4
        $region52: #{tpu_custom_call.1} parent=23 // pred_fallthru
          _
        // Predicated region
        $region53: #{tpu_custom_call.1} parent=23 // pred_check
          %p485 = pneg %p267
        $region54: #{tpu_custom_call.1} parent=23 // pred_check_branch
          %487 = sbr.rel (%p485) target = $region56
        $region55: #{tpu_custom_call.1} parent=23 // pred_region
          %s488 = sand.u32 %s23, 1
          %s489 = scalar_lea.sflag [#allocation3], %s488
          %s490 = sand.u32 %s257, 1
          %s491 = smul.addr %s490, 16
          %s492 = scalar_lea.vmem [#allocation11], %s491
          %s494 = ssub.s32 256, 256
          %495 = vsyncadd %s489, %s494
          %s496 = smul.addr %s23, 16
          %s497 = smul.addr %s496, 16
          %s498 = scalar_lea.hbm %s9, %s497
          %s499 = sshll.u32 %s492, 4
          %s500 = int_to_ptr.vmem [resolvable:$true] %s499
          %505 = dma.hbm_to_vmem [thread:$0]  %s498, 256, %s500, %s489, 64, 64, 4
        $region56: #{tpu_custom_call.1} parent=23 // pred_fallthru
          _
      $region24: #{tpu_custom_call.1} parent=5 // pred_fallthru
        _
      %p506 = scmp.le.s32.totalorder 1, %s23
      %p507 = scmp.lt.s32.totalorder %s23, 5
      %p508 = pnand %p506, %p507
      %p509 = pneg %p508
      // Predicated region
      $region57: #{tpu_custom_call.1} parent=5 // pred_check
        _
      $region58: #{tpu_custom_call.1} parent=5 // pred_check_branch
        %511 = sbr.rel (%p508) target = $region60
      $region59: #{tpu_custom_call.1} parent=5 // pred_region
        %s512 = ssub.s32 %s23, 1
        // Predicated region
        $region61: #{tpu_custom_call.1} parent=59 // pred_check
          %p513 = pneg %p44
        $region62: #{tpu_custom_call.1} parent=59 // pred_check_branch
          %515 = sbr.rel (%p513) target = $region64
        $region63: #{tpu_custom_call.1} parent=59 // pred_region
          %516 = dma.done [#allocation3], 512
        $region64: #{tpu_custom_call.1} parent=59 // pred_fallthru
          _
        // Predicated region
        $region65: #{tpu_custom_call.1} parent=59 // pred_check
          %p517 = pneg %p65
        $region66: #{tpu_custom_call.1} parent=59 // pred_check_branch
          %519 = sbr.rel (%p517) target = $region68
        $region67: #{tpu_custom_call.1} parent=59 // pred_region
          %520 = dma.done [#allocation6], 512
        $region68: #{tpu_custom_call.1} parent=59 // pred_fallthru
          _
        %s521 = sand.u32 %s28, 1
        %s522 = scalar_lea.sflag [#allocation3], %s521
        %s523 = sand.u32 %s104, 1
        %s524 = smul.addr %s523, 16
        %s525 = scalar_lea.vmem [#allocation7], %s524
        // Predicated region
        $region69: #{tpu_custom_call.1} parent=59 // pred_check
          %p526 = pneg %p117
        $region70: #{tpu_custom_call.1} parent=59 // pred_check_branch
          %528 = sbr.rel (%p526) target = $region72
        $region71: #{tpu_custom_call.1} parent=59 // pred_region
          %529 = dma.done %s522, 256
        $region72: #{tpu_custom_call.1} parent=59 // pred_fallthru
          _
        %s530 = sand.u32 %s28, 1
        %s531 = scalar_lea.sflag [#allocation3], %s530
        %s532 = sand.u32 %s156, 1
        %s533 = smul.addr %s532, 16
        %s534 = scalar_lea.vmem [#allocation8], %s533
        // Predicated region
        $region73: #{tpu_custom_call.1} parent=59 // pred_check
          %p535 = pneg %p169
        $region74: #{tpu_custom_call.1} parent=59 // pred_check_branch
          %537 = sbr.rel (%p535) target = $region76
        $region75: #{tpu_custom_call.1} parent=59 // pred_region
          %538 = dma.done %s531, 256
        $region76: #{tpu_custom_call.1} parent=59 // pred_fallthru
          _
        %s539 = sand.u32 %s28, 1
        %s540 = scalar_lea.sflag [#allocation3], %s539
        %s541 = sand.u32 %s182, 1
        %s542 = smul.addr %s541, 16
        %s543 = scalar_lea.vmem [#allocation9], %s542
        // Predicated region
        $region77: #{tpu_custom_call.1} parent=59 // pred_check
          %p544 = pneg %p195
        $region78: #{tpu_custom_call.1} parent=59 // pred_check_branch
          %546 = sbr.rel (%p544) target = $region80
        $region79: #{tpu_custom_call.1} parent=59 // pred_region
          %547 = dma.done %s540, 256
        $region80: #{tpu_custom_call.1} parent=59 // pred_fallthru
          _
        %s548 = sand.u32 %s28, 1
        %s549 = scalar_lea.sflag [#allocation3], %s548
        %s550 = sand.u32 %s234, 1
        %s551 = smul.addr %s550, 16
        %s552 = scalar_lea.vmem [#allocation10], %s551
        // Predicated region
        $region81: #{tpu_custom_call.1} parent=59 // pred_check
          %p553 = pneg %p247
        $region82: #{tpu_custom_call.1} parent=59 // pred_check_branch
          %555 = sbr.rel (%p553) target = $region84
        $region83: #{tpu_custom_call.1} parent=59 // pred_region
          %556 = dma.done %s549, 256
        $region84: #{tpu_custom_call.1} parent=59 // pred_fallthru
          _
        %s557 = sand.u32 %s28, 1
        %s558 = scalar_lea.sflag [#allocation3], %s557
        %s559 = sand.u32 %s260, 1
        %s560 = smul.addr %s559, 16
        %s561 = scalar_lea.vmem [#allocation11], %s560
        // Predicated region
        $region85: #{tpu_custom_call.1} parent=59 // pred_check
          %p562 = pneg %p273
        $region86: #{tpu_custom_call.1} parent=59 // pred_check_branch
          %564 = sbr.rel (%p562) target = $region88
        $region87: #{tpu_custom_call.1} parent=59 // pred_region
          %565 = dma.done %s558, 256
        $region88: #{tpu_custom_call.1} parent=59 // pred_fallthru
          _
        %p566 = pneg %p44
        %p567 = pneg %p41
        %p568 = pneg %p65
        %p569 = pneg %p62
        %p570 = scmp.lt.s32.totalorder %s28, 3
        %s571 = scalar_select %p570, %s28, 3
        %s572 = smul.addr %s571, 784
        %s573 = smul.addr %s572, 4
        %s574 = scalar_lea.vmem %s2, %s573
        %p575 = pneg %p91
        %p576 = pneg %p88
        %s577 = sand.u32 %s28, 1
        %s578 = scalar_lea.sflag [#allocation3], %s577
        %s579 = sand.u32 %s104, 1
        %s580 = smul.addr %s579, 16
        %s581 = scalar_lea.vmem [#allocation7], %s580
        %p582 = pneg %p117
        %p583 = pneg %p114
        %p584 = scmp.lt.s32.totalorder %s28, 3
        %s585 = scalar_select %p584, %s28, 3
        %s586 = smul.addr %s585, 512
        %s587 = smul.addr %s586, 8
        %s588 = scalar_lea.vmem %s4, %s587
        %p589 = pneg %p143
        %p590 = pneg %p140
        %s591 = sand.u32 %s28, 1
        %s592 = scalar_lea.sflag [#allocation3], %s591
        %s593 = sand.u32 %s156, 1
        %s594 = smul.addr %s593, 16
        %s595 = scalar_lea.vmem [#allocation8], %s594
        %p596 = pneg %p169
        %p597 = pneg %p166
        %s598 = sand.u32 %s28, 1
        %s599 = scalar_lea.sflag [#allocation3], %s598
        %s600 = sand.u32 %s182, 1
        %s601 = smul.addr %s600, 16
        %s602 = scalar_lea.vmem [#allocation9], %s601
        %p603 = pneg %p195
        %p604 = pneg %p192
        %p605 = scmp.lt.s32.totalorder %s28, 3
        %s606 = scalar_select %p605, %s28, 3
        %s607 = smul.addr %s606, 512
        %s608 = smul.addr %s607, 8
        %s609 = scalar_lea.vmem %s7, %s608
        %p610 = pneg %p221
        %p611 = pneg %p218
        %s612 = sand.u32 %s28, 1
        %s613 = scalar_lea.sflag [#allocation3], %s612
        %s614 = sand.u32 %s234, 1
        %s615 = smul.addr %s614, 16
        %s616 = scalar_lea.vmem [#allocation10], %s615
        %p617 = pneg %p247
        %p618 = pneg %p244
        %s619 = sand.u32 %s28, 1
        %s620 = scalar_lea.sflag [#allocation3], %s619
        %s621 = sand.u32 %s260, 1
        %s622 = smul.addr %s621, 16
        %s623 = scalar_lea.vmem [#allocation11], %s622
        %p624 = pneg %p273
        %p625 = pneg %p270
        %p626 = pneg %p294
        %p627 = pneg %p291
        %p628 = pneg %p315
        %p629 = pneg %p312
        %p630 = pneg %p336
        %p631 = pneg %p333
        %p632 = scmp.lt.s32.totalorder %s28, 3
        %s633 = scalar_select %p632, %s28, 3
        %s634 = smul.addr %s633, 784
        %s635 = smul.addr %s634, 4
        %s636 = scalar_lea.vmem %s2, %s635
        %p637 = scmp.lt.s32.totalorder %s28, 3
        %s638 = scalar_select %p637, %s28, 3
        %s639 = smul.addr %s638, 512
        %s640 = smul.addr %s639, 8
        %s641 = scalar_lea.vmem %s4, %s640
        %p642 = scmp.lt.s32.totalorder %s28, 3
        %s643 = scalar_select %p642, %s28, 3
        %s644 = smul.addr %s643, 512
        %s645 = smul.addr %s644, 8
        %s646 = scalar_lea.vmem %s7, %s645
        %p648 = scmp.eq.s32.totalorder %s28, 0
        // Predicated region
        $region89: #{tpu_custom_call.1} parent=59 // pred_check
          %p649 = pneg %p648
        $region90: #{tpu_custom_call.1} parent=59 // pred_check_branch
          %651 = sbr.rel (%p649) target = $region92
        $region91: #{tpu_custom_call.1} parent=59 // pred_region
          %v652 = vld [vmem:[#allocation2] sm:$0xff]
          %v653 = vld [vmem:[#allocation2 + $0x8] sm:$0xff]
          %v654 = vld [vmem:[#allocation2 + $0x10] sm:$0xff]
          %v655 = vld [vmem:[#allocation2 + $0x18] sm:$0xff]
          %656 = vst [vmem:[#allocation12] sm:$0xff] %v652
          %657 = vst [vmem:[#allocation12 + $0x8] sm:$0xff] %v653
          %658 = vst [vmem:[#allocation12 + $0x10] sm:$0xff] %v654
          %vm659 = vcmask 64512
          %660 = vst.msk [vmem:[#allocation12 + $0x18] sm:$0xff] %vm659, %v655
          %v661 = vld [vmem:[#allocation5] sm:$0xff]
          %v662 = vld [vmem:[#allocation5 + $0x8] sm:$0xff]
          %v663 = vld [vmem:[#allocation5 + $0x10] sm:$0xff]
          %v664 = vld [vmem:[#allocation5 + $0x18] sm:$0xff]
          %665 = vst [vmem:[#allocation13] sm:$0xff] %v661
          %666 = vst [vmem:[#allocation13 + $0x8] sm:$0xff] %v662
          %667 = vst [vmem:[#allocation13 + $0x10] sm:$0xff] %v663
          %668 = vst.msk [vmem:[#allocation13 + $0x18] sm:$0xff] %vm659, %v664
          %669 = vst [vmem:[#allocation15] sm:$0xff] 0.0
        $region92: #{tpu_custom_call.1} parent=59 // pred_fallthru
          _
        %v670 = vld [vmem:[#allocation12] sm:$0xff]
        %v671 = vld [vmem:[#allocation12 + $0x8] sm:$0xff]
        %v672 = vld [vmem:[#allocation12 + $0x10] sm:$0xff]
        %v673 = vld [vmem:[#allocation12 + $0x18] sm:$0xff]
        %v674 = vld [vmem:[%s636] sm:$0xff]
        %v675 = vld [vmem:[%s636 + $0x8] sm:$0xff]
        %v676 = vld [vmem:[%s636 + $0x10] sm:$0xff]
        %v677 = vld [vmem:[%s636 + $0x18] sm:$0xff]
        %v678 = vld [vmem:[%s636 + $0x20] sm:$0xff]
        %v679 = vld [vmem:[%s636 + $0x28] sm:$0xff]
        %v680 = vld [vmem:[%s636 + $0x30] sm:$0xff]
        %v681 = vld [vmem:[%s636 + $0x38] sm:$0xff]
        %v682 = vld [vmem:[%s636 + $0x40] sm:$0xff]
        %v683 = vld [vmem:[%s636 + $0x48] sm:$0xff]
        %v684 = vld [vmem:[%s636 + $0x50] sm:$0xff]
        %v685 = vld [vmem:[%s636 + $0x58] sm:$0xff]
        %v686 = vld [vmem:[%s636 + $0x60] sm:$0xff]
        %v687 = vld [vmem:[%s636 + $0x68] sm:$0xff]
        %v688 = vld [vmem:[%s636 + $0x70] sm:$0xff]
        %v689 = vld [vmem:[%s636 + $0x78] sm:$0xff]
        %v690 = vld [vmem:[%s636 + $0x80] sm:$0xff]
        %v691 = vld [vmem:[%s636 + $0x88] sm:$0xff]
        %v692 = vld [vmem:[%s636 + $0x90] sm:$0xff]
        %v693 = vld [vmem:[%s636 + $0x98] sm:$0xff]
        %v694 = vld [vmem:[%s636 + $0xa0] sm:$0xff]
        %v695 = vld [vmem:[%s636 + $0xa8] sm:$0xff]
        %v696 = vld [vmem:[%s636 + $0xb0] sm:$0xff]
        %v697 = vld [vmem:[%s636 + $0xb8] sm:$0xff]
        %v698 = vld [vmem:[%s636 + $0xc0] sm:$0xff]
        %v699 = vld [vmem:[%s636 + $0xc8] sm:$0xff]
        %v700 = vld [vmem:[%s636 + $0xd0] sm:$0xff]
        %v701 = vld [vmem:[%s636 + $0xd8] sm:$0xff]
        %v702 = vld [vmem:[%s636 + $0xe0] sm:$0xff]
        %v703 = vld [vmem:[%s636 + $0xe8] sm:$0xff]
        %v704 = vld [vmem:[%s636 + $0xf0] sm:$0xff]
        %v705 = vld [vmem:[%s636 + $0xf8] sm:$0xff]
        %v706 = vld [vmem:[%s636 + $0x100] sm:$0xff]
        %v707 = vld [vmem:[%s636 + $0x108] sm:$0xff]
        %v708 = vld [vmem:[%s636 + $0x110] sm:$0xff]
        %v709 = vld [vmem:[%s636 + $0x118] sm:$0xff]
        %v710 = vld [vmem:[%s636 + $0x120] sm:$0xff]
        %v711 = vld [vmem:[%s636 + $0x128] sm:$0xff]
        %v712 = vld [vmem:[%s636 + $0x130] sm:$0xff]
        %v713 = vld [vmem:[%s636 + $0x138] sm:$0xff]
        %v714 = vld [vmem:[%s636 + $0x140] sm:$0xff]
        %v715 = vld [vmem:[%s636 + $0x148] sm:$0xff]
        %v716 = vld [vmem:[%s636 + $0x150] sm:$0xff]
        %v717 = vld [vmem:[%s636 + $0x158] sm:$0xff]
        %v718 = vld [vmem:[%s636 + $0x160] sm:$0xff]
        %v719 = vld [vmem:[%s636 + $0x168] sm:$0xff]
        %v720 = vld [vmem:[%s636 + $0x170] sm:$0xff]
        %v721 = vld [vmem:[%s636 + $0x178] sm:$0xff]
        %v722 = vld [vmem:[%s636 + $0x180] sm:$0xff]
        %v723 = vld [vmem:[%s636 + $0x188] sm:$0xff]
        %v724 = vld [vmem:[%s636 + $0x190] sm:$0xff]
        %v725 = vld [vmem:[%s636 + $0x198] sm:$0xff]
        %v726 = vld [vmem:[%s636 + $0x1a0] sm:$0xff]
        %v727 = vld [vmem:[%s636 + $0x1a8] sm:$0xff]
        %v728 = vld [vmem:[%s636 + $0x1b0] sm:$0xff]
        %v729 = vld [vmem:[%s636 + $0x1b8] sm:$0xff]
        %v730 = vld [vmem:[%s636 + $0x1c0] sm:$0xff]
        %v731 = vld [vmem:[%s636 + $0x1c8] sm:$0xff]
        %v732 = vld [vmem:[%s636 + $0x1d0] sm:$0xff]
        %v733 = vld [vmem:[%s636 + $0x1d8] sm:$0xff]
        %v734 = vld [vmem:[%s636 + $0x1e0] sm:$0xff]
        %v735 = vld [vmem:[%s636 + $0x1e8] sm:$0xff]
        %v736 = vld [vmem:[%s636 + $0x1f0] sm:$0xff]
        %v737 = vld [vmem:[%s636 + $0x1f8] sm:$0xff]
        %v738 = vld [vmem:[%s636 + $0x200] sm:$0xff]
        %v739 = vld [vmem:[%s636 + $0x208] sm:$0xff]
        %v740 = vld [vmem:[%s636 + $0x210] sm:$0xff]
        %v741 = vld [vmem:[%s636 + $0x218] sm:$0xff]
        %v742 = vld [vmem:[%s636 + $0x220] sm:$0xff]
        %v743 = vld [vmem:[%s636 + $0x228] sm:$0xff]
        %v744 = vld [vmem:[%s636 + $0x230] sm:$0xff]
        %v745 = vld [vmem:[%s636 + $0x238] sm:$0xff]
        %v746 = vld [vmem:[%s636 + $0x240] sm:$0xff]
        %v747 = vld [vmem:[%s636 + $0x248] sm:$0xff]
        %v748 = vld [vmem:[%s636 + $0x250] sm:$0xff]
        %v749 = vld [vmem:[%s636 + $0x258] sm:$0xff]
        %v750 = vld [vmem:[%s636 + $0x260] sm:$0xff]
        %v751 = vld [vmem:[%s636 + $0x268] sm:$0xff]
        %v752 = vld [vmem:[%s636 + $0x270] sm:$0xff]
        %v753 = vld [vmem:[%s636 + $0x278] sm:$0xff]
        %v754 = vld [vmem:[%s636 + $0x280] sm:$0xff]
        %v755 = vld [vmem:[%s636 + $0x288] sm:$0xff]
        %v756 = vld [vmem:[%s636 + $0x290] sm:$0xff]
        %v757 = vld [vmem:[%s636 + $0x298] sm:$0xff]
        %v758 = vld [vmem:[%s636 + $0x2a0] sm:$0xff]
        %v759 = vld [vmem:[%s636 + $0x2a8] sm:$0xff]
        %v760 = vld [vmem:[%s636 + $0x2b0] sm:$0xff]
        %v761 = vld [vmem:[%s636 + $0x2b8] sm:$0xff]
        %v762 = vld [vmem:[%s636 + $0x2c0] sm:$0xff]
        %v763 = vld [vmem:[%s636 + $0x2c8] sm:$0xff]
        %v764 = vld [vmem:[%s636 + $0x2d0] sm:$0xff]
        %v765 = vld [vmem:[%s636 + $0x2d8] sm:$0xff]
        %v766 = vld [vmem:[%s636 + $0x2e0] sm:$0xff]
        %v767 = vld [vmem:[%s636 + $0x2e8] sm:$0xff]
        %v768 = vld [vmem:[%s636 + $0x2f0] sm:$0xff]
        %v769 = vld [vmem:[%s636 + $0x2f8] sm:$0xff]
        %v770 = vld [vmem:[%s636 + $0x300] sm:$0xff]
        %v771 = vld [vmem:[%s636 + $0x308] sm:$0xff]
        %v772 = vld [vmem:[%s636 + $0x310] sm:$0xff]
        %v773 = vld [vmem:[%s636 + $0x318] sm:$0xff]
        %v774 = vld [vmem:[%s636 + $0x320] sm:$0xff]
        %v775 = vld [vmem:[%s636 + $0x328] sm:$0xff]
        %v776 = vld [vmem:[%s636 + $0x330] sm:$0xff]
        %v777 = vld [vmem:[%s636 + $0x338] sm:$0xff]
        %v778 = vld [vmem:[%s636 + $0x340] sm:$0xff]
        %v779 = vld [vmem:[%s636 + $0x348] sm:$0xff]
        %v780 = vld [vmem:[%s636 + $0x350] sm:$0xff]
        %v781 = vld [vmem:[%s636 + $0x358] sm:$0xff]
        %v782 = vld [vmem:[%s636 + $0x360] sm:$0xff]
        %v783 = vld [vmem:[%s636 + $0x368] sm:$0xff]
        %v784 = vld [vmem:[%s636 + $0x370] sm:$0xff]
        %v785 = vld [vmem:[%s636 + $0x378] sm:$0xff]
        %v786 = vld [vmem:[%s636 + $0x380] sm:$0xff]
        %v787 = vld [vmem:[%s636 + $0x388] sm:$0xff]
        %v788 = vld [vmem:[%s636 + $0x390] sm:$0xff]
        %v789 = vld [vmem:[%s636 + $0x398] sm:$0xff]
        %v790 = vld [vmem:[%s636 + $0x3a0] sm:$0xff]
        %v791 = vld [vmem:[%s636 + $0x3a8] sm:$0xff]
        %v792 = vld [vmem:[%s636 + $0x3b0] sm:$0xff]
        %v793 = vld [vmem:[%s636 + $0x3b8] sm:$0xff]
        %v794 = vld [vmem:[%s636 + $0x3c0] sm:$0xff]
        %v795 = vld [vmem:[%s636 + $0x3c8] sm:$0xff]
        %v796 = vld [vmem:[%s636 + $0x3d0] sm:$0xff]
        %v797 = vld [vmem:[%s636 + $0x3d8] sm:$0xff]
        %v798 = vld [vmem:[%s636 + $0x3e0] sm:$0xff]
        %v799 = vld [vmem:[%s636 + $0x3e8] sm:$0xff]
        %v800 = vld [vmem:[%s636 + $0x3f0] sm:$0xff]
        %v801 = vld [vmem:[%s636 + $0x3f8] sm:$0xff]
        %v802 = vld [vmem:[%s636 + $0x400] sm:$0xff]
        %v803 = vld [vmem:[%s636 + $0x408] sm:$0xff]
        %v804 = vld [vmem:[%s636 + $0x410] sm:$0xff]
        %v805 = vld [vmem:[%s636 + $0x418] sm:$0xff]
        %v806 = vld [vmem:[%s636 + $0x420] sm:$0xff]
        %v807 = vld [vmem:[%s636 + $0x428] sm:$0xff]
        %v808 = vld [vmem:[%s636 + $0x430] sm:$0xff]
        %v809 = vld [vmem:[%s636 + $0x438] sm:$0xff]
        %v810 = vld [vmem:[%s636 + $0x440] sm:$0xff]
        %v811 = vld [vmem:[%s636 + $0x448] sm:$0xff]
        %v812 = vld [vmem:[%s636 + $0x450] sm:$0xff]
        %v813 = vld [vmem:[%s636 + $0x458] sm:$0xff]
        %v814 = vld [vmem:[%s636 + $0x460] sm:$0xff]
        %v815 = vld [vmem:[%s636 + $0x468] sm:$0xff]
        %v816 = vld [vmem:[%s636 + $0x470] sm:$0xff]
        %v817 = vld [vmem:[%s636 + $0x478] sm:$0xff]
        %v818 = vld [vmem:[%s636 + $0x480] sm:$0xff]
        %v819 = vld [vmem:[%s636 + $0x488] sm:$0xff]
        %v820 = vld [vmem:[%s636 + $0x490] sm:$0xff]
        %v821 = vld [vmem:[%s636 + $0x498] sm:$0xff]
        %v822 = vld [vmem:[%s636 + $0x4a0] sm:$0xff]
        %v823 = vld [vmem:[%s636 + $0x4a8] sm:$0xff]
        %v824 = vld [vmem:[%s636 + $0x4b0] sm:$0xff]
        %v825 = vld [vmem:[%s636 + $0x4b8] sm:$0xff]
        %v826 = vld [vmem:[%s636 + $0x4c0] sm:$0xff]
        %v827 = vld [vmem:[%s636 + $0x4c8] sm:$0xff]
        %v828 = vld [vmem:[%s636 + $0x4d0] sm:$0xff]
        %v829 = vld [vmem:[%s636 + $0x4d8] sm:$0xff]
        %v830 = vld [vmem:[%s636 + $0x4e0] sm:$0xff]
        %v831 = vld [vmem:[%s636 + $0x4e8] sm:$0xff]
        %v832 = vld [vmem:[%s636 + $0x4f0] sm:$0xff]
        %v833 = vld [vmem:[%s636 + $0x4f8] sm:$0xff]
        %v834 = vld [vmem:[%s636 + $0x500] sm:$0xff]
        %v835 = vld [vmem:[%s636 + $0x508] sm:$0xff]
        %v836 = vld [vmem:[%s636 + $0x510] sm:$0xff]
        %v837 = vld [vmem:[%s636 + $0x518] sm:$0xff]
        %v838 = vld [vmem:[%s636 + $0x520] sm:$0xff]
        %v839 = vld [vmem:[%s636 + $0x528] sm:$0xff]
        %v840 = vld [vmem:[%s636 + $0x530] sm:$0xff]
        %v841 = vld [vmem:[%s636 + $0x538] sm:$0xff]
        %v842 = vld [vmem:[%s636 + $0x540] sm:$0xff]
        %v843 = vld [vmem:[%s636 + $0x548] sm:$0xff]
        %v844 = vld [vmem:[%s636 + $0x550] sm:$0xff]
        %v845 = vld [vmem:[%s636 + $0x558] sm:$0xff]
        %v846 = vld [vmem:[%s636 + $0x560] sm:$0xff]
        %v847 = vld [vmem:[%s636 + $0x568] sm:$0xff]
        %v848 = vld [vmem:[%s636 + $0x570] sm:$0xff]
        %v849 = vld [vmem:[%s636 + $0x578] sm:$0xff]
        %v850 = vld [vmem:[%s636 + $0x580] sm:$0xff]
        %v851 = vld [vmem:[%s636 + $0x588] sm:$0xff]
        %v852 = vld [vmem:[%s636 + $0x590] sm:$0xff]
        %v853 = vld [vmem:[%s636 + $0x598] sm:$0xff]
        %v854 = vld [vmem:[%s636 + $0x5a0] sm:$0xff]
        %v855 = vld [vmem:[%s636 + $0x5a8] sm:$0xff]
        %v856 = vld [vmem:[%s636 + $0x5b0] sm:$0xff]
        %v857 = vld [vmem:[%s636 + $0x5b8] sm:$0xff]
        %v858 = vld [vmem:[%s636 + $0x5c0] sm:$0xff]
        %v859 = vld [vmem:[%s636 + $0x5c8] sm:$0xff]
        %v860 = vld [vmem:[%s636 + $0x5d0] sm:$0xff]
        %v861 = vld [vmem:[%s636 + $0x5d8] sm:$0xff]
        %v862 = vld [vmem:[%s636 + $0x5e0] sm:$0xff]
        %v863 = vld [vmem:[%s636 + $0x5e8] sm:$0xff]
        %v864 = vld [vmem:[%s636 + $0x5f0] sm:$0xff]
        %v865 = vld [vmem:[%s636 + $0x5f8] sm:$0xff]
        %v866 = vld [vmem:[%s636 + $0x600] sm:$0xff]
        %v867 = vld [vmem:[%s636 + $0x608] sm:$0xff]
        %v868 = vld [vmem:[%s636 + $0x610] sm:$0xff]
        %v869 = vld [vmem:[%s636 + $0x618] sm:$0xff]
        %v870 = vld [vmem:[%s525] sm:$0xff]
        %v871 = vld [vmem:[%s641] sm:$0xff]
        %v872 = vld [vmem:[%s641 + $0x8] sm:$0xff]
        %v873 = vld [vmem:[%s641 + $0x10] sm:$0xff]
        %v874 = vld [vmem:[%s641 + $0x18] sm:$0xff]
        %v875 = vld [vmem:[%s641 + $0x20] sm:$0xff]
        %v876 = vld [vmem:[%s641 + $0x28] sm:$0xff]
        %v877 = vld [vmem:[%s641 + $0x30] sm:$0xff]
        %v878 = vld [vmem:[%s641 + $0x38] sm:$0xff]
        %v879 = vld [vmem:[%s641 + $0x40] sm:$0xff]
        %v880 = vld [vmem:[%s641 + $0x48] sm:$0xff]
        %v881 = vld [vmem:[%s641 + $0x50] sm:$0xff]
        %v882 = vld [vmem:[%s641 + $0x58] sm:$0xff]
        %v883 = vld [vmem:[%s641 + $0x60] sm:$0xff]
        %v884 = vld [vmem:[%s641 + $0x68] sm:$0xff]
        %v885 = vld [vmem:[%s641 + $0x70] sm:$0xff]
        %v886 = vld [vmem:[%s641 + $0x78] sm:$0xff]
        %v887 = vld [vmem:[%s641 + $0x80] sm:$0xff]
        %v888 = vld [vmem:[%s641 + $0x88] sm:$0xff]
        %v889 = vld [vmem:[%s641 + $0x90] sm:$0xff]
        %v890 = vld [vmem:[%s641 + $0x98] sm:$0xff]
        %v891 = vld [vmem:[%s641 + $0xa0] sm:$0xff]
        %v892 = vld [vmem:[%s641 + $0xa8] sm:$0xff]
        %v893 = vld [vmem:[%s641 + $0xb0] sm:$0xff]
        %v894 = vld [vmem:[%s641 + $0xb8] sm:$0xff]
        %v895 = vld [vmem:[%s641 + $0xc0] sm:$0xff]
        %v896 = vld [vmem:[%s641 + $0xc8] sm:$0xff]
        %v897 = vld [vmem:[%s641 + $0xd0] sm:$0xff]
        %v898 = vld [vmem:[%s641 + $0xd8] sm:$0xff]
        %v899 = vld [vmem:[%s641 + $0xe0] sm:$0xff]
        %v900 = vld [vmem:[%s641 + $0xe8] sm:$0xff]
        %v901 = vld [vmem:[%s641 + $0xf0] sm:$0xff]
        %v902 = vld [vmem:[%s641 + $0xf8] sm:$0xff]
        %v903 = vld [vmem:[%s641 + $0x100] sm:$0xff]
        %v904 = vld [vmem:[%s641 + $0x108] sm:$0xff]
        %v905 = vld [vmem:[%s641 + $0x110] sm:$0xff]
        %v906 = vld [vmem:[%s641 + $0x118] sm:$0xff]
        %v907 = vld [vmem:[%s641 + $0x120] sm:$0xff]
        %v908 = vld [vmem:[%s641 + $0x128] sm:$0xff]
        %v909 = vld [vmem:[%s641 + $0x130] sm:$0xff]
        %v910 = vld [vmem:[%s641 + $0x138] sm:$0xff]
        %v911 = vld [vmem:[%s641 + $0x140] sm:$0xff]
        %v912 = vld [vmem:[%s641 + $0x148] sm:$0xff]
        %v913 = vld [vmem:[%s641 + $0x150] sm:$0xff]
        %v914 = vld [vmem:[%s641 + $0x158] sm:$0xff]
        %v915 = vld [vmem:[%s641 + $0x160] sm:$0xff]
        %v916 = vld [vmem:[%s641 + $0x168] sm:$0xff]
        %v917 = vld [vmem:[%s641 + $0x170] sm:$0xff]
        %v918 = vld [vmem:[%s641 + $0x178] sm:$0xff]
        %v919 = vld [vmem:[%s641 + $0x180] sm:$0xff]
        %v920 = vld [vmem:[%s641 + $0x188] sm:$0xff]
        %v921 = vld [vmem:[%s641 + $0x190] sm:$0xff]
        %v922 = vld [vmem:[%s641 + $0x198] sm:$0xff]
        %v923 = vld [vmem:[%s641 + $0x1a0] sm:$0xff]
        %v924 = vld [vmem:[%s641 + $0x1a8] sm:$0xff]
        %v925 = vld [vmem:[%s641 + $0x1b0] sm:$0xff]
        %v926 = vld [vmem:[%s641 + $0x1b8] sm:$0xff]
        %v927 = vld [vmem:[%s641 + $0x1c0] sm:$0xff]
        %v928 = vld [vmem:[%s641 + $0x1c8] sm:$0xff]
        %v929 = vld [vmem:[%s641 + $0x1d0] sm:$0xff]
        %v930 = vld [vmem:[%s641 + $0x1d8] sm:$0xff]
        %v931 = vld [vmem:[%s641 + $0x1e0] sm:$0xff]
        %v932 = vld [vmem:[%s641 + $0x1e8] sm:$0xff]
        %v933 = vld [vmem:[%s641 + $0x1f0] sm:$0xff]
        %v934 = vld [vmem:[%s641 + $0x1f8] sm:$0xff]
        %v935 = vld [vmem:[%s641 + $0x200] sm:$0xff]
        %v936 = vld [vmem:[%s641 + $0x208] sm:$0xff]
        %v937 = vld [vmem:[%s641 + $0x210] sm:$0xff]
        %v938 = vld [vmem:[%s641 + $0x218] sm:$0xff]
        %v939 = vld [vmem:[%s641 + $0x220] sm:$0xff]
        %v940 = vld [vmem:[%s641 + $0x228] sm:$0xff]
        %v941 = vld [vmem:[%s641 + $0x230] sm:$0xff]
        %v942 = vld [vmem:[%s641 + $0x238] sm:$0xff]
        %v943 = vld [vmem:[%s641 + $0x240] sm:$0xff]
        %v944 = vld [vmem:[%s641 + $0x248] sm:$0xff]
        %v945 = vld [vmem:[%s641 + $0x250] sm:$0xff]
        %v946 = vld [vmem:[%s641 + $0x258] sm:$0xff]
        %v947 = vld [vmem:[%s641 + $0x260] sm:$0xff]
        %v948 = vld [vmem:[%s641 + $0x268] sm:$0xff]
        %v949 = vld [vmem:[%s641 + $0x270] sm:$0xff]
        %v950 = vld [vmem:[%s641 + $0x278] sm:$0xff]
        %v951 = vld [vmem:[%s641 + $0x280] sm:$0xff]
        %v952 = vld [vmem:[%s641 + $0x288] sm:$0xff]
        %v953 = vld [vmem:[%s641 + $0x290] sm:$0xff]
        %v954 = vld [vmem:[%s641 + $0x298] sm:$0xff]
        %v955 = vld [vmem:[%s641 + $0x2a0] sm:$0xff]
        %v956 = vld [vmem:[%s641 + $0x2a8] sm:$0xff]
        %v957 = vld [vmem:[%s641 + $0x2b0] sm:$0xff]
        %v958 = vld [vmem:[%s641 + $0x2b8] sm:$0xff]
        %v959 = vld [vmem:[%s641 + $0x2c0] sm:$0xff]
        %v960 = vld [vmem:[%s641 + $0x2c8] sm:$0xff]
        %v961 = vld [vmem:[%s641 + $0x2d0] sm:$0xff]
        %v962 = vld [vmem:[%s641 + $0x2d8] sm:$0xff]
        %v963 = vld [vmem:[%s641 + $0x2e0] sm:$0xff]
        %v964 = vld [vmem:[%s641 + $0x2e8] sm:$0xff]
        %v965 = vld [vmem:[%s641 + $0x2f0] sm:$0xff]
        %v966 = vld [vmem:[%s641 + $0x2f8] sm:$0xff]
        %v967 = vld [vmem:[%s641 + $0x300] sm:$0xff]
        %v968 = vld [vmem:[%s641 + $0x308] sm:$0xff]
        %v969 = vld [vmem:[%s641 + $0x310] sm:$0xff]
        %v970 = vld [vmem:[%s641 + $0x318] sm:$0xff]
        %v971 = vld [vmem:[%s641 + $0x320] sm:$0xff]
        %v972 = vld [vmem:[%s641 + $0x328] sm:$0xff]
        %v973 = vld [vmem:[%s641 + $0x330] sm:$0xff]
        %v974 = vld [vmem:[%s641 + $0x338] sm:$0xff]
        %v975 = vld [vmem:[%s641 + $0x340] sm:$0xff]
        %v976 = vld [vmem:[%s641 + $0x348] sm:$0xff]
        %v977 = vld [vmem:[%s641 + $0x350] sm:$0xff]
        %v978 = vld [vmem:[%s641 + $0x358] sm:$0xff]
        %v979 = vld [vmem:[%s641 + $0x360] sm:$0xff]
        %v980 = vld [vmem:[%s641 + $0x368] sm:$0xff]
        %v981 = vld [vmem:[%s641 + $0x370] sm:$0xff]
        %v982 = vld [vmem:[%s641 + $0x378] sm:$0xff]
        %v983 = vld [vmem:[%s641 + $0x380] sm:$0xff]
        %v984 = vld [vmem:[%s641 + $0x388] sm:$0xff]
        %v985 = vld [vmem:[%s641 + $0x390] sm:$0xff]
        %v986 = vld [vmem:[%s641 + $0x398] sm:$0xff]
        %v987 = vld [vmem:[%s641 + $0x3a0] sm:$0xff]
        %v988 = vld [vmem:[%s641 + $0x3a8] sm:$0xff]
        %v989 = vld [vmem:[%s641 + $0x3b0] sm:$0xff]
        %v990 = vld [vmem:[%s641 + $0x3b8] sm:$0xff]
        %v991 = vld [vmem:[%s641 + $0x3c0] sm:$0xff]
        %v992 = vld [vmem:[%s641 + $0x3c8] sm:$0xff]
        %v993 = vld [vmem:[%s641 + $0x3d0] sm:$0xff]
        %v994 = vld [vmem:[%s641 + $0x3d8] sm:$0xff]
        %v995 = vld [vmem:[%s641 + $0x3e0] sm:$0xff]
        %v996 = vld [vmem:[%s641 + $0x3e8] sm:$0xff]
        %v997 = vld [vmem:[%s641 + $0x3f0] sm:$0xff]
        %v998 = vld [vmem:[%s641 + $0x3f8] sm:$0xff]
        %v999 = vld [vmem:[%s641 + $0x400] sm:$0xff]
        %v1000 = vld [vmem:[%s641 + $0x408] sm:$0xff]
        %v1001 = vld [vmem:[%s641 + $0x410] sm:$0xff]
        %v1002 = vld [vmem:[%s641 + $0x418] sm:$0xff]
        %v1003 = vld [vmem:[%s641 + $0x420] sm:$0xff]
        %v1004 = vld [vmem:[%s641 + $0x428] sm:$0xff]
        %v1005 = vld [vmem:[%s641 + $0x430] sm:$0xff]
        %v1006 = vld [vmem:[%s641 + $0x438] sm:$0xff]
        %v1007 = vld [vmem:[%s641 + $0x440] sm:$0xff]
        %v1008 = vld [vmem:[%s641 + $0x448] sm:$0xff]
        %v1009 = vld [vmem:[%s641 + $0x450] sm:$0xff]
        %v1010 = vld [vmem:[%s641 + $0x458] sm:$0xff]
        %v1011 = vld [vmem:[%s641 + $0x460] sm:$0xff]
        %v1012 = vld [vmem:[%s641 + $0x468] sm:$0xff]
        %v1013 = vld [vmem:[%s641 + $0x470] sm:$0xff]
        %v1014 = vld [vmem:[%s641 + $0x478] sm:$0xff]
        %v1015 = vld [vmem:[%s641 + $0x480] sm:$0xff]
        %v1016 = vld [vmem:[%s641 + $0x488] sm:$0xff]
        %v1017 = vld [vmem:[%s641 + $0x490] sm:$0xff]
        %v1018 = vld [vmem:[%s641 + $0x498] sm:$0xff]
        %v1019 = vld [vmem:[%s641 + $0x4a0] sm:$0xff]
        %v1020 = vld [vmem:[%s641 + $0x4a8] sm:$0xff]
        %v1021 = vld [vmem:[%s641 + $0x4b0] sm:$0xff]
        %v1022 = vld [vmem:[%s641 + $0x4b8] sm:$0xff]
        %v1023 = vld [vmem:[%s641 + $0x4c0] sm:$0xff]
        %v1024 = vld [vmem:[%s641 + $0x4c8] sm:$0xff]
        %v1025 = vld [vmem:[%s641 + $0x4d0] sm:$0xff]
        %v1026 = vld [vmem:[%s641 + $0x4d8] sm:$0xff]
        %v1027 = vld [vmem:[%s641 + $0x4e0] sm:$0xff]
        %v1028 = vld [vmem:[%s641 + $0x4e8] sm:$0xff]
        %v1029 = vld [vmem:[%s641 + $0x4f0] sm:$0xff]
        %v1030 = vld [vmem:[%s641 + $0x4f8] sm:$0xff]
        %v1031 = vld [vmem:[%s641 + $0x500] sm:$0xff]
        %v1032 = vld [vmem:[%s641 + $0x508] sm:$0xff]
        %v1033 = vld [vmem:[%s641 + $0x510] sm:$0xff]
        %v1034 = vld [vmem:[%s641 + $0x518] sm:$0xff]
        %v1035 = vld [vmem:[%s641 + $0x520] sm:$0xff]
        %v1036 = vld [vmem:[%s641 + $0x528] sm:$0xff]
        %v1037 = vld [vmem:[%s641 + $0x530] sm:$0xff]
        %v1038 = vld [vmem:[%s641 + $0x538] sm:$0xff]
        %v1039 = vld [vmem:[%s641 + $0x540] sm:$0xff]
        %v1040 = vld [vmem:[%s641 + $0x548] sm:$0xff]
        %v1041 = vld [vmem:[%s641 + $0x550] sm:$0xff]
        %v1042 = vld [vmem:[%s641 + $0x558] sm:$0xff]
        %v1043 = vld [vmem:[%s641 + $0x560] sm:$0xff]
        %v1044 = vld [vmem:[%s641 + $0x568] sm:$0xff]
        %v1045 = vld [vmem:[%s641 + $0x570] sm:$0xff]
        %v1046 = vld [vmem:[%s641 + $0x578] sm:$0xff]
        %v1047 = vld [vmem:[%s641 + $0x580] sm:$0xff]
        %v1048 = vld [vmem:[%s641 + $0x588] sm:$0xff]
        %v1049 = vld [vmem:[%s641 + $0x590] sm:$0xff]
        %v1050 = vld [vmem:[%s641 + $0x598] sm:$0xff]
        %v1051 = vld [vmem:[%s641 + $0x5a0] sm:$0xff]
        %v1052 = vld [vmem:[%s641 + $0x5a8] sm:$0xff]
        %v1053 = vld [vmem:[%s641 + $0x5b0] sm:$0xff]
        %v1054 = vld [vmem:[%s641 + $0x5b8] sm:$0xff]
        %v1055 = vld [vmem:[%s641 + $0x5c0] sm:$0xff]
        %v1056 = vld [vmem:[%s641 + $0x5c8] sm:$0xff]
        %v1057 = vld [vmem:[%s641 + $0x5d0] sm:$0xff]
        %v1058 = vld [vmem:[%s641 + $0x5d8] sm:$0xff]
        %v1059 = vld [vmem:[%s641 + $0x5e0] sm:$0xff]
        %v1060 = vld [vmem:[%s641 + $0x5e8] sm:$0xff]
        %v1061 = vld [vmem:[%s641 + $0x5f0] sm:$0xff]
        %v1062 = vld [vmem:[%s641 + $0x5f8] sm:$0xff]
        %v1063 = vld [vmem:[%s641 + $0x600] sm:$0xff]
        %v1064 = vld [vmem:[%s641 + $0x608] sm:$0xff]
        %v1065 = vld [vmem:[%s641 + $0x610] sm:$0xff]
        %v1066 = vld [vmem:[%s641 + $0x618] sm:$0xff]
        %v1067 = vld [vmem:[%s641 + $0x620] sm:$0xff]
        %v1068 = vld [vmem:[%s641 + $0x628] sm:$0xff]
        %v1069 = vld [vmem:[%s641 + $0x630] sm:$0xff]
        %v1070 = vld [vmem:[%s641 + $0x638] sm:$0xff]
        %v1071 = vld [vmem:[%s641 + $0x640] sm:$0xff]
        %v1072 = vld [vmem:[%s641 + $0x648] sm:$0xff]
        %v1073 = vld [vmem:[%s641 + $0x650] sm:$0xff]
        %v1074 = vld [vmem:[%s641 + $0x658] sm:$0xff]
        %v1075 = vld [vmem:[%s641 + $0x660] sm:$0xff]
        %v1076 = vld [vmem:[%s641 + $0x668] sm:$0xff]
        %v1077 = vld [vmem:[%s641 + $0x670] sm:$0xff]
        %v1078 = vld [vmem:[%s641 + $0x678] sm:$0xff]
        %v1079 = vld [vmem:[%s641 + $0x680] sm:$0xff]
        %v1080 = vld [vmem:[%s641 + $0x688] sm:$0xff]
        %v1081 = vld [vmem:[%s641 + $0x690] sm:$0xff]
        %v1082 = vld [vmem:[%s641 + $0x698] sm:$0xff]
        %v1083 = vld [vmem:[%s641 + $0x6a0] sm:$0xff]
        %v1084 = vld [vmem:[%s641 + $0x6a8] sm:$0xff]
        %v1085 = vld [vmem:[%s641 + $0x6b0] sm:$0xff]
        %v1086 = vld [vmem:[%s641 + $0x6b8] sm:$0xff]
        %v1087 = vld [vmem:[%s641 + $0x6c0] sm:$0xff]
        %v1088 = vld [vmem:[%s641 + $0x6c8] sm:$0xff]
        %v1089 = vld [vmem:[%s641 + $0x6d0] sm:$0xff]
        %v1090 = vld [vmem:[%s641 + $0x6d8] sm:$0xff]
        %v1091 = vld [vmem:[%s641 + $0x6e0] sm:$0xff]
        %v1092 = vld [vmem:[%s641 + $0x6e8] sm:$0xff]
        %v1093 = vld [vmem:[%s641 + $0x6f0] sm:$0xff]
        %v1094 = vld [vmem:[%s641 + $0x6f8] sm:$0xff]
        %v1095 = vld [vmem:[%s641 + $0x700] sm:$0xff]
        %v1096 = vld [vmem:[%s641 + $0x708] sm:$0xff]
        %v1097 = vld [vmem:[%s641 + $0x710] sm:$0xff]
        %v1098 = vld [vmem:[%s641 + $0x718] sm:$0xff]
        %v1099 = vld [vmem:[%s641 + $0x720] sm:$0xff]
        %v1100 = vld [vmem:[%s641 + $0x728] sm:$0xff]
        %v1101 = vld [vmem:[%s641 + $0x730] sm:$0xff]
        %v1102 = vld [vmem:[%s641 + $0x738] sm:$0xff]
        %v1103 = vld [vmem:[%s641 + $0x740] sm:$0xff]
        %v1104 = vld [vmem:[%s641 + $0x748] sm:$0xff]
        %v1105 = vld [vmem:[%s641 + $0x750] sm:$0xff]
        %v1106 = vld [vmem:[%s641 + $0x758] sm:$0xff]
        %v1107 = vld [vmem:[%s641 + $0x760] sm:$0xff]
        %v1108 = vld [vmem:[%s641 + $0x768] sm:$0xff]
        %v1109 = vld [vmem:[%s641 + $0x770] sm:$0xff]
        %v1110 = vld [vmem:[%s641 + $0x778] sm:$0xff]
        %v1111 = vld [vmem:[%s641 + $0x780] sm:$0xff]
        %v1112 = vld [vmem:[%s641 + $0x788] sm:$0xff]
        %v1113 = vld [vmem:[%s641 + $0x790] sm:$0xff]
        %v1114 = vld [vmem:[%s641 + $0x798] sm:$0xff]
        %v1115 = vld [vmem:[%s641 + $0x7a0] sm:$0xff]
        %v1116 = vld [vmem:[%s641 + $0x7a8] sm:$0xff]
        %v1117 = vld [vmem:[%s641 + $0x7b0] sm:$0xff]
        %v1118 = vld [vmem:[%s641 + $0x7b8] sm:$0xff]
        %v1119 = vld [vmem:[%s641 + $0x7c0] sm:$0xff]
        %v1120 = vld [vmem:[%s641 + $0x7c8] sm:$0xff]
        %v1121 = vld [vmem:[%s641 + $0x7d0] sm:$0xff]
        %v1122 = vld [vmem:[%s641 + $0x7d8] sm:$0xff]
        %v1123 = vld [vmem:[%s641 + $0x7e0] sm:$0xff]
        %v1124 = vld [vmem:[%s641 + $0x7e8] sm:$0xff]
        %v1125 = vld [vmem:[%s641 + $0x7f0] sm:$0xff]
        %v1126 = vld [vmem:[%s641 + $0x7f8] sm:$0xff]
        %v1127 = vld [vmem:[%s534] sm:$0xff]
        %v1128 = vld [vmem:[%s543] sm:$0xff]
        %v1129 = vld [vmem:[%s646] sm:$0xff]
        %v1130 = vld [vmem:[%s646 + $0x8] sm:$0xff]
        %v1131 = vld [vmem:[%s646 + $0x10] sm:$0xff]
        %v1132 = vld [vmem:[%s646 + $0x18] sm:$0xff]
        %v1133 = vld [vmem:[%s646 + $0x20] sm:$0xff]
        %v1134 = vld [vmem:[%s646 + $0x28] sm:$0xff]
        %v1135 = vld [vmem:[%s646 + $0x30] sm:$0xff]
        %v1136 = vld [vmem:[%s646 + $0x38] sm:$0xff]
        %v1137 = vld [vmem:[%s646 + $0x40] sm:$0xff]
        %v1138 = vld [vmem:[%s646 + $0x48] sm:$0xff]
        %v1139 = vld [vmem:[%s646 + $0x50] sm:$0xff]
        %v1140 = vld [vmem:[%s646 + $0x58] sm:$0xff]
        %v1141 = vld [vmem:[%s646 + $0x60] sm:$0xff]
        %v1142 = vld [vmem:[%s646 + $0x68] sm:$0xff]
        %v1143 = vld [vmem:[%s646 + $0x70] sm:$0xff]
        %v1144 = vld [vmem:[%s646 + $0x78] sm:$0xff]
        %v1145 = vld [vmem:[%s646 + $0x80] sm:$0xff]
        %v1146 = vld [vmem:[%s646 + $0x88] sm:$0xff]
        %v1147 = vld [vmem:[%s646 + $0x90] sm:$0xff]
        %v1148 = vld [vmem:[%s646 + $0x98] sm:$0xff]
        %v1149 = vld [vmem:[%s646 + $0xa0] sm:$0xff]
        %v1150 = vld [vmem:[%s646 + $0xa8] sm:$0xff]
        %v1151 = vld [vmem:[%s646 + $0xb0] sm:$0xff]
        %v1152 = vld [vmem:[%s646 + $0xb8] sm:$0xff]
        %v1153 = vld [vmem:[%s646 + $0xc0] sm:$0xff]
        %v1154 = vld [vmem:[%s646 + $0xc8] sm:$0xff]
        %v1155 = vld [vmem:[%s646 + $0xd0] sm:$0xff]
        %v1156 = vld [vmem:[%s646 + $0xd8] sm:$0xff]
        %v1157 = vld [vmem:[%s646 + $0xe0] sm:$0xff]
        %v1158 = vld [vmem:[%s646 + $0xe8] sm:$0xff]
        %v1159 = vld [vmem:[%s646 + $0xf0] sm:$0xff]
        %v1160 = vld [vmem:[%s646 + $0xf8] sm:$0xff]
        %v1161 = vld [vmem:[%s646 + $0x100] sm:$0xff]
        %v1162 = vld [vmem:[%s646 + $0x108] sm:$0xff]
        %v1163 = vld [vmem:[%s646 + $0x110] sm:$0xff]
        %v1164 = vld [vmem:[%s646 + $0x118] sm:$0xff]
        %v1165 = vld [vmem:[%s646 + $0x120] sm:$0xff]
        %v1166 = vld [vmem:[%s646 + $0x128] sm:$0xff]
        %v1167 = vld [vmem:[%s646 + $0x130] sm:$0xff]
        %v1168 = vld [vmem:[%s646 + $0x138] sm:$0xff]
        %v1169 = vld [vmem:[%s646 + $0x140] sm:$0xff]
        %v1170 = vld [vmem:[%s646 + $0x148] sm:$0xff]
        %v1171 = vld [vmem:[%s646 + $0x150] sm:$0xff]
        %v1172 = vld [vmem:[%s646 + $0x158] sm:$0xff]
        %v1173 = vld [vmem:[%s646 + $0x160] sm:$0xff]
        %v1174 = vld [vmem:[%s646 + $0x168] sm:$0xff]
        %v1175 = vld [vmem:[%s646 + $0x170] sm:$0xff]
        %v1176 = vld [vmem:[%s646 + $0x178] sm:$0xff]
        %v1177 = vld [vmem:[%s646 + $0x180] sm:$0xff]
        %v1178 = vld [vmem:[%s646 + $0x188] sm:$0xff]
        %v1179 = vld [vmem:[%s646 + $0x190] sm:$0xff]
        %v1180 = vld [vmem:[%s646 + $0x198] sm:$0xff]
        %v1181 = vld [vmem:[%s646 + $0x1a0] sm:$0xff]
        %v1182 = vld [vmem:[%s646 + $0x1a8] sm:$0xff]
        %v1183 = vld [vmem:[%s646 + $0x1b0] sm:$0xff]
        %v1184 = vld [vmem:[%s646 + $0x1b8] sm:$0xff]
        %v1185 = vld [vmem:[%s646 + $0x1c0] sm:$0xff]
        %v1186 = vld [vmem:[%s646 + $0x1c8] sm:$0xff]
        %v1187 = vld [vmem:[%s646 + $0x1d0] sm:$0xff]
        %v1188 = vld [vmem:[%s646 + $0x1d8] sm:$0xff]
        %v1189 = vld [vmem:[%s646 + $0x1e0] sm:$0xff]
        %v1190 = vld [vmem:[%s646 + $0x1e8] sm:$0xff]
        %v1191 = vld [vmem:[%s646 + $0x1f0] sm:$0xff]
        %v1192 = vld [vmem:[%s646 + $0x1f8] sm:$0xff]
        %v1193 = vld [vmem:[%s646 + $0x200] sm:$0xff]
        %v1194 = vld [vmem:[%s646 + $0x208] sm:$0xff]
        %v1195 = vld [vmem:[%s646 + $0x210] sm:$0xff]
        %v1196 = vld [vmem:[%s646 + $0x218] sm:$0xff]
        %v1197 = vld [vmem:[%s646 + $0x220] sm:$0xff]
        %v1198 = vld [vmem:[%s646 + $0x228] sm:$0xff]
        %v1199 = vld [vmem:[%s646 + $0x230] sm:$0xff]
        %v1200 = vld [vmem:[%s646 + $0x238] sm:$0xff]
        %v1201 = vld [vmem:[%s646 + $0x240] sm:$0xff]
        %v1202 = vld [vmem:[%s646 + $0x248] sm:$0xff]
        %v1203 = vld [vmem:[%s646 + $0x250] sm:$0xff]
        %v1204 = vld [vmem:[%s646 + $0x258] sm:$0xff]
        %v1205 = vld [vmem:[%s646 + $0x260] sm:$0xff]
        %v1206 = vld [vmem:[%s646 + $0x268] sm:$0xff]
        %v1207 = vld [vmem:[%s646 + $0x270] sm:$0xff]
        %v1208 = vld [vmem:[%s646 + $0x278] sm:$0xff]
        %v1209 = vld [vmem:[%s646 + $0x280] sm:$0xff]
        %v1210 = vld [vmem:[%s646 + $0x288] sm:$0xff]
        %v1211 = vld [vmem:[%s646 + $0x290] sm:$0xff]
        %v1212 = vld [vmem:[%s646 + $0x298] sm:$0xff]
        %v1213 = vld [vmem:[%s646 + $0x2a0] sm:$0xff]
        %v1214 = vld [vmem:[%s646 + $0x2a8] sm:$0xff]
        %v1215 = vld [vmem:[%s646 + $0x2b0] sm:$0xff]
        %v1216 = vld [vmem:[%s646 + $0x2b8] sm:$0xff]
        %v1217 = vld [vmem:[%s646 + $0x2c0] sm:$0xff]
        %v1218 = vld [vmem:[%s646 + $0x2c8] sm:$0xff]
        %v1219 = vld [vmem:[%s646 + $0x2d0] sm:$0xff]
        %v1220 = vld [vmem:[%s646 + $0x2d8] sm:$0xff]
        %v1221 = vld [vmem:[%s646 + $0x2e0] sm:$0xff]
        %v1222 = vld [vmem:[%s646 + $0x2e8] sm:$0xff]
        %v1223 = vld [vmem:[%s646 + $0x2f0] sm:$0xff]
        %v1224 = vld [vmem:[%s646 + $0x2f8] sm:$0xff]
        %v1225 = vld [vmem:[%s646 + $0x300] sm:$0xff]
        %v1226 = vld [vmem:[%s646 + $0x308] sm:$0xff]
        %v1227 = vld [vmem:[%s646 + $0x310] sm:$0xff]
        %v1228 = vld [vmem:[%s646 + $0x318] sm:$0xff]
        %v1229 = vld [vmem:[%s646 + $0x320] sm:$0xff]
        %v1230 = vld [vmem:[%s646 + $0x328] sm:$0xff]
        %v1231 = vld [vmem:[%s646 + $0x330] sm:$0xff]
        %v1232 = vld [vmem:[%s646 + $0x338] sm:$0xff]
        %v1233 = vld [vmem:[%s646 + $0x340] sm:$0xff]
        %v1234 = vld [vmem:[%s646 + $0x348] sm:$0xff]
        %v1235 = vld [vmem:[%s646 + $0x350] sm:$0xff]
        %v1236 = vld [vmem:[%s646 + $0x358] sm:$0xff]
        %v1237 = vld [vmem:[%s646 + $0x360] sm:$0xff]
        %v1238 = vld [vmem:[%s646 + $0x368] sm:$0xff]
        %v1239 = vld [vmem:[%s646 + $0x370] sm:$0xff]
        %v1240 = vld [vmem:[%s646 + $0x378] sm:$0xff]
        %v1241 = vld [vmem:[%s646 + $0x380] sm:$0xff]
        %v1242 = vld [vmem:[%s646 + $0x388] sm:$0xff]
        %v1243 = vld [vmem:[%s646 + $0x390] sm:$0xff]
        %v1244 = vld [vmem:[%s646 + $0x398] sm:$0xff]
        %v1245 = vld [vmem:[%s646 + $0x3a0] sm:$0xff]
        %v1246 = vld [vmem:[%s646 + $0x3a8] sm:$0xff]
        %v1247 = vld [vmem:[%s646 + $0x3b0] sm:$0xff]
        %v1248 = vld [vmem:[%s646 + $0x3b8] sm:$0xff]
        %v1249 = vld [vmem:[%s646 + $0x3c0] sm:$0xff]
        %v1250 = vld [vmem:[%s646 + $0x3c8] sm:$0xff]
        %v1251 = vld [vmem:[%s646 + $0x3d0] sm:$0xff]
        %v1252 = vld [vmem:[%s646 + $0x3d8] sm:$0xff]
        %v1253 = vld [vmem:[%s646 + $0x3e0] sm:$0xff]
        %v1254 = vld [vmem:[%s646 + $0x3e8] sm:$0xff]
        %v1255 = vld [vmem:[%s646 + $0x3f0] sm:$0xff]
        %v1256 = vld [vmem:[%s646 + $0x3f8] sm:$0xff]
        %v1257 = vld [vmem:[%s552] sm:$0xf]
        %v1258 = vld [vmem:[%s561] sm:$0xf]
        %s1259 = scalar_lea.vmem %s646, 1024
        %v1260 = vld [vmem:[%s1259] sm:$0xff]
        %v1261 = vld [vmem:[%s1259 + $0x8] sm:$0xff]
        %v1262 = vld [vmem:[%s1259 + $0x10] sm:$0xff]
        %v1263 = vld [vmem:[%s1259 + $0x18] sm:$0xff]
        %v1264 = vld [vmem:[%s1259 + $0x20] sm:$0xff]
        %v1265 = vld [vmem:[%s1259 + $0x28] sm:$0xff]
        %v1266 = vld [vmem:[%s1259 + $0x30] sm:$0xff]
        %v1267 = vld [vmem:[%s1259 + $0x38] sm:$0xff]
        %v1268 = vld [vmem:[%s1259 + $0x40] sm:$0xff]
        %v1269 = vld [vmem:[%s1259 + $0x48] sm:$0xff]
        %v1270 = vld [vmem:[%s1259 + $0x50] sm:$0xff]
        %v1271 = vld [vmem:[%s1259 + $0x58] sm:$0xff]
        %v1272 = vld [vmem:[%s1259 + $0x60] sm:$0xff]
        %v1273 = vld [vmem:[%s1259 + $0x68] sm:$0xff]
        %v1274 = vld [vmem:[%s1259 + $0x70] sm:$0xff]
        %v1275 = vld [vmem:[%s1259 + $0x78] sm:$0xff]
        %v1276 = vld [vmem:[%s1259 + $0x80] sm:$0xff]
        %v1277 = vld [vmem:[%s1259 + $0x88] sm:$0xff]
        %v1278 = vld [vmem:[%s1259 + $0x90] sm:$0xff]
        %v1279 = vld [vmem:[%s1259 + $0x98] sm:$0xff]
        %v1280 = vld [vmem:[%s1259 + $0xa0] sm:$0xff]
        %v1281 = vld [vmem:[%s1259 + $0xa8] sm:$0xff]
        %v1282 = vld [vmem:[%s1259 + $0xb0] sm:$0xff]
        %v1283 = vld [vmem:[%s1259 + $0xb8] sm:$0xff]
        %v1284 = vld [vmem:[%s1259 + $0xc0] sm:$0xff]
        %v1285 = vld [vmem:[%s1259 + $0xc8] sm:$0xff]
        %v1286 = vld [vmem:[%s1259 + $0xd0] sm:$0xff]
        %v1287 = vld [vmem:[%s1259 + $0xd8] sm:$0xff]
        %v1288 = vld [vmem:[%s1259 + $0xe0] sm:$0xff]
        %v1289 = vld [vmem:[%s1259 + $0xe8] sm:$0xff]
        %v1290 = vld [vmem:[%s1259 + $0xf0] sm:$0xff]
        %v1291 = vld [vmem:[%s1259 + $0xf8] sm:$0xff]
        %v1292 = vld [vmem:[%s1259 + $0x100] sm:$0xff]
        %v1293 = vld [vmem:[%s1259 + $0x108] sm:$0xff]
        %v1294 = vld [vmem:[%s1259 + $0x110] sm:$0xff]
        %v1295 = vld [vmem:[%s1259 + $0x118] sm:$0xff]
        %v1296 = vld [vmem:[%s1259 + $0x120] sm:$0xff]
        %v1297 = vld [vmem:[%s1259 + $0x128] sm:$0xff]
        %v1298 = vld [vmem:[%s1259 + $0x130] sm:$0xff]
        %v1299 = vld [vmem:[%s1259 + $0x138] sm:$0xff]
        %v1300 = vld [vmem:[%s1259 + $0x140] sm:$0xff]
        %v1301 = vld [vmem:[%s1259 + $0x148] sm:$0xff]
        %v1302 = vld [vmem:[%s1259 + $0x150] sm:$0xff]
        %v1303 = vld [vmem:[%s1259 + $0x158] sm:$0xff]
        %v1304 = vld [vmem:[%s1259 + $0x160] sm:$0xff]
        %v1305 = vld [vmem:[%s1259 + $0x168] sm:$0xff]
        %v1306 = vld [vmem:[%s1259 + $0x170] sm:$0xff]
        %v1307 = vld [vmem:[%s1259 + $0x178] sm:$0xff]
        %v1308 = vld [vmem:[%s1259 + $0x180] sm:$0xff]
        %v1309 = vld [vmem:[%s1259 + $0x188] sm:$0xff]
        %v1310 = vld [vmem:[%s1259 + $0x190] sm:$0xff]
        %v1311 = vld [vmem:[%s1259 + $0x198] sm:$0xff]
        %v1312 = vld [vmem:[%s1259 + $0x1a0] sm:$0xff]
        %v1313 = vld [vmem:[%s1259 + $0x1a8] sm:$0xff]
        %v1314 = vld [vmem:[%s1259 + $0x1b0] sm:$0xff]
        %v1315 = vld [vmem:[%s1259 + $0x1b8] sm:$0xff]
        %v1316 = vld [vmem:[%s1259 + $0x1c0] sm:$0xff]
        %v1317 = vld [vmem:[%s1259 + $0x1c8] sm:$0xff]
        %v1318 = vld [vmem:[%s1259 + $0x1d0] sm:$0xff]
        %v1319 = vld [vmem:[%s1259 + $0x1d8] sm:$0xff]
        %v1320 = vld [vmem:[%s1259 + $0x1e0] sm:$0xff]
        %v1321 = vld [vmem:[%s1259 + $0x1e8] sm:$0xff]
        %v1322 = vld [vmem:[%s1259 + $0x1f0] sm:$0xff]
        %v1323 = vld [vmem:[%s1259 + $0x1f8] sm:$0xff]
        %v1324 = vld [vmem:[%s1259 + $0x200] sm:$0xff]
        %v1325 = vld [vmem:[%s1259 + $0x208] sm:$0xff]
        %v1326 = vld [vmem:[%s1259 + $0x210] sm:$0xff]
        %v1327 = vld [vmem:[%s1259 + $0x218] sm:$0xff]
        %v1328 = vld [vmem:[%s1259 + $0x220] sm:$0xff]
        %v1329 = vld [vmem:[%s1259 + $0x228] sm:$0xff]
        %v1330 = vld [vmem:[%s1259 + $0x230] sm:$0xff]
        %v1331 = vld [vmem:[%s1259 + $0x238] sm:$0xff]
        %v1332 = vld [vmem:[%s1259 + $0x240] sm:$0xff]
        %v1333 = vld [vmem:[%s1259 + $0x248] sm:$0xff]
        %v1334 = vld [vmem:[%s1259 + $0x250] sm:$0xff]
        %v1335 = vld [vmem:[%s1259 + $0x258] sm:$0xff]
        %v1336 = vld [vmem:[%s1259 + $0x260] sm:$0xff]
        %v1337 = vld [vmem:[%s1259 + $0x268] sm:$0xff]
        %v1338 = vld [vmem:[%s1259 + $0x270] sm:$0xff]
        %v1339 = vld [vmem:[%s1259 + $0x278] sm:$0xff]
        %v1340 = vld [vmem:[%s1259 + $0x280] sm:$0xff]
        %v1341 = vld [vmem:[%s1259 + $0x288] sm:$0xff]
        %v1342 = vld [vmem:[%s1259 + $0x290] sm:$0xff]
        %v1343 = vld [vmem:[%s1259 + $0x298] sm:$0xff]
        %v1344 = vld [vmem:[%s1259 + $0x2a0] sm:$0xff]
        %v1345 = vld [vmem:[%s1259 + $0x2a8] sm:$0xff]
        %v1346 = vld [vmem:[%s1259 + $0x2b0] sm:$0xff]
        %v1347 = vld [vmem:[%s1259 + $0x2b8] sm:$0xff]
        %v1348 = vld [vmem:[%s1259 + $0x2c0] sm:$0xff]
        %v1349 = vld [vmem:[%s1259 + $0x2c8] sm:$0xff]
        %v1350 = vld [vmem:[%s1259 + $0x2d0] sm:$0xff]
        %v1351 = vld [vmem:[%s1259 + $0x2d8] sm:$0xff]
        %v1352 = vld [vmem:[%s1259 + $0x2e0] sm:$0xff]
        %v1353 = vld [vmem:[%s1259 + $0x2e8] sm:$0xff]
        %v1354 = vld [vmem:[%s1259 + $0x2f0] sm:$0xff]
        %v1355 = vld [vmem:[%s1259 + $0x2f8] sm:$0xff]
        %v1356 = vld [vmem:[%s1259 + $0x300] sm:$0xff]
        %v1357 = vld [vmem:[%s1259 + $0x308] sm:$0xff]
        %v1358 = vld [vmem:[%s1259 + $0x310] sm:$0xff]
        %v1359 = vld [vmem:[%s1259 + $0x318] sm:$0xff]
        %v1360 = vld [vmem:[%s1259 + $0x320] sm:$0xff]
        %v1361 = vld [vmem:[%s1259 + $0x328] sm:$0xff]
        %v1362 = vld [vmem:[%s1259 + $0x330] sm:$0xff]
        %v1363 = vld [vmem:[%s1259 + $0x338] sm:$0xff]
        %v1364 = vld [vmem:[%s1259 + $0x340] sm:$0xff]
        %v1365 = vld [vmem:[%s1259 + $0x348] sm:$0xff]
        %v1366 = vld [vmem:[%s1259 + $0x350] sm:$0xff]
        %v1367 = vld [vmem:[%s1259 + $0x358] sm:$0xff]
        %v1368 = vld [vmem:[%s1259 + $0x360] sm:$0xff]
        %v1369 = vld [vmem:[%s1259 + $0x368] sm:$0xff]
        %v1370 = vld [vmem:[%s1259 + $0x370] sm:$0xff]
        %v1371 = vld [vmem:[%s1259 + $0x378] sm:$0xff]
        %v1372 = vld [vmem:[%s1259 + $0x380] sm:$0xff]
        %v1373 = vld [vmem:[%s1259 + $0x388] sm:$0xff]
        %v1374 = vld [vmem:[%s1259 + $0x390] sm:$0xff]
        %v1375 = vld [vmem:[%s1259 + $0x398] sm:$0xff]
        %v1376 = vld [vmem:[%s1259 + $0x3a0] sm:$0xff]
        %v1377 = vld [vmem:[%s1259 + $0x3a8] sm:$0xff]
        %v1378 = vld [vmem:[%s1259 + $0x3b0] sm:$0xff]
        %v1379 = vld [vmem:[%s1259 + $0x3b8] sm:$0xff]
        %v1380 = vld [vmem:[%s1259 + $0x3c0] sm:$0xff]
        %v1381 = vld [vmem:[%s1259 + $0x3c8] sm:$0xff]
        %v1382 = vld [vmem:[%s1259 + $0x3d0] sm:$0xff]
        %v1383 = vld [vmem:[%s1259 + $0x3d8] sm:$0xff]
        %v1384 = vld [vmem:[%s1259 + $0x3e0] sm:$0xff]
        %v1385 = vld [vmem:[%s1259 + $0x3e8] sm:$0xff]
        %v1386 = vld [vmem:[%s1259 + $0x3f0] sm:$0xff]
        %v1387 = vld [vmem:[%s1259 + $0x3f8] sm:$0xff]
        %s1388 = scalar_lea.vmem %s552, 4 [#allocation10]
        %v1389 = vld [vmem:[%s1388] sm:$0xf]
        %s1390 = scalar_lea.vmem %s561, 4 [#allocation11]
        %v1391 = vld [vmem:[%s1390] sm:$0xf]
        %v1392 = vpack.c.bf16 %v670, %v670
        %v1393 = vpack.c.bf16 %v671, %v671
        %v1394 = vpack.c.bf16 %v672, %v672
        %v1395 = vpack.c.bf16 %v673, %v673
        %v1397 = vlaneseq
        %v1398 = vshrl.u32 %v1397, 7
        %v1399 = vsub.s32 0, %v1398
        %v1400 = vrot.slane %v870, %v1399
        %v1401 = vlaneseq
        %v1402 = vshrl.u32 %v1401, 7
        %v1403 = vsub.s32 1, %v1402
        %v1404 = vrot.slane %v870, %v1403
        %v1405 = vlaneseq
        %v1406 = vshrl.u32 %v1405, 7
        %v1407 = vsub.s32 2, %v1406
        %v1408 = vrot.slane %v870, %v1407
        %v1409 = vlaneseq
        %v1410 = vshrl.u32 %v1409, 7
        %v1411 = vsub.s32 3, %v1410
        %v1412 = vrot.slane %v870, %v1411
        %v1413 = vlaneseq
        %v1414 = vshrl.u32 %v1413, 7
        %v1415 = vsub.s32 4, %v1414
        %v1416 = vrot.slane %v870, %v1415
        %v1417 = vlaneseq
        %v1418 = vshrl.u32 %v1417, 7
        %v1419 = vsub.s32 5, %v1418
        %v1420 = vrot.slane %v870, %v1419
        %v1421 = vlaneseq
        %v1422 = vshrl.u32 %v1421, 7
        %v1423 = vsub.s32 6, %v1422
        %v1424 = vrot.slane %v870, %v1423
        %v1425 = vlaneseq
        %v1426 = vshrl.u32 %v1425, 7
        %v1427 = vsub.s32 7, %v1426
        %v1428 = vrot.slane %v870, %v1427
        %v1633 = vunpack.c.l.b16 %v674
        %v1634 = vunpack.c.h.b16 %v674
        %v1635 = vunpack.c.l.b16 %v675
        %v1636 = vunpack.c.h.b16 %v675
        %v1637 = vunpack.c.l.b16 %v676
        %v1638 = vunpack.c.h.b16 %v676
        %v1639 = vunpack.c.l.b16 %v677
        %v1640 = vunpack.c.h.b16 %v677
        %v1641 = vunpack.c.l.b16 %v678
        %v1642 = vunpack.c.h.b16 %v678
        %v1643 = vunpack.c.l.b16 %v679
        %v1644 = vunpack.c.h.b16 %v679
        %v1645 = vunpack.c.l.b16 %v680
        %v1646 = vunpack.c.h.b16 %v680
        %v1647 = vunpack.c.l.b16 %v681
        %v1648 = vunpack.c.h.b16 %v681
        %v1649 = vunpack.c.l.b16 %v682
        %v1650 = vunpack.c.h.b16 %v682
        %v1651 = vunpack.c.l.b16 %v683
        %v1652 = vunpack.c.h.b16 %v683
        %v1653 = vunpack.c.l.b16 %v684
        %v1654 = vunpack.c.h.b16 %v684
        %v1655 = vunpack.c.l.b16 %v685
        %v1656 = vunpack.c.h.b16 %v685
        %v1657 = vunpack.c.l.b16 %v686
        %v1658 = vunpack.c.h.b16 %v686
        %v1659 = vunpack.c.l.b16 %v687
        %v1660 = vunpack.c.h.b16 %v687
        %v1661 = vunpack.c.l.b16 %v688
        %v1662 = vunpack.c.h.b16 %v688
        %v1663 = vunpack.c.l.b16 %v689
        %v1664 = vunpack.c.h.b16 %v689
        %v1665 = vunpack.c.l.b16 %v690
        %v1666 = vunpack.c.h.b16 %v690
        %v1667 = vunpack.c.l.b16 %v691
        %v1668 = vunpack.c.h.b16 %v691
        %v1669 = vunpack.c.l.b16 %v692
        %v1670 = vunpack.c.h.b16 %v692
        %v1671 = vunpack.c.l.b16 %v693
        %v1672 = vunpack.c.h.b16 %v693
        %v1673 = vunpack.c.l.b16 %v694
        %v1674 = vunpack.c.h.b16 %v694
        %v1675 = vunpack.c.l.b16 %v695
        %v1676 = vunpack.c.h.b16 %v695
        %v1677 = vunpack.c.l.b16 %v696
        %v1678 = vunpack.c.h.b16 %v696
        %v1679 = vunpack.c.l.b16 %v697
        %v1680 = vunpack.c.h.b16 %v697
        %v1681 = vunpack.c.l.b16 %v698
        %v1682 = vunpack.c.h.b16 %v698
        %v1683 = vunpack.c.l.b16 %v699
        %v1684 = vunpack.c.h.b16 %v699
        %v1685 = vunpack.c.l.b16 %v700
        %v1686 = vunpack.c.h.b16 %v700
        %v1687 = vunpack.c.l.b16 %v701
        %v1688 = vunpack.c.h.b16 %v701
        %v1689 = vunpack.c.l.b16 %v702
        %v1690 = vunpack.c.h.b16 %v702
        %v1691 = vunpack.c.l.b16 %v703
        %v1692 = vunpack.c.h.b16 %v703
        %v1693 = vunpack.c.l.b16 %v704
        %v1694 = vunpack.c.h.b16 %v704
        %v1695 = vunpack.c.l.b16 %v705
        %v1696 = vunpack.c.h.b16 %v705
        %v1697 = vunpack.c.l.b16 %v706
        %v1698 = vunpack.c.h.b16 %v706
        %v1699 = vunpack.c.l.b16 %v707
        %v1700 = vunpack.c.h.b16 %v707
        %v1701 = vunpack.c.l.b16 %v708
        %v1702 = vunpack.c.h.b16 %v708
        %v1703 = vunpack.c.l.b16 %v709
        %v1704 = vunpack.c.h.b16 %v709
        %v1705 = vunpack.c.l.b16 %v710
        %v1706 = vunpack.c.h.b16 %v710
        %v1707 = vunpack.c.l.b16 %v711
        %v1708 = vunpack.c.h.b16 %v711
        %v1709 = vunpack.c.l.b16 %v712
        %v1710 = vunpack.c.h.b16 %v712
        %v1711 = vunpack.c.l.b16 %v713
        %v1712 = vunpack.c.h.b16 %v713
        %v1713 = vunpack.c.l.b16 %v714
        %v1714 = vunpack.c.h.b16 %v714
        %v1715 = vunpack.c.l.b16 %v715
        %v1716 = vunpack.c.h.b16 %v715
        %v1717 = vunpack.c.l.b16 %v716
        %v1718 = vunpack.c.h.b16 %v716
        %v1719 = vunpack.c.l.b16 %v717
        %v1720 = vunpack.c.h.b16 %v717
        %v1721 = vunpack.c.l.b16 %v718
        %v1722 = vunpack.c.h.b16 %v718
        %v1723 = vunpack.c.l.b16 %v719
        %v1724 = vunpack.c.h.b16 %v719
        %v1725 = vunpack.c.l.b16 %v720
        %v1726 = vunpack.c.h.b16 %v720
        %v1727 = vunpack.c.l.b16 %v721
        %v1728 = vunpack.c.h.b16 %v721
        %v1729 = vunpack.c.l.b16 %v722
        %v1730 = vunpack.c.h.b16 %v722
        %v1731 = vunpack.c.l.b16 %v723
        %v1732 = vunpack.c.h.b16 %v723
        %v1733 = vunpack.c.l.b16 %v724
        %v1734 = vunpack.c.h.b16 %v724
        %v1735 = vunpack.c.l.b16 %v725
        %v1736 = vunpack.c.h.b16 %v725
        %v1737 = vunpack.c.l.b16 %v726
        %v1738 = vunpack.c.h.b16 %v726
        %v1739 = vunpack.c.l.b16 %v727
        %v1740 = vunpack.c.h.b16 %v727
        %v1741 = vunpack.c.l.b16 %v728
        %v1742 = vunpack.c.h.b16 %v728
        %v1743 = vunpack.c.l.b16 %v729
        %v1744 = vunpack.c.h.b16 %v729
        %v1745 = vunpack.c.l.b16 %v730
        %v1746 = vunpack.c.h.b16 %v730
        %v1747 = vunpack.c.l.b16 %v731
        %v1748 = vunpack.c.h.b16 %v731
        %v1749 = vunpack.c.l.b16 %v732
        %v1750 = vunpack.c.h.b16 %v732
        %v1751 = vunpack.c.l.b16 %v733
        %v1752 = vunpack.c.h.b16 %v733
        %v1753 = vunpack.c.l.b16 %v734
        %v1754 = vunpack.c.h.b16 %v734
        %v1755 = vunpack.c.l.b16 %v735
        %v1756 = vunpack.c.h.b16 %v735
        %v1757 = vunpack.c.l.b16 %v736
        %v1758 = vunpack.c.h.b16 %v736
        %v1759 = vunpack.c.l.b16 %v737
        %v1760 = vunpack.c.h.b16 %v737
        %v1761 = vunpack.c.l.b16 %v738
        %v1762 = vunpack.c.h.b16 %v738
        %v1763 = vunpack.c.l.b16 %v739
        %v1764 = vunpack.c.h.b16 %v739
        %v1765 = vunpack.c.l.b16 %v740
        %v1766 = vunpack.c.h.b16 %v740
        %v1767 = vunpack.c.l.b16 %v741
        %v1768 = vunpack.c.h.b16 %v741
        %v1769 = vunpack.c.l.b16 %v742
        %v1770 = vunpack.c.h.b16 %v742
        %v1771 = vunpack.c.l.b16 %v743
        %v1772 = vunpack.c.h.b16 %v743
        %v1773 = vunpack.c.l.b16 %v744
        %v1774 = vunpack.c.h.b16 %v744
        %v1775 = vunpack.c.l.b16 %v745
        %v1776 = vunpack.c.h.b16 %v745
        %v1777 = vunpack.c.l.b16 %v746
        %v1778 = vunpack.c.h.b16 %v746
        %v1779 = vunpack.c.l.b16 %v747
        %v1780 = vunpack.c.h.b16 %v747
        %v1781 = vunpack.c.l.b16 %v748
        %v1782 = vunpack.c.h.b16 %v748
        %v1783 = vunpack.c.l.b16 %v749
        %v1784 = vunpack.c.h.b16 %v749
        %v1785 = vunpack.c.l.b16 %v750
        %v1786 = vunpack.c.h.b16 %v750
        %v1787 = vunpack.c.l.b16 %v751
        %v1788 = vunpack.c.h.b16 %v751
        %v1789 = vunpack.c.l.b16 %v752
        %v1790 = vunpack.c.h.b16 %v752
        %v1791 = vunpack.c.l.b16 %v753
        %v1792 = vunpack.c.h.b16 %v753
        %v1793 = vunpack.c.l.b16 %v754
        %v1794 = vunpack.c.h.b16 %v754
        %v1795 = vunpack.c.l.b16 %v755
        %v1796 = vunpack.c.h.b16 %v755
        %v1797 = vunpack.c.l.b16 %v756
        %v1798 = vunpack.c.h.b16 %v756
        %v1799 = vunpack.c.l.b16 %v757
        %v1800 = vunpack.c.h.b16 %v757
        %v1801 = vunpack.c.l.b16 %v758
        %v1802 = vunpack.c.h.b16 %v758
        %v1803 = vunpack.c.l.b16 %v759
        %v1804 = vunpack.c.h.b16 %v759
        %v1805 = vunpack.c.l.b16 %v760
        %v1806 = vunpack.c.h.b16 %v760
        %v1807 = vunpack.c.l.b16 %v761
        %v1808 = vunpack.c.h.b16 %v761
        %v1809 = vunpack.c.l.b16 %v762
        %v1810 = vunpack.c.h.b16 %v762
        %v1811 = vunpack.c.l.b16 %v763
        %v1812 = vunpack.c.h.b16 %v763
        %v1813 = vunpack.c.l.b16 %v764
        %v1814 = vunpack.c.h.b16 %v764
        %v1815 = vunpack.c.l.b16 %v765
        %v1816 = vunpack.c.h.b16 %v765
        %v1817 = vunpack.c.l.b16 %v766
        %v1818 = vunpack.c.h.b16 %v766
        %v1819 = vunpack.c.l.b16 %v767
        %v1820 = vunpack.c.h.b16 %v767
        %v1821 = vunpack.c.l.b16 %v768
        %v1822 = vunpack.c.h.b16 %v768
        %v1823 = vunpack.c.l.b16 %v769
        %v1824 = vunpack.c.h.b16 %v769
        %v1825 = vunpack.c.l.b16 %v770
        %v1826 = vunpack.c.h.b16 %v770
        %v1827 = vunpack.c.l.b16 %v771
        %v1828 = vunpack.c.h.b16 %v771
        %v1829 = vunpack.c.l.b16 %v772
        %v1830 = vunpack.c.h.b16 %v772
        %v1831 = vunpack.c.l.b16 %v773
        %v1832 = vunpack.c.h.b16 %v773
        %v1833 = vunpack.c.l.b16 %v774
        %v1834 = vunpack.c.h.b16 %v774
        %v1835 = vunpack.c.l.b16 %v775
        %v1836 = vunpack.c.h.b16 %v775
        %v1837 = vunpack.c.l.b16 %v776
        %v1838 = vunpack.c.h.b16 %v776
        %v1839 = vunpack.c.l.b16 %v777
        %v1840 = vunpack.c.h.b16 %v777
        %v1841 = vunpack.c.l.b16 %v778
        %v1842 = vunpack.c.h.b16 %v778
        %v1843 = vunpack.c.l.b16 %v779
        %v1844 = vunpack.c.h.b16 %v779
        %v1845 = vunpack.c.l.b16 %v780
        %v1846 = vunpack.c.h.b16 %v780
        %v1847 = vunpack.c.l.b16 %v781
        %v1848 = vunpack.c.h.b16 %v781
        %v1849 = vunpack.c.l.b16 %v782
        %v1850 = vunpack.c.h.b16 %v782
        %v1851 = vunpack.c.l.b16 %v783
        %v1852 = vunpack.c.h.b16 %v783
        %v1853 = vunpack.c.l.b16 %v784
        %v1854 = vunpack.c.h.b16 %v784
        %v1855 = vunpack.c.l.b16 %v785
        %v1856 = vunpack.c.h.b16 %v785
        %v1857 = vunpack.c.l.b16 %v786
        %v1858 = vunpack.c.h.b16 %v786
        %v1859 = vunpack.c.l.b16 %v787
        %v1860 = vunpack.c.h.b16 %v787
        %v1861 = vunpack.c.l.b16 %v788
        %v1862 = vunpack.c.h.b16 %v788
        %v1863 = vunpack.c.l.b16 %v789
        %v1864 = vunpack.c.h.b16 %v789
        %v1865 = vunpack.c.l.b16 %v790
        %v1866 = vunpack.c.h.b16 %v790
        %v1867 = vunpack.c.l.b16 %v791
        %v1868 = vunpack.c.h.b16 %v791
        %v1869 = vunpack.c.l.b16 %v792
        %v1870 = vunpack.c.h.b16 %v792
        %v1871 = vunpack.c.l.b16 %v793
        %v1872 = vunpack.c.h.b16 %v793
        %v1873 = vunpack.c.l.b16 %v794
        %v1874 = vunpack.c.h.b16 %v794
        %v1875 = vunpack.c.l.b16 %v795
        %v1876 = vunpack.c.h.b16 %v795
        %v1877 = vunpack.c.l.b16 %v796
        %v1878 = vunpack.c.h.b16 %v796
        %v1879 = vunpack.c.l.b16 %v797
        %v1880 = vunpack.c.h.b16 %v797
        %v1881 = vunpack.c.l.b16 %v798
        %v1882 = vunpack.c.h.b16 %v798
        %v1883 = vunpack.c.l.b16 %v799
        %v1884 = vunpack.c.h.b16 %v799
        %v1885 = vunpack.c.l.b16 %v800
        %v1886 = vunpack.c.h.b16 %v800
        %v1887 = vunpack.c.l.b16 %v801
        %v1888 = vunpack.c.h.b16 %v801
        %v1889 = vunpack.c.l.b16 %v802
        %v1890 = vunpack.c.h.b16 %v802
        %v1891 = vunpack.c.l.b16 %v803
        %v1892 = vunpack.c.h.b16 %v803
        %v1893 = vunpack.c.l.b16 %v804
        %v1894 = vunpack.c.h.b16 %v804
        %v1895 = vunpack.c.l.b16 %v805
        %v1896 = vunpack.c.h.b16 %v805
        %v1897 = vunpack.c.l.b16 %v806
        %v1898 = vunpack.c.h.b16 %v806
        %v1899 = vunpack.c.l.b16 %v807
        %v1900 = vunpack.c.h.b16 %v807
        %v1901 = vunpack.c.l.b16 %v808
        %v1902 = vunpack.c.h.b16 %v808
        %v1903 = vunpack.c.l.b16 %v809
        %v1904 = vunpack.c.h.b16 %v809
        %v1905 = vunpack.c.l.b16 %v810
        %v1906 = vunpack.c.h.b16 %v810
        %v1907 = vunpack.c.l.b16 %v811
        %v1908 = vunpack.c.h.b16 %v811
        %v1909 = vunpack.c.l.b16 %v812
        %v1910 = vunpack.c.h.b16 %v812
        %v1911 = vunpack.c.l.b16 %v813
        %v1912 = vunpack.c.h.b16 %v813
        %v1913 = vunpack.c.l.b16 %v814
        %v1914 = vunpack.c.h.b16 %v814
        %v1915 = vunpack.c.l.b16 %v815
        %v1916 = vunpack.c.h.b16 %v815
        %v1917 = vunpack.c.l.b16 %v816
        %v1918 = vunpack.c.h.b16 %v816
        %v1919 = vunpack.c.l.b16 %v817
        %v1920 = vunpack.c.h.b16 %v817
        %v1921 = vunpack.c.l.b16 %v818
        %v1922 = vunpack.c.h.b16 %v818
        %v1923 = vunpack.c.l.b16 %v819
        %v1924 = vunpack.c.h.b16 %v819
        %v1925 = vunpack.c.l.b16 %v820
        %v1926 = vunpack.c.h.b16 %v820
        %v1927 = vunpack.c.l.b16 %v821
        %v1928 = vunpack.c.h.b16 %v821
        %v1929 = vunpack.c.l.b16 %v822
        %v1930 = vunpack.c.h.b16 %v822
        %v1931 = vunpack.c.l.b16 %v823
        %v1932 = vunpack.c.h.b16 %v823
        %v1933 = vunpack.c.l.b16 %v824
        %v1934 = vunpack.c.h.b16 %v824
        %v1935 = vunpack.c.l.b16 %v825
        %v1936 = vunpack.c.h.b16 %v825
        %v1937 = vunpack.c.l.b16 %v826
        %v1938 = vunpack.c.h.b16 %v826
        %v1939 = vunpack.c.l.b16 %v827
        %v1940 = vunpack.c.h.b16 %v827
        %v1941 = vunpack.c.l.b16 %v828
        %v1942 = vunpack.c.h.b16 %v828
        %v1943 = vunpack.c.l.b16 %v829
        %v1944 = vunpack.c.h.b16 %v829
        %v1945 = vunpack.c.l.b16 %v830
        %v1946 = vunpack.c.h.b16 %v830
        %v1947 = vunpack.c.l.b16 %v831
        %v1948 = vunpack.c.h.b16 %v831
        %v1949 = vunpack.c.l.b16 %v832
        %v1950 = vunpack.c.h.b16 %v832
        %v1951 = vunpack.c.l.b16 %v833
        %v1952 = vunpack.c.h.b16 %v833
        %v1953 = vunpack.c.l.b16 %v834
        %v1954 = vunpack.c.h.b16 %v834
        %v1955 = vunpack.c.l.b16 %v835
        %v1956 = vunpack.c.h.b16 %v835
        %v1957 = vunpack.c.l.b16 %v836
        %v1958 = vunpack.c.h.b16 %v836
        %v1959 = vunpack.c.l.b16 %v837
        %v1960 = vunpack.c.h.b16 %v837
        %v1961 = vunpack.c.l.b16 %v838
        %v1962 = vunpack.c.h.b16 %v838
        %v1963 = vunpack.c.l.b16 %v839
        %v1964 = vunpack.c.h.b16 %v839
        %v1965 = vunpack.c.l.b16 %v840
        %v1966 = vunpack.c.h.b16 %v840
        %v1967 = vunpack.c.l.b16 %v841
        %v1968 = vunpack.c.h.b16 %v841
        %v1969 = vunpack.c.l.b16 %v842
        %v1970 = vunpack.c.h.b16 %v842
        %v1971 = vunpack.c.l.b16 %v843
        %v1972 = vunpack.c.h.b16 %v843
        %v1973 = vunpack.c.l.b16 %v844
        %v1974 = vunpack.c.h.b16 %v844
        %v1975 = vunpack.c.l.b16 %v845
        %v1976 = vunpack.c.h.b16 %v845
        %v1977 = vunpack.c.l.b16 %v846
        %v1978 = vunpack.c.h.b16 %v846
        %v1979 = vunpack.c.l.b16 %v847
        %v1980 = vunpack.c.h.b16 %v847
        %v1981 = vunpack.c.l.b16 %v848
        %v1982 = vunpack.c.h.b16 %v848
        %v1983 = vunpack.c.l.b16 %v849
        %v1984 = vunpack.c.h.b16 %v849
        %v1985 = vunpack.c.l.b16 %v850
        %v1986 = vunpack.c.h.b16 %v850
        %v1987 = vunpack.c.l.b16 %v851
        %v1988 = vunpack.c.h.b16 %v851
        %v1989 = vunpack.c.l.b16 %v852
        %v1990 = vunpack.c.h.b16 %v852
        %v1991 = vunpack.c.l.b16 %v853
        %v1992 = vunpack.c.h.b16 %v853
        %v1993 = vunpack.c.l.b16 %v854
        %v1994 = vunpack.c.h.b16 %v854
        %v1995 = vunpack.c.l.b16 %v855
        %v1996 = vunpack.c.h.b16 %v855
        %v1997 = vunpack.c.l.b16 %v856
        %v1998 = vunpack.c.h.b16 %v856
        %v1999 = vunpack.c.l.b16 %v857
        %v2000 = vunpack.c.h.b16 %v857
        %v2001 = vunpack.c.l.b16 %v858
        %v2002 = vunpack.c.h.b16 %v858
        %v2003 = vunpack.c.l.b16 %v859
        %v2004 = vunpack.c.h.b16 %v859
        %v2005 = vunpack.c.l.b16 %v860
        %v2006 = vunpack.c.h.b16 %v860
        %v2007 = vunpack.c.l.b16 %v861
        %v2008 = vunpack.c.h.b16 %v861
        %v2009 = vunpack.c.l.b16 %v862
        %v2010 = vunpack.c.h.b16 %v862
        %v2011 = vunpack.c.l.b16 %v863
        %v2012 = vunpack.c.h.b16 %v863
        %v2013 = vunpack.c.l.b16 %v864
        %v2014 = vunpack.c.h.b16 %v864
        %v2015 = vunpack.c.l.b16 %v865
        %v2016 = vunpack.c.h.b16 %v865
        %v2017 = vunpack.c.l.b16 %v866
        %v2018 = vunpack.c.h.b16 %v866
        %v2019 = vunpack.c.l.b16 %v867
        %v2020 = vunpack.c.h.b16 %v867
        %v2021 = vunpack.c.l.b16 %v868
        %v2022 = vunpack.c.h.b16 %v868
        %v2023 = vunpack.c.l.b16 %v869
        %v2024 = vunpack.c.h.b16 %v869
        %v2025 = vpack.c.b16 %v1641, %v1633
        %v2026 = vpack.c.b16 %v1642, %v1634
        %v2027 = vpack.c.b16 %v1643, %v1635
        %v2028 = vpack.c.b16 %v1644, %v1636
        %v2029 = vpack.c.b16 %v1645, %v1637
        %v2030 = vpack.c.b16 %v1646, %v1638
        %v2031 = vpack.c.b16 %v1647, %v1639
        %v2032 = vpack.c.b16 %v1648, %v1640
        %v2033 = vpack.c.b16 %v1657, %v1649
        %v2034 = vpack.c.b16 %v1658, %v1650
        %v2035 = vpack.c.b16 %v1659, %v1651
        %v2036 = vpack.c.b16 %v1660, %v1652
        %v2037 = vpack.c.b16 %v1661, %v1653
        %v2038 = vpack.c.b16 %v1662, %v1654
        %v2039 = vpack.c.b16 %v1663, %v1655
        %v2040 = vpack.c.b16 %v1664, %v1656
        %v2041 = vpack.c.b16 %v1673, %v1665
        %v2042 = vpack.c.b16 %v1674, %v1666
        %v2043 = vpack.c.b16 %v1675, %v1667
        %v2044 = vpack.c.b16 %v1676, %v1668
        %v2045 = vpack.c.b16 %v1677, %v1669
        %v2046 = vpack.c.b16 %v1678, %v1670
        %v2047 = vpack.c.b16 %v1679, %v1671
        %v2048 = vpack.c.b16 %v1680, %v1672
        %v2049 = vpack.c.b16 %v1689, %v1681
        %v2050 = vpack.c.b16 %v1690, %v1682
        %v2051 = vpack.c.b16 %v1691, %v1683
        %v2052 = vpack.c.b16 %v1692, %v1684
        %v2053 = vpack.c.b16 %v1693, %v1685
        %v2054 = vpack.c.b16 %v1694, %v1686
        %v2055 = vpack.c.b16 %v1695, %v1687
        %v2056 = vpack.c.b16 %v1696, %v1688
        %v2057 = vpack.c.b16 %v1705, %v1697
        %v2058 = vpack.c.b16 %v1706, %v1698
        %v2059 = vpack.c.b16 %v1707, %v1699
        %v2060 = vpack.c.b16 %v1708, %v1700
        %v2061 = vpack.c.b16 %v1709, %v1701
        %v2062 = vpack.c.b16 %v1710, %v1702
        %v2063 = vpack.c.b16 %v1711, %v1703
        %v2064 = vpack.c.b16 %v1712, %v1704
        %v2065 = vpack.c.b16 %v1721, %v1713
        %v2066 = vpack.c.b16 %v1722, %v1714
        %v2067 = vpack.c.b16 %v1723, %v1715
        %v2068 = vpack.c.b16 %v1724, %v1716
        %v2069 = vpack.c.b16 %v1725, %v1717
        %v2070 = vpack.c.b16 %v1726, %v1718
        %v2071 = vpack.c.b16 %v1727, %v1719
        %v2072 = vpack.c.b16 %v1728, %v1720
        %v2073 = vpack.c.b16 %v1737, %v1729
        %v2074 = vpack.c.b16 %v1738, %v1730
        %v2075 = vpack.c.b16 %v1739, %v1731
        %v2076 = vpack.c.b16 %v1740, %v1732
        %v2077 = vpack.c.b16 %v1741, %v1733
        %v2078 = vpack.c.b16 %v1742, %v1734
        %v2079 = vpack.c.b16 %v1743, %v1735
        %v2080 = vpack.c.b16 %v1744, %v1736
        %v2081 = vpack.c.b16 %v1753, %v1745
        %v2082 = vpack.c.b16 %v1754, %v1746
        %v2083 = vpack.c.b16 %v1755, %v1747
        %v2084 = vpack.c.b16 %v1756, %v1748
        %v2085 = vpack.c.b16 %v1757, %v1749
        %v2086 = vpack.c.b16 %v1758, %v1750
        %v2087 = vpack.c.b16 %v1759, %v1751
        %v2088 = vpack.c.b16 %v1760, %v1752
        %v2089 = vpack.c.b16 %v1769, %v1761
        %v2090 = vpack.c.b16 %v1770, %v1762
        %v2091 = vpack.c.b16 %v1771, %v1763
        %v2092 = vpack.c.b16 %v1772, %v1764
        %v2093 = vpack.c.b16 %v1773, %v1765
        %v2094 = vpack.c.b16 %v1774, %v1766
        %v2095 = vpack.c.b16 %v1775, %v1767
        %v2096 = vpack.c.b16 %v1776, %v1768
        %v2097 = vpack.c.b16 %v1785, %v1777
        %v2098 = vpack.c.b16 %v1786, %v1778
        %v2099 = vpack.c.b16 %v1787, %v1779
        %v2100 = vpack.c.b16 %v1788, %v1780
        %v2101 = vpack.c.b16 %v1789, %v1781
        %v2102 = vpack.c.b16 %v1790, %v1782
        %v2103 = vpack.c.b16 %v1791, %v1783
        %v2104 = vpack.c.b16 %v1792, %v1784
        %v2105 = vpack.c.b16 %v1801, %v1793
        %v2106 = vpack.c.b16 %v1802, %v1794
        %v2107 = vpack.c.b16 %v1803, %v1795
        %v2108 = vpack.c.b16 %v1804, %v1796
        %v2109 = vpack.c.b16 %v1805, %v1797
        %v2110 = vpack.c.b16 %v1806, %v1798
        %v2111 = vpack.c.b16 %v1807, %v1799
        %v2112 = vpack.c.b16 %v1808, %v1800
        %v2113 = vpack.c.b16 %v1817, %v1809
        %v2114 = vpack.c.b16 %v1818, %v1810
        %v2115 = vpack.c.b16 %v1819, %v1811
        %v2116 = vpack.c.b16 %v1820, %v1812
        %v2117 = vpack.c.b16 %v1821, %v1813
        %v2118 = vpack.c.b16 %v1822, %v1814
        %v2119 = vpack.c.b16 %v1823, %v1815
        %v2120 = vpack.c.b16 %v1824, %v1816
        %v2121 = vpack.c.b16 %v1833, %v1825
        %v2122 = vpack.c.b16 %v1834, %v1826
        %v2123 = vpack.c.b16 %v1835, %v1827
        %v2124 = vpack.c.b16 %v1836, %v1828
        %v2125 = vpack.c.b16 %v1837, %v1829
        %v2126 = vpack.c.b16 %v1838, %v1830
        %v2127 = vpack.c.b16 %v1839, %v1831
        %v2128 = vpack.c.b16 %v1840, %v1832
        %v2129 = vpack.c.b16 %v1849, %v1841
        %v2130 = vpack.c.b16 %v1850, %v1842
        %v2131 = vpack.c.b16 %v1851, %v1843
        %v2132 = vpack.c.b16 %v1852, %v1844
        %v2133 = vpack.c.b16 %v1853, %v1845
        %v2134 = vpack.c.b16 %v1854, %v1846
        %v2135 = vpack.c.b16 %v1855, %v1847
        %v2136 = vpack.c.b16 %v1856, %v1848
        %v2137 = vpack.c.b16 %v1865, %v1857
        %v2138 = vpack.c.b16 %v1866, %v1858
        %v2139 = vpack.c.b16 %v1867, %v1859
        %v2140 = vpack.c.b16 %v1868, %v1860
        %v2141 = vpack.c.b16 %v1869, %v1861
        %v2142 = vpack.c.b16 %v1870, %v1862
        %v2143 = vpack.c.b16 %v1871, %v1863
        %v2144 = vpack.c.b16 %v1872, %v1864
        %v2145 = vpack.c.b16 %v1881, %v1873
        %v2146 = vpack.c.b16 %v1882, %v1874
        %v2147 = vpack.c.b16 %v1883, %v1875
        %v2148 = vpack.c.b16 %v1884, %v1876
        %v2149 = vpack.c.b16 %v1885, %v1877
        %v2150 = vpack.c.b16 %v1886, %v1878
        %v2151 = vpack.c.b16 %v1887, %v1879
        %v2152 = vpack.c.b16 %v1888, %v1880
        %v2153 = vpack.c.b16 %v1897, %v1889
        %v2154 = vpack.c.b16 %v1898, %v1890
        %v2155 = vpack.c.b16 %v1899, %v1891
        %v2156 = vpack.c.b16 %v1900, %v1892
        %v2157 = vpack.c.b16 %v1901, %v1893
        %v2158 = vpack.c.b16 %v1902, %v1894
        %v2159 = vpack.c.b16 %v1903, %v1895
        %v2160 = vpack.c.b16 %v1904, %v1896
        %v2161 = vpack.c.b16 %v1913, %v1905
        %v2162 = vpack.c.b16 %v1914, %v1906
        %v2163 = vpack.c.b16 %v1915, %v1907
        %v2164 = vpack.c.b16 %v1916, %v1908
        %v2165 = vpack.c.b16 %v1917, %v1909
        %v2166 = vpack.c.b16 %v1918, %v1910
        %v2167 = vpack.c.b16 %v1919, %v1911
        %v2168 = vpack.c.b16 %v1920, %v1912
        %v2169 = vpack.c.b16 %v1929, %v1921
        %v2170 = vpack.c.b16 %v1930, %v1922
        %v2171 = vpack.c.b16 %v1931, %v1923
        %v2172 = vpack.c.b16 %v1932, %v1924
        %v2173 = vpack.c.b16 %v1933, %v1925
        %v2174 = vpack.c.b16 %v1934, %v1926
        %v2175 = vpack.c.b16 %v1935, %v1927
        %v2176 = vpack.c.b16 %v1936, %v1928
        %v2177 = vpack.c.b16 %v1945, %v1937
        %v2178 = vpack.c.b16 %v1946, %v1938
        %v2179 = vpack.c.b16 %v1947, %v1939
        %v2180 = vpack.c.b16 %v1948, %v1940
        %v2181 = vpack.c.b16 %v1949, %v1941
        %v2182 = vpack.c.b16 %v1950, %v1942
        %v2183 = vpack.c.b16 %v1951, %v1943
        %v2184 = vpack.c.b16 %v1952, %v1944
        %v2185 = vpack.c.b16 %v1961, %v1953
        %v2186 = vpack.c.b16 %v1962, %v1954
        %v2187 = vpack.c.b16 %v1963, %v1955
        %v2188 = vpack.c.b16 %v1964, %v1956
        %v2189 = vpack.c.b16 %v1965, %v1957
        %v2190 = vpack.c.b16 %v1966, %v1958
        %v2191 = vpack.c.b16 %v1967, %v1959
        %v2192 = vpack.c.b16 %v1968, %v1960
        %v2193 = vpack.c.b16 %v1977, %v1969
        %v2194 = vpack.c.b16 %v1978, %v1970
        %v2195 = vpack.c.b16 %v1979, %v1971
        %v2196 = vpack.c.b16 %v1980, %v1972
        %v2197 = vpack.c.b16 %v1981, %v1973
        %v2198 = vpack.c.b16 %v1982, %v1974
        %v2199 = vpack.c.b16 %v1983, %v1975
        %v2200 = vpack.c.b16 %v1984, %v1976
        %v2201 = vpack.c.b16 %v1993, %v1985
        %v2202 = vpack.c.b16 %v1994, %v1986
        %v2203 = vpack.c.b16 %v1995, %v1987
        %v2204 = vpack.c.b16 %v1996, %v1988
        %v2205 = vpack.c.b16 %v1997, %v1989
        %v2206 = vpack.c.b16 %v1998, %v1990
        %v2207 = vpack.c.b16 %v1999, %v1991
        %v2208 = vpack.c.b16 %v2000, %v1992
        %v2209 = vpack.c.b16 %v2009, %v2001
        %v2210 = vpack.c.b16 %v2010, %v2002
        %v2211 = vpack.c.b16 %v2011, %v2003
        %v2212 = vpack.c.b16 %v2012, %v2004
        %v2213 = vpack.c.b16 %v2013, %v2005
        %v2214 = vpack.c.b16 %v2014, %v2006
        %v2215 = vpack.c.b16 %v2015, %v2007
        %v2216 = vpack.c.b16 %v2016, %v2008
        %v2217 = vpack.c.b16 %v2017, %v2017
        %v2218 = vpack.c.b16 %v2018, %v2018
        %v2219 = vpack.c.b16 %v2019, %v2019
        %v2220 = vpack.c.b16 %v2020, %v2020
        %v2221 = vpack.c.b16 %v2021, %v2021
        %v2222 = vpack.c.b16 %v2022, %v2022
        %v2223 = vpack.c.b16 %v2023, %v2023
        %v2224 = vpack.c.b16 %v2024, %v2024
        %vm2417 = vcmask 64512
        %v2419 = vsel %vm2417, %v1395, 0
        %vm2421 = vcmask 1043456
        %v2423 = vsel %vm2421, %v2217, 0
        %v2426 = vsel %vm2421, %v2218, 0
        %v2429 = vsel %vm2421, %v2219, 0
        %v2432 = vsel %vm2421, %v2220, 0
        %v2435 = vsel %vm2421, %v2221, 0
        %v2438 = vsel %vm2421, %v2222, 0
        %v2441 = vsel %vm2421, %v2223, 0
        %v2444 = vsel %vm2421, %v2224, 0
        %2446 = vmatprep.subr.bf16.mxu0 %v2026
        %2447 = vmatpush1.bf16.msra.mxu0 %v2025
        %2448 = vmatprep.subr.bf16.mxu0 %v2034
        %2449 = vmatpush1.bf16.msra.mxu0 %v2033
        %2450 = vmatprep.subr.bf16.mxu0 %v2042
        %2451 = vmatpush1.bf16.msra.mxu0 %v2041
        %2452 = vmatprep.subr.bf16.mxu0 %v2050
        %2453 = vmatpush1.bf16.msra.mxu0 %v2049
        %2454 = vmatprep.subr.bf16.mxu0 %v2058
        %2455 = vmatpush1.bf16.msra.mxu0 %v2057
        %2456 = vmatprep.subr.bf16.mxu0 %v2066
        %2457 = vmatpush1.bf16.msra.mxu0 %v2065
        %2458 = vmatprep.subr.bf16.mxu0 %v2074
        %2459 = vmatpush1.bf16.msra.mxu0 %v2073
        %2460 = vmatprep.subr.bf16.mxu0 %v2082
        %2461 = vmatpush1.bf16.msra.mxu0 %v2081
        %2462 = vmatprep.subr.bf16.mxu0 %v2090
        %2463 = vmatpush1.bf16.msra.mxu0 %v2089
        %2464 = vmatprep.subr.bf16.mxu0 %v2098
        %2465 = vmatpush1.bf16.msra.mxu0 %v2097
        %2466 = vmatprep.subr.bf16.mxu0 %v2106
        %2467 = vmatpush1.bf16.msra.mxu0 %v2105
        %2468 = vmatprep.subr.bf16.mxu0 %v2114
        %2469 = vmatpush1.bf16.msra.mxu0 %v2113
        %2470 = vmatprep.subr.bf16.mxu0 %v2122
        %2471 = vmatpush1.bf16.msra.mxu0 %v2121
        %2472 = vmatprep.subr.bf16.mxu0 %v2130
        %2473 = vmatpush1.bf16.msra.mxu0 %v2129
        %2474 = vmatprep.subr.bf16.mxu0 %v2138
        %2475 = vmatpush1.bf16.msra.mxu0 %v2137
        %2476 = vmatprep.subr.bf16.mxu0 %v2146
        %2477 = vmatpush1.bf16.msra.mxu0 %v2145
        %2478 = vmatprep.mubr.bf16.mxu0 %v1393
        %2479 = vmatmul.mubr.bf16.gmra.mrb[0].mxu0 %v1392
        %v2480 = vpop.f32.mrb[0].mxu0
        %v2481 = vadd.f32 %v1400, %v2480
        %v2482 = vpop.f32.mrb[0].mxu0
        %v2483 = vadd.f32 %v1404, %v2482
        %v2484 = vpop.f32.mrb[0].mxu0
        %v2485 = vpop.f32.mrb[0].mxu0
        %2486 = vdwg.mxu0
        %2487 = vmatprep.subr.bf16.mxu0 %v2154
        %2488 = vmatpush1.bf16.msra.mxu0 %v2153
        %2489 = vmatprep.subr.bf16.mxu0 %v2162
        %2490 = vmatpush1.bf16.msra.mxu0 %v2161
        %2491 = vmatprep.subr.bf16.mxu0 %v2170
        %2492 = vmatpush1.bf16.msra.mxu0 %v2169
        %2493 = vmatprep.subr.bf16.mxu0 %v2178
        %2494 = vmatpush1.bf16.msra.mxu0 %v2177
        %2495 = vmatprep.subr.bf16.mxu0 %v2186
        %2496 = vmatpush1.bf16.msra.mxu0 %v2185
        %2497 = vmatprep.subr.bf16.mxu0 %v2194
        %2498 = vmatpush1.bf16.msra.mxu0 %v2193
        %2499 = vmatprep.subr.bf16.mxu0 %v2202
        %2500 = vmatpush1.bf16.msra.mxu0 %v2201
        %2501 = vmatprep.subr.bf16.mxu0 %v2210
        %2502 = vmatpush1.bf16.msra.mxu0 %v2209
        %2503 = vmatprep.subr.bf16.mxu0 %v2426
        %2504 = vmatpush1.bf16.msra.mxu0 %v2423
        %2505 = vmatprep.subr.bf16.mxu0 0
        %2506 = vmatpush1.bf16.msra.mxu0 0
        %2507 = vmatprep.subr.bf16.mxu0 0
        %2508 = vmatpush1.bf16.msra.mxu0 0
        %2509 = vmatprep.subr.bf16.mxu0 0
        %2510 = vmatpush1.bf16.msra.mxu0 0
        %2511 = vmatprep.subr.bf16.mxu0 0
        %2512 = vmatpush1.bf16.msra.mxu0 0
        %2513 = vmatprep.subr.bf16.mxu0 0
        %2514 = vmatpush1.bf16.msra.mxu0 0
        %2515 = vmatprep.subr.bf16.mxu0 0
        %2516 = vmatpush1.bf16.msra.mxu0 0
        %2517 = vmatprep.subr.bf16.mxu0 0
        %2518 = vmatpush1.bf16.msra.mxu0 0
        %2519 = vmatprep.mubr.bf16.mxu0 %v2419
        %2520 = vmatmul.mubr.bf16.gmra.mrb[0].mxu0 %v1394
        %v2521 = vpop.f32.mrb[0].mxu0
        %v2522 = vadd.f32 %v2481, %v2521
        %v2523 = vpop.f32.mrb[0].mxu0
        %v2524 = vadd.f32 %v2483, %v2523
        %v2525 = vpop.f32.mrb[0].mxu0
        %v2526 = vpop.f32.mrb[0].mxu0
        %2527 = vdwg.mxu0
        %2528 = vmatprep.subr.bf16.mxu0 %v2028
        %2529 = vmatpush1.bf16.msra.mxu0 %v2027
        %2530 = vmatprep.subr.bf16.mxu0 %v2036
        %2531 = vmatpush1.bf16.msra.mxu0 %v2035
        %2532 = vmatprep.subr.bf16.mxu0 %v2044
        %2533 = vmatpush1.bf16.msra.mxu0 %v2043
        %2534 = vmatprep.subr.bf16.mxu0 %v2052
        %2535 = vmatpush1.bf16.msra.mxu0 %v2051
        %2536 = vmatprep.subr.bf16.mxu0 %v2060
        %2537 = vmatpush1.bf16.msra.mxu0 %v2059
        %2538 = vmatprep.subr.bf16.mxu0 %v2068
        %2539 = vmatpush1.bf16.msra.mxu0 %v2067
        %2540 = vmatprep.subr.bf16.mxu0 %v2076
        %2541 = vmatpush1.bf16.msra.mxu0 %v2075
        %2542 = vmatprep.subr.bf16.mxu0 %v2084
        %2543 = vmatpush1.bf16.msra.mxu0 %v2083
        %2544 = vmatprep.subr.bf16.mxu0 %v2092
        %2545 = vmatpush1.bf16.msra.mxu0 %v2091
        %2546 = vmatprep.subr.bf16.mxu0 %v2100
        %2547 = vmatpush1.bf16.msra.mxu0 %v2099
        %2548 = vmatprep.subr.bf16.mxu0 %v2108
        %2549 = vmatpush1.bf16.msra.mxu0 %v2107
        %2550 = vmatprep.subr.bf16.mxu0 %v2116
        %2551 = vmatpush1.bf16.msra.mxu0 %v2115
        %2552 = vmatprep.subr.bf16.mxu0 %v2124
        %2553 = vmatpush1.bf16.msra.mxu0 %v2123
        %2554 = vmatprep.subr.bf16.mxu0 %v2132
        %2555 = vmatpush1.bf16.msra.mxu0 %v2131
        %2556 = vmatprep.subr.bf16.mxu0 %v2140
        %2557 = vmatpush1.bf16.msra.mxu0 %v2139
        %2558 = vmatprep.subr.bf16.mxu0 %v2148
        %2559 = vmatpush1.bf16.msra.mxu0 %v2147
        %2560 = vmatprep.mubr.bf16.mxu0 %v1393
        %2561 = vmatmul.mubr.bf16.gmra.mrb[0].mxu0 %v1392
        %v2562 = vpop.f32.mrb[0].mxu0
        %v2563 = vadd.f32 %v1408, %v2562
        %v2564 = vpop.f32.mrb[0].mxu0
        %v2565 = vadd.f32 %v1412, %v2564
        %v2566 = vpop.f32.mrb[0].mxu0
        %v2567 = vpop.f32.mrb[0].mxu0
        %2568 = vdwg.mxu0
        %2569 = vmatprep.subr.bf16.mxu0 %v2156
        %2570 = vmatpush1.bf16.msra.mxu0 %v2155
        %2571 = vmatprep.subr.bf16.mxu0 %v2164
        %2572 = vmatpush1.bf16.msra.mxu0 %v2163
        %2573 = vmatprep.subr.bf16.mxu0 %v2172
        %2574 = vmatpush1.bf16.msra.mxu0 %v2171
        %2575 = vmatprep.subr.bf16.mxu0 %v2180
        %2576 = vmatpush1.bf16.msra.mxu0 %v2179
        %2577 = vmatprep.subr.bf16.mxu0 %v2188
        %2578 = vmatpush1.bf16.msra.mxu0 %v2187
        %2579 = vmatprep.subr.bf16.mxu0 %v2196
        %2580 = vmatpush1.bf16.msra.mxu0 %v2195
        %2581 = vmatprep.subr.bf16.mxu0 %v2204
        %2582 = vmatpush1.bf16.msra.mxu0 %v2203
        %2583 = vmatprep.subr.bf16.mxu0 %v2212
        %2584 = vmatpush1.bf16.msra.mxu0 %v2211
        %2585 = vmatprep.subr.bf16.mxu0 %v2432
        %2586 = vmatpush1.bf16.msra.mxu0 %v2429
        %2587 = vmatprep.subr.bf16.mxu0 0
        %2588 = vmatpush1.bf16.msra.mxu0 0
        %2589 = vmatprep.subr.bf16.mxu0 0
        %2590 = vmatpush1.bf16.msra.mxu0 0
        %2591 = vmatprep.subr.bf16.mxu0 0
        %2592 = vmatpush1.bf16.msra.mxu0 0
        %2593 = vmatprep.subr.bf16.mxu0 0
        %2594 = vmatpush1.bf16.msra.mxu0 0
        %2595 = vmatprep.subr.bf16.mxu0 0
        %2596 = vmatpush1.bf16.msra.mxu0 0
        %2597 = vmatprep.subr.bf16.mxu0 0
        %2598 = vmatpush1.bf16.msra.mxu0 0
        %2599 = vmatprep.subr.bf16.mxu0 0
        %2600 = vmatpush1.bf16.msra.mxu0 0
        %2601 = vmatprep.mubr.bf16.mxu0 %v2419
        %2602 = vmatmul.mubr.bf16.gmra.mrb[0].mxu0 %v1394
        %v2603 = vpop.f32.mrb[0].mxu0
        %v2604 = vadd.f32 %v2563, %v2603
        %v2605 = vpop.f32.mrb[0].mxu0
        %v2606 = vadd.f32 %v2565, %v2605
        %v2607 = vpop.f32.mrb[0].mxu0
        %v2608 = vpop.f32.mrb[0].mxu0
        %2609 = vdwg.mxu0
        %2610 = vmatprep.subr.bf16.mxu0 %v2030
        %2611 = vmatpush1.bf16.msra.mxu0 %v2029
        %2612 = vmatprep.subr.bf16.mxu0 %v2038
        %2613 = vmatpush1.bf16.msra.mxu0 %v2037
        %2614 = vmatprep.subr.bf16.mxu0 %v2046
        %2615 = vmatpush1.bf16.msra.mxu0 %v2045
        %2616 = vmatprep.subr.bf16.mxu0 %v2054
        %2617 = vmatpush1.bf16.msra.mxu0 %v2053
        %2618 = vmatprep.subr.bf16.mxu0 %v2062
        %2619 = vmatpush1.bf16.msra.mxu0 %v2061
        %2620 = vmatprep.subr.bf16.mxu0 %v2070
        %2621 = vmatpush1.bf16.msra.mxu0 %v2069
        %2622 = vmatprep.subr.bf16.mxu0 %v2078
        %2623 = vmatpush1.bf16.msra.mxu0 %v2077
        %2624 = vmatprep.subr.bf16.mxu0 %v2086
        %2625 = vmatpush1.bf16.msra.mxu0 %v2085
        %2626 = vmatprep.subr.bf16.mxu0 %v2094
        %2627 = vmatpush1.bf16.msra.mxu0 %v2093
        %2628 = vmatprep.subr.bf16.mxu0 %v2102
        %2629 = vmatpush1.bf16.msra.mxu0 %v2101
        %2630 = vmatprep.subr.bf16.mxu0 %v2110
        %2631 = vmatpush1.bf16.msra.mxu0 %v2109
        %2632 = vmatprep.subr.bf16.mxu0 %v2118
        %2633 = vmatpush1.bf16.msra.mxu0 %v2117
        %2634 = vmatprep.subr.bf16.mxu0 %v2126
        %2635 = vmatpush1.bf16.msra.mxu0 %v2125
        %2636 = vmatprep.subr.bf16.mxu0 %v2134
        %2637 = vmatpush1.bf16.msra.mxu0 %v2133
        %2638 = vmatprep.subr.bf16.mxu0 %v2142
        %2639 = vmatpush1.bf16.msra.mxu0 %v2141
        %2640 = vmatprep.subr.bf16.mxu0 %v2150
        %2641 = vmatpush1.bf16.msra.mxu0 %v2149
        %2642 = vmatprep.mubr.bf16.mxu0 %v1393
        %2643 = vmatmul.mubr.bf16.gmra.mrb[0].mxu0 %v1392
        %v2644 = vpop.f32.mrb[0].mxu0
        %v2645 = vadd.f32 %v1416, %v2644
        %v2646 = vpop.f32.mrb[0].mxu0
        %v2647 = vadd.f32 %v1420, %v2646
        %v2648 = vpop.f32.mrb[0].mxu0
        %v2649 = vpop.f32.mrb[0].mxu0
        %2650 = vdwg.mxu0
        %2651 = vmatprep.subr.bf16.mxu0 %v2158
        %2652 = vmatpush1.bf16.msra.mxu0 %v2157
        %2653 = vmatprep.subr.bf16.mxu0 %v2166
        %2654 = vmatpush1.bf16.msra.mxu0 %v2165
        %2655 = vmatprep.subr.bf16.mxu0 %v2174
        %2656 = vmatpush1.bf16.msra.mxu0 %v2173
        %2657 = vmatprep.subr.bf16.mxu0 %v2182
        %2658 = vmatpush1.bf16.msra.mxu0 %v2181
        %2659 = vmatprep.subr.bf16.mxu0 %v2190
        %2660 = vmatpush1.bf16.msra.mxu0 %v2189
        %2661 = vmatprep.subr.bf16.mxu0 %v2198
        %2662 = vmatpush1.bf16.msra.mxu0 %v2197
        %2663 = vmatprep.subr.bf16.mxu0 %v2206
        %2664 = vmatpush1.bf16.msra.mxu0 %v2205
        %2665 = vmatprep.subr.bf16.mxu0 %v2214
        %2666 = vmatpush1.bf16.msra.mxu0 %v2213
        %2667 = vmatprep.subr.bf16.mxu0 %v2438
        %2668 = vmatpush1.bf16.msra.mxu0 %v2435
        %2669 = vmatprep.subr.bf16.mxu0 0
        %2670 = vmatpush1.bf16.msra.mxu0 0
        %2671 = vmatprep.subr.bf16.mxu0 0
        %2672 = vmatpush1.bf16.msra.mxu0 0
        %2673 = vmatprep.subr.bf16.mxu0 0
        %2674 = vmatpush1.bf16.msra.mxu0 0
        %2675 = vmatprep.subr.bf16.mxu0 0
        %2676 = vmatpush1.bf16.msra.mxu0 0
        %2677 = vmatprep.subr.bf16.mxu0 0
        %2678 = vmatpush1.bf16.msra.mxu0 0
        %2679 = vmatprep.subr.bf16.mxu0 0
        %2680 = vmatpush1.bf16.msra.mxu0 0
        %2681 = vmatprep.subr.bf16.mxu0 0
        %2682 = vmatpush1.bf16.msra.mxu0 0
        %2683 = vmatprep.mubr.bf16.mxu0 %v2419
        %2684 = vmatmul.mubr.bf16.gmra.mrb[0].mxu0 %v1394
        %v2685 = vpop.f32.mrb[0].mxu0
        %v2686 = vadd.f32 %v2645, %v2685
        %v2687 = vpop.f32.mrb[0].mxu0
        %v2688 = vadd.f32 %v2647, %v2687
        %v2689 = vpop.f32.mrb[0].mxu0
        %v2690 = vpop.f32.mrb[0].mxu0
        %2691 = vdwg.mxu0
        %2692 = vmatprep.subr.bf16.mxu0 %v2032
        %2693 = vmatpush1.bf16.msra.mxu0 %v2031
        %2694 = vmatprep.subr.bf16.mxu0 %v2040
        %2695 = vmatpush1.bf16.msra.mxu0 %v2039
        %2696 = vmatprep.subr.bf16.mxu0 %v2048
        %2697 = vmatpush1.bf16.msra.mxu0 %v2047
        %2698 = vmatprep.subr.bf16.mxu0 %v2056
        %2699 = vmatpush1.bf16.msra.mxu0 %v2055
        %2700 = vmatprep.subr.bf16.mxu0 %v2064
        %2701 = vmatpush1.bf16.msra.mxu0 %v2063
        %2702 = vmatprep.subr.bf16.mxu0 %v2072
        %2703 = vmatpush1.bf16.msra.mxu0 %v2071
        %2704 = vmatprep.subr.bf16.mxu0 %v2080
        %2705 = vmatpush1.bf16.msra.mxu0 %v2079
        %2706 = vmatprep.subr.bf16.mxu0 %v2088
        %2707 = vmatpush1.bf16.msra.mxu0 %v2087
        %2708 = vmatprep.subr.bf16.mxu0 %v2096
        %2709 = vmatpush1.bf16.msra.mxu0 %v2095
        %2710 = vmatprep.subr.bf16.mxu0 %v2104
        %2711 = vmatpush1.bf16.msra.mxu0 %v2103
        %2712 = vmatprep.subr.bf16.mxu0 %v2112
        %2713 = vmatpush1.bf16.msra.mxu0 %v2111
        %2714 = vmatprep.subr.bf16.mxu0 %v2120
        %2715 = vmatpush1.bf16.msra.mxu0 %v2119
        %2716 = vmatprep.subr.bf16.mxu0 %v2128
        %2717 = vmatpush1.bf16.msra.mxu0 %v2127
        %2718 = vmatprep.subr.bf16.mxu0 %v2136
        %2719 = vmatpush1.bf16.msra.mxu0 %v2135
        %2720 = vmatprep.subr.bf16.mxu0 %v2144
        %2721 = vmatpush1.bf16.msra.mxu0 %v2143
        %2722 = vmatprep.subr.bf16.mxu0 %v2152
        %2723 = vmatpush1.bf16.msra.mxu0 %v2151
        %2724 = vmatprep.mubr.bf16.mxu0 %v1393
        %2725 = vmatmul.mubr.bf16.gmra.mrb[0].mxu0 %v1392
        %v2726 = vpop.f32.mrb[0].mxu0
        %v2727 = vadd.f32 %v1424, %v2726
        %v2728 = vpop.f32.mrb[0].mxu0
        %v2729 = vadd.f32 %v1428, %v2728
        %v2730 = vpop.f32.mrb[0].mxu0
        %v2731 = vpop.f32.mrb[0].mxu0
        %2732 = vdwg.mxu0
        %2733 = vmatprep.subr.bf16.mxu0 %v2160
        %2734 = vmatpush1.bf16.msra.mxu0 %v2159
        %2735 = vmatprep.subr.bf16.mxu0 %v2168
        %2736 = vmatpush1.bf16.msra.mxu0 %v2167
        %2737 = vmatprep.subr.bf16.mxu0 %v2176
        %2738 = vmatpush1.bf16.msra.mxu0 %v2175
        %2739 = vmatprep.subr.bf16.mxu0 %v2184
        %2740 = vmatpush1.bf16.msra.mxu0 %v2183
        %2741 = vmatprep.subr.bf16.mxu0 %v2192
        %2742 = vmatpush1.bf16.msra.mxu0 %v2191
        %2743 = vmatprep.subr.bf16.mxu0 %v2200
        %2744 = vmatpush1.bf16.msra.mxu0 %v2199
        %2745 = vmatprep.subr.bf16.mxu0 %v2208
        %2746 = vmatpush1.bf16.msra.mxu0 %v2207
        %2747 = vmatprep.subr.bf16.mxu0 %v2216
        %2748 = vmatpush1.bf16.msra.mxu0 %v2215
        %2749 = vmatprep.subr.bf16.mxu0 %v2444
        %2750 = vmatpush1.bf16.msra.mxu0 %v2441
        %2751 = vmatprep.subr.bf16.mxu0 0
        %2752 = vmatpush1.bf16.msra.mxu0 0
        %2753 = vmatprep.subr.bf16.mxu0 0
        %2754 = vmatpush1.bf16.msra.mxu0 0
        %2755 = vmatprep.subr.bf16.mxu0 0
        %2756 = vmatpush1.bf16.msra.mxu0 0
        %2757 = vmatprep.subr.bf16.mxu0 0
        %2758 = vmatpush1.bf16.msra.mxu0 0
        %2759 = vmatprep.subr.bf16.mxu0 0
        %2760 = vmatpush1.bf16.msra.mxu0 0
        %2761 = vmatprep.subr.bf16.mxu0 0
        %2762 = vmatpush1.bf16.msra.mxu0 0
        %2763 = vmatprep.subr.bf16.mxu0 0
        %2764 = vmatpush1.bf16.msra.mxu0 0
        %2765 = vmatprep.mubr.bf16.mxu0 %v2419
        %2766 = vmatmul.mubr.bf16.gmra.mrb[0].mxu0 %v1394
        %v2767 = vpop.f32.mrb[0].mxu0
        %v2768 = vadd.f32 %v2727, %v2767
        %v2769 = vpop.f32.mrb[0].mxu0
        %v2770 = vadd.f32 %v2729, %v2769
        %v2771 = vpop.f32.mrb[0].mxu0
        %v2772 = vpop.f32.mrb[0].mxu0
        %2773 = vdwg.mxu0
        %v2774 = vmax.f32 %v2522, 0.0
        %v2775 = vmax.f32 %v2524, 0.0
        %v2776 = vmax.f32 %v2604, 0.0
        %v2777 = vmax.f32 %v2606, 0.0
        %v2778 = vmax.f32 %v2686, 0.0
        %v2779 = vmax.f32 %v2688, 0.0
        %v2780 = vmax.f32 %v2768, 0.0
        %v2781 = vmax.f32 %v2770, 0.0
        %v2782 = vunpack.c.l.s8.bf16 %v871
        %v2783 = vunpack.c.l.s8.bf16 %v872
        %v2784 = vunpack.c.l.s8.bf16 %v873
        %v2785 = vunpack.c.l.s8.bf16 %v874
        %v2786 = vunpack.c.l.s8.bf16 %v875
        %v2787 = vunpack.c.l.s8.bf16 %v876
        %v2788 = vunpack.c.l.s8.bf16 %v877
        %v2789 = vunpack.c.l.s8.bf16 %v878
        %v2790 = vunpack.c.h.s8.bf16 %v871
        %v2791 = vunpack.c.h.s8.bf16 %v872
        %v2792 = vunpack.c.h.s8.bf16 %v873
        %v2793 = vunpack.c.h.s8.bf16 %v874
        %v2794 = vunpack.c.h.s8.bf16 %v875
        %v2795 = vunpack.c.h.s8.bf16 %v876
        %v2796 = vunpack.c.h.s8.bf16 %v877
        %v2797 = vunpack.c.h.s8.bf16 %v878
        %v2798 = vunpack.c.l.s8.bf16 %v879
        %v2799 = vunpack.c.l.s8.bf16 %v880
        %v2800 = vunpack.c.l.s8.bf16 %v881
        %v2801 = vunpack.c.l.s8.bf16 %v882
        %v2802 = vunpack.c.l.s8.bf16 %v883
        %v2803 = vunpack.c.l.s8.bf16 %v884
        %v2804 = vunpack.c.l.s8.bf16 %v885
        %v2805 = vunpack.c.l.s8.bf16 %v886
        %v2806 = vunpack.c.h.s8.bf16 %v879
        %v2807 = vunpack.c.h.s8.bf16 %v880
        %v2808 = vunpack.c.h.s8.bf16 %v881
        %v2809 = vunpack.c.h.s8.bf16 %v882
        %v2810 = vunpack.c.h.s8.bf16 %v883
        %v2811 = vunpack.c.h.s8.bf16 %v884
        %v2812 = vunpack.c.h.s8.bf16 %v885
        %v2813 = vunpack.c.h.s8.bf16 %v886
        %v2814 = vunpack.c.l.s8.bf16 %v887
        %v2815 = vunpack.c.l.s8.bf16 %v888
        %v2816 = vunpack.c.l.s8.bf16 %v889
        %v2817 = vunpack.c.l.s8.bf16 %v890
        %v2818 = vunpack.c.l.s8.bf16 %v891
        %v2819 = vunpack.c.l.s8.bf16 %v892
        %v2820 = vunpack.c.l.s8.bf16 %v893
        %v2821 = vunpack.c.l.s8.bf16 %v894
        %v2822 = vunpack.c.h.s8.bf16 %v887
        %v2823 = vunpack.c.h.s8.bf16 %v888
        %v2824 = vunpack.c.h.s8.bf16 %v889
        %v2825 = vunpack.c.h.s8.bf16 %v890
        %v2826 = vunpack.c.h.s8.bf16 %v891
        %v2827 = vunpack.c.h.s8.bf16 %v892
        %v2828 = vunpack.c.h.s8.bf16 %v893
        %v2829 = vunpack.c.h.s8.bf16 %v894
        %v2830 = vunpack.c.l.s8.bf16 %v895
        %v2831 = vunpack.c.l.s8.bf16 %v896
        %v2832 = vunpack.c.l.s8.bf16 %v897
        %v2833 = vunpack.c.l.s8.bf16 %v898
        %v2834 = vunpack.c.l.s8.bf16 %v899
        %v2835 = vunpack.c.l.s8.bf16 %v900
        %v2836 = vunpack.c.l.s8.bf16 %v901
        %v2837 = vunpack.c.l.s8.bf16 %v902
        %v2838 = vunpack.c.h.s8.bf16 %v895
        %v2839 = vunpack.c.h.s8.bf16 %v896
        %v2840 = vunpack.c.h.s8.bf16 %v897
        %v2841 = vunpack.c.h.s8.bf16 %v898
        %v2842 = vunpack.c.h.s8.bf16 %v899
        %v2843 = vunpack.c.h.s8.bf16 %v900
        %v2844 = vunpack.c.h.s8.bf16 %v901
        %v2845 = vunpack.c.h.s8.bf16 %v902
        %v2846 = vunpack.c.l.s8.bf16 %v903
        %v2847 = vunpack.c.l.s8.bf16 %v904
        %v2848 = vunpack.c.l.s8.bf16 %v905
        %v2849 = vunpack.c.l.s8.bf16 %v906
        %v2850 = vunpack.c.l.s8.bf16 %v907
        %v2851 = vunpack.c.l.s8.bf16 %v908
        %v2852 = vunpack.c.l.s8.bf16 %v909
        %v2853 = vunpack.c.l.s8.bf16 %v910
        %v2854 = vunpack.c.h.s8.bf16 %v903
        %v2855 = vunpack.c.h.s8.bf16 %v904
        %v2856 = vunpack.c.h.s8.bf16 %v905
        %v2857 = vunpack.c.h.s8.bf16 %v906
        %v2858 = vunpack.c.h.s8.bf16 %v907
        %v2859 = vunpack.c.h.s8.bf16 %v908
        %v2860 = vunpack.c.h.s8.bf16 %v909
        %v2861 = vunpack.c.h.s8.bf16 %v910
        %v2862 = vunpack.c.l.s8.bf16 %v911
        %v2863 = vunpack.c.l.s8.bf16 %v912
        %v2864 = vunpack.c.l.s8.bf16 %v913
        %v2865 = vunpack.c.l.s8.bf16 %v914
        %v2866 = vunpack.c.l.s8.bf16 %v915
        %v2867 = vunpack.c.l.s8.bf16 %v916
        %v2868 = vunpack.c.l.s8.bf16 %v917
        %v2869 = vunpack.c.l.s8.bf16 %v918
        %v2870 = vunpack.c.h.s8.bf16 %v911
        %v2871 = vunpack.c.h.s8.bf16 %v912
        %v2872 = vunpack.c.h.s8.bf16 %v913
        %v2873 = vunpack.c.h.s8.bf16 %v914
        %v2874 = vunpack.c.h.s8.bf16 %v915
        %v2875 = vunpack.c.h.s8.bf16 %v916
        %v2876 = vunpack.c.h.s8.bf16 %v917
        %v2877 = vunpack.c.h.s8.bf16 %v918
        %v2878 = vunpack.c.l.s8.bf16 %v919
        %v2879 = vunpack.c.l.s8.bf16 %v920
        %v2880 = vunpack.c.l.s8.bf16 %v921
        %v2881 = vunpack.c.l.s8.bf16 %v922
        %v2882 = vunpack.c.l.s8.bf16 %v923
        %v2883 = vunpack.c.l.s8.bf16 %v924
        %v2884 = vunpack.c.l.s8.bf16 %v925
        %v2885 = vunpack.c.l.s8.bf16 %v926
        %v2886 = vunpack.c.h.s8.bf16 %v919
        %v2887 = vunpack.c.h.s8.bf16 %v920
        %v2888 = vunpack.c.h.s8.bf16 %v921
        %v2889 = vunpack.c.h.s8.bf16 %v922
        %v2890 = vunpack.c.h.s8.bf16 %v923
        %v2891 = vunpack.c.h.s8.bf16 %v924
        %v2892 = vunpack.c.h.s8.bf16 %v925
        %v2893 = vunpack.c.h.s8.bf16 %v926
        %v2894 = vunpack.c.l.s8.bf16 %v927
        %v2895 = vunpack.c.l.s8.bf16 %v928
        %v2896 = vunpack.c.l.s8.bf16 %v929
        %v2897 = vunpack.c.l.s8.bf16 %v930
        %v2898 = vunpack.c.l.s8.bf16 %v931
        %v2899 = vunpack.c.l.s8.bf16 %v932
        %v2900 = vunpack.c.l.s8.bf16 %v933
        %v2901 = vunpack.c.l.s8.bf16 %v934
        %v2902 = vunpack.c.h.s8.bf16 %v927
        %v2903 = vunpack.c.h.s8.bf16 %v928
        %v2904 = vunpack.c.h.s8.bf16 %v929
        %v2905 = vunpack.c.h.s8.bf16 %v930
        %v2906 = vunpack.c.h.s8.bf16 %v931
        %v2907 = vunpack.c.h.s8.bf16 %v932
        %v2908 = vunpack.c.h.s8.bf16 %v933
        %v2909 = vunpack.c.h.s8.bf16 %v934
        %v2910 = vunpack.c.l.s8.bf16 %v935
        %v2911 = vunpack.c.l.s8.bf16 %v936
        %v2912 = vunpack.c.l.s8.bf16 %v937
        %v2913 = vunpack.c.l.s8.bf16 %v938
        %v2914 = vunpack.c.l.s8.bf16 %v939
        %v2915 = vunpack.c.l.s8.bf16 %v940
        %v2916 = vunpack.c.l.s8.bf16 %v941
        %v2917 = vunpack.c.l.s8.bf16 %v942
        %v2918 = vunpack.c.h.s8.bf16 %v935
        %v2919 = vunpack.c.h.s8.bf16 %v936
        %v2920 = vunpack.c.h.s8.bf16 %v937
        %v2921 = vunpack.c.h.s8.bf16 %v938
        %v2922 = vunpack.c.h.s8.bf16 %v939
        %v2923 = vunpack.c.h.s8.bf16 %v940
        %v2924 = vunpack.c.h.s8.bf16 %v941
        %v2925 = vunpack.c.h.s8.bf16 %v942
        %v2926 = vunpack.c.l.s8.bf16 %v943
        %v2927 = vunpack.c.l.s8.bf16 %v944
        %v2928 = vunpack.c.l.s8.bf16 %v945
        %v2929 = vunpack.c.l.s8.bf16 %v946
        %v2930 = vunpack.c.l.s8.bf16 %v947
        %v2931 = vunpack.c.l.s8.bf16 %v948
        %v2932 = vunpack.c.l.s8.bf16 %v949
        %v2933 = vunpack.c.l.s8.bf16 %v950
        %v2934 = vunpack.c.h.s8.bf16 %v943
        %v2935 = vunpack.c.h.s8.bf16 %v944
        %v2936 = vunpack.c.h.s8.bf16 %v945
        %v2937 = vunpack.c.h.s8.bf16 %v946
        %v2938 = vunpack.c.h.s8.bf16 %v947
        %v2939 = vunpack.c.h.s8.bf16 %v948
        %v2940 = vunpack.c.h.s8.bf16 %v949
        %v2941 = vunpack.c.h.s8.bf16 %v950
        %v2942 = vunpack.c.l.s8.bf16 %v951
        %v2943 = vunpack.c.l.s8.bf16 %v952
        %v2944 = vunpack.c.l.s8.bf16 %v953
        %v2945 = vunpack.c.l.s8.bf16 %v954
        %v2946 = vunpack.c.l.s8.bf16 %v955
        %v2947 = vunpack.c.l.s8.bf16 %v956
        %v2948 = vunpack.c.l.s8.bf16 %v957
        %v2949 = vunpack.c.l.s8.bf16 %v958
        %v2950 = vunpack.c.h.s8.bf16 %v951
        %v2951 = vunpack.c.h.s8.bf16 %v952
        %v2952 = vunpack.c.h.s8.bf16 %v953
        %v2953 = vunpack.c.h.s8.bf16 %v954
        %v2954 = vunpack.c.h.s8.bf16 %v955
        %v2955 = vunpack.c.h.s8.bf16 %v956
        %v2956 = vunpack.c.h.s8.bf16 %v957
        %v2957 = vunpack.c.h.s8.bf16 %v958
        %v2958 = vunpack.c.l.s8.bf16 %v959
        %v2959 = vunpack.c.l.s8.bf16 %v960
        %v2960 = vunpack.c.l.s8.bf16 %v961
        %v2961 = vunpack.c.l.s8.bf16 %v962
        %v2962 = vunpack.c.l.s8.bf16 %v963
        %v2963 = vunpack.c.l.s8.bf16 %v964
        %v2964 = vunpack.c.l.s8.bf16 %v965
        %v2965 = vunpack.c.l.s8.bf16 %v966
        %v2966 = vunpack.c.h.s8.bf16 %v959
        %v2967 = vunpack.c.h.s8.bf16 %v960
        %v2968 = vunpack.c.h.s8.bf16 %v961
        %v2969 = vunpack.c.h.s8.bf16 %v962
        %v2970 = vunpack.c.h.s8.bf16 %v963
        %v2971 = vunpack.c.h.s8.bf16 %v964
        %v2972 = vunpack.c.h.s8.bf16 %v965
        %v2973 = vunpack.c.h.s8.bf16 %v966
        %v2974 = vunpack.c.l.s8.bf16 %v967
        %v2975 = vunpack.c.l.s8.bf16 %v968
        %v2976 = vunpack.c.l.s8.bf16 %v969
        %v2977 = vunpack.c.l.s8.bf16 %v970
        %v2978 = vunpack.c.l.s8.bf16 %v971
        %v2979 = vunpack.c.l.s8.bf16 %v972
        %v2980 = vunpack.c.l.s8.bf16 %v973
        %v2981 = vunpack.c.l.s8.bf16 %v974
        %v2982 = vunpack.c.h.s8.bf16 %v967
        %v2983 = vunpack.c.h.s8.bf16 %v968
        %v2984 = vunpack.c.h.s8.bf16 %v969
        %v2985 = vunpack.c.h.s8.bf16 %v970
        %v2986 = vunpack.c.h.s8.bf16 %v971
        %v2987 = vunpack.c.h.s8.bf16 %v972
        %v2988 = vunpack.c.h.s8.bf16 %v973
        %v2989 = vunpack.c.h.s8.bf16 %v974
        %v2990 = vunpack.c.l.s8.bf16 %v975
        %v2991 = vunpack.c.l.s8.bf16 %v976
        %v2992 = vunpack.c.l.s8.bf16 %v977
        %v2993 = vunpack.c.l.s8.bf16 %v978
        %v2994 = vunpack.c.l.s8.bf16 %v979
        %v2995 = vunpack.c.l.s8.bf16 %v980
        %v2996 = vunpack.c.l.s8.bf16 %v981
        %v2997 = vunpack.c.l.s8.bf16 %v982
        %v2998 = vunpack.c.h.s8.bf16 %v975
        %v2999 = vunpack.c.h.s8.bf16 %v976
        %v3000 = vunpack.c.h.s8.bf16 %v977
        %v3001 = vunpack.c.h.s8.bf16 %v978
        %v3002 = vunpack.c.h.s8.bf16 %v979
        %v3003 = vunpack.c.h.s8.bf16 %v980
        %v3004 = vunpack.c.h.s8.bf16 %v981
        %v3005 = vunpack.c.h.s8.bf16 %v982
        %v3006 = vunpack.c.l.s8.bf16 %v983
        %v3007 = vunpack.c.l.s8.bf16 %v984
        %v3008 = vunpack.c.l.s8.bf16 %v985
        %v3009 = vunpack.c.l.s8.bf16 %v986
        %v3010 = vunpack.c.l.s8.bf16 %v987
        %v3011 = vunpack.c.l.s8.bf16 %v988
        %v3012 = vunpack.c.l.s8.bf16 %v989
        %v3013 = vunpack.c.l.s8.bf16 %v990
        %v3014 = vunpack.c.h.s8.bf16 %v983
        %v3015 = vunpack.c.h.s8.bf16 %v984
        %v3016 = vunpack.c.h.s8.bf16 %v985
        %v3017 = vunpack.c.h.s8.bf16 %v986
        %v3018 = vunpack.c.h.s8.bf16 %v987
        %v3019 = vunpack.c.h.s8.bf16 %v988
        %v3020 = vunpack.c.h.s8.bf16 %v989
        %v3021 = vunpack.c.h.s8.bf16 %v990
        %v3022 = vunpack.c.l.s8.bf16 %v991
        %v3023 = vunpack.c.l.s8.bf16 %v992
        %v3024 = vunpack.c.l.s8.bf16 %v993
        %v3025 = vunpack.c.l.s8.bf16 %v994
        %v3026 = vunpack.c.l.s8.bf16 %v995
        %v3027 = vunpack.c.l.s8.bf16 %v996
        %v3028 = vunpack.c.l.s8.bf16 %v997
        %v3029 = vunpack.c.l.s8.bf16 %v998
        %v3030 = vunpack.c.h.s8.bf16 %v991
        %v3031 = vunpack.c.h.s8.bf16 %v992
        %v3032 = vunpack.c.h.s8.bf16 %v993
        %v3033 = vunpack.c.h.s8.bf16 %v994
        %v3034 = vunpack.c.h.s8.bf16 %v995
        %v3035 = vunpack.c.h.s8.bf16 %v996
        %v3036 = vunpack.c.h.s8.bf16 %v997
        %v3037 = vunpack.c.h.s8.bf16 %v998
        %v3038 = vunpack.c.l.s8.bf16 %v999
        %v3039 = vunpack.c.l.s8.bf16 %v1000
        %v3040 = vunpack.c.l.s8.bf16 %v1001
        %v3041 = vunpack.c.l.s8.bf16 %v1002
        %v3042 = vunpack.c.l.s8.bf16 %v1003
        %v3043 = vunpack.c.l.s8.bf16 %v1004
        %v3044 = vunpack.c.l.s8.bf16 %v1005
        %v3045 = vunpack.c.l.s8.bf16 %v1006
        %v3046 = vunpack.c.h.s8.bf16 %v999
        %v3047 = vunpack.c.h.s8.bf16 %v1000
        %v3048 = vunpack.c.h.s8.bf16 %v1001
        %v3049 = vunpack.c.h.s8.bf16 %v1002
        %v3050 = vunpack.c.h.s8.bf16 %v1003
        %v3051 = vunpack.c.h.s8.bf16 %v1004
        %v3052 = vunpack.c.h.s8.bf16 %v1005
        %v3053 = vunpack.c.h.s8.bf16 %v1006
        %v3054 = vunpack.c.l.s8.bf16 %v1007
        %v3055 = vunpack.c.l.s8.bf16 %v1008
        %v3056 = vunpack.c.l.s8.bf16 %v1009
        %v3057 = vunpack.c.l.s8.bf16 %v1010
        %v3058 = vunpack.c.l.s8.bf16 %v1011
        %v3059 = vunpack.c.l.s8.bf16 %v1012
        %v3060 = vunpack.c.l.s8.bf16 %v1013
        %v3061 = vunpack.c.l.s8.bf16 %v1014
        %v3062 = vunpack.c.h.s8.bf16 %v1007
        %v3063 = vunpack.c.h.s8.bf16 %v1008
        %v3064 = vunpack.c.h.s8.bf16 %v1009
        %v3065 = vunpack.c.h.s8.bf16 %v1010
        %v3066 = vunpack.c.h.s8.bf16 %v1011
        %v3067 = vunpack.c.h.s8.bf16 %v1012
        %v3068 = vunpack.c.h.s8.bf16 %v1013
        %v3069 = vunpack.c.h.s8.bf16 %v1014
        %v3070 = vunpack.c.l.s8.bf16 %v1015
        %v3071 = vunpack.c.l.s8.bf16 %v1016
        %v3072 = vunpack.c.l.s8.bf16 %v1017
        %v3073 = vunpack.c.l.s8.bf16 %v1018
        %v3074 = vunpack.c.l.s8.bf16 %v1019
        %v3075 = vunpack.c.l.s8.bf16 %v1020
        %v3076 = vunpack.c.l.s8.bf16 %v1021
        %v3077 = vunpack.c.l.s8.bf16 %v1022
        %v3078 = vunpack.c.h.s8.bf16 %v1015
        %v3079 = vunpack.c.h.s8.bf16 %v1016
        %v3080 = vunpack.c.h.s8.bf16 %v1017
        %v3081 = vunpack.c.h.s8.bf16 %v1018
        %v3082 = vunpack.c.h.s8.bf16 %v1019
        %v3083 = vunpack.c.h.s8.bf16 %v1020
        %v3084 = vunpack.c.h.s8.bf16 %v1021
        %v3085 = vunpack.c.h.s8.bf16 %v1022
        %v3086 = vunpack.c.l.s8.bf16 %v1023
        %v3087 = vunpack.c.l.s8.bf16 %v1024
        %v3088 = vunpack.c.l.s8.bf16 %v1025
        %v3089 = vunpack.c.l.s8.bf16 %v1026
        %v3090 = vunpack.c.l.s8.bf16 %v1027
        %v3091 = vunpack.c.l.s8.bf16 %v1028
        %v3092 = vunpack.c.l.s8.bf16 %v1029
        %v3093 = vunpack.c.l.s8.bf16 %v1030
        %v3094 = vunpack.c.h.s8.bf16 %v1023
        %v3095 = vunpack.c.h.s8.bf16 %v1024
        %v3096 = vunpack.c.h.s8.bf16 %v1025
        %v3097 = vunpack.c.h.s8.bf16 %v1026
        %v3098 = vunpack.c.h.s8.bf16 %v1027
        %v3099 = vunpack.c.h.s8.bf16 %v1028
        %v3100 = vunpack.c.h.s8.bf16 %v1029
        %v3101 = vunpack.c.h.s8.bf16 %v1030
        %v3102 = vunpack.c.l.s8.bf16 %v1031
        %v3103 = vunpack.c.l.s8.bf16 %v1032
        %v3104 = vunpack.c.l.s8.bf16 %v1033
        %v3105 = vunpack.c.l.s8.bf16 %v1034
        %v3106 = vunpack.c.l.s8.bf16 %v1035
        %v3107 = vunpack.c.l.s8.bf16 %v1036
        %v3108 = vunpack.c.l.s8.bf16 %v1037
        %v3109 = vunpack.c.l.s8.bf16 %v1038
        %v3110 = vunpack.c.h.s8.bf16 %v1031
        %v3111 = vunpack.c.h.s8.bf16 %v1032
        %v3112 = vunpack.c.h.s8.bf16 %v1033
        %v3113 = vunpack.c.h.s8.bf16 %v1034
        %v3114 = vunpack.c.h.s8.bf16 %v1035
        %v3115 = vunpack.c.h.s8.bf16 %v1036
        %v3116 = vunpack.c.h.s8.bf16 %v1037
        %v3117 = vunpack.c.h.s8.bf16 %v1038
        %v3118 = vunpack.c.l.s8.bf16 %v1039
        %v3119 = vunpack.c.l.s8.bf16 %v1040
        %v3120 = vunpack.c.l.s8.bf16 %v1041
        %v3121 = vunpack.c.l.s8.bf16 %v1042
        %v3122 = vunpack.c.l.s8.bf16 %v1043
        %v3123 = vunpack.c.l.s8.bf16 %v1044
        %v3124 = vunpack.c.l.s8.bf16 %v1045
        %v3125 = vunpack.c.l.s8.bf16 %v1046
        %v3126 = vunpack.c.h.s8.bf16 %v1039
        %v3127 = vunpack.c.h.s8.bf16 %v1040
        %v3128 = vunpack.c.h.s8.bf16 %v1041
        %v3129 = vunpack.c.h.s8.bf16 %v1042
        %v3130 = vunpack.c.h.s8.bf16 %v1043
        %v3131 = vunpack.c.h.s8.bf16 %v1044
        %v3132 = vunpack.c.h.s8.bf16 %v1045
        %v3133 = vunpack.c.h.s8.bf16 %v1046
        %v3134 = vunpack.c.l.s8.bf16 %v1047
        %v3135 = vunpack.c.l.s8.bf16 %v1048
        %v3136 = vunpack.c.l.s8.bf16 %v1049
        %v3137 = vunpack.c.l.s8.bf16 %v1050
        %v3138 = vunpack.c.l.s8.bf16 %v1051
        %v3139 = vunpack.c.l.s8.bf16 %v1052
        %v3140 = vunpack.c.l.s8.bf16 %v1053
        %v3141 = vunpack.c.l.s8.bf16 %v1054
        %v3142 = vunpack.c.h.s8.bf16 %v1047
        %v3143 = vunpack.c.h.s8.bf16 %v1048
        %v3144 = vunpack.c.h.s8.bf16 %v1049
        %v3145 = vunpack.c.h.s8.bf16 %v1050
        %v3146 = vunpack.c.h.s8.bf16 %v1051
        %v3147 = vunpack.c.h.s8.bf16 %v1052
        %v3148 = vunpack.c.h.s8.bf16 %v1053
        %v3149 = vunpack.c.h.s8.bf16 %v1054
        %v3150 = vunpack.c.l.s8.bf16 %v1055
        %v3151 = vunpack.c.l.s8.bf16 %v1056
        %v3152 = vunpack.c.l.s8.bf16 %v1057
        %v3153 = vunpack.c.l.s8.bf16 %v1058
        %v3154 = vunpack.c.l.s8.bf16 %v1059
        %v3155 = vunpack.c.l.s8.bf16 %v1060
        %v3156 = vunpack.c.l.s8.bf16 %v1061
        %v3157 = vunpack.c.l.s8.bf16 %v1062
        %v3158 = vunpack.c.h.s8.bf16 %v1055
        %v3159 = vunpack.c.h.s8.bf16 %v1056
        %v3160 = vunpack.c.h.s8.bf16 %v1057
        %v3161 = vunpack.c.h.s8.bf16 %v1058
        %v3162 = vunpack.c.h.s8.bf16 %v1059
        %v3163 = vunpack.c.h.s8.bf16 %v1060
        %v3164 = vunpack.c.h.s8.bf16 %v1061
        %v3165 = vunpack.c.h.s8.bf16 %v1062
        %v3166 = vunpack.c.l.s8.bf16 %v1063
        %v3167 = vunpack.c.l.s8.bf16 %v1064
        %v3168 = vunpack.c.l.s8.bf16 %v1065
        %v3169 = vunpack.c.l.s8.bf16 %v1066
        %v3170 = vunpack.c.l.s8.bf16 %v1067
        %v3171 = vunpack.c.l.s8.bf16 %v1068
        %v3172 = vunpack.c.l.s8.bf16 %v1069
        %v3173 = vunpack.c.l.s8.bf16 %v1070
        %v3174 = vunpack.c.h.s8.bf16 %v1063
        %v3175 = vunpack.c.h.s8.bf16 %v1064
        %v3176 = vunpack.c.h.s8.bf16 %v1065
        %v3177 = vunpack.c.h.s8.bf16 %v1066
        %v3178 = vunpack.c.h.s8.bf16 %v1067
        %v3179 = vunpack.c.h.s8.bf16 %v1068
        %v3180 = vunpack.c.h.s8.bf16 %v1069
        %v3181 = vunpack.c.h.s8.bf16 %v1070
        %v3182 = vunpack.c.l.s8.bf16 %v1071
        %v3183 = vunpack.c.l.s8.bf16 %v1072
        %v3184 = vunpack.c.l.s8.bf16 %v1073
        %v3185 = vunpack.c.l.s8.bf16 %v1074
        %v3186 = vunpack.c.l.s8.bf16 %v1075
        %v3187 = vunpack.c.l.s8.bf16 %v1076
        %v3188 = vunpack.c.l.s8.bf16 %v1077
        %v3189 = vunpack.c.l.s8.bf16 %v1078
        %v3190 = vunpack.c.h.s8.bf16 %v1071
        %v3191 = vunpack.c.h.s8.bf16 %v1072
        %v3192 = vunpack.c.h.s8.bf16 %v1073
        %v3193 = vunpack.c.h.s8.bf16 %v1074
        %v3194 = vunpack.c.h.s8.bf16 %v1075
        %v3195 = vunpack.c.h.s8.bf16 %v1076
        %v3196 = vunpack.c.h.s8.bf16 %v1077
        %v3197 = vunpack.c.h.s8.bf16 %v1078
        %v3198 = vunpack.c.l.s8.bf16 %v1079
        %v3199 = vunpack.c.l.s8.bf16 %v1080
        %v3200 = vunpack.c.l.s8.bf16 %v1081
        %v3201 = vunpack.c.l.s8.bf16 %v1082
        %v3202 = vunpack.c.l.s8.bf16 %v1083
        %v3203 = vunpack.c.l.s8.bf16 %v1084
        %v3204 = vunpack.c.l.s8.bf16 %v1085
        %v3205 = vunpack.c.l.s8.bf16 %v1086
        %v3206 = vunpack.c.h.s8.bf16 %v1079
        %v3207 = vunpack.c.h.s8.bf16 %v1080
        %v3208 = vunpack.c.h.s8.bf16 %v1081
        %v3209 = vunpack.c.h.s8.bf16 %v1082
        %v3210 = vunpack.c.h.s8.bf16 %v1083
        %v3211 = vunpack.c.h.s8.bf16 %v1084
        %v3212 = vunpack.c.h.s8.bf16 %v1085
        %v3213 = vunpack.c.h.s8.bf16 %v1086
        %v3214 = vunpack.c.l.s8.bf16 %v1087
        %v3215 = vunpack.c.l.s8.bf16 %v1088
        %v3216 = vunpack.c.l.s8.bf16 %v1089
        %v3217 = vunpack.c.l.s8.bf16 %v1090
        %v3218 = vunpack.c.l.s8.bf16 %v1091
        %v3219 = vunpack.c.l.s8.bf16 %v1092
        %v3220 = vunpack.c.l.s8.bf16 %v1093
        %v3221 = vunpack.c.l.s8.bf16 %v1094
        %v3222 = vunpack.c.h.s8.bf16 %v1087
        %v3223 = vunpack.c.h.s8.bf16 %v1088
        %v3224 = vunpack.c.h.s8.bf16 %v1089
        %v3225 = vunpack.c.h.s8.bf16 %v1090
        %v3226 = vunpack.c.h.s8.bf16 %v1091
        %v3227 = vunpack.c.h.s8.bf16 %v1092
        %v3228 = vunpack.c.h.s8.bf16 %v1093
        %v3229 = vunpack.c.h.s8.bf16 %v1094
        %v3230 = vunpack.c.l.s8.bf16 %v1095
        %v3231 = vunpack.c.l.s8.bf16 %v1096
        %v3232 = vunpack.c.l.s8.bf16 %v1097
        %v3233 = vunpack.c.l.s8.bf16 %v1098
        %v3234 = vunpack.c.l.s8.bf16 %v1099
        %v3235 = vunpack.c.l.s8.bf16 %v1100
        %v3236 = vunpack.c.l.s8.bf16 %v1101
        %v3237 = vunpack.c.l.s8.bf16 %v1102
        %v3238 = vunpack.c.h.s8.bf16 %v1095
        %v3239 = vunpack.c.h.s8.bf16 %v1096
        %v3240 = vunpack.c.h.s8.bf16 %v1097
        %v3241 = vunpack.c.h.s8.bf16 %v1098
        %v3242 = vunpack.c.h.s8.bf16 %v1099
        %v3243 = vunpack.c.h.s8.bf16 %v1100
        %v3244 = vunpack.c.h.s8.bf16 %v1101
        %v3245 = vunpack.c.h.s8.bf16 %v1102
        %v3246 = vunpack.c.l.s8.bf16 %v1103
        %v3247 = vunpack.c.l.s8.bf16 %v1104
        %v3248 = vunpack.c.l.s8.bf16 %v1105
        %v3249 = vunpack.c.l.s8.bf16 %v1106
        %v3250 = vunpack.c.l.s8.bf16 %v1107
        %v3251 = vunpack.c.l.s8.bf16 %v1108
        %v3252 = vunpack.c.l.s8.bf16 %v1109
        %v3253 = vunpack.c.l.s8.bf16 %v1110
        %v3254 = vunpack.c.h.s8.bf16 %v1103
        %v3255 = vunpack.c.h.s8.bf16 %v1104
        %v3256 = vunpack.c.h.s8.bf16 %v1105
        %v3257 = vunpack.c.h.s8.bf16 %v1106
        %v3258 = vunpack.c.h.s8.bf16 %v1107
        %v3259 = vunpack.c.h.s8.bf16 %v1108
        %v3260 = vunpack.c.h.s8.bf16 %v1109
        %v3261 = vunpack.c.h.s8.bf16 %v1110
        %v3262 = vunpack.c.l.s8.bf16 %v1111
        %v3263 = vunpack.c.l.s8.bf16 %v1112
        %v3264 = vunpack.c.l.s8.bf16 %v1113
        %v3265 = vunpack.c.l.s8.bf16 %v1114
        %v3266 = vunpack.c.l.s8.bf16 %v1115
        %v3267 = vunpack.c.l.s8.bf16 %v1116
        %v3268 = vunpack.c.l.s8.bf16 %v1117
        %v3269 = vunpack.c.l.s8.bf16 %v1118
        %v3270 = vunpack.c.h.s8.bf16 %v1111
        %v3271 = vunpack.c.h.s8.bf16 %v1112
        %v3272 = vunpack.c.h.s8.bf16 %v1113
        %v3273 = vunpack.c.h.s8.bf16 %v1114
        %v3274 = vunpack.c.h.s8.bf16 %v1115
        %v3275 = vunpack.c.h.s8.bf16 %v1116
        %v3276 = vunpack.c.h.s8.bf16 %v1117
        %v3277 = vunpack.c.h.s8.bf16 %v1118
        %v3278 = vunpack.c.l.s8.bf16 %v1119
        %v3279 = vunpack.c.l.s8.bf16 %v1120
        %v3280 = vunpack.c.l.s8.bf16 %v1121
        %v3281 = vunpack.c.l.s8.bf16 %v1122
        %v3282 = vunpack.c.l.s8.bf16 %v1123
        %v3283 = vunpack.c.l.s8.bf16 %v1124
        %v3284 = vunpack.c.l.s8.bf16 %v1125
        %v3285 = vunpack.c.l.s8.bf16 %v1126
        %v3286 = vunpack.c.h.s8.bf16 %v1119
        %v3287 = vunpack.c.h.s8.bf16 %v1120
        %v3288 = vunpack.c.h.s8.bf16 %v1121
        %v3289 = vunpack.c.h.s8.bf16 %v1122
        %v3290 = vunpack.c.h.s8.bf16 %v1123
        %v3291 = vunpack.c.h.s8.bf16 %v1124
        %v3292 = vunpack.c.h.s8.bf16 %v1125
        %v3293 = vunpack.c.h.s8.bf16 %v1126
        %v3294 = vpack.c.bf16 %v2774, %v2774
        %v3295 = vpack.c.bf16 %v2775, %v2775
        %v3296 = vpack.c.bf16 %v2776, %v2776
        %v3297 = vpack.c.bf16 %v2777, %v2777
        %v3298 = vpack.c.bf16 %v2778, %v2778
        %v3299 = vpack.c.bf16 %v2779, %v2779
        %v3300 = vpack.c.bf16 %v2780, %v2780
        %v3301 = vpack.c.bf16 %v2781, %v2781
        %3302 = vmatprep.subr.bf16.mxu0 %v2783
        %3303 = vmatpush1.bf16.msra.mxu0 %v2782
        %3304 = vmatprep.subr.bf16.mxu0 %v2791
        %3305 = vmatpush1.bf16.msra.mxu0 %v2790
        %3306 = vmatprep.subr.bf16.mxu0 %v2799
        %3307 = vmatpush1.bf16.msra.mxu0 %v2798
        %3308 = vmatprep.subr.bf16.mxu0 %v2807
        %3309 = vmatpush1.bf16.msra.mxu0 %v2806
        %3310 = vmatprep.subr.bf16.mxu0 %v2815
        %3311 = vmatpush1.bf16.msra.mxu0 %v2814
        %3312 = vmatprep.subr.bf16.mxu0 %v2823
        %3313 = vmatpush1.bf16.msra.mxu0 %v2822
        %3314 = vmatprep.subr.bf16.mxu0 %v2831
        %3315 = vmatpush1.bf16.msra.mxu0 %v2830
        %3316 = vmatprep.subr.bf16.mxu0 %v2839
        %3317 = vmatpush1.bf16.msra.mxu0 %v2838
        %3318 = vmatprep.subr.bf16.mxu0 %v2847
        %3319 = vmatpush1.bf16.msra.mxu0 %v2846
        %3320 = vmatprep.subr.bf16.mxu0 %v2855
        %3321 = vmatpush1.bf16.msra.mxu0 %v2854
        %3322 = vmatprep.subr.bf16.mxu0 %v2863
        %3323 = vmatpush1.bf16.msra.mxu0 %v2862
        %3324 = vmatprep.subr.bf16.mxu0 %v2871
        %3325 = vmatpush1.bf16.msra.mxu0 %v2870
        %3326 = vmatprep.subr.bf16.mxu0 %v2879
        %3327 = vmatpush1.bf16.msra.mxu0 %v2878
        %3328 = vmatprep.subr.bf16.mxu0 %v2887
        %3329 = vmatpush1.bf16.msra.mxu0 %v2886
        %3330 = vmatprep.subr.bf16.mxu0 %v2895
        %3331 = vmatpush1.bf16.msra.mxu0 %v2894
        %3332 = vmatprep.subr.bf16.mxu0 %v2903
        %3333 = vmatpush1.bf16.msra.mxu0 %v2902
        %3334 = vmatprep.mubr.bf16.mxu0 %v3295
        %3335 = vmatmul.mubr.bf16.gmra.mrb[0].mxu0 %v3294
        %v3336 = vpop.f32.mrb[0].mxu0
        %v3337 = vadd.f32 0.0, %v3336
        %v3338 = vpop.f32.mrb[0].mxu0
        %v3339 = vadd.f32 0.0, %v3338
        %v3340 = vpop.f32.mrb[0].mxu0
        %v3341 = vpop.f32.mrb[0].mxu0
        %3342 = vdwg.mxu0
        %3343 = vmatprep.subr.bf16.mxu0 %v2911
        %3344 = vmatpush1.bf16.msra.mxu0 %v2910
        %3345 = vmatprep.subr.bf16.mxu0 %v2919
        %3346 = vmatpush1.bf16.msra.mxu0 %v2918
        %3347 = vmatprep.subr.bf16.mxu0 %v2927
        %3348 = vmatpush1.bf16.msra.mxu0 %v2926
        %3349 = vmatprep.subr.bf16.mxu0 %v2935
        %3350 = vmatpush1.bf16.msra.mxu0 %v2934
        %3351 = vmatprep.subr.bf16.mxu0 %v2943
        %3352 = vmatpush1.bf16.msra.mxu0 %v2942
        %3353 = vmatprep.subr.bf16.mxu0 %v2951
        %3354 = vmatpush1.bf16.msra.mxu0 %v2950
        %3355 = vmatprep.subr.bf16.mxu0 %v2959
        %3356 = vmatpush1.bf16.msra.mxu0 %v2958
        %3357 = vmatprep.subr.bf16.mxu0 %v2967
        %3358 = vmatpush1.bf16.msra.mxu0 %v2966
        %3359 = vmatprep.subr.bf16.mxu0 %v2975
        %3360 = vmatpush1.bf16.msra.mxu0 %v2974
        %3361 = vmatprep.subr.bf16.mxu0 %v2983
        %3362 = vmatpush1.bf16.msra.mxu0 %v2982
        %3363 = vmatprep.subr.bf16.mxu0 %v2991
        %3364 = vmatpush1.bf16.msra.mxu0 %v2990
        %3365 = vmatprep.subr.bf16.mxu0 %v2999
        %3366 = vmatpush1.bf16.msra.mxu0 %v2998
        %3367 = vmatprep.subr.bf16.mxu0 %v3007
        %3368 = vmatpush1.bf16.msra.mxu0 %v3006
        %3369 = vmatprep.subr.bf16.mxu0 %v3015
        %3370 = vmatpush1.bf16.msra.mxu0 %v3014
        %3371 = vmatprep.subr.bf16.mxu0 %v3023
        %3372 = vmatpush1.bf16.msra.mxu0 %v3022
        %3373 = vmatprep.subr.bf16.mxu0 %v3031
        %3374 = vmatpush1.bf16.msra.mxu0 %v3030
        %3375 = vmatprep.mubr.bf16.mxu0 %v3297
        %3376 = vmatmul.mubr.bf16.gmra.mrb[0].mxu0 %v3296
        %v3377 = vpop.f32.mrb[0].mxu0
        %v3378 = vadd.f32 %v3337, %v3377
        %v3379 = vpop.f32.mrb[0].mxu0
        %v3380 = vadd.f32 %v3339, %v3379
        %v3381 = vpop.f32.mrb[0].mxu0
        %v3382 = vpop.f32.mrb[0].mxu0
        %3383 = vdwg.mxu0
        %3384 = vmatprep.subr.bf16.mxu0 %v3039
        %3385 = vmatpush1.bf16.msra.mxu0 %v3038
        %3386 = vmatprep.subr.bf16.mxu0 %v3047
        %3387 = vmatpush1.bf16.msra.mxu0 %v3046
        %3388 = vmatprep.subr.bf16.mxu0 %v3055
        %3389 = vmatpush1.bf16.msra.mxu0 %v3054
        %3390 = vmatprep.subr.bf16.mxu0 %v3063
        %3391 = vmatpush1.bf16.msra.mxu0 %v3062
        %3392 = vmatprep.subr.bf16.mxu0 %v3071
        %3393 = vmatpush1.bf16.msra.mxu0 %v3070
        %3394 = vmatprep.subr.bf16.mxu0 %v3079
        %3395 = vmatpush1.bf16.msra.mxu0 %v3078
        %3396 = vmatprep.subr.bf16.mxu0 %v3087
        %3397 = vmatpush1.bf16.msra.mxu0 %v3086
        %3398 = vmatprep.subr.bf16.mxu0 %v3095
        %3399 = vmatpush1.bf16.msra.mxu0 %v3094
        %3400 = vmatprep.subr.bf16.mxu0 %v3103
        %3401 = vmatpush1.bf16.msra.mxu0 %v3102
        %3402 = vmatprep.subr.bf16.mxu0 %v3111
        %3403 = vmatpush1.bf16.msra.mxu0 %v3110
        %3404 = vmatprep.subr.bf16.mxu0 %v3119
        %3405 = vmatpush1.bf16.msra.mxu0 %v3118
        %3406 = vmatprep.subr.bf16.mxu0 %v3127
        %3407 = vmatpush1.bf16.msra.mxu0 %v3126
        %3408 = vmatprep.subr.bf16.mxu0 %v3135
        %3409 = vmatpush1.bf16.msra.mxu0 %v3134
        %3410 = vmatprep.subr.bf16.mxu0 %v3143
        %3411 = vmatpush1.bf16.msra.mxu0 %v3142
        %3412 = vmatprep.subr.bf16.mxu0 %v3151
        %3413 = vmatpush1.bf16.msra.mxu0 %v3150
        %3414 = vmatprep.subr.bf16.mxu0 %v3159
        %3415 = vmatpush1.bf16.msra.mxu0 %v3158
        %3416 = vmatprep.mubr.bf16.mxu0 %v3299
        %3417 = vmatmul.mubr.bf16.gmra.mrb[0].mxu0 %v3298
        %v3418 = vpop.f32.mrb[0].mxu0
        %v3419 = vadd.f32 %v3378, %v3418
        %v3420 = vpop.f32.mrb[0].mxu0
        %v3421 = vadd.f32 %v3380, %v3420
        %v3422 = vpop.f32.mrb[0].mxu0
        %v3423 = vpop.f32.mrb[0].mxu0
        %3424 = vdwg.mxu0
        %3425 = vmatprep.subr.bf16.mxu0 %v3167
        %3426 = vmatpush1.bf16.msra.mxu0 %v3166
        %3427 = vmatprep.subr.bf16.mxu0 %v3175
        %3428 = vmatpush1.bf16.msra.mxu0 %v3174
        %3429 = vmatprep.subr.bf16.mxu0 %v3183
        %3430 = vmatpush1.bf16.msra.mxu0 %v3182
        %3431 = vmatprep.subr.bf16.mxu0 %v3191
        %3432 = vmatpush1.bf16.msra.mxu0 %v3190
        %3433 = vmatprep.subr.bf16.mxu0 %v3199
        %3434 = vmatpush1.bf16.msra.mxu0 %v3198
        %3435 = vmatprep.subr.bf16.mxu0 %v3207
        %3436 = vmatpush1.bf16.msra.mxu0 %v3206
        %3437 = vmatprep.subr.bf16.mxu0 %v3215
        %3438 = vmatpush1.bf16.msra.mxu0 %v3214
        %3439 = vmatprep.subr.bf16.mxu0 %v3223
        %3440 = vmatpush1.bf16.msra.mxu0 %v3222
        %3441 = vmatprep.subr.bf16.mxu0 %v3231
        %3442 = vmatpush1.bf16.msra.mxu0 %v3230
        %3443 = vmatprep.subr.bf16.mxu0 %v3239
        %3444 = vmatpush1.bf16.msra.mxu0 %v3238
        %3445 = vmatprep.subr.bf16.mxu0 %v3247
        %3446 = vmatpush1.bf16.msra.mxu0 %v3246
        %3447 = vmatprep.subr.bf16.mxu0 %v3255
        %3448 = vmatpush1.bf16.msra.mxu0 %v3254
        %3449 = vmatprep.subr.bf16.mxu0 %v3263
        %3450 = vmatpush1.bf16.msra.mxu0 %v3262
        %3451 = vmatprep.subr.bf16.mxu0 %v3271
        %3452 = vmatpush1.bf16.msra.mxu0 %v3270
        %3453 = vmatprep.subr.bf16.mxu0 %v3279
        %3454 = vmatpush1.bf16.msra.mxu0 %v3278
        %3455 = vmatprep.subr.bf16.mxu0 %v3287
        %3456 = vmatpush1.bf16.msra.mxu0 %v3286
        %3457 = vmatprep.mubr.bf16.mxu0 %v3301
        %3458 = vmatmul.mubr.bf16.gmra.mrb[0].mxu0 %v3300
        %v3459 = vpop.f32.mrb[0].mxu0
        %v3460 = vadd.f32 %v3419, %v3459
        %v3461 = vpop.f32.mrb[0].mxu0
        %v3462 = vadd.f32 %v3421, %v3461
        %v3463 = vpop.f32.mrb[0].mxu0
        %v3464 = vpop.f32.mrb[0].mxu0
        %3465 = vdwg.mxu0
        %3466 = vmatprep.subr.bf16.mxu0 %v2785
        %3467 = vmatpush1.bf16.msra.mxu0 %v2784
        %3468 = vmatprep.subr.bf16.mxu0 %v2793
        %3469 = vmatpush1.bf16.msra.mxu0 %v2792
        %3470 = vmatprep.subr.bf16.mxu0 %v2801
        %3471 = vmatpush1.bf16.msra.mxu0 %v2800
        %3472 = vmatprep.subr.bf16.mxu0 %v2809
        %3473 = vmatpush1.bf16.msra.mxu0 %v2808
        %3474 = vmatprep.subr.bf16.mxu0 %v2817
        %3475 = vmatpush1.bf16.msra.mxu0 %v2816
        %3476 = vmatprep.subr.bf16.mxu0 %v2825
        %3477 = vmatpush1.bf16.msra.mxu0 %v2824
        %3478 = vmatprep.subr.bf16.mxu0 %v2833
        %3479 = vmatpush1.bf16.msra.mxu0 %v2832
        %3480 = vmatprep.subr.bf16.mxu0 %v2841
        %3481 = vmatpush1.bf16.msra.mxu0 %v2840
        %3482 = vmatprep.subr.bf16.mxu0 %v2849
        %3483 = vmatpush1.bf16.msra.mxu0 %v2848
        %3484 = vmatprep.subr.bf16.mxu0 %v2857
        %3485 = vmatpush1.bf16.msra.mxu0 %v2856
        %3486 = vmatprep.subr.bf16.mxu0 %v2865
        %3487 = vmatpush1.bf16.msra.mxu0 %v2864
        %3488 = vmatprep.subr.bf16.mxu0 %v2873
        %3489 = vmatpush1.bf16.msra.mxu0 %v2872
        %3490 = vmatprep.subr.bf16.mxu0 %v2881
        %3491 = vmatpush1.bf16.msra.mxu0 %v2880
        %3492 = vmatprep.subr.bf16.mxu0 %v2889
        %3493 = vmatpush1.bf16.msra.mxu0 %v2888
        %3494 = vmatprep.subr.bf16.mxu0 %v2897
        %3495 = vmatpush1.bf16.msra.mxu0 %v2896
        %3496 = vmatprep.subr.bf16.mxu0 %v2905
        %3497 = vmatpush1.bf16.msra.mxu0 %v2904
        %3498 = vmatprep.mubr.bf16.mxu0 %v3295
        %3499 = vmatmul.mubr.bf16.gmra.mrb[0].mxu0 %v3294
        %v3500 = vpop.f32.mrb[0].mxu0
        %v3501 = vadd.f32 0.0, %v3500
        %v3502 = vpop.f32.mrb[0].mxu0
        %v3503 = vadd.f32 0.0, %v3502
        %v3504 = vpop.f32.mrb[0].mxu0
        %v3505 = vpop.f32.mrb[0].mxu0
        %3506 = vdwg.mxu0
        %3507 = vmatprep.subr.bf16.mxu0 %v2913
        %3508 = vmatpush1.bf16.msra.mxu0 %v2912
        %3509 = vmatprep.subr.bf16.mxu0 %v2921
        %3510 = vmatpush1.bf16.msra.mxu0 %v2920
        %3511 = vmatprep.subr.bf16.mxu0 %v2929
        %3512 = vmatpush1.bf16.msra.mxu0 %v2928
        %3513 = vmatprep.subr.bf16.mxu0 %v2937
        %3514 = vmatpush1.bf16.msra.mxu0 %v2936
        %3515 = vmatprep.subr.bf16.mxu0 %v2945
        %3516 = vmatpush1.bf16.msra.mxu0 %v2944
        %3517 = vmatprep.subr.bf16.mxu0 %v2953
        %3518 = vmatpush1.bf16.msra.mxu0 %v2952
        %3519 = vmatprep.subr.bf16.mxu0 %v2961
        %3520 = vmatpush1.bf16.msra.mxu0 %v2960
        %3521 = vmatprep.subr.bf16.mxu0 %v2969
        %3522 = vmatpush1.bf16.msra.mxu0 %v2968
        %3523 = vmatprep.subr.bf16.mxu0 %v2977
        %3524 = vmatpush1.bf16.msra.mxu0 %v2976
        %3525 = vmatprep.subr.bf16.mxu0 %v2985
        %3526 = vmatpush1.bf16.msra.mxu0 %v2984
        %3527 = vmatprep.subr.bf16.mxu0 %v2993
        %3528 = vmatpush1.bf16.msra.mxu0 %v2992
        %3529 = vmatprep.subr.bf16.mxu0 %v3001
        %3530 = vmatpush1.bf16.msra.mxu0 %v3000
        %3531 = vmatprep.subr.bf16.mxu0 %v3009
        %3532 = vmatpush1.bf16.msra.mxu0 %v3008
        %3533 = vmatprep.subr.bf16.mxu0 %v3017
        %3534 = vmatpush1.bf16.msra.mxu0 %v3016
        %3535 = vmatprep.subr.bf16.mxu0 %v3025
        %3536 = vmatpush1.bf16.msra.mxu0 %v3024
        %3537 = vmatprep.subr.bf16.mxu0 %v3033
        %3538 = vmatpush1.bf16.msra.mxu0 %v3032
        %3539 = vmatprep.mubr.bf16.mxu0 %v3297
        %3540 = vmatmul.mubr.bf16.gmra.mrb[0].mxu0 %v3296
        %v3541 = vpop.f32.mrb[0].mxu0
        %v3542 = vadd.f32 %v3501, %v3541
        %v3543 = vpop.f32.mrb[0].mxu0
        %v3544 = vadd.f32 %v3503, %v3543
        %v3545 = vpop.f32.mrb[0].mxu0
        %v3546 = vpop.f32.mrb[0].mxu0
        %3547 = vdwg.mxu0
        %3548 = vmatprep.subr.bf16.mxu0 %v3041
        %3549 = vmatpush1.bf16.msra.mxu0 %v3040
        %3550 = vmatprep.subr.bf16.mxu0 %v3049
        %3551 = vmatpush1.bf16.msra.mxu0 %v3048
        %3552 = vmatprep.subr.bf16.mxu0 %v3057
        %3553 = vmatpush1.bf16.msra.mxu0 %v3056
        %3554 = vmatprep.subr.bf16.mxu0 %v3065
        %3555 = vmatpush1.bf16.msra.mxu0 %v3064
        %3556 = vmatprep.subr.bf16.mxu0 %v3073
        %3557 = vmatpush1.bf16.msra.mxu0 %v3072
        %3558 = vmatprep.subr.bf16.mxu0 %v3081
        %3559 = vmatpush1.bf16.msra.mxu0 %v3080
        %3560 = vmatprep.subr.bf16.mxu0 %v3089
        %3561 = vmatpush1.bf16.msra.mxu0 %v3088
        %3562 = vmatprep.subr.bf16.mxu0 %v3097
        %3563 = vmatpush1.bf16.msra.mxu0 %v3096
        %3564 = vmatprep.subr.bf16.mxu0 %v3105
        %3565 = vmatpush1.bf16.msra.mxu0 %v3104
        %3566 = vmatprep.subr.bf16.mxu0 %v3113
        %3567 = vmatpush1.bf16.msra.mxu0 %v3112
        %3568 = vmatprep.subr.bf16.mxu0 %v3121
        %3569 = vmatpush1.bf16.msra.mxu0 %v3120
        %3570 = vmatprep.subr.bf16.mxu0 %v3129
        %3571 = vmatpush1.bf16.msra.mxu0 %v3128
        %3572 = vmatprep.subr.bf16.mxu0 %v3137
        %3573 = vmatpush1.bf16.msra.mxu0 %v3136
        %3574 = vmatprep.subr.bf16.mxu0 %v3145
        %3575 = vmatpush1.bf16.msra.mxu0 %v3144
        %3576 = vmatprep.subr.bf16.mxu0 %v3153
        %3577 = vmatpush1.bf16.msra.mxu0 %v3152
        %3578 = vmatprep.subr.bf16.mxu0 %v3161
        %3579 = vmatpush1.bf16.msra.mxu0 %v3160
        %3580 = vmatprep.mubr.bf16.mxu0 %v3299
        %3581 = vmatmul.mubr.bf16.gmra.mrb[0].mxu0 %v3298
        %v3582 = vpop.f32.mrb[0].mxu0
        %v3583 = vadd.f32 %v3542, %v3582
        %v3584 = vpop.f32.mrb[0].mxu0
        %v3585 = vadd.f32 %v3544, %v3584
        %v3586 = vpop.f32.mrb[0].mxu0
        %v3587 = vpop.f32.mrb[0].mxu0
        %3588 = vdwg.mxu0
        %3589 = vmatprep.subr.bf16.mxu0 %v3169
        %3590 = vmatpush1.bf16.msra.mxu0 %v3168
        %3591 = vmatprep.subr.bf16.mxu0 %v3177
        %3592 = vmatpush1.bf16.msra.mxu0 %v3176
        %3593 = vmatprep.subr.bf16.mxu0 %v3185
        %3594 = vmatpush1.bf16.msra.mxu0 %v3184
        %3595 = vmatprep.subr.bf16.mxu0 %v3193
        %3596 = vmatpush1.bf16.msra.mxu0 %v3192
        %3597 = vmatprep.subr.bf16.mxu0 %v3201
        %3598 = vmatpush1.bf16.msra.mxu0 %v3200
        %3599 = vmatprep.subr.bf16.mxu0 %v3209
        %3600 = vmatpush1.bf16.msra.mxu0 %v3208
        %3601 = vmatprep.subr.bf16.mxu0 %v3217
        %3602 = vmatpush1.bf16.msra.mxu0 %v3216
        %3603 = vmatprep.subr.bf16.mxu0 %v3225
        %3604 = vmatpush1.bf16.msra.mxu0 %v3224
        %3605 = vmatprep.subr.bf16.mxu0 %v3233
        %3606 = vmatpush1.bf16.msra.mxu0 %v3232
        %3607 = vmatprep.subr.bf16.mxu0 %v3241
        %3608 = vmatpush1.bf16.msra.mxu0 %v3240
        %3609 = vmatprep.subr.bf16.mxu0 %v3249
        %3610 = vmatpush1.bf16.msra.mxu0 %v3248
        %3611 = vmatprep.subr.bf16.mxu0 %v3257
        %3612 = vmatpush1.bf16.msra.mxu0 %v3256
        %3613 = vmatprep.subr.bf16.mxu0 %v3265
        %3614 = vmatpush1.bf16.msra.mxu0 %v3264
        %3615 = vmatprep.subr.bf16.mxu0 %v3273
        %3616 = vmatpush1.bf16.msra.mxu0 %v3272
        %3617 = vmatprep.subr.bf16.mxu0 %v3281
        %3618 = vmatpush1.bf16.msra.mxu0 %v3280
        %3619 = vmatprep.subr.bf16.mxu0 %v3289
        %3620 = vmatpush1.bf16.msra.mxu0 %v3288
        %3621 = vmatprep.mubr.bf16.mxu0 %v3301
        %3622 = vmatmul.mubr.bf16.gmra.mrb[0].mxu0 %v3300
        %v3623 = vpop.f32.mrb[0].mxu0
        %v3624 = vadd.f32 %v3583, %v3623
        %v3625 = vpop.f32.mrb[0].mxu0
        %v3626 = vadd.f32 %v3585, %v3625
        %v3627 = vpop.f32.mrb[0].mxu0
        %v3628 = vpop.f32.mrb[0].mxu0
        %3629 = vdwg.mxu0
        %3630 = vmatprep.subr.bf16.mxu0 %v2787
        %3631 = vmatpush1.bf16.msra.mxu0 %v2786
        %3632 = vmatprep.subr.bf16.mxu0 %v2795
        %3633 = vmatpush1.bf16.msra.mxu0 %v2794
        %3634 = vmatprep.subr.bf16.mxu0 %v2803
        %3635 = vmatpush1.bf16.msra.mxu0 %v2802
        %3636 = vmatprep.subr.bf16.mxu0 %v2811
        %3637 = vmatpush1.bf16.msra.mxu0 %v2810
        %3638 = vmatprep.subr.bf16.mxu0 %v2819
        %3639 = vmatpush1.bf16.msra.mxu0 %v2818
        %3640 = vmatprep.subr.bf16.mxu0 %v2827
        %3641 = vmatpush1.bf16.msra.mxu0 %v2826
        %3642 = vmatprep.subr.bf16.mxu0 %v2835
        %3643 = vmatpush1.bf16.msra.mxu0 %v2834
        %3644 = vmatprep.subr.bf16.mxu0 %v2843
        %3645 = vmatpush1.bf16.msra.mxu0 %v2842
        %3646 = vmatprep.subr.bf16.mxu0 %v2851
        %3647 = vmatpush1.bf16.msra.mxu0 %v2850
        %3648 = vmatprep.subr.bf16.mxu0 %v2859
        %3649 = vmatpush1.bf16.msra.mxu0 %v2858
        %3650 = vmatprep.subr.bf16.mxu0 %v2867
        %3651 = vmatpush1.bf16.msra.mxu0 %v2866
        %3652 = vmatprep.subr.bf16.mxu0 %v2875
        %3653 = vmatpush1.bf16.msra.mxu0 %v2874
        %3654 = vmatprep.subr.bf16.mxu0 %v2883
        %3655 = vmatpush1.bf16.msra.mxu0 %v2882
        %3656 = vmatprep.subr.bf16.mxu0 %v2891
        %3657 = vmatpush1.bf16.msra.mxu0 %v2890
        %3658 = vmatprep.subr.bf16.mxu0 %v2899
        %3659 = vmatpush1.bf16.msra.mxu0 %v2898
        %3660 = vmatprep.subr.bf16.mxu0 %v2907
        %3661 = vmatpush1.bf16.msra.mxu0 %v2906
        %3662 = vmatprep.mubr.bf16.mxu0 %v3295
        %3663 = vmatmul.mubr.bf16.gmra.mrb[0].mxu0 %v3294
        %v3664 = vpop.f32.mrb[0].mxu0
        %v3665 = vadd.f32 0.0, %v3664
        %v3666 = vpop.f32.mrb[0].mxu0
        %v3667 = vadd.f32 0.0, %v3666
        %v3668 = vpop.f32.mrb[0].mxu0
        %v3669 = vpop.f32.mrb[0].mxu0
        %3670 = vdwg.mxu0
        %3671 = vmatprep.subr.bf16.mxu0 %v2915
        %3672 = vmatpush1.bf16.msra.mxu0 %v2914
        %3673 = vmatprep.subr.bf16.mxu0 %v2923
        %3674 = vmatpush1.bf16.msra.mxu0 %v2922
        %3675 = vmatprep.subr.bf16.mxu0 %v2931
        %3676 = vmatpush1.bf16.msra.mxu0 %v2930
        %3677 = vmatprep.subr.bf16.mxu0 %v2939
        %3678 = vmatpush1.bf16.msra.mxu0 %v2938
        %3679 = vmatprep.subr.bf16.mxu0 %v2947
        %3680 = vmatpush1.bf16.msra.mxu0 %v2946
        %3681 = vmatprep.subr.bf16.mxu0 %v2955
        %3682 = vmatpush1.bf16.msra.mxu0 %v2954
        %3683 = vmatprep.subr.bf16.mxu0 %v2963
        %3684 = vmatpush1.bf16.msra.mxu0 %v2962
        %3685 = vmatprep.subr.bf16.mxu0 %v2971
        %3686 = vmatpush1.bf16.msra.mxu0 %v2970
        %3687 = vmatprep.subr.bf16.mxu0 %v2979
        %3688 = vmatpush1.bf16.msra.mxu0 %v2978
        %3689 = vmatprep.subr.bf16.mxu0 %v2987
        %3690 = vmatpush1.bf16.msra.mxu0 %v2986
        %3691 = vmatprep.subr.bf16.mxu0 %v2995
        %3692 = vmatpush1.bf16.msra.mxu0 %v2994
        %3693 = vmatprep.subr.bf16.mxu0 %v3003
        %3694 = vmatpush1.bf16.msra.mxu0 %v3002
        %3695 = vmatprep.subr.bf16.mxu0 %v3011
        %3696 = vmatpush1.bf16.msra.mxu0 %v3010
        %3697 = vmatprep.subr.bf16.mxu0 %v3019
        %3698 = vmatpush1.bf16.msra.mxu0 %v3018
        %3699 = vmatprep.subr.bf16.mxu0 %v3027
        %3700 = vmatpush1.bf16.msra.mxu0 %v3026
        %3701 = vmatprep.subr.bf16.mxu0 %v3035
        %3702 = vmatpush1.bf16.msra.mxu0 %v3034
        %3703 = vmatprep.mubr.bf16.mxu0 %v3297
        %3704 = vmatmul.mubr.bf16.gmra.mrb[0].mxu0 %v3296
        %v3705 = vpop.f32.mrb[0].mxu0
        %v3706 = vadd.f32 %v3665, %v3705
        %v3707 = vpop.f32.mrb[0].mxu0
        %v3708 = vadd.f32 %v3667, %v3707
        %v3709 = vpop.f32.mrb[0].mxu0
        %v3710 = vpop.f32.mrb[0].mxu0
        %3711 = vdwg.mxu0
        %3712 = vmatprep.subr.bf16.mxu0 %v3043
        %3713 = vmatpush1.bf16.msra.mxu0 %v3042
        %3714 = vmatprep.subr.bf16.mxu0 %v3051
        %3715 = vmatpush1.bf16.msra.mxu0 %v3050
        %3716 = vmatprep.subr.bf16.mxu0 %v3059
        %3717 = vmatpush1.bf16.msra.mxu0 %v3058
        %3718 = vmatprep.subr.bf16.mxu0 %v3067
        %3719 = vmatpush1.bf16.msra.mxu0 %v3066
        %3720 = vmatprep.subr.bf16.mxu0 %v3075
        %3721 = vmatpush1.bf16.msra.mxu0 %v3074
        %3722 = vmatprep.subr.bf16.mxu0 %v3083
        %3723 = vmatpush1.bf16.msra.mxu0 %v3082
        %3724 = vmatprep.subr.bf16.mxu0 %v3091
        %3725 = vmatpush1.bf16.msra.mxu0 %v3090
        %3726 = vmatprep.subr.bf16.mxu0 %v3099
        %3727 = vmatpush1.bf16.msra.mxu0 %v3098
        %3728 = vmatprep.subr.bf16.mxu0 %v3107
        %3729 = vmatpush1.bf16.msra.mxu0 %v3106
        %3730 = vmatprep.subr.bf16.mxu0 %v3115
        %3731 = vmatpush1.bf16.msra.mxu0 %v3114
        %3732 = vmatprep.subr.bf16.mxu0 %v3123
        %3733 = vmatpush1.bf16.msra.mxu0 %v3122
        %3734 = vmatprep.subr.bf16.mxu0 %v3131
        %3735 = vmatpush1.bf16.msra.mxu0 %v3130
        %3736 = vmatprep.subr.bf16.mxu0 %v3139
        %3737 = vmatpush1.bf16.msra.mxu0 %v3138
        %3738 = vmatprep.subr.bf16.mxu0 %v3147
        %3739 = vmatpush1.bf16.msra.mxu0 %v3146
        %3740 = vmatprep.subr.bf16.mxu0 %v3155
        %3741 = vmatpush1.bf16.msra.mxu0 %v3154
        %3742 = vmatprep.subr.bf16.mxu0 %v3163
        %3743 = vmatpush1.bf16.msra.mxu0 %v3162
        %3744 = vmatprep.mubr.bf16.mxu0 %v3299
        %3745 = vmatmul.mubr.bf16.gmra.mrb[0].mxu0 %v3298
        %v3746 = vpop.f32.mrb[0].mxu0
        %v3747 = vadd.f32 %v3706, %v3746
        %v3748 = vpop.f32.mrb[0].mxu0
        %v3749 = vadd.f32 %v3708, %v3748
        %v3750 = vpop.f32.mrb[0].mxu0
        %v3751 = vpop.f32.mrb[0].mxu0
        %3752 = vdwg.mxu0
        %3753 = vmatprep.subr.bf16.mxu0 %v3171
        %3754 = vmatpush1.bf16.msra.mxu0 %v3170
        %3755 = vmatprep.subr.bf16.mxu0 %v3179
        %3756 = vmatpush1.bf16.msra.mxu0 %v3178
        %3757 = vmatprep.subr.bf16.mxu0 %v3187
        %3758 = vmatpush1.bf16.msra.mxu0 %v3186
        %3759 = vmatprep.subr.bf16.mxu0 %v3195
        %3760 = vmatpush1.bf16.msra.mxu0 %v3194
        %3761 = vmatprep.subr.bf16.mxu0 %v3203
        %3762 = vmatpush1.bf16.msra.mxu0 %v3202
        %3763 = vmatprep.subr.bf16.mxu0 %v3211
        %3764 = vmatpush1.bf16.msra.mxu0 %v3210
        %3765 = vmatprep.subr.bf16.mxu0 %v3219
        %3766 = vmatpush1.bf16.msra.mxu0 %v3218
        %3767 = vmatprep.subr.bf16.mxu0 %v3227
        %3768 = vmatpush1.bf16.msra.mxu0 %v3226
        %3769 = vmatprep.subr.bf16.mxu0 %v3235
        %3770 = vmatpush1.bf16.msra.mxu0 %v3234
        %3771 = vmatprep.subr.bf16.mxu0 %v3243
        %3772 = vmatpush1.bf16.msra.mxu0 %v3242
        %3773 = vmatprep.subr.bf16.mxu0 %v3251
        %3774 = vmatpush1.bf16.msra.mxu0 %v3250
        %3775 = vmatprep.subr.bf16.mxu0 %v3259
        %3776 = vmatpush1.bf16.msra.mxu0 %v3258
        %3777 = vmatprep.subr.bf16.mxu0 %v3267
        %3778 = vmatpush1.bf16.msra.mxu0 %v3266
        %3779 = vmatprep.subr.bf16.mxu0 %v3275
        %3780 = vmatpush1.bf16.msra.mxu0 %v3274
        %3781 = vmatprep.subr.bf16.mxu0 %v3283
        %3782 = vmatpush1.bf16.msra.mxu0 %v3282
        %3783 = vmatprep.subr.bf16.mxu0 %v3291
        %3784 = vmatpush1.bf16.msra.mxu0 %v3290
        %3785 = vmatprep.mubr.bf16.mxu0 %v3301
        %3786 = vmatmul.mubr.bf16.gmra.mrb[0].mxu0 %v3300
        %v3787 = vpop.f32.mrb[0].mxu0
        %v3788 = vadd.f32 %v3747, %v3787
        %v3789 = vpop.f32.mrb[0].mxu0
        %v3790 = vadd.f32 %v3749, %v3789
        %v3791 = vpop.f32.mrb[0].mxu0
        %v3792 = vpop.f32.mrb[0].mxu0
        %3793 = vdwg.mxu0
        %3794 = vmatprep.subr.bf16.mxu0 %v2789
        %3795 = vmatpush1.bf16.msra.mxu0 %v2788
        %3796 = vmatprep.subr.bf16.mxu0 %v2797
        %3797 = vmatpush1.bf16.msra.mxu0 %v2796
        %3798 = vmatprep.subr.bf16.mxu0 %v2805
        %3799 = vmatpush1.bf16.msra.mxu0 %v2804
        %3800 = vmatprep.subr.bf16.mxu0 %v2813
        %3801 = vmatpush1.bf16.msra.mxu0 %v2812
        %3802 = vmatprep.subr.bf16.mxu0 %v2821
        %3803 = vmatpush1.bf16.msra.mxu0 %v2820
        %3804 = vmatprep.subr.bf16.mxu0 %v2829
        %3805 = vmatpush1.bf16.msra.mxu0 %v2828
        %3806 = vmatprep.subr.bf16.mxu0 %v2837
        %3807 = vmatpush1.bf16.msra.mxu0 %v2836
        %3808 = vmatprep.subr.bf16.mxu0 %v2845
        %3809 = vmatpush1.bf16.msra.mxu0 %v2844
        %3810 = vmatprep.subr.bf16.mxu0 %v2853
        %3811 = vmatpush1.bf16.msra.mxu0 %v2852
        %3812 = vmatprep.subr.bf16.mxu0 %v2861
        %3813 = vmatpush1.bf16.msra.mxu0 %v2860
        %3814 = vmatprep.subr.bf16.mxu0 %v2869
        %3815 = vmatpush1.bf16.msra.mxu0 %v2868
        %3816 = vmatprep.subr.bf16.mxu0 %v2877
        %3817 = vmatpush1.bf16.msra.mxu0 %v2876
        %3818 = vmatprep.subr.bf16.mxu0 %v2885
        %3819 = vmatpush1.bf16.msra.mxu0 %v2884
        %3820 = vmatprep.subr.bf16.mxu0 %v2893
        %3821 = vmatpush1.bf16.msra.mxu0 %v2892
        %3822 = vmatprep.subr.bf16.mxu0 %v2901
        %3823 = vmatpush1.bf16.msra.mxu0 %v2900
        %3824 = vmatprep.subr.bf16.mxu0 %v2909
        %3825 = vmatpush1.bf16.msra.mxu0 %v2908
        %3826 = vmatprep.mubr.bf16.mxu0 %v3295
        %3827 = vmatmul.mubr.bf16.gmra.mrb[0].mxu0 %v3294
        %v3828 = vpop.f32.mrb[0].mxu0
        %v3829 = vadd.f32 0.0, %v3828
        %v3830 = vpop.f32.mrb[0].mxu0
        %v3831 = vadd.f32 0.0, %v3830
        %v3832 = vpop.f32.mrb[0].mxu0
        %v3833 = vpop.f32.mrb[0].mxu0
        %3834 = vdwg.mxu0
        %3835 = vmatprep.subr.bf16.mxu0 %v2917
        %3836 = vmatpush1.bf16.msra.mxu0 %v2916
        %3837 = vmatprep.subr.bf16.mxu0 %v2925
        %3838 = vmatpush1.bf16.msra.mxu0 %v2924
        %3839 = vmatprep.subr.bf16.mxu0 %v2933
        %3840 = vmatpush1.bf16.msra.mxu0 %v2932
        %3841 = vmatprep.subr.bf16.mxu0 %v2941
        %3842 = vmatpush1.bf16.msra.mxu0 %v2940
        %3843 = vmatprep.subr.bf16.mxu0 %v2949
        %3844 = vmatpush1.bf16.msra.mxu0 %v2948
        %3845 = vmatprep.subr.bf16.mxu0 %v2957
        %3846 = vmatpush1.bf16.msra.mxu0 %v2956
        %3847 = vmatprep.subr.bf16.mxu0 %v2965
        %3848 = vmatpush1.bf16.msra.mxu0 %v2964
        %3849 = vmatprep.subr.bf16.mxu0 %v2973
        %3850 = vmatpush1.bf16.msra.mxu0 %v2972
        %3851 = vmatprep.subr.bf16.mxu0 %v2981
        %3852 = vmatpush1.bf16.msra.mxu0 %v2980
        %3853 = vmatprep.subr.bf16.mxu0 %v2989
        %3854 = vmatpush1.bf16.msra.mxu0 %v2988
        %3855 = vmatprep.subr.bf16.mxu0 %v2997
        %3856 = vmatpush1.bf16.msra.mxu0 %v2996
        %3857 = vmatprep.subr.bf16.mxu0 %v3005
        %3858 = vmatpush1.bf16.msra.mxu0 %v3004
        %3859 = vmatprep.subr.bf16.mxu0 %v3013
        %3860 = vmatpush1.bf16.msra.mxu0 %v3012
        %3861 = vmatprep.subr.bf16.mxu0 %v3021
        %3862 = vmatpush1.bf16.msra.mxu0 %v3020
        %3863 = vmatprep.subr.bf16.mxu0 %v3029
        %3864 = vmatpush1.bf16.msra.mxu0 %v3028
        %3865 = vmatprep.subr.bf16.mxu0 %v3037
        %3866 = vmatpush1.bf16.msra.mxu0 %v3036
        %3867 = vmatprep.mubr.bf16.mxu0 %v3297
        %3868 = vmatmul.mubr.bf16.gmra.mrb[0].mxu0 %v3296
        %v3869 = vpop.f32.mrb[0].mxu0
        %v3870 = vadd.f32 %v3829, %v3869
        %v3871 = vpop.f32.mrb[0].mxu0
        %v3872 = vadd.f32 %v3831, %v3871
        %v3873 = vpop.f32.mrb[0].mxu0
        %v3874 = vpop.f32.mrb[0].mxu0
        %3875 = vdwg.mxu0
        %3876 = vmatprep.subr.bf16.mxu0 %v3045
        %3877 = vmatpush1.bf16.msra.mxu0 %v3044
        %3878 = vmatprep.subr.bf16.mxu0 %v3053
        %3879 = vmatpush1.bf16.msra.mxu0 %v3052
        %3880 = vmatprep.subr.bf16.mxu0 %v3061
        %3881 = vmatpush1.bf16.msra.mxu0 %v3060
        %3882 = vmatprep.subr.bf16.mxu0 %v3069
        %3883 = vmatpush1.bf16.msra.mxu0 %v3068
        %3884 = vmatprep.subr.bf16.mxu0 %v3077
        %3885 = vmatpush1.bf16.msra.mxu0 %v3076
        %3886 = vmatprep.subr.bf16.mxu0 %v3085
        %3887 = vmatpush1.bf16.msra.mxu0 %v3084
        %3888 = vmatprep.subr.bf16.mxu0 %v3093
        %3889 = vmatpush1.bf16.msra.mxu0 %v3092
        %3890 = vmatprep.subr.bf16.mxu0 %v3101
        %3891 = vmatpush1.bf16.msra.mxu0 %v3100
        %3892 = vmatprep.subr.bf16.mxu0 %v3109
        %3893 = vmatpush1.bf16.msra.mxu0 %v3108
        %3894 = vmatprep.subr.bf16.mxu0 %v3117
        %3895 = vmatpush1.bf16.msra.mxu0 %v3116
        %3896 = vmatprep.subr.bf16.mxu0 %v3125
        %3897 = vmatpush1.bf16.msra.mxu0 %v3124
        %3898 = vmatprep.subr.bf16.mxu0 %v3133
        %3899 = vmatpush1.bf16.msra.mxu0 %v3132
        %3900 = vmatprep.subr.bf16.mxu0 %v3141
        %3901 = vmatpush1.bf16.msra.mxu0 %v3140
        %3902 = vmatprep.subr.bf16.mxu0 %v3149
        %3903 = vmatpush1.bf16.msra.mxu0 %v3148
        %3904 = vmatprep.subr.bf16.mxu0 %v3157
        %3905 = vmatpush1.bf16.msra.mxu0 %v3156
        %3906 = vmatprep.subr.bf16.mxu0 %v3165
        %3907 = vmatpush1.bf16.msra.mxu0 %v3164
        %3908 = vmatprep.mubr.bf16.mxu0 %v3299
        %3909 = vmatmul.mubr.bf16.gmra.mrb[0].mxu0 %v3298
        %v3910 = vpop.f32.mrb[0].mxu0
        %v3911 = vadd.f32 %v3870, %v3910
        %v3912 = vpop.f32.mrb[0].mxu0
        %v3913 = vadd.f32 %v3872, %v3912
        %v3914 = vpop.f32.mrb[0].mxu0
        %v3915 = vpop.f32.mrb[0].mxu0
        %3916 = vdwg.mxu0
        %3917 = vmatprep.subr.bf16.mxu0 %v3173
        %3918 = vmatpush1.bf16.msra.mxu0 %v3172
        %3919 = vmatprep.subr.bf16.mxu0 %v3181
        %3920 = vmatpush1.bf16.msra.mxu0 %v3180
        %3921 = vmatprep.subr.bf16.mxu0 %v3189
        %3922 = vmatpush1.bf16.msra.mxu0 %v3188
        %3923 = vmatprep.subr.bf16.mxu0 %v3197
        %3924 = vmatpush1.bf16.msra.mxu0 %v3196
        %3925 = vmatprep.subr.bf16.mxu0 %v3205
        %3926 = vmatpush1.bf16.msra.mxu0 %v3204
        %3927 = vmatprep.subr.bf16.mxu0 %v3213
        %3928 = vmatpush1.bf16.msra.mxu0 %v3212
        %3929 = vmatprep.subr.bf16.mxu0 %v3221
        %3930 = vmatpush1.bf16.msra.mxu0 %v3220
        %3931 = vmatprep.subr.bf16.mxu0 %v3229
        %3932 = vmatpush1.bf16.msra.mxu0 %v3228
        %3933 = vmatprep.subr.bf16.mxu0 %v3237
        %3934 = vmatpush1.bf16.msra.mxu0 %v3236
        %3935 = vmatprep.subr.bf16.mxu0 %v3245
        %3936 = vmatpush1.bf16.msra.mxu0 %v3244
        %3937 = vmatprep.subr.bf16.mxu0 %v3253
        %3938 = vmatpush1.bf16.msra.mxu0 %v3252
        %3939 = vmatprep.subr.bf16.mxu0 %v3261
        %3940 = vmatpush1.bf16.msra.mxu0 %v3260
        %3941 = vmatprep.subr.bf16.mxu0 %v3269
        %3942 = vmatpush1.bf16.msra.mxu0 %v3268
        %3943 = vmatprep.subr.bf16.mxu0 %v3277
        %3944 = vmatpush1.bf16.msra.mxu0 %v3276
        %3945 = vmatprep.subr.bf16.mxu0 %v3285
        %3946 = vmatpush1.bf16.msra.mxu0 %v3284
        %3947 = vmatprep.subr.bf16.mxu0 %v3293
        %3948 = vmatpush1.bf16.msra.mxu0 %v3292
        %3949 = vmatprep.mubr.bf16.mxu0 %v3301
        %3950 = vmatmul.mubr.bf16.gmra.mrb[0].mxu0 %v3300
        %v3951 = vpop.f32.mrb[0].mxu0
        %v3952 = vadd.f32 %v3911, %v3951
        %v3953 = vpop.f32.mrb[0].mxu0
        %v3954 = vadd.f32 %v3913, %v3953
        %v3955 = vpop.f32.mrb[0].mxu0
        %v3956 = vpop.f32.mrb[0].mxu0
        %3957 = vdwg.mxu0
        %v3959 = vlaneseq
        %v3960 = vshrl.u32 %v3959, 7
        %v3961 = vsub.s32 0, %v3960
        %v3962 = vrot.slane %v1127, %v3961
        %v3963 = vlaneseq
        %v3964 = vshrl.u32 %v3963, 7
        %v3965 = vsub.s32 1, %v3964
        %v3966 = vrot.slane %v1127, %v3965
        %v3967 = vlaneseq
        %v3968 = vshrl.u32 %v3967, 7
        %v3969 = vsub.s32 2, %v3968
        %v3970 = vrot.slane %v1127, %v3969
        %v3971 = vlaneseq
        %v3972 = vshrl.u32 %v3971, 7
        %v3973 = vsub.s32 3, %v3972
        %v3974 = vrot.slane %v1127, %v3973
        %v3975 = vlaneseq
        %v3976 = vshrl.u32 %v3975, 7
        %v3977 = vsub.s32 4, %v3976
        %v3978 = vrot.slane %v1127, %v3977
        %v3979 = vlaneseq
        %v3980 = vshrl.u32 %v3979, 7
        %v3981 = vsub.s32 5, %v3980
        %v3982 = vrot.slane %v1127, %v3981
        %v3983 = vlaneseq
        %v3984 = vshrl.u32 %v3983, 7
        %v3985 = vsub.s32 6, %v3984
        %v3986 = vrot.slane %v1127, %v3985
        %v3987 = vlaneseq
        %v3988 = vshrl.u32 %v3987, 7
        %v3989 = vsub.s32 7, %v3988
        %v3990 = vrot.slane %v1127, %v3989
        %v3999 = vmul.f32 %v3460, %v3962
        %v4000 = vmul.f32 %v3462, %v3966
        %v4001 = vmul.f32 %v3624, %v3970
        %v4002 = vmul.f32 %v3626, %v3974
        %v4003 = vmul.f32 %v3788, %v3978
        %v4004 = vmul.f32 %v3790, %v3982
        %v4005 = vmul.f32 %v3952, %v3986
        %v4006 = vmul.f32 %v3954, %v3990
        %v4008 = vlaneseq
        %v4009 = vshrl.u32 %v4008, 7
        %v4010 = vsub.s32 0, %v4009
        %v4011 = vrot.slane %v1128, %v4010
        %v4012 = vlaneseq
        %v4013 = vshrl.u32 %v4012, 7
        %v4014 = vsub.s32 1, %v4013
        %v4015 = vrot.slane %v1128, %v4014
        %v4016 = vlaneseq
        %v4017 = vshrl.u32 %v4016, 7
        %v4018 = vsub.s32 2, %v4017
        %v4019 = vrot.slane %v1128, %v4018
        %v4020 = vlaneseq
        %v4021 = vshrl.u32 %v4020, 7
        %v4022 = vsub.s32 3, %v4021
        %v4023 = vrot.slane %v1128, %v4022
        %v4024 = vlaneseq
        %v4025 = vshrl.u32 %v4024, 7
        %v4026 = vsub.s32 4, %v4025
        %v4027 = vrot.slane %v1128, %v4026
        %v4028 = vlaneseq
        %v4029 = vshrl.u32 %v4028, 7
        %v4030 = vsub.s32 5, %v4029
        %v4031 = vrot.slane %v1128, %v4030
        %v4032 = vlaneseq
        %v4033 = vshrl.u32 %v4032, 7
        %v4034 = vsub.s32 6, %v4033
        %v4035 = vrot.slane %v1128, %v4034
        %v4036 = vlaneseq
        %v4037 = vshrl.u32 %v4036, 7
        %v4038 = vsub.s32 7, %v4037
        %v4039 = vrot.slane %v1128, %v4038
        %v4048 = vadd.f32 %v3999, %v4011
        %v4049 = vadd.f32 %v4000, %v4015
        %v4050 = vadd.f32 %v4001, %v4019
        %v4051 = vadd.f32 %v4002, %v4023
        %v4052 = vadd.f32 %v4003, %v4027
        %v4053 = vadd.f32 %v4004, %v4031
        %v4054 = vadd.f32 %v4005, %v4035
        %v4055 = vadd.f32 %v4006, %v4039
        %v4056 = vmax.f32 %v4048, 0.0
        %v4057 = vmax.f32 %v4049, 0.0
        %v4058 = vmax.f32 %v4050, 0.0
        %v4059 = vmax.f32 %v4051, 0.0
        %v4060 = vmax.f32 %v4052, 0.0
        %v4061 = vmax.f32 %v4053, 0.0
        %v4062 = vmax.f32 %v4054, 0.0
        %v4063 = vmax.f32 %v4055, 0.0
        %v4064 = vpack.c.bf16 %v4056, %v4056
        %v4065 = vpack.c.bf16 %v4057, %v4057
        %v4066 = vpack.c.bf16 %v4058, %v4058
        %v4067 = vpack.c.bf16 %v4059, %v4059
        %v4068 = vpack.c.bf16 %v4060, %v4060
        %v4069 = vpack.c.bf16 %v4061, %v4061
        %v4070 = vpack.c.bf16 %v4062, %v4062
        %v4071 = vpack.c.bf16 %v4063, %v4063
        %v4072 = vunpack.c.l.s8.bf16 %v1129
        %v4073 = vunpack.c.l.s8.bf16 %v1130
        %v4074 = vunpack.c.l.s8.bf16 %v1131
        %v4075 = vunpack.c.l.s8.bf16 %v1132
        %v4076 = vunpack.c.h.s8.bf16 %v1129
        %v4077 = vunpack.c.h.s8.bf16 %v1130
        %v4078 = vunpack.c.h.s8.bf16 %v1131
        %v4079 = vunpack.c.h.s8.bf16 %v1132
        %v4080 = vunpack.c.l.s8.bf16 %v1133
        %v4081 = vunpack.c.l.s8.bf16 %v1134
        %v4082 = vunpack.c.l.s8.bf16 %v1135
        %v4083 = vunpack.c.l.s8.bf16 %v1136
        %v4084 = vunpack.c.h.s8.bf16 %v1133
        %v4085 = vunpack.c.h.s8.bf16 %v1134
        %v4086 = vunpack.c.h.s8.bf16 %v1135
        %v4087 = vunpack.c.h.s8.bf16 %v1136
        %v4088 = vunpack.c.l.s8.bf16 %v1137
        %v4089 = vunpack.c.l.s8.bf16 %v1138
        %v4090 = vunpack.c.l.s8.bf16 %v1139
        %v4091 = vunpack.c.l.s8.bf16 %v1140
        %v4092 = vunpack.c.h.s8.bf16 %v1137
        %v4093 = vunpack.c.h.s8.bf16 %v1138
        %v4094 = vunpack.c.h.s8.bf16 %v1139
        %v4095 = vunpack.c.h.s8.bf16 %v1140
        %v4096 = vunpack.c.l.s8.bf16 %v1141
        %v4097 = vunpack.c.l.s8.bf16 %v1142
        %v4098 = vunpack.c.l.s8.bf16 %v1143
        %v4099 = vunpack.c.l.s8.bf16 %v1144
        %v4100 = vunpack.c.h.s8.bf16 %v1141
        %v4101 = vunpack.c.h.s8.bf16 %v1142
        %v4102 = vunpack.c.h.s8.bf16 %v1143
        %v4103 = vunpack.c.h.s8.bf16 %v1144
        %v4104 = vunpack.c.l.s8.bf16 %v1145
        %v4105 = vunpack.c.l.s8.bf16 %v1146
        %v4106 = vunpack.c.l.s8.bf16 %v1147
        %v4107 = vunpack.c.l.s8.bf16 %v1148
        %v4108 = vunpack.c.h.s8.bf16 %v1145
        %v4109 = vunpack.c.h.s8.bf16 %v1146
        %v4110 = vunpack.c.h.s8.bf16 %v1147
        %v4111 = vunpack.c.h.s8.bf16 %v1148
        %v4112 = vunpack.c.l.s8.bf16 %v1149
        %v4113 = vunpack.c.l.s8.bf16 %v1150
        %v4114 = vunpack.c.l.s8.bf16 %v1151
        %v4115 = vunpack.c.l.s8.bf16 %v1152
        %v4116 = vunpack.c.h.s8.bf16 %v1149
        %v4117 = vunpack.c.h.s8.bf16 %v1150
        %v4118 = vunpack.c.h.s8.bf16 %v1151
        %v4119 = vunpack.c.h.s8.bf16 %v1152
        %v4120 = vunpack.c.l.s8.bf16 %v1153
        %v4121 = vunpack.c.l.s8.bf16 %v1154
        %v4122 = vunpack.c.l.s8.bf16 %v1155
        %v4123 = vunpack.c.l.s8.bf16 %v1156
        %v4124 = vunpack.c.h.s8.bf16 %v1153
        %v4125 = vunpack.c.h.s8.bf16 %v1154
        %v4126 = vunpack.c.h.s8.bf16 %v1155
        %v4127 = vunpack.c.h.s8.bf16 %v1156
        %v4128 = vunpack.c.l.s8.bf16 %v1157
        %v4129 = vunpack.c.l.s8.bf16 %v1158
        %v4130 = vunpack.c.l.s8.bf16 %v1159
        %v4131 = vunpack.c.l.s8.bf16 %v1160
        %v4132 = vunpack.c.h.s8.bf16 %v1157
        %v4133 = vunpack.c.h.s8.bf16 %v1158
        %v4134 = vunpack.c.h.s8.bf16 %v1159
        %v4135 = vunpack.c.h.s8.bf16 %v1160
        %v4136 = vunpack.c.l.s8.bf16 %v1161
        %v4137 = vunpack.c.l.s8.bf16 %v1162
        %v4138 = vunpack.c.l.s8.bf16 %v1163
        %v4139 = vunpack.c.l.s8.bf16 %v1164
        %v4140 = vunpack.c.h.s8.bf16 %v1161
        %v4141 = vunpack.c.h.s8.bf16 %v1162
        %v4142 = vunpack.c.h.s8.bf16 %v1163
        %v4143 = vunpack.c.h.s8.bf16 %v1164
        %v4144 = vunpack.c.l.s8.bf16 %v1165
        %v4145 = vunpack.c.l.s8.bf16 %v1166
        %v4146 = vunpack.c.l.s8.bf16 %v1167
        %v4147 = vunpack.c.l.s8.bf16 %v1168
        %v4148 = vunpack.c.h.s8.bf16 %v1165
        %v4149 = vunpack.c.h.s8.bf16 %v1166
        %v4150 = vunpack.c.h.s8.bf16 %v1167
        %v4151 = vunpack.c.h.s8.bf16 %v1168
        %v4152 = vunpack.c.l.s8.bf16 %v1169
        %v4153 = vunpack.c.l.s8.bf16 %v1170
        %v4154 = vunpack.c.l.s8.bf16 %v1171
        %v4155 = vunpack.c.l.s8.bf16 %v1172
        %v4156 = vunpack.c.h.s8.bf16 %v1169
        %v4157 = vunpack.c.h.s8.bf16 %v1170
        %v4158 = vunpack.c.h.s8.bf16 %v1171
        %v4159 = vunpack.c.h.s8.bf16 %v1172
        %v4160 = vunpack.c.l.s8.bf16 %v1173
        %v4161 = vunpack.c.l.s8.bf16 %v1174
        %v4162 = vunpack.c.l.s8.bf16 %v1175
        %v4163 = vunpack.c.l.s8.bf16 %v1176
        %v4164 = vunpack.c.h.s8.bf16 %v1173
        %v4165 = vunpack.c.h.s8.bf16 %v1174
        %v4166 = vunpack.c.h.s8.bf16 %v1175
        %v4167 = vunpack.c.h.s8.bf16 %v1176
        %v4168 = vunpack.c.l.s8.bf16 %v1177
        %v4169 = vunpack.c.l.s8.bf16 %v1178
        %v4170 = vunpack.c.l.s8.bf16 %v1179
        %v4171 = vunpack.c.l.s8.bf16 %v1180
        %v4172 = vunpack.c.h.s8.bf16 %v1177
        %v4173 = vunpack.c.h.s8.bf16 %v1178
        %v4174 = vunpack.c.h.s8.bf16 %v1179
        %v4175 = vunpack.c.h.s8.bf16 %v1180
        %v4176 = vunpack.c.l.s8.bf16 %v1181
        %v4177 = vunpack.c.l.s8.bf16 %v1182
        %v4178 = vunpack.c.l.s8.bf16 %v1183
        %v4179 = vunpack.c.l.s8.bf16 %v1184
        %v4180 = vunpack.c.h.s8.bf16 %v1181
        %v4181 = vunpack.c.h.s8.bf16 %v1182
        %v4182 = vunpack.c.h.s8.bf16 %v1183
        %v4183 = vunpack.c.h.s8.bf16 %v1184
        %v4184 = vunpack.c.l.s8.bf16 %v1185
        %v4185 = vunpack.c.l.s8.bf16 %v1186
        %v4186 = vunpack.c.l.s8.bf16 %v1187
        %v4187 = vunpack.c.l.s8.bf16 %v1188
        %v4188 = vunpack.c.h.s8.bf16 %v1185
        %v4189 = vunpack.c.h.s8.bf16 %v1186
        %v4190 = vunpack.c.h.s8.bf16 %v1187
        %v4191 = vunpack.c.h.s8.bf16 %v1188
        %v4192 = vunpack.c.l.s8.bf16 %v1189
        %v4193 = vunpack.c.l.s8.bf16 %v1190
        %v4194 = vunpack.c.l.s8.bf16 %v1191
        %v4195 = vunpack.c.l.s8.bf16 %v1192
        %v4196 = vunpack.c.h.s8.bf16 %v1189
        %v4197 = vunpack.c.h.s8.bf16 %v1190
        %v4198 = vunpack.c.h.s8.bf16 %v1191
        %v4199 = vunpack.c.h.s8.bf16 %v1192
        %v4200 = vunpack.c.l.s8.bf16 %v1193
        %v4201 = vunpack.c.l.s8.bf16 %v1194
        %v4202 = vunpack.c.l.s8.bf16 %v1195
        %v4203 = vunpack.c.l.s8.bf16 %v1196
        %v4204 = vunpack.c.h.s8.bf16 %v1193
        %v4205 = vunpack.c.h.s8.bf16 %v1194
        %v4206 = vunpack.c.h.s8.bf16 %v1195
        %v4207 = vunpack.c.h.s8.bf16 %v1196
        %v4208 = vunpack.c.l.s8.bf16 %v1197
        %v4209 = vunpack.c.l.s8.bf16 %v1198
        %v4210 = vunpack.c.l.s8.bf16 %v1199
        %v4211 = vunpack.c.l.s8.bf16 %v1200
        %v4212 = vunpack.c.h.s8.bf16 %v1197
        %v4213 = vunpack.c.h.s8.bf16 %v1198
        %v4214 = vunpack.c.h.s8.bf16 %v1199
        %v4215 = vunpack.c.h.s8.bf16 %v1200
        %v4216 = vunpack.c.l.s8.bf16 %v1201
        %v4217 = vunpack.c.l.s8.bf16 %v1202
        %v4218 = vunpack.c.l.s8.bf16 %v1203
        %v4219 = vunpack.c.l.s8.bf16 %v1204
        %v4220 = vunpack.c.h.s8.bf16 %v1201
        %v4221 = vunpack.c.h.s8.bf16 %v1202
        %v4222 = vunpack.c.h.s8.bf16 %v1203
        %v4223 = vunpack.c.h.s8.bf16 %v1204
        %v4224 = vunpack.c.l.s8.bf16 %v1205
        %v4225 = vunpack.c.l.s8.bf16 %v1206
        %v4226 = vunpack.c.l.s8.bf16 %v1207
        %v4227 = vunpack.c.l.s8.bf16 %v1208
        %v4228 = vunpack.c.h.s8.bf16 %v1205
        %v4229 = vunpack.c.h.s8.bf16 %v1206
        %v4230 = vunpack.c.h.s8.bf16 %v1207
        %v4231 = vunpack.c.h.s8.bf16 %v1208
        %v4232 = vunpack.c.l.s8.bf16 %v1209
        %v4233 = vunpack.c.l.s8.bf16 %v1210
        %v4234 = vunpack.c.l.s8.bf16 %v1211
        %v4235 = vunpack.c.l.s8.bf16 %v1212
        %v4236 = vunpack.c.h.s8.bf16 %v1209
        %v4237 = vunpack.c.h.s8.bf16 %v1210
        %v4238 = vunpack.c.h.s8.bf16 %v1211
        %v4239 = vunpack.c.h.s8.bf16 %v1212
        %v4240 = vunpack.c.l.s8.bf16 %v1213
        %v4241 = vunpack.c.l.s8.bf16 %v1214
        %v4242 = vunpack.c.l.s8.bf16 %v1215
        %v4243 = vunpack.c.l.s8.bf16 %v1216
        %v4244 = vunpack.c.h.s8.bf16 %v1213
        %v4245 = vunpack.c.h.s8.bf16 %v1214
        %v4246 = vunpack.c.h.s8.bf16 %v1215
        %v4247 = vunpack.c.h.s8.bf16 %v1216
        %v4248 = vunpack.c.l.s8.bf16 %v1217
        %v4249 = vunpack.c.l.s8.bf16 %v1218
        %v4250 = vunpack.c.l.s8.bf16 %v1219
        %v4251 = vunpack.c.l.s8.bf16 %v1220
        %v4252 = vunpack.c.h.s8.bf16 %v1217
        %v4253 = vunpack.c.h.s8.bf16 %v1218
        %v4254 = vunpack.c.h.s8.bf16 %v1219
        %v4255 = vunpack.c.h.s8.bf16 %v1220
        %v4256 = vunpack.c.l.s8.bf16 %v1221
        %v4257 = vunpack.c.l.s8.bf16 %v1222
        %v4258 = vunpack.c.l.s8.bf16 %v1223
        %v4259 = vunpack.c.l.s8.bf16 %v1224
        %v4260 = vunpack.c.h.s8.bf16 %v1221
        %v4261 = vunpack.c.h.s8.bf16 %v1222
        %v4262 = vunpack.c.h.s8.bf16 %v1223
        %v4263 = vunpack.c.h.s8.bf16 %v1224
        %v4264 = vunpack.c.l.s8.bf16 %v1225
        %v4265 = vunpack.c.l.s8.bf16 %v1226
        %v4266 = vunpack.c.l.s8.bf16 %v1227
        %v4267 = vunpack.c.l.s8.bf16 %v1228
        %v4268 = vunpack.c.h.s8.bf16 %v1225
        %v4269 = vunpack.c.h.s8.bf16 %v1226
        %v4270 = vunpack.c.h.s8.bf16 %v1227
        %v4271 = vunpack.c.h.s8.bf16 %v1228
        %v4272 = vunpack.c.l.s8.bf16 %v1229
        %v4273 = vunpack.c.l.s8.bf16 %v1230
        %v4274 = vunpack.c.l.s8.bf16 %v1231
        %v4275 = vunpack.c.l.s8.bf16 %v1232
        %v4276 = vunpack.c.h.s8.bf16 %v1229
        %v4277 = vunpack.c.h.s8.bf16 %v1230
        %v4278 = vunpack.c.h.s8.bf16 %v1231
        %v4279 = vunpack.c.h.s8.bf16 %v1232
        %v4280 = vunpack.c.l.s8.bf16 %v1233
        %v4281 = vunpack.c.l.s8.bf16 %v1234
        %v4282 = vunpack.c.l.s8.bf16 %v1235
        %v4283 = vunpack.c.l.s8.bf16 %v1236
        %v4284 = vunpack.c.h.s8.bf16 %v1233
        %v4285 = vunpack.c.h.s8.bf16 %v1234
        %v4286 = vunpack.c.h.s8.bf16 %v1235
        %v4287 = vunpack.c.h.s8.bf16 %v1236
        %v4288 = vunpack.c.l.s8.bf16 %v1237
        %v4289 = vunpack.c.l.s8.bf16 %v1238
        %v4290 = vunpack.c.l.s8.bf16 %v1239
        %v4291 = vunpack.c.l.s8.bf16 %v1240
        %v4292 = vunpack.c.h.s8.bf16 %v1237
        %v4293 = vunpack.c.h.s8.bf16 %v1238
        %v4294 = vunpack.c.h.s8.bf16 %v1239
        %v4295 = vunpack.c.h.s8.bf16 %v1240
        %v4296 = vunpack.c.l.s8.bf16 %v1241
        %v4297 = vunpack.c.l.s8.bf16 %v1242
        %v4298 = vunpack.c.l.s8.bf16 %v1243
        %v4299 = vunpack.c.l.s8.bf16 %v1244
        %v4300 = vunpack.c.h.s8.bf16 %v1241
        %v4301 = vunpack.c.h.s8.bf16 %v1242
        %v4302 = vunpack.c.h.s8.bf16 %v1243
        %v4303 = vunpack.c.h.s8.bf16 %v1244
        %v4304 = vunpack.c.l.s8.bf16 %v1245
        %v4305 = vunpack.c.l.s8.bf16 %v1246
        %v4306 = vunpack.c.l.s8.bf16 %v1247
        %v4307 = vunpack.c.l.s8.bf16 %v1248
        %v4308 = vunpack.c.h.s8.bf16 %v1245
        %v4309 = vunpack.c.h.s8.bf16 %v1246
        %v4310 = vunpack.c.h.s8.bf16 %v1247
        %v4311 = vunpack.c.h.s8.bf16 %v1248
        %v4312 = vunpack.c.l.s8.bf16 %v1249
        %v4313 = vunpack.c.l.s8.bf16 %v1250
        %v4314 = vunpack.c.l.s8.bf16 %v1251
        %v4315 = vunpack.c.l.s8.bf16 %v1252
        %v4316 = vunpack.c.h.s8.bf16 %v1249
        %v4317 = vunpack.c.h.s8.bf16 %v1250
        %v4318 = vunpack.c.h.s8.bf16 %v1251
        %v4319 = vunpack.c.h.s8.bf16 %v1252
        %v4320 = vunpack.c.l.s8.bf16 %v1253
        %v4321 = vunpack.c.l.s8.bf16 %v1254
        %v4322 = vunpack.c.l.s8.bf16 %v1255
        %v4323 = vunpack.c.l.s8.bf16 %v1256
        %v4324 = vunpack.c.h.s8.bf16 %v1253
        %v4325 = vunpack.c.h.s8.bf16 %v1254
        %v4326 = vunpack.c.h.s8.bf16 %v1255
        %v4327 = vunpack.c.h.s8.bf16 %v1256
        %v4328 = vunpack.c.l.s8.bf16 %v1260
        %v4329 = vunpack.c.l.s8.bf16 %v1261
        %v4330 = vunpack.c.l.s8.bf16 %v1262
        %v4331 = vunpack.c.l.s8.bf16 %v1263
        %v4332 = vunpack.c.h.s8.bf16 %v1260
        %v4333 = vunpack.c.h.s8.bf16 %v1261
        %v4334 = vunpack.c.h.s8.bf16 %v1262
        %v4335 = vunpack.c.h.s8.bf16 %v1263
        %v4336 = vunpack.c.l.s8.bf16 %v1264
        %v4337 = vunpack.c.l.s8.bf16 %v1265
        %v4338 = vunpack.c.l.s8.bf16 %v1266
        %v4339 = vunpack.c.l.s8.bf16 %v1267
        %v4340 = vunpack.c.h.s8.bf16 %v1264
        %v4341 = vunpack.c.h.s8.bf16 %v1265
        %v4342 = vunpack.c.h.s8.bf16 %v1266
        %v4343 = vunpack.c.h.s8.bf16 %v1267
        %v4344 = vunpack.c.l.s8.bf16 %v1268
        %v4345 = vunpack.c.l.s8.bf16 %v1269
        %v4346 = vunpack.c.l.s8.bf16 %v1270
        %v4347 = vunpack.c.l.s8.bf16 %v1271
        %v4348 = vunpack.c.h.s8.bf16 %v1268
        %v4349 = vunpack.c.h.s8.bf16 %v1269
        %v4350 = vunpack.c.h.s8.bf16 %v1270
        %v4351 = vunpack.c.h.s8.bf16 %v1271
        %v4352 = vunpack.c.l.s8.bf16 %v1272
        %v4353 = vunpack.c.l.s8.bf16 %v1273
        %v4354 = vunpack.c.l.s8.bf16 %v1274
        %v4355 = vunpack.c.l.s8.bf16 %v1275
        %v4356 = vunpack.c.h.s8.bf16 %v1272
        %v4357 = vunpack.c.h.s8.bf16 %v1273
        %v4358 = vunpack.c.h.s8.bf16 %v1274
        %v4359 = vunpack.c.h.s8.bf16 %v1275
        %v4360 = vunpack.c.l.s8.bf16 %v1276
        %v4361 = vunpack.c.l.s8.bf16 %v1277
        %v4362 = vunpack.c.l.s8.bf16 %v1278
        %v4363 = vunpack.c.l.s8.bf16 %v1279
        %v4364 = vunpack.c.h.s8.bf16 %v1276
        %v4365 = vunpack.c.h.s8.bf16 %v1277
        %v4366 = vunpack.c.h.s8.bf16 %v1278
        %v4367 = vunpack.c.h.s8.bf16 %v1279
        %v4368 = vunpack.c.l.s8.bf16 %v1280
        %v4369 = vunpack.c.l.s8.bf16 %v1281
        %v4370 = vunpack.c.l.s8.bf16 %v1282
        %v4371 = vunpack.c.l.s8.bf16 %v1283
        %v4372 = vunpack.c.h.s8.bf16 %v1280
        %v4373 = vunpack.c.h.s8.bf16 %v1281
        %v4374 = vunpack.c.h.s8.bf16 %v1282
        %v4375 = vunpack.c.h.s8.bf16 %v1283
        %v4376 = vunpack.c.l.s8.bf16 %v1284
        %v4377 = vunpack.c.l.s8.bf16 %v1285
        %v4378 = vunpack.c.l.s8.bf16 %v1286
        %v4379 = vunpack.c.l.s8.bf16 %v1287
        %v4380 = vunpack.c.h.s8.bf16 %v1284
        %v4381 = vunpack.c.h.s8.bf16 %v1285
        %v4382 = vunpack.c.h.s8.bf16 %v1286
        %v4383 = vunpack.c.h.s8.bf16 %v1287
        %v4384 = vunpack.c.l.s8.bf16 %v1288
        %v4385 = vunpack.c.l.s8.bf16 %v1289
        %v4386 = vunpack.c.l.s8.bf16 %v1290
        %v4387 = vunpack.c.l.s8.bf16 %v1291
        %v4388 = vunpack.c.h.s8.bf16 %v1288
        %v4389 = vunpack.c.h.s8.bf16 %v1289
        %v4390 = vunpack.c.h.s8.bf16 %v1290
        %v4391 = vunpack.c.h.s8.bf16 %v1291
        %v4392 = vunpack.c.l.s8.bf16 %v1292
        %v4393 = vunpack.c.l.s8.bf16 %v1293
        %v4394 = vunpack.c.l.s8.bf16 %v1294
        %v4395 = vunpack.c.l.s8.bf16 %v1295
        %v4396 = vunpack.c.h.s8.bf16 %v1292
        %v4397 = vunpack.c.h.s8.bf16 %v1293
        %v4398 = vunpack.c.h.s8.bf16 %v1294
        %v4399 = vunpack.c.h.s8.bf16 %v1295
        %v4400 = vunpack.c.l.s8.bf16 %v1296
        %v4401 = vunpack.c.l.s8.bf16 %v1297
        %v4402 = vunpack.c.l.s8.bf16 %v1298
        %v4403 = vunpack.c.l.s8.bf16 %v1299
        %v4404 = vunpack.c.h.s8.bf16 %v1296
        %v4405 = vunpack.c.h.s8.bf16 %v1297
        %v4406 = vunpack.c.h.s8.bf16 %v1298
        %v4407 = vunpack.c.h.s8.bf16 %v1299
        %v4408 = vunpack.c.l.s8.bf16 %v1300
        %v4409 = vunpack.c.l.s8.bf16 %v1301
        %v4410 = vunpack.c.l.s8.bf16 %v1302
        %v4411 = vunpack.c.l.s8.bf16 %v1303
        %v4412 = vunpack.c.h.s8.bf16 %v1300
        %v4413 = vunpack.c.h.s8.bf16 %v1301
        %v4414 = vunpack.c.h.s8.bf16 %v1302
        %v4415 = vunpack.c.h.s8.bf16 %v1303
        %v4416 = vunpack.c.l.s8.bf16 %v1304
        %v4417 = vunpack.c.l.s8.bf16 %v1305
        %v4418 = vunpack.c.l.s8.bf16 %v1306
        %v4419 = vunpack.c.l.s8.bf16 %v1307
        %v4420 = vunpack.c.h.s8.bf16 %v1304
        %v4421 = vunpack.c.h.s8.bf16 %v1305
        %v4422 = vunpack.c.h.s8.bf16 %v1306
        %v4423 = vunpack.c.h.s8.bf16 %v1307
        %v4424 = vunpack.c.l.s8.bf16 %v1308
        %v4425 = vunpack.c.l.s8.bf16 %v1309
        %v4426 = vunpack.c.l.s8.bf16 %v1310
        %v4427 = vunpack.c.l.s8.bf16 %v1311
        %v4428 = vunpack.c.h.s8.bf16 %v1308
        %v4429 = vunpack.c.h.s8.bf16 %v1309
        %v4430 = vunpack.c.h.s8.bf16 %v1310
        %v4431 = vunpack.c.h.s8.bf16 %v1311
        %v4432 = vunpack.c.l.s8.bf16 %v1312
        %v4433 = vunpack.c.l.s8.bf16 %v1313
        %v4434 = vunpack.c.l.s8.bf16 %v1314
        %v4435 = vunpack.c.l.s8.bf16 %v1315
        %v4436 = vunpack.c.h.s8.bf16 %v1312
        %v4437 = vunpack.c.h.s8.bf16 %v1313
        %v4438 = vunpack.c.h.s8.bf16 %v1314
        %v4439 = vunpack.c.h.s8.bf16 %v1315
        %v4440 = vunpack.c.l.s8.bf16 %v1316
        %v4441 = vunpack.c.l.s8.bf16 %v1317
        %v4442 = vunpack.c.l.s8.bf16 %v1318
        %v4443 = vunpack.c.l.s8.bf16 %v1319
        %v4444 = vunpack.c.h.s8.bf16 %v1316
        %v4445 = vunpack.c.h.s8.bf16 %v1317
        %v4446 = vunpack.c.h.s8.bf16 %v1318
        %v4447 = vunpack.c.h.s8.bf16 %v1319
        %v4448 = vunpack.c.l.s8.bf16 %v1320
        %v4449 = vunpack.c.l.s8.bf16 %v1321
        %v4450 = vunpack.c.l.s8.bf16 %v1322
        %v4451 = vunpack.c.l.s8.bf16 %v1323
        %v4452 = vunpack.c.h.s8.bf16 %v1320
        %v4453 = vunpack.c.h.s8.bf16 %v1321
        %v4454 = vunpack.c.h.s8.bf16 %v1322
        %v4455 = vunpack.c.h.s8.bf16 %v1323
        %v4456 = vunpack.c.l.s8.bf16 %v1324
        %v4457 = vunpack.c.l.s8.bf16 %v1325
        %v4458 = vunpack.c.l.s8.bf16 %v1326
        %v4459 = vunpack.c.l.s8.bf16 %v1327
        %v4460 = vunpack.c.h.s8.bf16 %v1324
        %v4461 = vunpack.c.h.s8.bf16 %v1325
        %v4462 = vunpack.c.h.s8.bf16 %v1326
        %v4463 = vunpack.c.h.s8.bf16 %v1327
        %v4464 = vunpack.c.l.s8.bf16 %v1328
        %v4465 = vunpack.c.l.s8.bf16 %v1329
        %v4466 = vunpack.c.l.s8.bf16 %v1330
        %v4467 = vunpack.c.l.s8.bf16 %v1331
        %v4468 = vunpack.c.h.s8.bf16 %v1328
        %v4469 = vunpack.c.h.s8.bf16 %v1329
        %v4470 = vunpack.c.h.s8.bf16 %v1330
        %v4471 = vunpack.c.h.s8.bf16 %v1331
        %v4472 = vunpack.c.l.s8.bf16 %v1332
        %v4473 = vunpack.c.l.s8.bf16 %v1333
        %v4474 = vunpack.c.l.s8.bf16 %v1334
        %v4475 = vunpack.c.l.s8.bf16 %v1335
        %v4476 = vunpack.c.h.s8.bf16 %v1332
        %v4477 = vunpack.c.h.s8.bf16 %v1333
        %v4478 = vunpack.c.h.s8.bf16 %v1334
        %v4479 = vunpack.c.h.s8.bf16 %v1335
        %v4480 = vunpack.c.l.s8.bf16 %v1336
        %v4481 = vunpack.c.l.s8.bf16 %v1337
        %v4482 = vunpack.c.l.s8.bf16 %v1338
        %v4483 = vunpack.c.l.s8.bf16 %v1339
        %v4484 = vunpack.c.h.s8.bf16 %v1336
        %v4485 = vunpack.c.h.s8.bf16 %v1337
        %v4486 = vunpack.c.h.s8.bf16 %v1338
        %v4487 = vunpack.c.h.s8.bf16 %v1339
        %v4488 = vunpack.c.l.s8.bf16 %v1340
        %v4489 = vunpack.c.l.s8.bf16 %v1341
        %v4490 = vunpack.c.l.s8.bf16 %v1342
        %v4491 = vunpack.c.l.s8.bf16 %v1343
        %v4492 = vunpack.c.h.s8.bf16 %v1340
        %v4493 = vunpack.c.h.s8.bf16 %v1341
        %v4494 = vunpack.c.h.s8.bf16 %v1342
        %v4495 = vunpack.c.h.s8.bf16 %v1343
        %v4496 = vunpack.c.l.s8.bf16 %v1344
        %v4497 = vunpack.c.l.s8.bf16 %v1345
        %v4498 = vunpack.c.l.s8.bf16 %v1346
        %v4499 = vunpack.c.l.s8.bf16 %v1347
        %v4500 = vunpack.c.h.s8.bf16 %v1344
        %v4501 = vunpack.c.h.s8.bf16 %v1345
        %v4502 = vunpack.c.h.s8.bf16 %v1346
        %v4503 = vunpack.c.h.s8.bf16 %v1347
        %v4504 = vunpack.c.l.s8.bf16 %v1348
        %v4505 = vunpack.c.l.s8.bf16 %v1349
        %v4506 = vunpack.c.l.s8.bf16 %v1350
        %v4507 = vunpack.c.l.s8.bf16 %v1351
        %v4508 = vunpack.c.h.s8.bf16 %v1348
        %v4509 = vunpack.c.h.s8.bf16 %v1349
        %v4510 = vunpack.c.h.s8.bf16 %v1350
        %v4511 = vunpack.c.h.s8.bf16 %v1351
        %v4512 = vunpack.c.l.s8.bf16 %v1352
        %v4513 = vunpack.c.l.s8.bf16 %v1353
        %v4514 = vunpack.c.l.s8.bf16 %v1354
        %v4515 = vunpack.c.l.s8.bf16 %v1355
        %v4516 = vunpack.c.h.s8.bf16 %v1352
        %v4517 = vunpack.c.h.s8.bf16 %v1353
        %v4518 = vunpack.c.h.s8.bf16 %v1354
        %v4519 = vunpack.c.h.s8.bf16 %v1355
        %v4520 = vunpack.c.l.s8.bf16 %v1356
        %v4521 = vunpack.c.l.s8.bf16 %v1357
        %v4522 = vunpack.c.l.s8.bf16 %v1358
        %v4523 = vunpack.c.l.s8.bf16 %v1359
        %v4524 = vunpack.c.h.s8.bf16 %v1356
        %v4525 = vunpack.c.h.s8.bf16 %v1357
        %v4526 = vunpack.c.h.s8.bf16 %v1358
        %v4527 = vunpack.c.h.s8.bf16 %v1359
        %v4528 = vunpack.c.l.s8.bf16 %v1360
        %v4529 = vunpack.c.l.s8.bf16 %v1361
        %v4530 = vunpack.c.l.s8.bf16 %v1362
        %v4531 = vunpack.c.l.s8.bf16 %v1363
        %v4532 = vunpack.c.h.s8.bf16 %v1360
        %v4533 = vunpack.c.h.s8.bf16 %v1361
        %v4534 = vunpack.c.h.s8.bf16 %v1362
        %v4535 = vunpack.c.h.s8.bf16 %v1363
        %v4536 = vunpack.c.l.s8.bf16 %v1364
        %v4537 = vunpack.c.l.s8.bf16 %v1365
        %v4538 = vunpack.c.l.s8.bf16 %v1366
        %v4539 = vunpack.c.l.s8.bf16 %v1367
        %v4540 = vunpack.c.h.s8.bf16 %v1364
        %v4541 = vunpack.c.h.s8.bf16 %v1365
        %v4542 = vunpack.c.h.s8.bf16 %v1366
        %v4543 = vunpack.c.h.s8.bf16 %v1367
        %v4544 = vunpack.c.l.s8.bf16 %v1368
        %v4545 = vunpack.c.l.s8.bf16 %v1369
        %v4546 = vunpack.c.l.s8.bf16 %v1370
        %v4547 = vunpack.c.l.s8.bf16 %v1371
        %v4548 = vunpack.c.h.s8.bf16 %v1368
        %v4549 = vunpack.c.h.s8.bf16 %v1369
        %v4550 = vunpack.c.h.s8.bf16 %v1370
        %v4551 = vunpack.c.h.s8.bf16 %v1371
        %v4552 = vunpack.c.l.s8.bf16 %v1372
        %v4553 = vunpack.c.l.s8.bf16 %v1373
        %v4554 = vunpack.c.l.s8.bf16 %v1374
        %v4555 = vunpack.c.l.s8.bf16 %v1375
        %v4556 = vunpack.c.h.s8.bf16 %v1372
        %v4557 = vunpack.c.h.s8.bf16 %v1373
        %v4558 = vunpack.c.h.s8.bf16 %v1374
        %v4559 = vunpack.c.h.s8.bf16 %v1375
        %v4560 = vunpack.c.l.s8.bf16 %v1376
        %v4561 = vunpack.c.l.s8.bf16 %v1377
        %v4562 = vunpack.c.l.s8.bf16 %v1378
        %v4563 = vunpack.c.l.s8.bf16 %v1379
        %v4564 = vunpack.c.h.s8.bf16 %v1376
        %v4565 = vunpack.c.h.s8.bf16 %v1377
        %v4566 = vunpack.c.h.s8.bf16 %v1378
        %v4567 = vunpack.c.h.s8.bf16 %v1379
        %v4568 = vunpack.c.l.s8.bf16 %v1380
        %v4569 = vunpack.c.l.s8.bf16 %v1381
        %v4570 = vunpack.c.l.s8.bf16 %v1382
        %v4571 = vunpack.c.l.s8.bf16 %v1383
        %v4572 = vunpack.c.h.s8.bf16 %v1380
        %v4573 = vunpack.c.h.s8.bf16 %v1381
        %v4574 = vunpack.c.h.s8.bf16 %v1382
        %v4575 = vunpack.c.h.s8.bf16 %v1383
        %v4576 = vunpack.c.l.s8.bf16 %v1384
        %v4577 = vunpack.c.l.s8.bf16 %v1385
        %v4578 = vunpack.c.l.s8.bf16 %v1386
        %v4579 = vunpack.c.l.s8.bf16 %v1387
        %v4580 = vunpack.c.h.s8.bf16 %v1384
        %v4581 = vunpack.c.h.s8.bf16 %v1385
        %v4582 = vunpack.c.h.s8.bf16 %v1386
        %v4583 = vunpack.c.h.s8.bf16 %v1387
        %4584 = vmatprep.subr.bf16.mxu0 %v4073
        %4585 = vmatpush1.bf16.msra.mxu0 %v4072
        %4586 = vmatprep.subr.bf16.mxu0 %v4077
        %4587 = vmatpush1.bf16.msra.mxu0 %v4076
        %4588 = vmatprep.subr.bf16.mxu0 %v4081
        %4589 = vmatpush1.bf16.msra.mxu0 %v4080
        %4590 = vmatprep.subr.bf16.mxu0 %v4085
        %4591 = vmatpush1.bf16.msra.mxu0 %v4084
        %4592 = vmatprep.subr.bf16.mxu0 %v4089
        %4593 = vmatpush1.bf16.msra.mxu0 %v4088
        %4594 = vmatprep.subr.bf16.mxu0 %v4093
        %4595 = vmatpush1.bf16.msra.mxu0 %v4092
        %4596 = vmatprep.subr.bf16.mxu0 %v4097
        %4597 = vmatpush1.bf16.msra.mxu0 %v4096
        %4598 = vmatprep.subr.bf16.mxu0 %v4101
        %4599 = vmatpush1.bf16.msra.mxu0 %v4100
        %4600 = vmatprep.subr.bf16.mxu0 %v4105
        %4601 = vmatpush1.bf16.msra.mxu0 %v4104
        %4602 = vmatprep.subr.bf16.mxu0 %v4109
        %4603 = vmatpush1.bf16.msra.mxu0 %v4108
        %4604 = vmatprep.subr.bf16.mxu0 %v4113
        %4605 = vmatpush1.bf16.msra.mxu0 %v4112
        %4606 = vmatprep.subr.bf16.mxu0 %v4117
        %4607 = vmatpush1.bf16.msra.mxu0 %v4116
        %4608 = vmatprep.subr.bf16.mxu0 %v4121
        %4609 = vmatpush1.bf16.msra.mxu0 %v4120
        %4610 = vmatprep.subr.bf16.mxu0 %v4125
        %4611 = vmatpush1.bf16.msra.mxu0 %v4124
        %4612 = vmatprep.subr.bf16.mxu0 %v4129
        %4613 = vmatpush1.bf16.msra.mxu0 %v4128
        %4614 = vmatprep.subr.bf16.mxu0 %v4133
        %4615 = vmatpush1.bf16.msra.mxu0 %v4132
        %4616 = vmatprep.mubr.bf16.mxu0 %v4065
        %4617 = vmatmul.mubr.bf16.gmra.mrb[0].mxu0 %v4064
        %v4618 = vpop.f32.mrb[0].mxu0
        %v4619 = vadd.f32 0.0, %v4618
        %v4620 = vpop.f32.mrb[0].mxu0
        %v4621 = vadd.f32 0.0, %v4620
        %v4622 = vpop.f32.mrb[0].mxu0
        %v4623 = vpop.f32.mrb[0].mxu0
        %4624 = vdwg.mxu0
        %4625 = vmatprep.subr.bf16.mxu0 %v4137
        %4626 = vmatpush1.bf16.msra.mxu0 %v4136
        %4627 = vmatprep.subr.bf16.mxu0 %v4141
        %4628 = vmatpush1.bf16.msra.mxu0 %v4140
        %4629 = vmatprep.subr.bf16.mxu0 %v4145
        %4630 = vmatpush1.bf16.msra.mxu0 %v4144
        %4631 = vmatprep.subr.bf16.mxu0 %v4149
        %4632 = vmatpush1.bf16.msra.mxu0 %v4148
        %4633 = vmatprep.subr.bf16.mxu0 %v4153
        %4634 = vmatpush1.bf16.msra.mxu0 %v4152
        %4635 = vmatprep.subr.bf16.mxu0 %v4157
        %4636 = vmatpush1.bf16.msra.mxu0 %v4156
        %4637 = vmatprep.subr.bf16.mxu0 %v4161
        %4638 = vmatpush1.bf16.msra.mxu0 %v4160
        %4639 = vmatprep.subr.bf16.mxu0 %v4165
        %4640 = vmatpush1.bf16.msra.mxu0 %v4164
        %4641 = vmatprep.subr.bf16.mxu0 %v4169
        %4642 = vmatpush1.bf16.msra.mxu0 %v4168
        %4643 = vmatprep.subr.bf16.mxu0 %v4173
        %4644 = vmatpush1.bf16.msra.mxu0 %v4172
        %4645 = vmatprep.subr.bf16.mxu0 %v4177
        %4646 = vmatpush1.bf16.msra.mxu0 %v4176
        %4647 = vmatprep.subr.bf16.mxu0 %v4181
        %4648 = vmatpush1.bf16.msra.mxu0 %v4180
        %4649 = vmatprep.subr.bf16.mxu0 %v4185
        %4650 = vmatpush1.bf16.msra.mxu0 %v4184
        %4651 = vmatprep.subr.bf16.mxu0 %v4189
        %4652 = vmatpush1.bf16.msra.mxu0 %v4188
        %4653 = vmatprep.subr.bf16.mxu0 %v4193
        %4654 = vmatpush1.bf16.msra.mxu0 %v4192
        %4655 = vmatprep.subr.bf16.mxu0 %v4197
        %4656 = vmatpush1.bf16.msra.mxu0 %v4196
        %4657 = vmatprep.mubr.bf16.mxu0 %v4067
        %4658 = vmatmul.mubr.bf16.gmra.mrb[0].mxu0 %v4066
        %v4659 = vpop.f32.mrb[0].mxu0
        %v4660 = vadd.f32 %v4619, %v4659
        %v4661 = vpop.f32.mrb[0].mxu0
        %v4662 = vadd.f32 %v4621, %v4661
        %v4663 = vpop.f32.mrb[0].mxu0
        %v4664 = vpop.f32.mrb[0].mxu0
        %4665 = vdwg.mxu0
        %4666 = vmatprep.subr.bf16.mxu0 %v4201
        %4667 = vmatpush1.bf16.msra.mxu0 %v4200
        %4668 = vmatprep.subr.bf16.mxu0 %v4205
        %4669 = vmatpush1.bf16.msra.mxu0 %v4204
        %4670 = vmatprep.subr.bf16.mxu0 %v4209
        %4671 = vmatpush1.bf16.msra.mxu0 %v4208
        %4672 = vmatprep.subr.bf16.mxu0 %v4213
        %4673 = vmatpush1.bf16.msra.mxu0 %v4212
        %4674 = vmatprep.subr.bf16.mxu0 %v4217
        %4675 = vmatpush1.bf16.msra.mxu0 %v4216
        %4676 = vmatprep.subr.bf16.mxu0 %v4221
        %4677 = vmatpush1.bf16.msra.mxu0 %v4220
        %4678 = vmatprep.subr.bf16.mxu0 %v4225
        %4679 = vmatpush1.bf16.msra.mxu0 %v4224
        %4680 = vmatprep.subr.bf16.mxu0 %v4229
        %4681 = vmatpush1.bf16.msra.mxu0 %v4228
        %4682 = vmatprep.subr.bf16.mxu0 %v4233
        %4683 = vmatpush1.bf16.msra.mxu0 %v4232
        %4684 = vmatprep.subr.bf16.mxu0 %v4237
        %4685 = vmatpush1.bf16.msra.mxu0 %v4236
        %4686 = vmatprep.subr.bf16.mxu0 %v4241
        %4687 = vmatpush1.bf16.msra.mxu0 %v4240
        %4688 = vmatprep.subr.bf16.mxu0 %v4245
        %4689 = vmatpush1.bf16.msra.mxu0 %v4244
        %4690 = vmatprep.subr.bf16.mxu0 %v4249
        %4691 = vmatpush1.bf16.msra.mxu0 %v4248
        %4692 = vmatprep.subr.bf16.mxu0 %v4253
        %4693 = vmatpush1.bf16.msra.mxu0 %v4252
        %4694 = vmatprep.subr.bf16.mxu0 %v4257
        %4695 = vmatpush1.bf16.msra.mxu0 %v4256
        %4696 = vmatprep.subr.bf16.mxu0 %v4261
        %4697 = vmatpush1.bf16.msra.mxu0 %v4260
        %4698 = vmatprep.mubr.bf16.mxu0 %v4069
        %4699 = vmatmul.mubr.bf16.gmra.mrb[0].mxu0 %v4068
        %v4700 = vpop.f32.mrb[0].mxu0
        %v4701 = vadd.f32 %v4660, %v4700
        %v4702 = vpop.f32.mrb[0].mxu0
        %v4703 = vadd.f32 %v4662, %v4702
        %v4704 = vpop.f32.mrb[0].mxu0
        %v4705 = vpop.f32.mrb[0].mxu0
        %4706 = vdwg.mxu0
        %4707 = vmatprep.subr.bf16.mxu0 %v4265
        %4708 = vmatpush1.bf16.msra.mxu0 %v4264
        %4709 = vmatprep.subr.bf16.mxu0 %v4269
        %4710 = vmatpush1.bf16.msra.mxu0 %v4268
        %4711 = vmatprep.subr.bf16.mxu0 %v4273
        %4712 = vmatpush1.bf16.msra.mxu0 %v4272
        %4713 = vmatprep.subr.bf16.mxu0 %v4277
        %4714 = vmatpush1.bf16.msra.mxu0 %v4276
        %4715 = vmatprep.subr.bf16.mxu0 %v4281
        %4716 = vmatpush1.bf16.msra.mxu0 %v4280
        %4717 = vmatprep.subr.bf16.mxu0 %v4285
        %4718 = vmatpush1.bf16.msra.mxu0 %v4284
        %4719 = vmatprep.subr.bf16.mxu0 %v4289
        %4720 = vmatpush1.bf16.msra.mxu0 %v4288
        %4721 = vmatprep.subr.bf16.mxu0 %v4293
        %4722 = vmatpush1.bf16.msra.mxu0 %v4292
        %4723 = vmatprep.subr.bf16.mxu0 %v4297
        %4724 = vmatpush1.bf16.msra.mxu0 %v4296
        %4725 = vmatprep.subr.bf16.mxu0 %v4301
        %4726 = vmatpush1.bf16.msra.mxu0 %v4300
        %4727 = vmatprep.subr.bf16.mxu0 %v4305
        %4728 = vmatpush1.bf16.msra.mxu0 %v4304
        %4729 = vmatprep.subr.bf16.mxu0 %v4309
        %4730 = vmatpush1.bf16.msra.mxu0 %v4308
        %4731 = vmatprep.subr.bf16.mxu0 %v4313
        %4732 = vmatpush1.bf16.msra.mxu0 %v4312
        %4733 = vmatprep.subr.bf16.mxu0 %v4317
        %4734 = vmatpush1.bf16.msra.mxu0 %v4316
        %4735 = vmatprep.subr.bf16.mxu0 %v4321
        %4736 = vmatpush1.bf16.msra.mxu0 %v4320
        %4737 = vmatprep.subr.bf16.mxu0 %v4325
        %4738 = vmatpush1.bf16.msra.mxu0 %v4324
        %4739 = vmatprep.mubr.bf16.mxu0 %v4071
        %4740 = vmatmul.mubr.bf16.gmra.mrb[0].mxu0 %v4070
        %v4741 = vpop.f32.mrb[0].mxu0
        %v4742 = vadd.f32 %v4701, %v4741
        %v4743 = vpop.f32.mrb[0].mxu0
        %v4744 = vadd.f32 %v4703, %v4743
        %v4745 = vpop.f32.mrb[0].mxu0
        %v4746 = vpop.f32.mrb[0].mxu0
        %4747 = vdwg.mxu0
        %4748 = vmatprep.subr.bf16.mxu0 %v4075
        %4749 = vmatpush1.bf16.msra.mxu0 %v4074
        %4750 = vmatprep.subr.bf16.mxu0 %v4079
        %4751 = vmatpush1.bf16.msra.mxu0 %v4078
        %4752 = vmatprep.subr.bf16.mxu0 %v4083
        %4753 = vmatpush1.bf16.msra.mxu0 %v4082
        %4754 = vmatprep.subr.bf16.mxu0 %v4087
        %4755 = vmatpush1.bf16.msra.mxu0 %v4086
        %4756 = vmatprep.subr.bf16.mxu0 %v4091
        %4757 = vmatpush1.bf16.msra.mxu0 %v4090
        %4758 = vmatprep.subr.bf16.mxu0 %v4095
        %4759 = vmatpush1.bf16.msra.mxu0 %v4094
        %4760 = vmatprep.subr.bf16.mxu0 %v4099
        %4761 = vmatpush1.bf16.msra.mxu0 %v4098
        %4762 = vmatprep.subr.bf16.mxu0 %v4103
        %4763 = vmatpush1.bf16.msra.mxu0 %v4102
        %4764 = vmatprep.subr.bf16.mxu0 %v4107
        %4765 = vmatpush1.bf16.msra.mxu0 %v4106
        %4766 = vmatprep.subr.bf16.mxu0 %v4111
        %4767 = vmatpush1.bf16.msra.mxu0 %v4110
        %4768 = vmatprep.subr.bf16.mxu0 %v4115
        %4769 = vmatpush1.bf16.msra.mxu0 %v4114
        %4770 = vmatprep.subr.bf16.mxu0 %v4119
        %4771 = vmatpush1.bf16.msra.mxu0 %v4118
        %4772 = vmatprep.subr.bf16.mxu0 %v4123
        %4773 = vmatpush1.bf16.msra.mxu0 %v4122
        %4774 = vmatprep.subr.bf16.mxu0 %v4127
        %4775 = vmatpush1.bf16.msra.mxu0 %v4126
        %4776 = vmatprep.subr.bf16.mxu0 %v4131
        %4777 = vmatpush1.bf16.msra.mxu0 %v4130
        %4778 = vmatprep.subr.bf16.mxu0 %v4135
        %4779 = vmatpush1.bf16.msra.mxu0 %v4134
        %4780 = vmatprep.mubr.bf16.mxu0 %v4065
        %4781 = vmatmul.mubr.bf16.gmra.mrb[0].mxu0 %v4064
        %v4782 = vpop.f32.mrb[0].mxu0
        %v4783 = vadd.f32 0.0, %v4782
        %v4784 = vpop.f32.mrb[0].mxu0
        %v4785 = vadd.f32 0.0, %v4784
        %v4786 = vpop.f32.mrb[0].mxu0
        %v4787 = vpop.f32.mrb[0].mxu0
        %4788 = vdwg.mxu0
        %4789 = vmatprep.subr.bf16.mxu0 %v4139
        %4790 = vmatpush1.bf16.msra.mxu0 %v4138
        %4791 = vmatprep.subr.bf16.mxu0 %v4143
        %4792 = vmatpush1.bf16.msra.mxu0 %v4142
        %4793 = vmatprep.subr.bf16.mxu0 %v4147
        %4794 = vmatpush1.bf16.msra.mxu0 %v4146
        %4795 = vmatprep.subr.bf16.mxu0 %v4151
        %4796 = vmatpush1.bf16.msra.mxu0 %v4150
        %4797 = vmatprep.subr.bf16.mxu0 %v4155
        %4798 = vmatpush1.bf16.msra.mxu0 %v4154
        %4799 = vmatprep.subr.bf16.mxu0 %v4159
        %4800 = vmatpush1.bf16.msra.mxu0 %v4158
        %4801 = vmatprep.subr.bf16.mxu0 %v4163
        %4802 = vmatpush1.bf16.msra.mxu0 %v4162
        %4803 = vmatprep.subr.bf16.mxu0 %v4167
        %4804 = vmatpush1.bf16.msra.mxu0 %v4166
        %4805 = vmatprep.subr.bf16.mxu0 %v4171
        %4806 = vmatpush1.bf16.msra.mxu0 %v4170
        %4807 = vmatprep.subr.bf16.mxu0 %v4175
        %4808 = vmatpush1.bf16.msra.mxu0 %v4174
        %4809 = vmatprep.subr.bf16.mxu0 %v4179
        %4810 = vmatpush1.bf16.msra.mxu0 %v4178
        %4811 = vmatprep.subr.bf16.mxu0 %v4183
        %4812 = vmatpush1.bf16.msra.mxu0 %v4182
        %4813 = vmatprep.subr.bf16.mxu0 %v4187
        %4814 = vmatpush1.bf16.msra.mxu0 %v4186
        %4815 = vmatprep.subr.bf16.mxu0 %v4191
        %4816 = vmatpush1.bf16.msra.mxu0 %v4190
        %4817 = vmatprep.subr.bf16.mxu0 %v4195
        %4818 = vmatpush1.bf16.msra.mxu0 %v4194
        %4819 = vmatprep.subr.bf16.mxu0 %v4199
        %4820 = vmatpush1.bf16.msra.mxu0 %v4198
        %4821 = vmatprep.mubr.bf16.mxu0 %v4067
        %4822 = vmatmul.mubr.bf16.gmra.mrb[0].mxu0 %v4066
        %v4823 = vpop.f32.mrb[0].mxu0
        %v4824 = vadd.f32 %v4783, %v4823
        %v4825 = vpop.f32.mrb[0].mxu0
        %v4826 = vadd.f32 %v4785, %v4825
        %v4827 = vpop.f32.mrb[0].mxu0
        %v4828 = vpop.f32.mrb[0].mxu0
        %4829 = vdwg.mxu0
        %4830 = vmatprep.subr.bf16.mxu0 %v4203
        %4831 = vmatpush1.bf16.msra.mxu0 %v4202
        %4832 = vmatprep.subr.bf16.mxu0 %v4207
        %4833 = vmatpush1.bf16.msra.mxu0 %v4206
        %4834 = vmatprep.subr.bf16.mxu0 %v4211
        %4835 = vmatpush1.bf16.msra.mxu0 %v4210
        %4836 = vmatprep.subr.bf16.mxu0 %v4215
        %4837 = vmatpush1.bf16.msra.mxu0 %v4214
        %4838 = vmatprep.subr.bf16.mxu0 %v4219
        %4839 = vmatpush1.bf16.msra.mxu0 %v4218
        %4840 = vmatprep.subr.bf16.mxu0 %v4223
        %4841 = vmatpush1.bf16.msra.mxu0 %v4222
        %4842 = vmatprep.subr.bf16.mxu0 %v4227
        %4843 = vmatpush1.bf16.msra.mxu0 %v4226
        %4844 = vmatprep.subr.bf16.mxu0 %v4231
        %4845 = vmatpush1.bf16.msra.mxu0 %v4230
        %4846 = vmatprep.subr.bf16.mxu0 %v4235
        %4847 = vmatpush1.bf16.msra.mxu0 %v4234
        %4848 = vmatprep.subr.bf16.mxu0 %v4239
        %4849 = vmatpush1.bf16.msra.mxu0 %v4238
        %4850 = vmatprep.subr.bf16.mxu0 %v4243
        %4851 = vmatpush1.bf16.msra.mxu0 %v4242
        %4852 = vmatprep.subr.bf16.mxu0 %v4247
        %4853 = vmatpush1.bf16.msra.mxu0 %v4246
        %4854 = vmatprep.subr.bf16.mxu0 %v4251
        %4855 = vmatpush1.bf16.msra.mxu0 %v4250
        %4856 = vmatprep.subr.bf16.mxu0 %v4255
        %4857 = vmatpush1.bf16.msra.mxu0 %v4254
        %4858 = vmatprep.subr.bf16.mxu0 %v4259
        %4859 = vmatpush1.bf16.msra.mxu0 %v4258
        %4860 = vmatprep.subr.bf16.mxu0 %v4263
        %4861 = vmatpush1.bf16.msra.mxu0 %v4262
        %4862 = vmatprep.mubr.bf16.mxu0 %v4069
        %4863 = vmatmul.mubr.bf16.gmra.mrb[0].mxu0 %v4068
        %v4864 = vpop.f32.mrb[0].mxu0
        %v4865 = vadd.f32 %v4824, %v4864
        %v4866 = vpop.f32.mrb[0].mxu0
        %v4867 = vadd.f32 %v4826, %v4866
        %v4868 = vpop.f32.mrb[0].mxu0
        %v4869 = vpop.f32.mrb[0].mxu0
        %4870 = vdwg.mxu0
        %4871 = vmatprep.subr.bf16.mxu0 %v4267
        %4872 = vmatpush1.bf16.msra.mxu0 %v4266
        %4873 = vmatprep.subr.bf16.mxu0 %v4271
        %4874 = vmatpush1.bf16.msra.mxu0 %v4270
        %4875 = vmatprep.subr.bf16.mxu0 %v4275
        %4876 = vmatpush1.bf16.msra.mxu0 %v4274
        %4877 = vmatprep.subr.bf16.mxu0 %v4279
        %4878 = vmatpush1.bf16.msra.mxu0 %v4278
        %4879 = vmatprep.subr.bf16.mxu0 %v4283
        %4880 = vmatpush1.bf16.msra.mxu0 %v4282
        %4881 = vmatprep.subr.bf16.mxu0 %v4287
        %4882 = vmatpush1.bf16.msra.mxu0 %v4286
        %4883 = vmatprep.subr.bf16.mxu0 %v4291
        %4884 = vmatpush1.bf16.msra.mxu0 %v4290
        %4885 = vmatprep.subr.bf16.mxu0 %v4295
        %4886 = vmatpush1.bf16.msra.mxu0 %v4294
        %4887 = vmatprep.subr.bf16.mxu0 %v4299
        %4888 = vmatpush1.bf16.msra.mxu0 %v4298
        %4889 = vmatprep.subr.bf16.mxu0 %v4303
        %4890 = vmatpush1.bf16.msra.mxu0 %v4302
        %4891 = vmatprep.subr.bf16.mxu0 %v4307
        %4892 = vmatpush1.bf16.msra.mxu0 %v4306
        %4893 = vmatprep.subr.bf16.mxu0 %v4311
        %4894 = vmatpush1.bf16.msra.mxu0 %v4310
        %4895 = vmatprep.subr.bf16.mxu0 %v4315
        %4896 = vmatpush1.bf16.msra.mxu0 %v4314
        %4897 = vmatprep.subr.bf16.mxu0 %v4319
        %4898 = vmatpush1.bf16.msra.mxu0 %v4318
        %4899 = vmatprep.subr.bf16.mxu0 %v4323
        %4900 = vmatpush1.bf16.msra.mxu0 %v4322
        %4901 = vmatprep.subr.bf16.mxu0 %v4327
        %4902 = vmatpush1.bf16.msra.mxu0 %v4326
        %4903 = vmatprep.mubr.bf16.mxu0 %v4071
        %4904 = vmatmul.mubr.bf16.gmra.mrb[0].mxu0 %v4070
        %v4905 = vpop.f32.mrb[0].mxu0
        %v4906 = vadd.f32 %v4865, %v4905
        %v4907 = vpop.f32.mrb[0].mxu0
        %v4908 = vadd.f32 %v4867, %v4907
        %v4909 = vpop.f32.mrb[0].mxu0
        %v4910 = vpop.f32.mrb[0].mxu0
        %4911 = vdwg.mxu0
        %v4913 = vlaneseq
        %v4914 = vshrl.u32 %v4913, 7
        %v4915 = vsub.s32 0, %v4914
        %v4916 = vrot.slane %v1257, %v4915
        %v4917 = vlaneseq
        %v4918 = vshrl.u32 %v4917, 7
        %v4919 = vsub.s32 1, %v4918
        %v4920 = vrot.slane %v1257, %v4919
        %v4921 = vlaneseq
        %v4922 = vshrl.u32 %v4921, 7
        %v4923 = vsub.s32 2, %v4922
        %v4924 = vrot.slane %v1257, %v4923
        %v4925 = vlaneseq
        %v4926 = vshrl.u32 %v4925, 7
        %v4927 = vsub.s32 3, %v4926
        %v4928 = vrot.slane %v1257, %v4927
        %v4933 = vmul.f32 %v4742, %v4916
        %v4934 = vmul.f32 %v4744, %v4920
        %v4935 = vmul.f32 %v4906, %v4924
        %v4936 = vmul.f32 %v4908, %v4928
        %v4938 = vlaneseq
        %v4939 = vshrl.u32 %v4938, 7
        %v4940 = vsub.s32 0, %v4939
        %v4941 = vrot.slane %v1258, %v4940
        %v4942 = vlaneseq
        %v4943 = vshrl.u32 %v4942, 7
        %v4944 = vsub.s32 1, %v4943
        %v4945 = vrot.slane %v1258, %v4944
        %v4946 = vlaneseq
        %v4947 = vshrl.u32 %v4946, 7
        %v4948 = vsub.s32 2, %v4947
        %v4949 = vrot.slane %v1258, %v4948
        %v4950 = vlaneseq
        %v4951 = vshrl.u32 %v4950, 7
        %v4952 = vsub.s32 3, %v4951
        %v4953 = vrot.slane %v1258, %v4952
        %v4958 = vadd.f32 %v4933, %v4941
        %v4959 = vadd.f32 %v4934, %v4945
        %v4960 = vadd.f32 %v4935, %v4949
        %v4961 = vadd.f32 %v4936, %v4953
        %v4962 = vtanh.pop %v4958
        %v4963 = vtanh.pop %v4959
        %v4964 = vtanh.pop %v4960
        %v4965 = vtanh.pop %v4961
        %4966 = vmatprep.subr.bf16.mxu0 %v4329
        %4967 = vmatpush1.bf16.msra.mxu0 %v4328
        %4968 = vmatprep.subr.bf16.mxu0 %v4333
        %4969 = vmatpush1.bf16.msra.mxu0 %v4332
        %4970 = vmatprep.subr.bf16.mxu0 %v4337
        %4971 = vmatpush1.bf16.msra.mxu0 %v4336
        %4972 = vmatprep.subr.bf16.mxu0 %v4341
        %4973 = vmatpush1.bf16.msra.mxu0 %v4340
        %4974 = vmatprep.subr.bf16.mxu0 %v4345
        %4975 = vmatpush1.bf16.msra.mxu0 %v4344
        %4976 = vmatprep.subr.bf16.mxu0 %v4349
        %4977 = vmatpush1.bf16.msra.mxu0 %v4348
        %4978 = vmatprep.subr.bf16.mxu0 %v4353
        %4979 = vmatpush1.bf16.msra.mxu0 %v4352
        %4980 = vmatprep.subr.bf16.mxu0 %v4357
        %4981 = vmatpush1.bf16.msra.mxu0 %v4356
        %4982 = vmatprep.subr.bf16.mxu0 %v4361
        %4983 = vmatpush1.bf16.msra.mxu0 %v4360
        %4984 = vmatprep.subr.bf16.mxu0 %v4365
        %4985 = vmatpush1.bf16.msra.mxu0 %v4364
        %4986 = vmatprep.subr.bf16.mxu0 %v4369
        %4987 = vmatpush1.bf16.msra.mxu0 %v4368
        %4988 = vmatprep.subr.bf16.mxu0 %v4373
        %4989 = vmatpush1.bf16.msra.mxu0 %v4372
        %4990 = vmatprep.subr.bf16.mxu0 %v4377
        %4991 = vmatpush1.bf16.msra.mxu0 %v4376
        %4992 = vmatprep.subr.bf16.mxu0 %v4381
        %4993 = vmatpush1.bf16.msra.mxu0 %v4380
        %4994 = vmatprep.subr.bf16.mxu0 %v4385
        %4995 = vmatpush1.bf16.msra.mxu0 %v4384
        %4996 = vmatprep.subr.bf16.mxu0 %v4389
        %4997 = vmatpush1.bf16.msra.mxu0 %v4388
        %4998 = vmatprep.mubr.bf16.mxu0 %v4065
        %4999 = vmatmul.mubr.bf16.gmra.mrb[0].mxu0 %v4064
        %v5000 = vpop.f32.mrb[0].mxu0
        %v5001 = vadd.f32 0.0, %v5000
        %v5002 = vpop.f32.mrb[0].mxu0
        %v5003 = vadd.f32 0.0, %v5002
        %v5004 = vpop.f32.mrb[0].mxu0
        %v5005 = vpop.f32.mrb[0].mxu0
        %5006 = vdwg.mxu0
        %5007 = vmatprep.subr.bf16.mxu0 %v4393
        %5008 = vmatpush1.bf16.msra.mxu0 %v4392
        %5009 = vmatprep.subr.bf16.mxu0 %v4397
        %5010 = vmatpush1.bf16.msra.mxu0 %v4396
        %5011 = vmatprep.subr.bf16.mxu0 %v4401
        %5012 = vmatpush1.bf16.msra.mxu0 %v4400
        %5013 = vmatprep.subr.bf16.mxu0 %v4405
        %5014 = vmatpush1.bf16.msra.mxu0 %v4404
        %5015 = vmatprep.subr.bf16.mxu0 %v4409
        %5016 = vmatpush1.bf16.msra.mxu0 %v4408
        %5017 = vmatprep.subr.bf16.mxu0 %v4413
        %5018 = vmatpush1.bf16.msra.mxu0 %v4412
        %5019 = vmatprep.subr.bf16.mxu0 %v4417
        %5020 = vmatpush1.bf16.msra.mxu0 %v4416
        %5021 = vmatprep.subr.bf16.mxu0 %v4421
        %5022 = vmatpush1.bf16.msra.mxu0 %v4420
        %5023 = vmatprep.subr.bf16.mxu0 %v4425
        %5024 = vmatpush1.bf16.msra.mxu0 %v4424
        %5025 = vmatprep.subr.bf16.mxu0 %v4429
        %5026 = vmatpush1.bf16.msra.mxu0 %v4428
        %5027 = vmatprep.subr.bf16.mxu0 %v4433
        %5028 = vmatpush1.bf16.msra.mxu0 %v4432
        %5029 = vmatprep.subr.bf16.mxu0 %v4437
        %5030 = vmatpush1.bf16.msra.mxu0 %v4436
        %5031 = vmatprep.subr.bf16.mxu0 %v4441
        %5032 = vmatpush1.bf16.msra.mxu0 %v4440
        %5033 = vmatprep.subr.bf16.mxu0 %v4445
        %5034 = vmatpush1.bf16.msra.mxu0 %v4444
        %5035 = vmatprep.subr.bf16.mxu0 %v4449
        %5036 = vmatpush1.bf16.msra.mxu0 %v4448
        %5037 = vmatprep.subr.bf16.mxu0 %v4453
        %5038 = vmatpush1.bf16.msra.mxu0 %v4452
        %5039 = vmatprep.mubr.bf16.mxu0 %v4067
        %5040 = vmatmul.mubr.bf16.gmra.mrb[0].mxu0 %v4066
        %v5041 = vpop.f32.mrb[0].mxu0
        %v5042 = vadd.f32 %v5001, %v5041
        %v5043 = vpop.f32.mrb[0].mxu0
        %v5044 = vadd.f32 %v5003, %v5043
        %v5045 = vpop.f32.mrb[0].mxu0
        %v5046 = vpop.f32.mrb[0].mxu0
        %5047 = vdwg.mxu0
        %5048 = vmatprep.subr.bf16.mxu0 %v4457
        %5049 = vmatpush1.bf16.msra.mxu0 %v4456
        %5050 = vmatprep.subr.bf16.mxu0 %v4461
        %5051 = vmatpush1.bf16.msra.mxu0 %v4460
        %5052 = vmatprep.subr.bf16.mxu0 %v4465
        %5053 = vmatpush1.bf16.msra.mxu0 %v4464
        %5054 = vmatprep.subr.bf16.mxu0 %v4469
        %5055 = vmatpush1.bf16.msra.mxu0 %v4468
        %5056 = vmatprep.subr.bf16.mxu0 %v4473
        %5057 = vmatpush1.bf16.msra.mxu0 %v4472
        %5058 = vmatprep.subr.bf16.mxu0 %v4477
        %5059 = vmatpush1.bf16.msra.mxu0 %v4476
        %5060 = vmatprep.subr.bf16.mxu0 %v4481
        %5061 = vmatpush1.bf16.msra.mxu0 %v4480
        %5062 = vmatprep.subr.bf16.mxu0 %v4485
        %5063 = vmatpush1.bf16.msra.mxu0 %v4484
        %5064 = vmatprep.subr.bf16.mxu0 %v4489
        %5065 = vmatpush1.bf16.msra.mxu0 %v4488
        %5066 = vmatprep.subr.bf16.mxu0 %v4493
        %5067 = vmatpush1.bf16.msra.mxu0 %v4492
        %5068 = vmatprep.subr.bf16.mxu0 %v4497
        %5069 = vmatpush1.bf16.msra.mxu0 %v4496
        %5070 = vmatprep.subr.bf16.mxu0 %v4501
        %5071 = vmatpush1.bf16.msra.mxu0 %v4500
        %5072 = vmatprep.subr.bf16.mxu0 %v4505
        %5073 = vmatpush1.bf16.msra.mxu0 %v4504
        %5074 = vmatprep.subr.bf16.mxu0 %v4509
        %5075 = vmatpush1.bf16.msra.mxu0 %v4508
        %5076 = vmatprep.subr.bf16.mxu0 %v4513
        %5077 = vmatpush1.bf16.msra.mxu0 %v4512
        %5078 = vmatprep.subr.bf16.mxu0 %v4517
        %5079 = vmatpush1.bf16.msra.mxu0 %v4516
        %5080 = vmatprep.mubr.bf16.mxu0 %v4069
        %5081 = vmatmul.mubr.bf16.gmra.mrb[0].mxu0 %v4068
        %v5082 = vpop.f32.mrb[0].mxu0
        %v5083 = vadd.f32 %v5042, %v5082
        %v5084 = vpop.f32.mrb[0].mxu0
        %v5085 = vadd.f32 %v5044, %v5084
        %v5086 = vpop.f32.mrb[0].mxu0
        %v5087 = vpop.f32.mrb[0].mxu0
        %5088 = vdwg.mxu0
        %5089 = vmatprep.subr.bf16.mxu0 %v4521
        %5090 = vmatpush1.bf16.msra.mxu0 %v4520
        %5091 = vmatprep.subr.bf16.mxu0 %v4525
        %5092 = vmatpush1.bf16.msra.mxu0 %v4524
        %5093 = vmatprep.subr.bf16.mxu0 %v4529
        %5094 = vmatpush1.bf16.msra.mxu0 %v4528
        %5095 = vmatprep.subr.bf16.mxu0 %v4533
        %5096 = vmatpush1.bf16.msra.mxu0 %v4532
        %5097 = vmatprep.subr.bf16.mxu0 %v4537
        %5098 = vmatpush1.bf16.msra.mxu0 %v4536
        %5099 = vmatprep.subr.bf16.mxu0 %v4541
        %5100 = vmatpush1.bf16.msra.mxu0 %v4540
        %5101 = vmatprep.subr.bf16.mxu0 %v4545
        %5102 = vmatpush1.bf16.msra.mxu0 %v4544
        %5103 = vmatprep.subr.bf16.mxu0 %v4549
        %5104 = vmatpush1.bf16.msra.mxu0 %v4548
        %5105 = vmatprep.subr.bf16.mxu0 %v4553
        %5106 = vmatpush1.bf16.msra.mxu0 %v4552
        %5107 = vmatprep.subr.bf16.mxu0 %v4557
        %5108 = vmatpush1.bf16.msra.mxu0 %v4556
        %5109 = vmatprep.subr.bf16.mxu0 %v4561
        %5110 = vmatpush1.bf16.msra.mxu0 %v4560
        %5111 = vmatprep.subr.bf16.mxu0 %v4565
        %5112 = vmatpush1.bf16.msra.mxu0 %v4564
        %5113 = vmatprep.subr.bf16.mxu0 %v4569
        %5114 = vmatpush1.bf16.msra.mxu0 %v4568
        %5115 = vmatprep.subr.bf16.mxu0 %v4573
        %5116 = vmatpush1.bf16.msra.mxu0 %v4572
        %5117 = vmatprep.subr.bf16.mxu0 %v4577
        %5118 = vmatpush1.bf16.msra.mxu0 %v4576
        %5119 = vmatprep.subr.bf16.mxu0 %v4581
        %5120 = vmatpush1.bf16.msra.mxu0 %v4580
        %5121 = vmatprep.mubr.bf16.mxu0 %v4071
        %5122 = vmatmul.mubr.bf16.gmra.mrb[0].mxu0 %v4070
        %v5123 = vpop.f32.mrb[0].mxu0
        %v5124 = vadd.f32 %v5083, %v5123
        %v5125 = vpop.f32.mrb[0].mxu0
        %v5126 = vadd.f32 %v5085, %v5125
        %v5127 = vpop.f32.mrb[0].mxu0
        %v5128 = vpop.f32.mrb[0].mxu0
        %5129 = vdwg.mxu0
        %5130 = vmatprep.subr.bf16.mxu0 %v4331
        %5131 = vmatpush1.bf16.msra.mxu0 %v4330
        %5132 = vmatprep.subr.bf16.mxu0 %v4335
        %5133 = vmatpush1.bf16.msra.mxu0 %v4334
        %5134 = vmatprep.subr.bf16.mxu0 %v4339
        %5135 = vmatpush1.bf16.msra.mxu0 %v4338
        %5136 = vmatprep.subr.bf16.mxu0 %v4343
        %5137 = vmatpush1.bf16.msra.mxu0 %v4342
        %5138 = vmatprep.subr.bf16.mxu0 %v4347
        %5139 = vmatpush1.bf16.msra.mxu0 %v4346
        %5140 = vmatprep.subr.bf16.mxu0 %v4351
        %5141 = vmatpush1.bf16.msra.mxu0 %v4350
        %5142 = vmatprep.subr.bf16.mxu0 %v4355
        %5143 = vmatpush1.bf16.msra.mxu0 %v4354
        %5144 = vmatprep.subr.bf16.mxu0 %v4359
        %5145 = vmatpush1.bf16.msra.mxu0 %v4358
        %5146 = vmatprep.subr.bf16.mxu0 %v4363
        %5147 = vmatpush1.bf16.msra.mxu0 %v4362
        %5148 = vmatprep.subr.bf16.mxu0 %v4367
        %5149 = vmatpush1.bf16.msra.mxu0 %v4366
        %5150 = vmatprep.subr.bf16.mxu0 %v4371
        %5151 = vmatpush1.bf16.msra.mxu0 %v4370
        %5152 = vmatprep.subr.bf16.mxu0 %v4375
        %5153 = vmatpush1.bf16.msra.mxu0 %v4374
        %5154 = vmatprep.subr.bf16.mxu0 %v4379
        %5155 = vmatpush1.bf16.msra.mxu0 %v4378
        %5156 = vmatprep.subr.bf16.mxu0 %v4383
        %5157 = vmatpush1.bf16.msra.mxu0 %v4382
        %5158 = vmatprep.subr.bf16.mxu0 %v4387
        %5159 = vmatpush1.bf16.msra.mxu0 %v4386
        %5160 = vmatprep.subr.bf16.mxu0 %v4391
        %5161 = vmatpush1.bf16.msra.mxu0 %v4390
        %5162 = vmatprep.mubr.bf16.mxu0 %v4065
        %5163 = vmatmul.mubr.bf16.gmra.mrb[0].mxu0 %v4064
        %v5164 = vpop.f32.mrb[0].mxu0
        %v5165 = vadd.f32 0.0, %v5164
        %v5166 = vpop.f32.mrb[0].mxu0
        %v5167 = vadd.f32 0.0, %v5166
        %v5168 = vpop.f32.mrb[0].mxu0
        %v5169 = vpop.f32.mrb[0].mxu0
        %5170 = vdwg.mxu0
        %5171 = vmatprep.subr.bf16.mxu0 %v4395
        %5172 = vmatpush1.bf16.msra.mxu0 %v4394
        %5173 = vmatprep.subr.bf16.mxu0 %v4399
        %5174 = vmatpush1.bf16.msra.mxu0 %v4398
        %5175 = vmatprep.subr.bf16.mxu0 %v4403
        %5176 = vmatpush1.bf16.msra.mxu0 %v4402
        %5177 = vmatprep.subr.bf16.mxu0 %v4407
        %5178 = vmatpush1.bf16.msra.mxu0 %v4406
        %5179 = vmatprep.subr.bf16.mxu0 %v4411
        %5180 = vmatpush1.bf16.msra.mxu0 %v4410
        %5181 = vmatprep.subr.bf16.mxu0 %v4415
        %5182 = vmatpush1.bf16.msra.mxu0 %v4414
        %5183 = vmatprep.subr.bf16.mxu0 %v4419
        %5184 = vmatpush1.bf16.msra.mxu0 %v4418
        %5185 = vmatprep.subr.bf16.mxu0 %v4423
        %5186 = vmatpush1.bf16.msra.mxu0 %v4422
        %5187 = vmatprep.subr.bf16.mxu0 %v4427
        %5188 = vmatpush1.bf16.msra.mxu0 %v4426
        %5189 = vmatprep.subr.bf16.mxu0 %v4431
        %5190 = vmatpush1.bf16.msra.mxu0 %v4430
        %5191 = vmatprep.subr.bf16.mxu0 %v4435
        %5192 = vmatpush1.bf16.msra.mxu0 %v4434
        %5193 = vmatprep.subr.bf16.mxu0 %v4439
        %5194 = vmatpush1.bf16.msra.mxu0 %v4438
        %5195 = vmatprep.subr.bf16.mxu0 %v4443
        %5196 = vmatpush1.bf16.msra.mxu0 %v4442
        %5197 = vmatprep.subr.bf16.mxu0 %v4447
        %5198 = vmatpush1.bf16.msra.mxu0 %v4446
        %5199 = vmatprep.subr.bf16.mxu0 %v4451
        %5200 = vmatpush1.bf16.msra.mxu0 %v4450
        %5201 = vmatprep.subr.bf16.mxu0 %v4455
        %5202 = vmatpush1.bf16.msra.mxu0 %v4454
        %5203 = vmatprep.mubr.bf16.mxu0 %v4067
        %5204 = vmatmul.mubr.bf16.gmra.mrb[0].mxu0 %v4066
        %v5205 = vpop.f32.mrb[0].mxu0
        %v5206 = vadd.f32 %v5165, %v5205
        %v5207 = vpop.f32.mrb[0].mxu0
        %v5208 = vadd.f32 %v5167, %v5207
        %v5209 = vpop.f32.mrb[0].mxu0
        %v5210 = vpop.f32.mrb[0].mxu0
        %5211 = vdwg.mxu0
        %5212 = vmatprep.subr.bf16.mxu0 %v4459
        %5213 = vmatpush1.bf16.msra.mxu0 %v4458
        %5214 = vmatprep.subr.bf16.mxu0 %v4463
        %5215 = vmatpush1.bf16.msra.mxu0 %v4462
        %5216 = vmatprep.subr.bf16.mxu0 %v4467
        %5217 = vmatpush1.bf16.msra.mxu0 %v4466
        %5218 = vmatprep.subr.bf16.mxu0 %v4471
        %5219 = vmatpush1.bf16.msra.mxu0 %v4470
        %5220 = vmatprep.subr.bf16.mxu0 %v4475
        %5221 = vmatpush1.bf16.msra.mxu0 %v4474
        %5222 = vmatprep.subr.bf16.mxu0 %v4479
        %5223 = vmatpush1.bf16.msra.mxu0 %v4478
        %5224 = vmatprep.subr.bf16.mxu0 %v4483
        %5225 = vmatpush1.bf16.msra.mxu0 %v4482
        %5226 = vmatprep.subr.bf16.mxu0 %v4487
        %5227 = vmatpush1.bf16.msra.mxu0 %v4486
        %5228 = vmatprep.subr.bf16.mxu0 %v4491
        %5229 = vmatpush1.bf16.msra.mxu0 %v4490
        %5230 = vmatprep.subr.bf16.mxu0 %v4495
        %5231 = vmatpush1.bf16.msra.mxu0 %v4494
        %5232 = vmatprep.subr.bf16.mxu0 %v4499
        %5233 = vmatpush1.bf16.msra.mxu0 %v4498
        %5234 = vmatprep.subr.bf16.mxu0 %v4503
        %5235 = vmatpush1.bf16.msra.mxu0 %v4502
        %5236 = vmatprep.subr.bf16.mxu0 %v4507
        %5237 = vmatpush1.bf16.msra.mxu0 %v4506
        %5238 = vmatprep.subr.bf16.mxu0 %v4511
        %5239 = vmatpush1.bf16.msra.mxu0 %v4510
        %5240 = vmatprep.subr.bf16.mxu0 %v4515
        %5241 = vmatpush1.bf16.msra.mxu0 %v4514
        %5242 = vmatprep.subr.bf16.mxu0 %v4519
        %5243 = vmatpush1.bf16.msra.mxu0 %v4518
        %5244 = vmatprep.mubr.bf16.mxu0 %v4069
        %5245 = vmatmul.mubr.bf16.gmra.mrb[0].mxu0 %v4068
        %v5246 = vpop.f32.mrb[0].mxu0
        %v5247 = vadd.f32 %v5206, %v5246
        %v5248 = vpop.f32.mrb[0].mxu0
        %v5249 = vadd.f32 %v5208, %v5248
        %v5250 = vpop.f32.mrb[0].mxu0
        %v5251 = vpop.f32.mrb[0].mxu0
        %5252 = vdwg.mxu0
        %5253 = vmatprep.subr.bf16.mxu0 %v4523
        %5254 = vmatpush1.bf16.msra.mxu0 %v4522
        %5255 = vmatprep.subr.bf16.mxu0 %v4527
        %5256 = vmatpush1.bf16.msra.mxu0 %v4526
        %5257 = vmatprep.subr.bf16.mxu0 %v4531
        %5258 = vmatpush1.bf16.msra.mxu0 %v4530
        %5259 = vmatprep.subr.bf16.mxu0 %v4535
        %5260 = vmatpush1.bf16.msra.mxu0 %v4534
        %5261 = vmatprep.subr.bf16.mxu0 %v4539
        %5262 = vmatpush1.bf16.msra.mxu0 %v4538
        %5263 = vmatprep.subr.bf16.mxu0 %v4543
        %5264 = vmatpush1.bf16.msra.mxu0 %v4542
        %5265 = vmatprep.subr.bf16.mxu0 %v4547
        %5266 = vmatpush1.bf16.msra.mxu0 %v4546
        %5267 = vmatprep.subr.bf16.mxu0 %v4551
        %5268 = vmatpush1.bf16.msra.mxu0 %v4550
        %5269 = vmatprep.subr.bf16.mxu0 %v4555
        %5270 = vmatpush1.bf16.msra.mxu0 %v4554
        %5271 = vmatprep.subr.bf16.mxu0 %v4559
        %5272 = vmatpush1.bf16.msra.mxu0 %v4558
        %5273 = vmatprep.subr.bf16.mxu0 %v4563
        %5274 = vmatpush1.bf16.msra.mxu0 %v4562
        %5275 = vmatprep.subr.bf16.mxu0 %v4567
        %5276 = vmatpush1.bf16.msra.mxu0 %v4566
        %5277 = vmatprep.subr.bf16.mxu0 %v4571
        %5278 = vmatpush1.bf16.msra.mxu0 %v4570
        %5279 = vmatprep.subr.bf16.mxu0 %v4575
        %5280 = vmatpush1.bf16.msra.mxu0 %v4574
        %5281 = vmatprep.subr.bf16.mxu0 %v4579
        %5282 = vmatpush1.bf16.msra.mxu0 %v4578
        %5283 = vmatprep.subr.bf16.mxu0 %v4583
        %5284 = vmatpush1.bf16.msra.mxu0 %v4582
        %5285 = vmatprep.mubr.bf16.mxu0 %v4071
        %5286 = vmatmul.mubr.bf16.gmra.mrb[0].mxu0 %v4070
        %v5287 = vpop.f32.mrb[0].mxu0
        %v5288 = vadd.f32 %v5247, %v5287
        %v5289 = vpop.f32.mrb[0].mxu0
        %v5290 = vadd.f32 %v5249, %v5289
        %v5291 = vpop.f32.mrb[0].mxu0
        %v5292 = vpop.f32.mrb[0].mxu0
        %5293 = vdwg.mxu0
        %v5295 = vlaneseq
        %v5296 = vshrl.u32 %v5295, 7
        %v5297 = vsub.s32 0, %v5296
        %v5298 = vrot.slane %v1389, %v5297
        %v5299 = vlaneseq
        %v5300 = vshrl.u32 %v5299, 7
        %v5301 = vsub.s32 1, %v5300
        %v5302 = vrot.slane %v1389, %v5301
        %v5303 = vlaneseq
        %v5304 = vshrl.u32 %v5303, 7
        %v5305 = vsub.s32 2, %v5304
        %v5306 = vrot.slane %v1389, %v5305
        %v5307 = vlaneseq
        %v5308 = vshrl.u32 %v5307, 7
        %v5309 = vsub.s32 3, %v5308
        %v5310 = vrot.slane %v1389, %v5309
        %v5315 = vmul.f32 %v5124, %v5298
        %v5316 = vmul.f32 %v5126, %v5302
        %v5317 = vmul.f32 %v5288, %v5306
        %v5318 = vmul.f32 %v5290, %v5310
        %v5320 = vlaneseq
        %v5321 = vshrl.u32 %v5320, 7
        %v5322 = vsub.s32 0, %v5321
        %v5323 = vrot.slane %v1391, %v5322
        %v5324 = vlaneseq
        %v5325 = vshrl.u32 %v5324, 7
        %v5326 = vsub.s32 1, %v5325
        %v5327 = vrot.slane %v1391, %v5326
        %v5328 = vlaneseq
        %v5329 = vshrl.u32 %v5328, 7
        %v5330 = vsub.s32 2, %v5329
        %v5331 = vrot.slane %v1391, %v5330
        %v5332 = vlaneseq
        %v5333 = vshrl.u32 %v5332, 7
        %v5334 = vsub.s32 3, %v5333
        %v5335 = vrot.slane %v1391, %v5334
        %v5340 = vadd.f32 %v5315, %v5323
        %v5341 = vadd.f32 %v5316, %v5327
        %v5342 = vadd.f32 %v5317, %v5331
        %v5343 = vadd.f32 %v5318, %v5335
        %v5344 = vld [vmem:[#allocation13] sm:$0xff]
        %v5345 = vld [vmem:[#allocation13 + $0x8] sm:$0xff]
        %v5346 = vld [vmem:[#allocation13 + $0x10] sm:$0xff]
        %v5347 = vld [vmem:[#allocation13 + $0x18] sm:$0xff]
        %v5348 = vmul.f32 %v4962, 1.442695
        %v5349 = vpow.pop %v5348
        %v5350 = vmul.f32 %v4963, 1.442695
        %v5351 = vpow.pop %v5350
        %v5352 = vmul.f32 %v4964, 1.442695
        %v5353 = vpow.pop %v5352
        %v5354 = vmul.f32 %v4965, 1.442695
        %v5355 = vpow.pop %v5354
        %v5356 = vmul.f32 %v5344, %v5349
        %v5357 = vmul.f32 %v5345, %v5351
        %v5358 = vmul.f32 %v5346, %v5353
        %v5359 = vmul.f32 %v5347, %v5355
        %v5360 = vadd.f32 %v5356, %v5340
        %v5361 = vadd.f32 %v5357, %v5341
        %v5362 = vadd.f32 %v5358, %v5342
        %v5363 = vadd.f32 %v5359, %v5343
        %5364 = vst [vmem:[#allocation13] sm:$0xff] %v5360
        %5365 = vst [vmem:[#allocation13 + $0x8] sm:$0xff] %v5361
        %5366 = vst [vmem:[#allocation13 + $0x10] sm:$0xff] %v5362
        %5367 = vst.msk [vmem:[#allocation13 + $0x18] sm:$0xff] %vm2417, %v5363
        %v5368 = vld [vmem:[#allocation15] sm:$0xff]
        %v5369 = vadd.f32 %v4962, %v4963
        %v5370 = vadd.f32 %v5369, %v4964
        %v5371 = vsel %vm2417, %v4965, 0.0
        %v5372 = vadd.f32 %v5370, %v5371
        %5373 = vadd.xlane.f32.xlu0 %v5372
        %v5374 = vpop.xlane.xlu0 %5373
        %v5375 = vadd.f32 %v5368, %v5374
        %5376 = vst [vmem:[#allocation15] sm:$0xff] %v5375
        %v5377 = vld [vmem:[#allocation13] sm:$0xff]
        %v5378 = vld [vmem:[#allocation13 + $0x8] sm:$0xff]
        %v5379 = vld [vmem:[#allocation13 + $0x10] sm:$0xff]
        %v5380 = vld [vmem:[#allocation13 + $0x18] sm:$0xff]
        %s5381 = scalar_lea.vmem %s636, 1568
        %v5382 = vld [vmem:[%s5381] sm:$0xff]
        %v5383 = vld [vmem:[%s5381 + $0x8] sm:$0xff]
        %v5384 = vld [vmem:[%s5381 + $0x10] sm:$0xff]
        %v5385 = vld [vmem:[%s5381 + $0x18] sm:$0xff]
        %v5386 = vld [vmem:[%s5381 + $0x20] sm:$0xff]
        %v5387 = vld [vmem:[%s5381 + $0x28] sm:$0xff]
        %v5388 = vld [vmem:[%s5381 + $0x30] sm:$0xff]
        %v5389 = vld [vmem:[%s5381 + $0x38] sm:$0xff]
        %v5390 = vld [vmem:[%s5381 + $0x40] sm:$0xff]
        %v5391 = vld [vmem:[%s5381 + $0x48] sm:$0xff]
        %v5392 = vld [vmem:[%s5381 + $0x50] sm:$0xff]
        %v5393 = vld [vmem:[%s5381 + $0x58] sm:$0xff]
        %v5394 = vld [vmem:[%s5381 + $0x60] sm:$0xff]
        %v5395 = vld [vmem:[%s5381 + $0x68] sm:$0xff]
        %v5396 = vld [vmem:[%s5381 + $0x70] sm:$0xff]
        %v5397 = vld [vmem:[%s5381 + $0x78] sm:$0xff]
        %v5398 = vld [vmem:[%s5381 + $0x80] sm:$0xff]
        %v5399 = vld [vmem:[%s5381 + $0x88] sm:$0xff]
        %v5400 = vld [vmem:[%s5381 + $0x90] sm:$0xff]
        %v5401 = vld [vmem:[%s5381 + $0x98] sm:$0xff]
        %v5402 = vld [vmem:[%s5381 + $0xa0] sm:$0xff]
        %v5403 = vld [vmem:[%s5381 + $0xa8] sm:$0xff]
        %v5404 = vld [vmem:[%s5381 + $0xb0] sm:$0xff]
        %v5405 = vld [vmem:[%s5381 + $0xb8] sm:$0xff]
        %v5406 = vld [vmem:[%s5381 + $0xc0] sm:$0xff]
        %v5407 = vld [vmem:[%s5381 + $0xc8] sm:$0xff]
        %v5408 = vld [vmem:[%s5381 + $0xd0] sm:$0xff]
        %v5409 = vld [vmem:[%s5381 + $0xd8] sm:$0xff]
        %v5410 = vld [vmem:[%s5381 + $0xe0] sm:$0xff]
        %v5411 = vld [vmem:[%s5381 + $0xe8] sm:$0xff]
        %v5412 = vld [vmem:[%s5381 + $0xf0] sm:$0xff]
        %v5413 = vld [vmem:[%s5381 + $0xf8] sm:$0xff]
        %v5414 = vld [vmem:[%s5381 + $0x100] sm:$0xff]
        %v5415 = vld [vmem:[%s5381 + $0x108] sm:$0xff]
        %v5416 = vld [vmem:[%s5381 + $0x110] sm:$0xff]
        %v5417 = vld [vmem:[%s5381 + $0x118] sm:$0xff]
        %v5418 = vld [vmem:[%s5381 + $0x120] sm:$0xff]
        %v5419 = vld [vmem:[%s5381 + $0x128] sm:$0xff]
        %v5420 = vld [vmem:[%s5381 + $0x130] sm:$0xff]
        %v5421 = vld [vmem:[%s5381 + $0x138] sm:$0xff]
        %v5422 = vld [vmem:[%s5381 + $0x140] sm:$0xff]
        %v5423 = vld [vmem:[%s5381 + $0x148] sm:$0xff]
        %v5424 = vld [vmem:[%s5381 + $0x150] sm:$0xff]
        %v5425 = vld [vmem:[%s5381 + $0x158] sm:$0xff]
        %v5426 = vld [vmem:[%s5381 + $0x160] sm:$0xff]
        %v5427 = vld [vmem:[%s5381 + $0x168] sm:$0xff]
        %v5428 = vld [vmem:[%s5381 + $0x170] sm:$0xff]
        %v5429 = vld [vmem:[%s5381 + $0x178] sm:$0xff]
        %v5430 = vld [vmem:[%s5381 + $0x180] sm:$0xff]
        %v5431 = vld [vmem:[%s5381 + $0x188] sm:$0xff]
        %v5432 = vld [vmem:[%s5381 + $0x190] sm:$0xff]
        %v5433 = vld [vmem:[%s5381 + $0x198] sm:$0xff]
        %v5434 = vld [vmem:[%s5381 + $0x1a0] sm:$0xff]
        %v5435 = vld [vmem:[%s5381 + $0x1a8] sm:$0xff]
        %v5436 = vld [vmem:[%s5381 + $0x1b0] sm:$0xff]
        %v5437 = vld [vmem:[%s5381 + $0x1b8] sm:$0xff]
        %v5438 = vld [vmem:[%s5381 + $0x1c0] sm:$0xff]
        %v5439 = vld [vmem:[%s5381 + $0x1c8] sm:$0xff]
        %v5440 = vld [vmem:[%s5381 + $0x1d0] sm:$0xff]
        %v5441 = vld [vmem:[%s5381 + $0x1d8] sm:$0xff]
        %v5442 = vld [vmem:[%s5381 + $0x1e0] sm:$0xff]
        %v5443 = vld [vmem:[%s5381 + $0x1e8] sm:$0xff]
        %v5444 = vld [vmem:[%s5381 + $0x1f0] sm:$0xff]
        %v5445 = vld [vmem:[%s5381 + $0x1f8] sm:$0xff]
        %v5446 = vld [vmem:[%s5381 + $0x200] sm:$0xff]
        %v5447 = vld [vmem:[%s5381 + $0x208] sm:$0xff]
        %v5448 = vld [vmem:[%s5381 + $0x210] sm:$0xff]
        %v5449 = vld [vmem:[%s5381 + $0x218] sm:$0xff]
        %v5450 = vld [vmem:[%s5381 + $0x220] sm:$0xff]
        %v5451 = vld [vmem:[%s5381 + $0x228] sm:$0xff]
        %v5452 = vld [vmem:[%s5381 + $0x230] sm:$0xff]
        %v5453 = vld [vmem:[%s5381 + $0x238] sm:$0xff]
        %v5454 = vld [vmem:[%s5381 + $0x240] sm:$0xff]
        %v5455 = vld [vmem:[%s5381 + $0x248] sm:$0xff]
        %v5456 = vld [vmem:[%s5381 + $0x250] sm:$0xff]
        %v5457 = vld [vmem:[%s5381 + $0x258] sm:$0xff]
        %v5458 = vld [vmem:[%s5381 + $0x260] sm:$0xff]
        %v5459 = vld [vmem:[%s5381 + $0x268] sm:$0xff]
        %v5460 = vld [vmem:[%s5381 + $0x270] sm:$0xff]
        %v5461 = vld [vmem:[%s5381 + $0x278] sm:$0xff]
        %v5462 = vld [vmem:[%s5381 + $0x280] sm:$0xff]
        %v5463 = vld [vmem:[%s5381 + $0x288] sm:$0xff]
        %v5464 = vld [vmem:[%s5381 + $0x290] sm:$0xff]
        %v5465 = vld [vmem:[%s5381 + $0x298] sm:$0xff]
        %v5466 = vld [vmem:[%s5381 + $0x2a0] sm:$0xff]
        %v5467 = vld [vmem:[%s5381 + $0x2a8] sm:$0xff]
        %v5468 = vld [vmem:[%s5381 + $0x2b0] sm:$0xff]
        %v5469 = vld [vmem:[%s5381 + $0x2b8] sm:$0xff]
        %v5470 = vld [vmem:[%s5381 + $0x2c0] sm:$0xff]
        %v5471 = vld [vmem:[%s5381 + $0x2c8] sm:$0xff]
        %v5472 = vld [vmem:[%s5381 + $0x2d0] sm:$0xff]
        %v5473 = vld [vmem:[%s5381 + $0x2d8] sm:$0xff]
        %v5474 = vld [vmem:[%s5381 + $0x2e0] sm:$0xff]
        %v5475 = vld [vmem:[%s5381 + $0x2e8] sm:$0xff]
        %v5476 = vld [vmem:[%s5381 + $0x2f0] sm:$0xff]
        %v5477 = vld [vmem:[%s5381 + $0x2f8] sm:$0xff]
        %v5478 = vld [vmem:[%s5381 + $0x300] sm:$0xff]
        %v5479 = vld [vmem:[%s5381 + $0x308] sm:$0xff]
        %v5480 = vld [vmem:[%s5381 + $0x310] sm:$0xff]
        %v5481 = vld [vmem:[%s5381 + $0x318] sm:$0xff]
        %v5482 = vld [vmem:[%s5381 + $0x320] sm:$0xff]
        %v5483 = vld [vmem:[%s5381 + $0x328] sm:$0xff]
        %v5484 = vld [vmem:[%s5381 + $0x330] sm:$0xff]
        %v5485 = vld [vmem:[%s5381 + $0x338] sm:$0xff]
        %v5486 = vld [vmem:[%s5381 + $0x340] sm:$0xff]
        %v5487 = vld [vmem:[%s5381 + $0x348] sm:$0xff]
        %v5488 = vld [vmem:[%s5381 + $0x350] sm:$0xff]
        %v5489 = vld [vmem:[%s5381 + $0x358] sm:$0xff]
        %v5490 = vld [vmem:[%s5381 + $0x360] sm:$0xff]
        %v5491 = vld [vmem:[%s5381 + $0x368] sm:$0xff]
        %v5492 = vld [vmem:[%s5381 + $0x370] sm:$0xff]
        %v5493 = vld [vmem:[%s5381 + $0x378] sm:$0xff]
        %v5494 = vld [vmem:[%s5381 + $0x380] sm:$0xff]
        %v5495 = vld [vmem:[%s5381 + $0x388] sm:$0xff]
        %v5496 = vld [vmem:[%s5381 + $0x390] sm:$0xff]
        %v5497 = vld [vmem:[%s5381 + $0x398] sm:$0xff]
        %v5498 = vld [vmem:[%s5381 + $0x3a0] sm:$0xff]
        %v5499 = vld [vmem:[%s5381 + $0x3a8] sm:$0xff]
        %v5500 = vld [vmem:[%s5381 + $0x3b0] sm:$0xff]
        %v5501 = vld [vmem:[%s5381 + $0x3b8] sm:$0xff]
        %v5502 = vld [vmem:[%s5381 + $0x3c0] sm:$0xff]
        %v5503 = vld [vmem:[%s5381 + $0x3c8] sm:$0xff]
        %v5504 = vld [vmem:[%s5381 + $0x3d0] sm:$0xff]
        %v5505 = vld [vmem:[%s5381 + $0x3d8] sm:$0xff]
        %v5506 = vld [vmem:[%s5381 + $0x3e0] sm:$0xff]
        %v5507 = vld [vmem:[%s5381 + $0x3e8] sm:$0xff]
        %v5508 = vld [vmem:[%s5381 + $0x3f0] sm:$0xff]
        %v5509 = vld [vmem:[%s5381 + $0x3f8] sm:$0xff]
        %v5510 = vld [vmem:[%s5381 + $0x400] sm:$0xff]
        %v5511 = vld [vmem:[%s5381 + $0x408] sm:$0xff]
        %v5512 = vld [vmem:[%s5381 + $0x410] sm:$0xff]
        %v5513 = vld [vmem:[%s5381 + $0x418] sm:$0xff]
        %v5514 = vld [vmem:[%s5381 + $0x420] sm:$0xff]
        %v5515 = vld [vmem:[%s5381 + $0x428] sm:$0xff]
        %v5516 = vld [vmem:[%s5381 + $0x430] sm:$0xff]
        %v5517 = vld [vmem:[%s5381 + $0x438] sm:$0xff]
        %v5518 = vld [vmem:[%s5381 + $0x440] sm:$0xff]
        %v5519 = vld [vmem:[%s5381 + $0x448] sm:$0xff]
        %v5520 = vld [vmem:[%s5381 + $0x450] sm:$0xff]
        %v5521 = vld [vmem:[%s5381 + $0x458] sm:$0xff]
        %v5522 = vld [vmem:[%s5381 + $0x460] sm:$0xff]
        %v5523 = vld [vmem:[%s5381 + $0x468] sm:$0xff]
        %v5524 = vld [vmem:[%s5381 + $0x470] sm:$0xff]
        %v5525 = vld [vmem:[%s5381 + $0x478] sm:$0xff]
        %v5526 = vld [vmem:[%s5381 + $0x480] sm:$0xff]
        %v5527 = vld [vmem:[%s5381 + $0x488] sm:$0xff]
        %v5528 = vld [vmem:[%s5381 + $0x490] sm:$0xff]
        %v5529 = vld [vmem:[%s5381 + $0x498] sm:$0xff]
        %v5530 = vld [vmem:[%s5381 + $0x4a0] sm:$0xff]
        %v5531 = vld [vmem:[%s5381 + $0x4a8] sm:$0xff]
        %v5532 = vld [vmem:[%s5381 + $0x4b0] sm:$0xff]
        %v5533 = vld [vmem:[%s5381 + $0x4b8] sm:$0xff]
        %v5534 = vld [vmem:[%s5381 + $0x4c0] sm:$0xff]
        %v5535 = vld [vmem:[%s5381 + $0x4c8] sm:$0xff]
        %v5536 = vld [vmem:[%s5381 + $0x4d0] sm:$0xff]
        %v5537 = vld [vmem:[%s5381 + $0x4d8] sm:$0xff]
        %v5538 = vld [vmem:[%s5381 + $0x4e0] sm:$0xff]
        %v5539 = vld [vmem:[%s5381 + $0x4e8] sm:$0xff]
        %v5540 = vld [vmem:[%s5381 + $0x4f0] sm:$0xff]
        %v5541 = vld [vmem:[%s5381 + $0x4f8] sm:$0xff]
        %v5542 = vld [vmem:[%s5381 + $0x500] sm:$0xff]
        %v5543 = vld [vmem:[%s5381 + $0x508] sm:$0xff]
        %v5544 = vld [vmem:[%s5381 + $0x510] sm:$0xff]
        %v5545 = vld [vmem:[%s5381 + $0x518] sm:$0xff]
        %v5546 = vld [vmem:[%s5381 + $0x520] sm:$0xff]
        %v5547 = vld [vmem:[%s5381 + $0x528] sm:$0xff]
        %v5548 = vld [vmem:[%s5381 + $0x530] sm:$0xff]
        %v5549 = vld [vmem:[%s5381 + $0x538] sm:$0xff]
        %v5550 = vld [vmem:[%s5381 + $0x540] sm:$0xff]
        %v5551 = vld [vmem:[%s5381 + $0x548] sm:$0xff]
        %v5552 = vld [vmem:[%s5381 + $0x550] sm:$0xff]
        %v5553 = vld [vmem:[%s5381 + $0x558] sm:$0xff]
        %v5554 = vld [vmem:[%s5381 + $0x560] sm:$0xff]
        %v5555 = vld [vmem:[%s5381 + $0x568] sm:$0xff]
        %v5556 = vld [vmem:[%s5381 + $0x570] sm:$0xff]
        %v5557 = vld [vmem:[%s5381 + $0x578] sm:$0xff]
        %v5558 = vld [vmem:[%s5381 + $0x580] sm:$0xff]
        %v5559 = vld [vmem:[%s5381 + $0x588] sm:$0xff]
        %v5560 = vld [vmem:[%s5381 + $0x590] sm:$0xff]
        %v5561 = vld [vmem:[%s5381 + $0x598] sm:$0xff]
        %v5562 = vld [vmem:[%s5381 + $0x5a0] sm:$0xff]
        %v5563 = vld [vmem:[%s5381 + $0x5a8] sm:$0xff]
        %v5564 = vld [vmem:[%s5381 + $0x5b0] sm:$0xff]
        %v5565 = vld [vmem:[%s5381 + $0x5b8] sm:$0xff]
        %v5566 = vld [vmem:[%s5381 + $0x5c0] sm:$0xff]
        %v5567 = vld [vmem:[%s5381 + $0x5c8] sm:$0xff]
        %v5568 = vld [vmem:[%s5381 + $0x5d0] sm:$0xff]
        %v5569 = vld [vmem:[%s5381 + $0x5d8] sm:$0xff]
        %v5570 = vld [vmem:[%s5381 + $0x5e0] sm:$0xff]
        %v5571 = vld [vmem:[%s5381 + $0x5e8] sm:$0xff]
        %v5572 = vld [vmem:[%s5381 + $0x5f0] sm:$0xff]
        %v5573 = vld [vmem:[%s5381 + $0x5f8] sm:$0xff]
        %v5574 = vld [vmem:[%s5381 + $0x600] sm:$0xff]
        %v5575 = vld [vmem:[%s5381 + $0x608] sm:$0xff]
        %v5576 = vld [vmem:[%s5381 + $0x610] sm:$0xff]
        %v5577 = vld [vmem:[%s5381 + $0x618] sm:$0xff]
        %s5578 = scalar_lea.vmem %s525, 8 [#allocation7]
        %v5579 = vld [vmem:[%s5578] sm:$0xff]
        %s5580 = scalar_lea.vmem %s641, 2048
        %v5581 = vld [vmem:[%s5580] sm:$0xff]
        %v5582 = vld [vmem:[%s5580 + $0x8] sm:$0xff]
        %v5583 = vld [vmem:[%s5580 + $0x10] sm:$0xff]
        %v5584 = vld [vmem:[%s5580 + $0x18] sm:$0xff]
        %v5585 = vld [vmem:[%s5580 + $0x20] sm:$0xff]
        %v5586 = vld [vmem:[%s5580 + $0x28] sm:$0xff]
        %v5587 = vld [vmem:[%s5580 + $0x30] sm:$0xff]
        %v5588 = vld [vmem:[%s5580 + $0x38] sm:$0xff]
        %v5589 = vld [vmem:[%s5580 + $0x40] sm:$0xff]
        %v5590 = vld [vmem:[%s5580 + $0x48] sm:$0xff]
        %v5591 = vld [vmem:[%s5580 + $0x50] sm:$0xff]
        %v5592 = vld [vmem:[%s5580 + $0x58] sm:$0xff]
        %v5593 = vld [vmem:[%s5580 + $0x60] sm:$0xff]
        %v5594 = vld [vmem:[%s5580 + $0x68] sm:$0xff]
        %v5595 = vld [vmem:[%s5580 + $0x70] sm:$0xff]
        %v5596 = vld [vmem:[%s5580 + $0x78] sm:$0xff]
        %v5597 = vld [vmem:[%s5580 + $0x80] sm:$0xff]
        %v5598 = vld [vmem:[%s5580 + $0x88] sm:$0xff]
        %v5599 = vld [vmem:[%s5580 + $0x90] sm:$0xff]
        %v5600 = vld [vmem:[%s5580 + $0x98] sm:$0xff]
        %v5601 = vld [vmem:[%s5580 + $0xa0] sm:$0xff]
        %v5602 = vld [vmem:[%s5580 + $0xa8] sm:$0xff]
        %v5603 = vld [vmem:[%s5580 + $0xb0] sm:$0xff]
        %v5604 = vld [vmem:[%s5580 + $0xb8] sm:$0xff]
        %v5605 = vld [vmem:[%s5580 + $0xc0] sm:$0xff]
        %v5606 = vld [vmem:[%s5580 + $0xc8] sm:$0xff]
        %v5607 = vld [vmem:[%s5580 + $0xd0] sm:$0xff]
        %v5608 = vld [vmem:[%s5580 + $0xd8] sm:$0xff]
        %v5609 = vld [vmem:[%s5580 + $0xe0] sm:$0xff]
        %v5610 = vld [vmem:[%s5580 + $0xe8] sm:$0xff]
        %v5611 = vld [vmem:[%s5580 + $0xf0] sm:$0xff]
        %v5612 = vld [vmem:[%s5580 + $0xf8] sm:$0xff]
        %v5613 = vld [vmem:[%s5580 + $0x100] sm:$0xff]
        %v5614 = vld [vmem:[%s5580 + $0x108] sm:$0xff]
        %v5615 = vld [vmem:[%s5580 + $0x110] sm:$0xff]
        %v5616 = vld [vmem:[%s5580 + $0x118] sm:$0xff]
        %v5617 = vld [vmem:[%s5580 + $0x120] sm:$0xff]
        %v5618 = vld [vmem:[%s5580 + $0x128] sm:$0xff]
        %v5619 = vld [vmem:[%s5580 + $0x130] sm:$0xff]
        %v5620 = vld [vmem:[%s5580 + $0x138] sm:$0xff]
        %v5621 = vld [vmem:[%s5580 + $0x140] sm:$0xff]
        %v5622 = vld [vmem:[%s5580 + $0x148] sm:$0xff]
        %v5623 = vld [vmem:[%s5580 + $0x150] sm:$0xff]
        %v5624 = vld [vmem:[%s5580 + $0x158] sm:$0xff]
        %v5625 = vld [vmem:[%s5580 + $0x160] sm:$0xff]
        %v5626 = vld [vmem:[%s5580 + $0x168] sm:$0xff]
        %v5627 = vld [vmem:[%s5580 + $0x170] sm:$0xff]
        %v5628 = vld [vmem:[%s5580 + $0x178] sm:$0xff]
        %v5629 = vld [vmem:[%s5580 + $0x180] sm:$0xff]
        %v5630 = vld [vmem:[%s5580 + $0x188] sm:$0xff]
        %v5631 = vld [vmem:[%s5580 + $0x190] sm:$0xff]
        %v5632 = vld [vmem:[%s5580 + $0x198] sm:$0xff]
        %v5633 = vld [vmem:[%s5580 + $0x1a0] sm:$0xff]
        %v5634 = vld [vmem:[%s5580 + $0x1a8] sm:$0xff]
        %v5635 = vld [vmem:[%s5580 + $0x1b0] sm:$0xff]
        %v5636 = vld [vmem:[%s5580 + $0x1b8] sm:$0xff]
        %v5637 = vld [vmem:[%s5580 + $0x1c0] sm:$0xff]
        %v5638 = vld [vmem:[%s5580 + $0x1c8] sm:$0xff]
        %v5639 = vld [vmem:[%s5580 + $0x1d0] sm:$0xff]
        %v5640 = vld [vmem:[%s5580 + $0x1d8] sm:$0xff]
        %v5641 = vld [vmem:[%s5580 + $0x1e0] sm:$0xff]
        %v5642 = vld [vmem:[%s5580 + $0x1e8] sm:$0xff]
        %v5643 = vld [vmem:[%s5580 + $0x1f0] sm:$0xff]
        %v5644 = vld [vmem:[%s5580 + $0x1f8] sm:$0xff]
        %v5645 = vld [vmem:[%s5580 + $0x200] sm:$0xff]
        %v5646 = vld [vmem:[%s5580 + $0x208] sm:$0xff]
        %v5647 = vld [vmem:[%s5580 + $0x210] sm:$0xff]
        %v5648 = vld [vmem:[%s5580 + $0x218] sm:$0xff]
        %v5649 = vld [vmem:[%s5580 + $0x220] sm:$0xff]
        %v5650 = vld [vmem:[%s5580 + $0x228] sm:$0xff]
        %v5651 = vld [vmem:[%s5580 + $0x230] sm:$0xff]
        %v5652 = vld [vmem:[%s5580 + $0x238] sm:$0xff]
        %v5653 = vld [vmem:[%s5580 + $0x240] sm:$0xff]
        %v5654 = vld [vmem:[%s5580 + $0x248] sm:$0xff]
        %v5655 = vld [vmem:[%s5580 + $0x250] sm:$0xff]
        %v5656 = vld [vmem:[%s5580 + $0x258] sm:$0xff]
        %v5657 = vld [vmem:[%s5580 + $0x260] sm:$0xff]
        %v5658 = vld [vmem:[%s5580 + $0x268] sm:$0xff]
        %v5659 = vld [vmem:[%s5580 + $0x270] sm:$0xff]
        %v5660 = vld [vmem:[%s5580 + $0x278] sm:$0xff]
        %v5661 = vld [vmem:[%s5580 + $0x280] sm:$0xff]
        %v5662 = vld [vmem:[%s5580 + $0x288] sm:$0xff]
        %v5663 = vld [vmem:[%s5580 + $0x290] sm:$0xff]
        %v5664 = vld [vmem:[%s5580 + $0x298] sm:$0xff]
        %v5665 = vld [vmem:[%s5580 + $0x2a0] sm:$0xff]
        %v5666 = vld [vmem:[%s5580 + $0x2a8] sm:$0xff]
        %v5667 = vld [vmem:[%s5580 + $0x2b0] sm:$0xff]
        %v5668 = vld [vmem:[%s5580 + $0x2b8] sm:$0xff]
        %v5669 = vld [vmem:[%s5580 + $0x2c0] sm:$0xff]
        %v5670 = vld [vmem:[%s5580 + $0x2c8] sm:$0xff]
        %v5671 = vld [vmem:[%s5580 + $0x2d0] sm:$0xff]
        %v5672 = vld [vmem:[%s5580 + $0x2d8] sm:$0xff]
        %v5673 = vld [vmem:[%s5580 + $0x2e0] sm:$0xff]
        %v5674 = vld [vmem:[%s5580 + $0x2e8] sm:$0xff]
        %v5675 = vld [vmem:[%s5580 + $0x2f0] sm:$0xff]
        %v5676 = vld [vmem:[%s5580 + $0x2f8] sm:$0xff]
        %v5677 = vld [vmem:[%s5580 + $0x300] sm:$0xff]
        %v5678 = vld [vmem:[%s5580 + $0x308] sm:$0xff]
        %v5679 = vld [vmem:[%s5580 + $0x310] sm:$0xff]
        %v5680 = vld [vmem:[%s5580 + $0x318] sm:$0xff]
        %v5681 = vld [vmem:[%s5580 + $0x320] sm:$0xff]
        %v5682 = vld [vmem:[%s5580 + $0x328] sm:$0xff]
        %v5683 = vld [vmem:[%s5580 + $0x330] sm:$0xff]
        %v5684 = vld [vmem:[%s5580 + $0x338] sm:$0xff]
        %v5685 = vld [vmem:[%s5580 + $0x340] sm:$0xff]
        %v5686 = vld [vmem:[%s5580 + $0x348] sm:$0xff]
        %v5687 = vld [vmem:[%s5580 + $0x350] sm:$0xff]
        %v5688 = vld [vmem:[%s5580 + $0x358] sm:$0xff]
        %v5689 = vld [vmem:[%s5580 + $0x360] sm:$0xff]
        %v5690 = vld [vmem:[%s5580 + $0x368] sm:$0xff]
        %v5691 = vld [vmem:[%s5580 + $0x370] sm:$0xff]
        %v5692 = vld [vmem:[%s5580 + $0x378] sm:$0xff]
        %v5693 = vld [vmem:[%s5580 + $0x380] sm:$0xff]
        %v5694 = vld [vmem:[%s5580 + $0x388] sm:$0xff]
        %v5695 = vld [vmem:[%s5580 + $0x390] sm:$0xff]
        %v5696 = vld [vmem:[%s5580 + $0x398] sm:$0xff]
        %v5697 = vld [vmem:[%s5580 + $0x3a0] sm:$0xff]
        %v5698 = vld [vmem:[%s5580 + $0x3a8] sm:$0xff]
        %v5699 = vld [vmem:[%s5580 + $0x3b0] sm:$0xff]
        %v5700 = vld [vmem:[%s5580 + $0x3b8] sm:$0xff]
        %v5701 = vld [vmem:[%s5580 + $0x3c0] sm:$0xff]
        %v5702 = vld [vmem:[%s5580 + $0x3c8] sm:$0xff]
        %v5703 = vld [vmem:[%s5580 + $0x3d0] sm:$0xff]
        %v5704 = vld [vmem:[%s5580 + $0x3d8] sm:$0xff]
        %v5705 = vld [vmem:[%s5580 + $0x3e0] sm:$0xff]
        %v5706 = vld [vmem:[%s5580 + $0x3e8] sm:$0xff]
        %v5707 = vld [vmem:[%s5580 + $0x3f0] sm:$0xff]
        %v5708 = vld [vmem:[%s5580 + $0x3f8] sm:$0xff]
        %v5709 = vld [vmem:[%s5580 + $0x400] sm:$0xff]
        %v5710 = vld [vmem:[%s5580 + $0x408] sm:$0xff]
        %v5711 = vld [vmem:[%s5580 + $0x410] sm:$0xff]
        %v5712 = vld [vmem:[%s5580 + $0x418] sm:$0xff]
        %v5713 = vld [vmem:[%s5580 + $0x420] sm:$0xff]
        %v5714 = vld [vmem:[%s5580 + $0x428] sm:$0xff]
        %v5715 = vld [vmem:[%s5580 + $0x430] sm:$0xff]
        %v5716 = vld [vmem:[%s5580 + $0x438] sm:$0xff]
        %v5717 = vld [vmem:[%s5580 + $0x440] sm:$0xff]
        %v5718 = vld [vmem:[%s5580 + $0x448] sm:$0xff]
        %v5719 = vld [vmem:[%s5580 + $0x450] sm:$0xff]
        %v5720 = vld [vmem:[%s5580 + $0x458] sm:$0xff]
        %v5721 = vld [vmem:[%s5580 + $0x460] sm:$0xff]
        %v5722 = vld [vmem:[%s5580 + $0x468] sm:$0xff]
        %v5723 = vld [vmem:[%s5580 + $0x470] sm:$0xff]
        %v5724 = vld [vmem:[%s5580 + $0x478] sm:$0xff]
        %v5725 = vld [vmem:[%s5580 + $0x480] sm:$0xff]
        %v5726 = vld [vmem:[%s5580 + $0x488] sm:$0xff]
        %v5727 = vld [vmem:[%s5580 + $0x490] sm:$0xff]
        %v5728 = vld [vmem:[%s5580 + $0x498] sm:$0xff]
        %v5729 = vld [vmem:[%s5580 + $0x4a0] sm:$0xff]
        %v5730 = vld [vmem:[%s5580 + $0x4a8] sm:$0xff]
        %v5731 = vld [vmem:[%s5580 + $0x4b0] sm:$0xff]
        %v5732 = vld [vmem:[%s5580 + $0x4b8] sm:$0xff]
        %v5733 = vld [vmem:[%s5580 + $0x4c0] sm:$0xff]
        %v5734 = vld [vmem:[%s5580 + $0x4c8] sm:$0xff]
        %v5735 = vld [vmem:[%s5580 + $0x4d0] sm:$0xff]
        %v5736 = vld [vmem:[%s5580 + $0x4d8] sm:$0xff]
        %v5737 = vld [vmem:[%s5580 + $0x4e0] sm:$0xff]
        %v5738 = vld [vmem:[%s5580 + $0x4e8] sm:$0xff]
        %v5739 = vld [vmem:[%s5580 + $0x4f0] sm:$0xff]
        %v5740 = vld [vmem:[%s5580 + $0x4f8] sm:$0xff]
        %v5741 = vld [vmem:[%s5580 + $0x500] sm:$0xff]
        %v5742 = vld [vmem:[%s5580 + $0x508] sm:$0xff]
        %v5743 = vld [vmem:[%s5580 + $0x510] sm:$0xff]
        %v5744 = vld [vmem:[%s5580 + $0x518] sm:$0xff]
        %v5745 = vld [vmem:[%s5580 + $0x520] sm:$0xff]
        %v5746 = vld [vmem:[%s5580 + $0x528] sm:$0xff]
        %v5747 = vld [vmem:[%s5580 + $0x530] sm:$0xff]
        %v5748 = vld [vmem:[%s5580 + $0x538] sm:$0xff]
        %v5749 = vld [vmem:[%s5580 + $0x540] sm:$0xff]
        %v5750 = vld [vmem:[%s5580 + $0x548] sm:$0xff]
        %v5751 = vld [vmem:[%s5580 + $0x550] sm:$0xff]
        %v5752 = vld [vmem:[%s5580 + $0x558] sm:$0xff]
        %v5753 = vld [vmem:[%s5580 + $0x560] sm:$0xff]
        %v5754 = vld [vmem:[%s5580 + $0x568] sm:$0xff]
        %v5755 = vld [vmem:[%s5580 + $0x570] sm:$0xff]
        %v5756 = vld [vmem:[%s5580 + $0x578] sm:$0xff]
        %v5757 = vld [vmem:[%s5580 + $0x580] sm:$0xff]
        %v5758 = vld [vmem:[%s5580 + $0x588] sm:$0xff]
        %v5759 = vld [vmem:[%s5580 + $0x590] sm:$0xff]
        %v5760 = vld [vmem:[%s5580 + $0x598] sm:$0xff]
        %v5761 = vld [vmem:[%s5580 + $0x5a0] sm:$0xff]
        %v5762 = vld [vmem:[%s5580 + $0x5a8] sm:$0xff]
        %v5763 = vld [vmem:[%s5580 + $0x5b0] sm:$0xff]
        %v5764 = vld [vmem:[%s5580 + $0x5b8] sm:$0xff]
        %v5765 = vld [vmem:[%s5580 + $0x5c0] sm:$0xff]
        %v5766 = vld [vmem:[%s5580 + $0x5c8] sm:$0xff]
        %v5767 = vld [vmem:[%s5580 + $0x5d0] sm:$0xff]
        %v5768 = vld [vmem:[%s5580 + $0x5d8] sm:$0xff]
        %v5769 = vld [vmem:[%s5580 + $0x5e0] sm:$0xff]
        %v5770 = vld [vmem:[%s5580 + $0x5e8] sm:$0xff]
        %v5771 = vld [vmem:[%s5580 + $0x5f0] sm:$0xff]
        %v5772 = vld [vmem:[%s5580 + $0x5f8] sm:$0xff]
        %v5773 = vld [vmem:[%s5580 + $0x600] sm:$0xff]
        %v5774 = vld [vmem:[%s5580 + $0x608] sm:$0xff]
        %v5775 = vld [vmem:[%s5580 + $0x610] sm:$0xff]
        %v5776 = vld [vmem:[%s5580 + $0x618] sm:$0xff]
        %v5777 = vld [vmem:[%s5580 + $0x620] sm:$0xff]
        %v5778 = vld [vmem:[%s5580 + $0x628] sm:$0xff]
        %v5779 = vld [vmem:[%s5580 + $0x630] sm:$0xff]
        %v5780 = vld [vmem:[%s5580 + $0x638] sm:$0xff]
        %v5781 = vld [vmem:[%s5580 + $0x640] sm:$0xff]
        %v5782 = vld [vmem:[%s5580 + $0x648] sm:$0xff]
        %v5783 = vld [vmem:[%s5580 + $0x650] sm:$0xff]
        %v5784 = vld [vmem:[%s5580 + $0x658] sm:$0xff]
        %v5785 = vld [vmem:[%s5580 + $0x660] sm:$0xff]
        %v5786 = vld [vmem:[%s5580 + $0x668] sm:$0xff]
        %v5787 = vld [vmem:[%s5580 + $0x670] sm:$0xff]
        %v5788 = vld [vmem:[%s5580 + $0x678] sm:$0xff]
        %v5789 = vld [vmem:[%s5580 + $0x680] sm:$0xff]
        %v5790 = vld [vmem:[%s5580 + $0x688] sm:$0xff]
        %v5791 = vld [vmem:[%s5580 + $0x690] sm:$0xff]
        %v5792 = vld [vmem:[%s5580 + $0x698] sm:$0xff]
        %v5793 = vld [vmem:[%s5580 + $0x6a0] sm:$0xff]
        %v5794 = vld [vmem:[%s5580 + $0x6a8] sm:$0xff]
        %v5795 = vld [vmem:[%s5580 + $0x6b0] sm:$0xff]
        %v5796 = vld [vmem:[%s5580 + $0x6b8] sm:$0xff]
        %v5797 = vld [vmem:[%s5580 + $0x6c0] sm:$0xff]
        %v5798 = vld [vmem:[%s5580 + $0x6c8] sm:$0xff]
        %v5799 = vld [vmem:[%s5580 + $0x6d0] sm:$0xff]
        %v5800 = vld [vmem:[%s5580 + $0x6d8] sm:$0xff]
        %v5801 = vld [vmem:[%s5580 + $0x6e0] sm:$0xff]
        %v5802 = vld [vmem:[%s5580 + $0x6e8] sm:$0xff]
        %v5803 = vld [vmem:[%s5580 + $0x6f0] sm:$0xff]
        %v5804 = vld [vmem:[%s5580 + $0x6f8] sm:$0xff]
        %v5805 = vld [vmem:[%s5580 + $0x700] sm:$0xff]
        %v5806 = vld [vmem:[%s5580 + $0x708] sm:$0xff]
        %v5807 = vld [vmem:[%s5580 + $0x710] sm:$0xff]
        %v5808 = vld [vmem:[%s5580 + $0x718] sm:$0xff]
        %v5809 = vld [vmem:[%s5580 + $0x720] sm:$0xff]
        %v5810 = vld [vmem:[%s5580 + $0x728] sm:$0xff]
        %v5811 = vld [vmem:[%s5580 + $0x730] sm:$0xff]
        %v5812 = vld [vmem:[%s5580 + $0x738] sm:$0xff]
        %v5813 = vld [vmem:[%s5580 + $0x740] sm:$0xff]
        %v5814 = vld [vmem:[%s5580 + $0x748] sm:$0xff]
        %v5815 = vld [vmem:[%s5580 + $0x750] sm:$0xff]
        %v5816 = vld [vmem:[%s5580 + $0x758] sm:$0xff]
        %v5817 = vld [vmem:[%s5580 + $0x760] sm:$0xff]
        %v5818 = vld [vmem:[%s5580 + $0x768] sm:$0xff]
        %v5819 = vld [vmem:[%s5580 + $0x770] sm:$0xff]
        %v5820 = vld [vmem:[%s5580 + $0x778] sm:$0xff]
        %v5821 = vld [vmem:[%s5580 + $0x780] sm:$0xff]
        %v5822 = vld [vmem:[%s5580 + $0x788] sm:$0xff]
        %v5823 = vld [vmem:[%s5580 + $0x790] sm:$0xff]
        %v5824 = vld [vmem:[%s5580 + $0x798] sm:$0xff]
        %v5825 = vld [vmem:[%s5580 + $0x7a0] sm:$0xff]
        %v5826 = vld [vmem:[%s5580 + $0x7a8] sm:$0xff]
        %v5827 = vld [vmem:[%s5580 + $0x7b0] sm:$0xff]
        %v5828 = vld [vmem:[%s5580 + $0x7b8] sm:$0xff]
        %v5829 = vld [vmem:[%s5580 + $0x7c0] sm:$0xff]
        %v5830 = vld [vmem:[%s5580 + $0x7c8] sm:$0xff]
        %v5831 = vld [vmem:[%s5580 + $0x7d0] sm:$0xff]
        %v5832 = vld [vmem:[%s5580 + $0x7d8] sm:$0xff]
        %v5833 = vld [vmem:[%s5580 + $0x7e0] sm:$0xff]
        %v5834 = vld [vmem:[%s5580 + $0x7e8] sm:$0xff]
        %v5835 = vld [vmem:[%s5580 + $0x7f0] sm:$0xff]
        %v5836 = vld [vmem:[%s5580 + $0x7f8] sm:$0xff]
        %s5837 = scalar_lea.vmem %s534, 8 [#allocation8]
        %v5838 = vld [vmem:[%s5837] sm:$0xff]
        %s5839 = scalar_lea.vmem %s543, 8 [#allocation9]
        %v5840 = vld [vmem:[%s5839] sm:$0xff]
        %s5841 = scalar_lea.vmem %s646, 2048
        %v5842 = vld [vmem:[%s5841] sm:$0xff]
        %v5843 = vld [vmem:[%s5841 + $0x8] sm:$0xff]
        %v5844 = vld [vmem:[%s5841 + $0x10] sm:$0xff]
        %v5845 = vld [vmem:[%s5841 + $0x18] sm:$0xff]
        %v5846 = vld [vmem:[%s5841 + $0x20] sm:$0xff]
        %v5847 = vld [vmem:[%s5841 + $0x28] sm:$0xff]
        %v5848 = vld [vmem:[%s5841 + $0x30] sm:$0xff]
        %v5849 = vld [vmem:[%s5841 + $0x38] sm:$0xff]
        %v5850 = vld [vmem:[%s5841 + $0x40] sm:$0xff]
        %v5851 = vld [vmem:[%s5841 + $0x48] sm:$0xff]
        %v5852 = vld [vmem:[%s5841 + $0x50] sm:$0xff]
        %v5853 = vld [vmem:[%s5841 + $0x58] sm:$0xff]
        %v5854 = vld [vmem:[%s5841 + $0x60] sm:$0xff]
        %v5855 = vld [vmem:[%s5841 + $0x68] sm:$0xff]
        %v5856 = vld [vmem:[%s5841 + $0x70] sm:$0xff]
        %v5857 = vld [vmem:[%s5841 + $0x78] sm:$0xff]
        %v5858 = vld [vmem:[%s5841 + $0x80] sm:$0xff]
        %v5859 = vld [vmem:[%s5841 + $0x88] sm:$0xff]
        %v5860 = vld [vmem:[%s5841 + $0x90] sm:$0xff]
        %v5861 = vld [vmem:[%s5841 + $0x98] sm:$0xff]
        %v5862 = vld [vmem:[%s5841 + $0xa0] sm:$0xff]
        %v5863 = vld [vmem:[%s5841 + $0xa8] sm:$0xff]
        %v5864 = vld [vmem:[%s5841 + $0xb0] sm:$0xff]
        %v5865 = vld [vmem:[%s5841 + $0xb8] sm:$0xff]
        %v5866 = vld [vmem:[%s5841 + $0xc0] sm:$0xff]
        %v5867 = vld [vmem:[%s5841 + $0xc8] sm:$0xff]
        %v5868 = vld [vmem:[%s5841 + $0xd0] sm:$0xff]
        %v5869 = vld [vmem:[%s5841 + $0xd8] sm:$0xff]
        %v5870 = vld [vmem:[%s5841 + $0xe0] sm:$0xff]
        %v5871 = vld [vmem:[%s5841 + $0xe8] sm:$0xff]
        %v5872 = vld [vmem:[%s5841 + $0xf0] sm:$0xff]
        %v5873 = vld [vmem:[%s5841 + $0xf8] sm:$0xff]
        %v5874 = vld [vmem:[%s5841 + $0x100] sm:$0xff]
        %v5875 = vld [vmem:[%s5841 + $0x108] sm:$0xff]
        %v5876 = vld [vmem:[%s5841 + $0x110] sm:$0xff]
        %v5877 = vld [vmem:[%s5841 + $0x118] sm:$0xff]
        %v5878 = vld [vmem:[%s5841 + $0x120] sm:$0xff]
        %v5879 = vld [vmem:[%s5841 + $0x128] sm:$0xff]
        %v5880 = vld [vmem:[%s5841 + $0x130] sm:$0xff]
        %v5881 = vld [vmem:[%s5841 + $0x138] sm:$0xff]
        %v5882 = vld [vmem:[%s5841 + $0x140] sm:$0xff]
        %v5883 = vld [vmem:[%s5841 + $0x148] sm:$0xff]
        %v5884 = vld [vmem:[%s5841 + $0x150] sm:$0xff]
        %v5885 = vld [vmem:[%s5841 + $0x158] sm:$0xff]
        %v5886 = vld [vmem:[%s5841 + $0x160] sm:$0xff]
        %v5887 = vld [vmem:[%s5841 + $0x168] sm:$0xff]
        %v5888 = vld [vmem:[%s5841 + $0x170] sm:$0xff]
        %v5889 = vld [vmem:[%s5841 + $0x178] sm:$0xff]
        %v5890 = vld [vmem:[%s5841 + $0x180] sm:$0xff]
        %v5891 = vld [vmem:[%s5841 + $0x188] sm:$0xff]
        %v5892 = vld [vmem:[%s5841 + $0x190] sm:$0xff]
        %v5893 = vld [vmem:[%s5841 + $0x198] sm:$0xff]
        %v5894 = vld [vmem:[%s5841 + $0x1a0] sm:$0xff]
        %v5895 = vld [vmem:[%s5841 + $0x1a8] sm:$0xff]
        %v5896 = vld [vmem:[%s5841 + $0x1b0] sm:$0xff]
        %v5897 = vld [vmem:[%s5841 + $0x1b8] sm:$0xff]
        %v5898 = vld [vmem:[%s5841 + $0x1c0] sm:$0xff]
        %v5899 = vld [vmem:[%s5841 + $0x1c8] sm:$0xff]
        %v5900 = vld [vmem:[%s5841 + $0x1d0] sm:$0xff]
        %v5901 = vld [vmem:[%s5841 + $0x1d8] sm:$0xff]
        %v5902 = vld [vmem:[%s5841 + $0x1e0] sm:$0xff]
        %v5903 = vld [vmem:[%s5841 + $0x1e8] sm:$0xff]
        %v5904 = vld [vmem:[%s5841 + $0x1f0] sm:$0xff]
        %v5905 = vld [vmem:[%s5841 + $0x1f8] sm:$0xff]
        %v5906 = vld [vmem:[%s5841 + $0x200] sm:$0xff]
        %v5907 = vld [vmem:[%s5841 + $0x208] sm:$0xff]
        %v5908 = vld [vmem:[%s5841 + $0x210] sm:$0xff]
        %v5909 = vld [vmem:[%s5841 + $0x218] sm:$0xff]
        %v5910 = vld [vmem:[%s5841 + $0x220] sm:$0xff]
        %v5911 = vld [vmem:[%s5841 + $0x228] sm:$0xff]
        %v5912 = vld [vmem:[%s5841 + $0x230] sm:$0xff]
        %v5913 = vld [vmem:[%s5841 + $0x238] sm:$0xff]
        %v5914 = vld [vmem:[%s5841 + $0x240] sm:$0xff]
        %v5915 = vld [vmem:[%s5841 + $0x248] sm:$0xff]
        %v5916 = vld [vmem:[%s5841 + $0x250] sm:$0xff]
        %v5917 = vld [vmem:[%s5841 + $0x258] sm:$0xff]
        %v5918 = vld [vmem:[%s5841 + $0x260] sm:$0xff]
        %v5919 = vld [vmem:[%s5841 + $0x268] sm:$0xff]
        %v5920 = vld [vmem:[%s5841 + $0x270] sm:$0xff]
        %v5921 = vld [vmem:[%s5841 + $0x278] sm:$0xff]
        %v5922 = vld [vmem:[%s5841 + $0x280] sm:$0xff]
        %v5923 = vld [vmem:[%s5841 + $0x288] sm:$0xff]
        %v5924 = vld [vmem:[%s5841 + $0x290] sm:$0xff]
        %v5925 = vld [vmem:[%s5841 + $0x298] sm:$0xff]
        %v5926 = vld [vmem:[%s5841 + $0x2a0] sm:$0xff]
        %v5927 = vld [vmem:[%s5841 + $0x2a8] sm:$0xff]
        %v5928 = vld [vmem:[%s5841 + $0x2b0] sm:$0xff]
        %v5929 = vld [vmem:[%s5841 + $0x2b8] sm:$0xff]
        %v5930 = vld [vmem:[%s5841 + $0x2c0] sm:$0xff]
        %v5931 = vld [vmem:[%s5841 + $0x2c8] sm:$0xff]
        %v5932 = vld [vmem:[%s5841 + $0x2d0] sm:$0xff]
        %v5933 = vld [vmem:[%s5841 + $0x2d8] sm:$0xff]
        %v5934 = vld [vmem:[%s5841 + $0x2e0] sm:$0xff]
        %v5935 = vld [vmem:[%s5841 + $0x2e8] sm:$0xff]
        %v5936 = vld [vmem:[%s5841 + $0x2f0] sm:$0xff]
        %v5937 = vld [vmem:[%s5841 + $0x2f8] sm:$0xff]
        %v5938 = vld [vmem:[%s5841 + $0x300] sm:$0xff]
        %v5939 = vld [vmem:[%s5841 + $0x308] sm:$0xff]
        %v5940 = vld [vmem:[%s5841 + $0x310] sm:$0xff]
        %v5941 = vld [vmem:[%s5841 + $0x318] sm:$0xff]
        %v5942 = vld [vmem:[%s5841 + $0x320] sm:$0xff]
        %v5943 = vld [vmem:[%s5841 + $0x328] sm:$0xff]
        %v5944 = vld [vmem:[%s5841 + $0x330] sm:$0xff]
        %v5945 = vld [vmem:[%s5841 + $0x338] sm:$0xff]
        %v5946 = vld [vmem:[%s5841 + $0x340] sm:$0xff]
        %v5947 = vld [vmem:[%s5841 + $0x348] sm:$0xff]
        %v5948 = vld [vmem:[%s5841 + $0x350] sm:$0xff]
        %v5949 = vld [vmem:[%s5841 + $0x358] sm:$0xff]
        %v5950 = vld [vmem:[%s5841 + $0x360] sm:$0xff]
        %v5951 = vld [vmem:[%s5841 + $0x368] sm:$0xff]
        %v5952 = vld [vmem:[%s5841 + $0x370] sm:$0xff]
        %v5953 = vld [vmem:[%s5841 + $0x378] sm:$0xff]
        %v5954 = vld [vmem:[%s5841 + $0x380] sm:$0xff]
        %v5955 = vld [vmem:[%s5841 + $0x388] sm:$0xff]
        %v5956 = vld [vmem:[%s5841 + $0x390] sm:$0xff]
        %v5957 = vld [vmem:[%s5841 + $0x398] sm:$0xff]
        %v5958 = vld [vmem:[%s5841 + $0x3a0] sm:$0xff]
        %v5959 = vld [vmem:[%s5841 + $0x3a8] sm:$0xff]
        %v5960 = vld [vmem:[%s5841 + $0x3b0] sm:$0xff]
        %v5961 = vld [vmem:[%s5841 + $0x3b8] sm:$0xff]
        %v5962 = vld [vmem:[%s5841 + $0x3c0] sm:$0xff]
        %v5963 = vld [vmem:[%s5841 + $0x3c8] sm:$0xff]
        %v5964 = vld [vmem:[%s5841 + $0x3d0] sm:$0xff]
        %v5965 = vld [vmem:[%s5841 + $0x3d8] sm:$0xff]
        %v5966 = vld [vmem:[%s5841 + $0x3e0] sm:$0xff]
        %v5967 = vld [vmem:[%s5841 + $0x3e8] sm:$0xff]
        %v5968 = vld [vmem:[%s5841 + $0x3f0] sm:$0xff]
        %v5969 = vld [vmem:[%s5841 + $0x3f8] sm:$0xff]
        %s5970 = scalar_lea.vmem %s552, 8 [#allocation10]
        %v5971 = vld [vmem:[%s5970] sm:$0xf]
        %s5972 = scalar_lea.vmem %s561, 8 [#allocation11]
        %v5973 = vld [vmem:[%s5972] sm:$0xf]
        %s5974 = scalar_lea.vmem %s646, 3072
        %v5975 = vld [vmem:[%s5974] sm:$0xff]
        %v5976 = vld [vmem:[%s5974 + $0x8] sm:$0xff]
        %v5977 = vld [vmem:[%s5974 + $0x10] sm:$0xff]
        %v5978 = vld [vmem:[%s5974 + $0x18] sm:$0xff]
        %v5979 = vld [vmem:[%s5974 + $0x20] sm:$0xff]
        %v5980 = vld [vmem:[%s5974 + $0x28] sm:$0xff]
        %v5981 = vld [vmem:[%s5974 + $0x30] sm:$0xff]
        %v5982 = vld [vmem:[%s5974 + $0x38] sm:$0xff]
        %v5983 = vld [vmem:[%s5974 + $0x40] sm:$0xff]
        %v5984 = vld [vmem:[%s5974 + $0x48] sm:$0xff]
        %v5985 = vld [vmem:[%s5974 + $0x50] sm:$0xff]
        %v5986 = vld [vmem:[%s5974 + $0x58] sm:$0xff]
        %v5987 = vld [vmem:[%s5974 + $0x60] sm:$0xff]
        %v5988 = vld [vmem:[%s5974 + $0x68] sm:$0xff]
        %v5989 = vld [vmem:[%s5974 + $0x70] sm:$0xff]
        %v5990 = vld [vmem:[%s5974 + $0x78] sm:$0xff]
        %v5991 = vld [vmem:[%s5974 + $0x80] sm:$0xff]
        %v5992 = vld [vmem:[%s5974 + $0x88] sm:$0xff]
        %v5993 = vld [vmem:[%s5974 + $0x90] sm:$0xff]
        %v5994 = vld [vmem:[%s5974 + $0x98] sm:$0xff]
        %v5995 = vld [vmem:[%s5974 + $0xa0] sm:$0xff]
        %v5996 = vld [vmem:[%s5974 + $0xa8] sm:$0xff]
        %v5997 = vld [vmem:[%s5974 + $0xb0] sm:$0xff]
        %v5998 = vld [vmem:[%s5974 + $0xb8] sm:$0xff]
        %v5999 = vld [vmem:[%s5974 + $0xc0] sm:$0xff]
        %v6000 = vld [vmem:[%s5974 + $0xc8] sm:$0xff]
        %v6001 = vld [vmem:[%s5974 + $0xd0] sm:$0xff]
        %v6002 = vld [vmem:[%s5974 + $0xd8] sm:$0xff]
        %v6003 = vld [vmem:[%s5974 + $0xe0] sm:$0xff]
        %v6004 = vld [vmem:[%s5974 + $0xe8] sm:$0xff]
        %v6005 = vld [vmem:[%s5974 + $0xf0] sm:$0xff]
        %v6006 = vld [vmem:[%s5974 + $0xf8] sm:$0xff]
        %v6007 = vld [vmem:[%s5974 + $0x100] sm:$0xff]
        %v6008 = vld [vmem:[%s5974 + $0x108] sm:$0xff]
        %v6009 = vld [vmem:[%s5974 + $0x110] sm:$0xff]
        %v6010 = vld [vmem:[%s5974 + $0x118] sm:$0xff]
        %v6011 = vld [vmem:[%s5974 + $0x120] sm:$0xff]
        %v6012 = vld [vmem:[%s5974 + $0x128] sm:$0xff]
        %v6013 = vld [vmem:[%s5974 + $0x130] sm:$0xff]
        %v6014 = vld [vmem:[%s5974 + $0x138] sm:$0xff]
        %v6015 = vld [vmem:[%s5974 + $0x140] sm:$0xff]
        %v6016 = vld [vmem:[%s5974 + $0x148] sm:$0xff]
        %v6017 = vld [vmem:[%s5974 + $0x150] sm:$0xff]
        %v6018 = vld [vmem:[%s5974 + $0x158] sm:$0xff]
        %v6019 = vld [vmem:[%s5974 + $0x160] sm:$0xff]
        %v6020 = vld [vmem:[%s5974 + $0x168] sm:$0xff]
        %v6021 = vld [vmem:[%s5974 + $0x170] sm:$0xff]
        %v6022 = vld [vmem:[%s5974 + $0x178] sm:$0xff]
        %v6023 = vld [vmem:[%s5974 + $0x180] sm:$0xff]
        %v6024 = vld [vmem:[%s5974 + $0x188] sm:$0xff]
        %v6025 = vld [vmem:[%s5974 + $0x190] sm:$0xff]
        %v6026 = vld [vmem:[%s5974 + $0x198] sm:$0xff]
        %v6027 = vld [vmem:[%s5974 + $0x1a0] sm:$0xff]
        %v6028 = vld [vmem:[%s5974 + $0x1a8] sm:$0xff]
        %v6029 = vld [vmem:[%s5974 + $0x1b0] sm:$0xff]
        %v6030 = vld [vmem:[%s5974 + $0x1b8] sm:$0xff]
        %v6031 = vld [vmem:[%s5974 + $0x1c0] sm:$0xff]
        %v6032 = vld [vmem:[%s5974 + $0x1c8] sm:$0xff]
        %v6033 = vld [vmem:[%s5974 + $0x1d0] sm:$0xff]
        %v6034 = vld [vmem:[%s5974 + $0x1d8] sm:$0xff]
        %v6035 = vld [vmem:[%s5974 + $0x1e0] sm:$0xff]
        %v6036 = vld [vmem:[%s5974 + $0x1e8] sm:$0xff]
        %v6037 = vld [vmem:[%s5974 + $0x1f0] sm:$0xff]
        %v6038 = vld [vmem:[%s5974 + $0x1f8] sm:$0xff]
        %v6039 = vld [vmem:[%s5974 + $0x200] sm:$0xff]
        %v6040 = vld [vmem:[%s5974 + $0x208] sm:$0xff]
        %v6041 = vld [vmem:[%s5974 + $0x210] sm:$0xff]
        %v6042 = vld [vmem:[%s5974 + $0x218] sm:$0xff]
        %v6043 = vld [vmem:[%s5974 + $0x220] sm:$0xff]
        %v6044 = vld [vmem:[%s5974 + $0x228] sm:$0xff]
        %v6045 = vld [vmem:[%s5974 + $0x230] sm:$0xff]
        %v6046 = vld [vmem:[%s5974 + $0x238] sm:$0xff]
        %v6047 = vld [vmem:[%s5974 + $0x240] sm:$0xff]
        %v6048 = vld [vmem:[%s5974 + $0x248] sm:$0xff]
        %v6049 = vld [vmem:[%s5974 + $0x250] sm:$0xff]
        %v6050 = vld [vmem:[%s5974 + $0x258] sm:$0xff]
        %v6051 = vld [vmem:[%s5974 + $0x260] sm:$0xff]
        %v6052 = vld [vmem:[%s5974 + $0x268] sm:$0xff]
        %v6053 = vld [vmem:[%s5974 + $0x270] sm:$0xff]
        %v6054 = vld [vmem:[%s5974 + $0x278] sm:$0xff]
        %v6055 = vld [vmem:[%s5974 + $0x280] sm:$0xff]
        %v6056 = vld [vmem:[%s5974 + $0x288] sm:$0xff]
        %v6057 = vld [vmem:[%s5974 + $0x290] sm:$0xff]
        %v6058 = vld [vmem:[%s5974 + $0x298] sm:$0xff]
        %v6059 = vld [vmem:[%s5974 + $0x2a0] sm:$0xff]
        %v6060 = vld [vmem:[%s5974 + $0x2a8] sm:$0xff]
        %v6061 = vld [vmem:[%s5974 + $0x2b0] sm:$0xff]
        %v6062 = vld [vmem:[%s5974 + $0x2b8] sm:$0xff]
        %v6063 = vld [vmem:[%s5974 + $0x2c0] sm:$0xff]
        %v6064 = vld [vmem:[%s5974 + $0x2c8] sm:$0xff]
        %v6065 = vld [vmem:[%s5974 + $0x2d0] sm:$0xff]
        %v6066 = vld [vmem:[%s5974 + $0x2d8] sm:$0xff]
        %v6067 = vld [vmem:[%s5974 + $0x2e0] sm:$0xff]
        %v6068 = vld [vmem:[%s5974 + $0x2e8] sm:$0xff]
        %v6069 = vld [vmem:[%s5974 + $0x2f0] sm:$0xff]
        %v6070 = vld [vmem:[%s5974 + $0x2f8] sm:$0xff]
        %v6071 = vld [vmem:[%s5974 + $0x300] sm:$0xff]
        %v6072 = vld [vmem:[%s5974 + $0x308] sm:$0xff]
        %v6073 = vld [vmem:[%s5974 + $0x310] sm:$0xff]
        %v6074 = vld [vmem:[%s5974 + $0x318] sm:$0xff]
        %v6075 = vld [vmem:[%s5974 + $0x320] sm:$0xff]
        %v6076 = vld [vmem:[%s5974 + $0x328] sm:$0xff]
        %v6077 = vld [vmem:[%s5974 + $0x330] sm:$0xff]
        %v6078 = vld [vmem:[%s5974 + $0x338] sm:$0xff]
        %v6079 = vld [vmem:[%s5974 + $0x340] sm:$0xff]
        %v6080 = vld [vmem:[%s5974 + $0x348] sm:$0xff]
        %v6081 = vld [vmem:[%s5974 + $0x350] sm:$0xff]
        %v6082 = vld [vmem:[%s5974 + $0x358] sm:$0xff]
        %v6083 = vld [vmem:[%s5974 + $0x360] sm:$0xff]
        %v6084 = vld [vmem:[%s5974 + $0x368] sm:$0xff]
        %v6085 = vld [vmem:[%s5974 + $0x370] sm:$0xff]
        %v6086 = vld [vmem:[%s5974 + $0x378] sm:$0xff]
        %v6087 = vld [vmem:[%s5974 + $0x380] sm:$0xff]
        %v6088 = vld [vmem:[%s5974 + $0x388] sm:$0xff]
        %v6089 = vld [vmem:[%s5974 + $0x390] sm:$0xff]
        %v6090 = vld [vmem:[%s5974 + $0x398] sm:$0xff]
        %v6091 = vld [vmem:[%s5974 + $0x3a0] sm:$0xff]
        %v6092 = vld [vmem:[%s5974 + $0x3a8] sm:$0xff]
        %v6093 = vld [vmem:[%s5974 + $0x3b0] sm:$0xff]
        %v6094 = vld [vmem:[%s5974 + $0x3b8] sm:$0xff]
        %v6095 = vld [vmem:[%s5974 + $0x3c0] sm:$0xff]
        %v6096 = vld [vmem:[%s5974 + $0x3c8] sm:$0xff]
        %v6097 = vld [vmem:[%s5974 + $0x3d0] sm:$0xff]
        %v6098 = vld [vmem:[%s5974 + $0x3d8] sm:$0xff]
        %v6099 = vld [vmem:[%s5974 + $0x3e0] sm:$0xff]
        %v6100 = vld [vmem:[%s5974 + $0x3e8] sm:$0xff]
        %v6101 = vld [vmem:[%s5974 + $0x3f0] sm:$0xff]
        %v6102 = vld [vmem:[%s5974 + $0x3f8] sm:$0xff]
        %s6103 = scalar_lea.vmem %s552, 12 [#allocation10]
        %v6104 = vld [vmem:[%s6103] sm:$0xf]
        %s6105 = scalar_lea.vmem %s561, 12 [#allocation11]
        %v6106 = vld [vmem:[%s6105] sm:$0xf]
        %v6107 = vpack.c.bf16 %v5377, %v5377
        %v6108 = vpack.c.bf16 %v5378, %v5378
        %v6109 = vpack.c.bf16 %v5379, %v5379
        %v6110 = vpack.c.bf16 %v5380, %v5380
        %v6112 = vlaneseq
        %v6113 = vshrl.u32 %v6112, 7
        %v6114 = vsub.s32 0, %v6113
        %v6115 = vrot.slane %v5579, %v6114
        %v6116 = vlaneseq
        %v6117 = vshrl.u32 %v6116, 7
        %v6118 = vsub.s32 1, %v6117
        %v6119 = vrot.slane %v5579, %v6118
        %v6120 = vlaneseq
        %v6121 = vshrl.u32 %v6120, 7
        %v6122 = vsub.s32 2, %v6121
        %v6123 = vrot.slane %v5579, %v6122
        %v6124 = vlaneseq
        %v6125 = vshrl.u32 %v6124, 7
        %v6126 = vsub.s32 3, %v6125
        %v6127 = vrot.slane %v5579, %v6126
        %v6128 = vlaneseq
        %v6129 = vshrl.u32 %v6128, 7
        %v6130 = vsub.s32 4, %v6129
        %v6131 = vrot.slane %v5579, %v6130
        %v6132 = vlaneseq
        %v6133 = vshrl.u32 %v6132, 7
        %v6134 = vsub.s32 5, %v6133
        %v6135 = vrot.slane %v5579, %v6134
        %v6136 = vlaneseq
        %v6137 = vshrl.u32 %v6136, 7
        %v6138 = vsub.s32 6, %v6137
        %v6139 = vrot.slane %v5579, %v6138
        %v6140 = vlaneseq
        %v6141 = vshrl.u32 %v6140, 7
        %v6142 = vsub.s32 7, %v6141
        %v6143 = vrot.slane %v5579, %v6142
        %v6348 = vunpack.c.l.b16 %v5382
        %v6349 = vunpack.c.h.b16 %v5382
        %v6350 = vunpack.c.l.b16 %v5383
        %v6351 = vunpack.c.h.b16 %v5383
        %v6352 = vunpack.c.l.b16 %v5384
        %v6353 = vunpack.c.h.b16 %v5384
        %v6354 = vunpack.c.l.b16 %v5385
        %v6355 = vunpack.c.h.b16 %v5385
        %v6356 = vunpack.c.l.b16 %v5386
        %v6357 = vunpack.c.h.b16 %v5386
        %v6358 = vunpack.c.l.b16 %v5387
        %v6359 = vunpack.c.h.b16 %v5387
        %v6360 = vunpack.c.l.b16 %v5388
        %v6361 = vunpack.c.h.b16 %v5388
        %v6362 = vunpack.c.l.b16 %v5389
        %v6363 = vunpack.c.h.b16 %v5389
        %v6364 = vunpack.c.l.b16 %v5390
        %v6365 = vunpack.c.h.b16 %v5390
        %v6366 = vunpack.c.l.b16 %v5391
        %v6367 = vunpack.c.h.b16 %v5391
        %v6368 = vunpack.c.l.b16 %v5392
        %v6369 = vunpack.c.h.b16 %v5392
        %v6370 = vunpack.c.l.b16 %v5393
        %v6371 = vunpack.c.h.b16 %v5393
        %v6372 = vunpack.c.l.b16 %v5394
        %v6373 = vunpack.c.h.b16 %v5394
        %v6374 = vunpack.c.l.b16 %v5395
        %v6375 = vunpack.c.h.b16 %v5395
        %v6376 = vunpack.c.l.b16 %v5396
        %v6377 = vunpack.c.h.b16 %v5396
        %v6378 = vunpack.c.l.b16 %v5397
        %v6379 = vunpack.c.h.b16 %v5397
        %v6380 = vunpack.c.l.b16 %v5398
        %v6381 = vunpack.c.h.b16 %v5398
        %v6382 = vunpack.c.l.b16 %v5399
        %v6383 = vunpack.c.h.b16 %v5399
        %v6384 = vunpack.c.l.b16 %v5400
        %v6385 = vunpack.c.h.b16 %v5400
        %v6386 = vunpack.c.l.b16 %v5401
        %v6387 = vunpack.c.h.b16 %v5401
        %v6388 = vunpack.c.l.b16 %v5402
        %v6389 = vunpack.c.h.b16 %v5402
        %v6390 = vunpack.c.l.b16 %v5403
        %v6391 = vunpack.c.h.b16 %v5403
        %v6392 = vunpack.c.l.b16 %v5404
        %v6393 = vunpack.c.h.b16 %v5404
        %v6394 = vunpack.c.l.b16 %v5405
        %v6395 = vunpack.c.h.b16 %v5405
        %v6396 = vunpack.c.l.b16 %v5406
        %v6397 = vunpack.c.h.b16 %v5406
        %v6398 = vunpack.c.l.b16 %v5407
        %v6399 = vunpack.c.h.b16 %v5407
        %v6400 = vunpack.c.l.b16 %v5408
        %v6401 = vunpack.c.h.b16 %v5408
        %v6402 = vunpack.c.l.b16 %v5409
        %v6403 = vunpack.c.h.b16 %v5409
        %v6404 = vunpack.c.l.b16 %v5410
        %v6405 = vunpack.c.h.b16 %v5410
        %v6406 = vunpack.c.l.b16 %v5411
        %v6407 = vunpack.c.h.b16 %v5411
        %v6408 = vunpack.c.l.b16 %v5412
        %v6409 = vunpack.c.h.b16 %v5412
        %v6410 = vunpack.c.l.b16 %v5413
        %v6411 = vunpack.c.h.b16 %v5413
        %v6412 = vunpack.c.l.b16 %v5414
        %v6413 = vunpack.c.h.b16 %v5414
        %v6414 = vunpack.c.l.b16 %v5415
        %v6415 = vunpack.c.h.b16 %v5415
        %v6416 = vunpack.c.l.b16 %v5416
        %v6417 = vunpack.c.h.b16 %v5416
        %v6418 = vunpack.c.l.b16 %v5417
        %v6419 = vunpack.c.h.b16 %v5417
        %v6420 = vunpack.c.l.b16 %v5418
        %v6421 = vunpack.c.h.b16 %v5418
        %v6422 = vunpack.c.l.b16 %v5419
        %v6423 = vunpack.c.h.b16 %v5419
        %v6424 = vunpack.c.l.b16 %v5420
        %v6425 = vunpack.c.h.b16 %v5420
        %v6426 = vunpack.c.l.b16 %v5421
        %v6427 = vunpack.c.h.b16 %v5421
        %v6428 = vunpack.c.l.b16 %v5422
        %v6429 = vunpack.c.h.b16 %v5422
        %v6430 = vunpack.c.l.b16 %v5423
        %v6431 = vunpack.c.h.b16 %v5423
        %v6432 = vunpack.c.l.b16 %v5424
        %v6433 = vunpack.c.h.b16 %v5424
        %v6434 = vunpack.c.l.b16 %v5425
        %v6435 = vunpack.c.h.b16 %v5425
        %v6436 = vunpack.c.l.b16 %v5426
        %v6437 = vunpack.c.h.b16 %v5426
        %v6438 = vunpack.c.l.b16 %v5427
        %v6439 = vunpack.c.h.b16 %v5427
        %v6440 = vunpack.c.l.b16 %v5428
        %v6441 = vunpack.c.h.b16 %v5428
        %v6442 = vunpack.c.l.b16 %v5429
        %v6443 = vunpack.c.h.b16 %v5429
        %v6444 = vunpack.c.l.b16 %v5430
        %v6445 = vunpack.c.h.b16 %v5430
        %v6446 = vunpack.c.l.b16 %v5431
        %v6447 = vunpack.c.h.b16 %v5431
        %v6448 = vunpack.c.l.b16 %v5432
        %v6449 = vunpack.c.h.b16 %v5432
        %v6450 = vunpack.c.l.b16 %v5433
        %v6451 = vunpack.c.h.b16 %v5433
        %v6452 = vunpack.c.l.b16 %v5434
        %v6453 = vunpack.c.h.b16 %v5434
        %v6454 = vunpack.c.l.b16 %v5435
        %v6455 = vunpack.c.h.b16 %v5435
        %v6456 = vunpack.c.l.b16 %v5436
        %v6457 = vunpack.c.h.b16 %v5436
        %v6458 = vunpack.c.l.b16 %v5437
        %v6459 = vunpack.c.h.b16 %v5437
        %v6460 = vunpack.c.l.b16 %v5438
        %v6461 = vunpack.c.h.b16 %v5438
        %v6462 = vunpack.c.l.b16 %v5439
        %v6463 = vunpack.c.h.b16 %v5439
        %v6464 = vunpack.c.l.b16 %v5440
        %v6465 = vunpack.c.h.b16 %v5440
        %v6466 = vunpack.c.l.b16 %v5441
        %v6467 = vunpack.c.h.b16 %v5441
        %v6468 = vunpack.c.l.b16 %v5442
        %v6469 = vunpack.c.h.b16 %v5442
        %v6470 = vunpack.c.l.b16 %v5443
        %v6471 = vunpack.c.h.b16 %v5443
        %v6472 = vunpack.c.l.b16 %v5444
        %v6473 = vunpack.c.h.b16 %v5444
        %v6474 = vunpack.c.l.b16 %v5445
        %v6475 = vunpack.c.h.b16 %v5445
        %v6476 = vunpack.c.l.b16 %v5446
        %v6477 = vunpack.c.h.b16 %v5446
        %v6478 = vunpack.c.l.b16 %v5447
        %v6479 = vunpack.c.h.b16 %v5447
        %v6480 = vunpack.c.l.b16 %v5448
        %v6481 = vunpack.c.h.b16 %v5448
        %v6482 = vunpack.c.l.b16 %v5449
        %v6483 = vunpack.c.h.b16 %v5449
        %v6484 = vunpack.c.l.b16 %v5450
        %v6485 = vunpack.c.h.b16 %v5450
        %v6486 = vunpack.c.l.b16 %v5451
        %v6487 = vunpack.c.h.b16 %v5451
        %v6488 = vunpack.c.l.b16 %v5452
        %v6489 = vunpack.c.h.b16 %v5452
        %v6490 = vunpack.c.l.b16 %v5453
        %v6491 = vunpack.c.h.b16 %v5453
        %v6492 = vunpack.c.l.b16 %v5454
        %v6493 = vunpack.c.h.b16 %v5454
        %v6494 = vunpack.c.l.b16 %v5455
        %v6495 = vunpack.c.h.b16 %v5455
        %v6496 = vunpack.c.l.b16 %v5456
        %v6497 = vunpack.c.h.b16 %v5456
        %v6498 = vunpack.c.l.b16 %v5457
        %v6499 = vunpack.c.h.b16 %v5457
        %v6500 = vunpack.c.l.b16 %v5458
        %v6501 = vunpack.c.h.b16 %v5458
        %v6502 = vunpack.c.l.b16 %v5459
        %v6503 = vunpack.c.h.b16 %v5459
        %v6504 = vunpack.c.l.b16 %v5460
        %v6505 = vunpack.c.h.b16 %v5460
        %v6506 = vunpack.c.l.b16 %v5461
        %v6507 = vunpack.c.h.b16 %v5461
        %v6508 = vunpack.c.l.b16 %v5462
        %v6509 = vunpack.c.h.b16 %v5462
        %v6510 = vunpack.c.l.b16 %v5463
        %v6511 = vunpack.c.h.b16 %v5463
        %v6512 = vunpack.c.l.b16 %v5464
        %v6513 = vunpack.c.h.b16 %v5464
        %v6514 = vunpack.c.l.b16 %v5465
        %v6515 = vunpack.c.h.b16 %v5465
        %v6516 = vunpack.c.l.b16 %v5466
        %v6517 = vunpack.c.h.b16 %v5466
        %v6518 = vunpack.c.l.b16 %v5467
        %v6519 = vunpack.c.h.b16 %v5467
        %v6520 = vunpack.c.l.b16 %v5468
        %v6521 = vunpack.c.h.b16 %v5468
        %v6522 = vunpack.c.l.b16 %v5469
        %v6523 = vunpack.c.h.b16 %v5469
        %v6524 = vunpack.c.l.b16 %v5470
        %v6525 = vunpack.c.h.b16 %v5470
        %v6526 = vunpack.c.l.b16 %v5471
        %v6527 = vunpack.c.h.b16 %v5471
        %v6528 = vunpack.c.l.b16 %v5472
        %v6529 = vunpack.c.h.b16 %v5472
        %v6530 = vunpack.c.l.b16 %v5473
        %v6531 = vunpack.c.h.b16 %v5473
        %v6532 = vunpack.c.l.b16 %v5474
        %v6533 = vunpack.c.h.b16 %v5474
        %v6534 = vunpack.c.l.b16 %v5475
        %v6535 = vunpack.c.h.b16 %v5475
        %v6536 = vunpack.c.l.b16 %v5476
        %v6537 = vunpack.c.h.b16 %v5476
        %v6538 = vunpack.c.l.b16 %v5477
        %v6539 = vunpack.c.h.b16 %v5477
        %v6540 = vunpack.c.l.b16 %v5478
        %v6541 = vunpack.c.h.b16 %v5478
        %v6542 = vunpack.c.l.b16 %v5479
        %v6543 = vunpack.c.h.b16 %v5479
        %v6544 = vunpack.c.l.b16 %v5480
        %v6545 = vunpack.c.h.b16 %v5480
        %v6546 = vunpack.c.l.b16 %v5481
        %v6547 = vunpack.c.h.b16 %v5481
        %v6548 = vunpack.c.l.b16 %v5482
        %v6549 = vunpack.c.h.b16 %v5482
        %v6550 = vunpack.c.l.b16 %v5483
        %v6551 = vunpack.c.h.b16 %v5483
        %v6552 = vunpack.c.l.b16 %v5484
        %v6553 = vunpack.c.h.b16 %v5484
        %v6554 = vunpack.c.l.b16 %v5485
        %v6555 = vunpack.c.h.b16 %v5485
        %v6556 = vunpack.c.l.b16 %v5486
        %v6557 = vunpack.c.h.b16 %v5486
        %v6558 = vunpack.c.l.b16 %v5487
        %v6559 = vunpack.c.h.b16 %v5487
        %v6560 = vunpack.c.l.b16 %v5488
        %v6561 = vunpack.c.h.b16 %v5488
        %v6562 = vunpack.c.l.b16 %v5489
        %v6563 = vunpack.c.h.b16 %v5489
        %v6564 = vunpack.c.l.b16 %v5490
        %v6565 = vunpack.c.h.b16 %v5490
        %v6566 = vunpack.c.l.b16 %v5491
        %v6567 = vunpack.c.h.b16 %v5491
        %v6568 = vunpack.c.l.b16 %v5492
        %v6569 = vunpack.c.h.b16 %v5492
        %v6570 = vunpack.c.l.b16 %v5493
        %v6571 = vunpack.c.h.b16 %v5493
        %v6572 = vunpack.c.l.b16 %v5494
        %v6573 = vunpack.c.h.b16 %v5494
        %v6574 = vunpack.c.l.b16 %v5495
        %v6575 = vunpack.c.h.b16 %v5495
        %v6576 = vunpack.c.l.b16 %v5496
        %v6577 = vunpack.c.h.b16 %v5496
        %v6578 = vunpack.c.l.b16 %v5497
        %v6579 = vunpack.c.h.b16 %v5497
        %v6580 = vunpack.c.l.b16 %v5498
        %v6581 = vunpack.c.h.b16 %v5498
        %v6582 = vunpack.c.l.b16 %v5499
        %v6583 = vunpack.c.h.b16 %v5499
        %v6584 = vunpack.c.l.b16 %v5500
        %v6585 = vunpack.c.h.b16 %v5500
        %v6586 = vunpack.c.l.b16 %v5501
        %v6587 = vunpack.c.h.b16 %v5501
        %v6588 = vunpack.c.l.b16 %v5502
        %v6589 = vunpack.c.h.b16 %v5502
        %v6590 = vunpack.c.l.b16 %v5503
        %v6591 = vunpack.c.h.b16 %v5503
        %v6592 = vunpack.c.l.b16 %v5504
        %v6593 = vunpack.c.h.b16 %v5504
        %v6594 = vunpack.c.l.b16 %v5505
        %v6595 = vunpack.c.h.b16 %v5505
        %v6596 = vunpack.c.l.b16 %v5506
        %v6597 = vunpack.c.h.b16 %v5506
        %v6598 = vunpack.c.l.b16 %v5507
        %v6599 = vunpack.c.h.b16 %v5507
        %v6600 = vunpack.c.l.b16 %v5508
        %v6601 = vunpack.c.h.b16 %v5508
        %v6602 = vunpack.c.l.b16 %v5509
        %v6603 = vunpack.c.h.b16 %v5509
        %v6604 = vunpack.c.l.b16 %v5510
        %v6605 = vunpack.c.h.b16 %v5510
        %v6606 = vunpack.c.l.b16 %v5511
        %v6607 = vunpack.c.h.b16 %v5511
        %v6608 = vunpack.c.l.b16 %v5512
        %v6609 = vunpack.c.h.b16 %v5512
        %v6610 = vunpack.c.l.b16 %v5513
        %v6611 = vunpack.c.h.b16 %v5513
        %v6612 = vunpack.c.l.b16 %v5514
        %v6613 = vunpack.c.h.b16 %v5514
        %v6614 = vunpack.c.l.b16 %v5515
        %v6615 = vunpack.c.h.b16 %v5515
        %v6616 = vunpack.c.l.b16 %v5516
        %v6617 = vunpack.c.h.b16 %v5516
        %v6618 = vunpack.c.l.b16 %v5517
        %v6619 = vunpack.c.h.b16 %v5517
        %v6620 = vunpack.c.l.b16 %v5518
        %v6621 = vunpack.c.h.b16 %v5518
        %v6622 = vunpack.c.l.b16 %v5519
        %v6623 = vunpack.c.h.b16 %v5519
        %v6624 = vunpack.c.l.b16 %v5520
        %v6625 = vunpack.c.h.b16 %v5520
        %v6626 = vunpack.c.l.b16 %v5521
        %v6627 = vunpack.c.h.b16 %v5521
        %v6628 = vunpack.c.l.b16 %v5522
        %v6629 = vunpack.c.h.b16 %v5522
        %v6630 = vunpack.c.l.b16 %v5523
        %v6631 = vunpack.c.h.b16 %v5523
        %v6632 = vunpack.c.l.b16 %v5524
        %v6633 = vunpack.c.h.b16 %v5524
        %v6634 = vunpack.c.l.b16 %v5525
        %v6635 = vunpack.c.h.b16 %v5525
        %v6636 = vunpack.c.l.b16 %v5526
        %v6637 = vunpack.c.h.b16 %v5526
        %v6638 = vunpack.c.l.b16 %v5527
        %v6639 = vunpack.c.h.b16 %v5527
        %v6640 = vunpack.c.l.b16 %v5528
        %v6641 = vunpack.c.h.b16 %v5528
        %v6642 = vunpack.c.l.b16 %v5529
        %v6643 = vunpack.c.h.b16 %v5529
        %v6644 = vunpack.c.l.b16 %v5530
        %v6645 = vunpack.c.h.b16 %v5530
        %v6646 = vunpack.c.l.b16 %v5531
        %v6647 = vunpack.c.h.b16 %v5531
        %v6648 = vunpack.c.l.b16 %v5532
        %v6649 = vunpack.c.h.b16 %v5532
        %v6650 = vunpack.c.l.b16 %v5533
        %v6651 = vunpack.c.h.b16 %v5533
        %v6652 = vunpack.c.l.b16 %v5534
        %v6653 = vunpack.c.h.b16 %v5534
        %v6654 = vunpack.c.l.b16 %v5535
        %v6655 = vunpack.c.h.b16 %v5535
        %v6656 = vunpack.c.l.b16 %v5536
        %v6657 = vunpack.c.h.b16 %v5536
        %v6658 = vunpack.c.l.b16 %v5537
        %v6659 = vunpack.c.h.b16 %v5537
        %v6660 = vunpack.c.l.b16 %v5538
        %v6661 = vunpack.c.h.b16 %v5538
        %v6662 = vunpack.c.l.b16 %v5539
        %v6663 = vunpack.c.h.b16 %v5539
        %v6664 = vunpack.c.l.b16 %v5540
        %v6665 = vunpack.c.h.b16 %v5540
        %v6666 = vunpack.c.l.b16 %v5541
        %v6667 = vunpack.c.h.b16 %v5541
        %v6668 = vunpack.c.l.b16 %v5542
        %v6669 = vunpack.c.h.b16 %v5542
        %v6670 = vunpack.c.l.b16 %v5543
        %v6671 = vunpack.c.h.b16 %v5543
        %v6672 = vunpack.c.l.b16 %v5544
        %v6673 = vunpack.c.h.b16 %v5544
        %v6674 = vunpack.c.l.b16 %v5545
        %v6675 = vunpack.c.h.b16 %v5545
        %v6676 = vunpack.c.l.b16 %v5546
        %v6677 = vunpack.c.h.b16 %v5546
        %v6678 = vunpack.c.l.b16 %v5547
        %v6679 = vunpack.c.h.b16 %v5547
        %v6680 = vunpack.c.l.b16 %v5548
        %v6681 = vunpack.c.h.b16 %v5548
        %v6682 = vunpack.c.l.b16 %v5549
        %v6683 = vunpack.c.h.b16 %v5549
        %v6684 = vunpack.c.l.b16 %v5550
        %v6685 = vunpack.c.h.b16 %v5550
        %v6686 = vunpack.c.l.b16 %v5551
        %v6687 = vunpack.c.h.b16 %v5551
        %v6688 = vunpack.c.l.b16 %v5552
        %v6689 = vunpack.c.h.b16 %v5552
        %v6690 = vunpack.c.l.b16 %v5553
        %v6691 = vunpack.c.h.b16 %v5553
        %v6692 = vunpack.c.l.b16 %v5554
        %v6693 = vunpack.c.h.b16 %v5554
        %v6694 = vunpack.c.l.b16 %v5555
        %v6695 = vunpack.c.h.b16 %v5555
        %v6696 = vunpack.c.l.b16 %v5556
        %v6697 = vunpack.c.h.b16 %v5556
        %v6698 = vunpack.c.l.b16 %v5557
        %v6699 = vunpack.c.h.b16 %v5557
        %v6700 = vunpack.c.l.b16 %v5558
        %v6701 = vunpack.c.h.b16 %v5558
        %v6702 = vunpack.c.l.b16 %v5559
        %v6703 = vunpack.c.h.b16 %v5559
        %v6704 = vunpack.c.l.b16 %v5560
        %v6705 = vunpack.c.h.b16 %v5560
        %v6706 = vunpack.c.l.b16 %v5561
        %v6707 = vunpack.c.h.b16 %v5561
        %v6708 = vunpack.c.l.b16 %v5562
        %v6709 = vunpack.c.h.b16 %v5562
        %v6710 = vunpack.c.l.b16 %v5563
        %v6711 = vunpack.c.h.b16 %v5563
        %v6712 = vunpack.c.l.b16 %v5564
        %v6713 = vunpack.c.h.b16 %v5564
        %v6714 = vunpack.c.l.b16 %v5565
        %v6715 = vunpack.c.h.b16 %v5565
        %v6716 = vunpack.c.l.b16 %v5566
        %v6717 = vunpack.c.h.b16 %v5566
        %v6718 = vunpack.c.l.b16 %v5567
        %v6719 = vunpack.c.h.b16 %v5567
        %v6720 = vunpack.c.l.b16 %v5568
        %v6721 = vunpack.c.h.b16 %v5568
        %v6722 = vunpack.c.l.b16 %v5569
        %v6723 = vunpack.c.h.b16 %v5569
        %v6724 = vunpack.c.l.b16 %v5570
        %v6725 = vunpack.c.h.b16 %v5570
        %v6726 = vunpack.c.l.b16 %v5571
        %v6727 = vunpack.c.h.b16 %v5571
        %v6728 = vunpack.c.l.b16 %v5572
        %v6729 = vunpack.c.h.b16 %v5572
        %v6730 = vunpack.c.l.b16 %v5573
        %v6731 = vunpack.c.h.b16 %v5573
        %v6732 = vunpack.c.l.b16 %v5574
        %v6733 = vunpack.c.h.b16 %v5574
        %v6734 = vunpack.c.l.b16 %v5575
        %v6735 = vunpack.c.h.b16 %v5575
        %v6736 = vunpack.c.l.b16 %v5576
        %v6737 = vunpack.c.h.b16 %v5576
        %v6738 = vunpack.c.l.b16 %v5577
        %v6739 = vunpack.c.h.b16 %v5577
        %v6740 = vpack.c.b16 %v6356, %v6348
        %v6741 = vpack.c.b16 %v6357, %v6349
        %v6742 = vpack.c.b16 %v6358, %v6350
        %v6743 = vpack.c.b16 %v6359, %v6351
        %v6744 = vpack.c.b16 %v6360, %v6352
        %v6745 = vpack.c.b16 %v6361, %v6353
        %v6746 = vpack.c.b16 %v6362, %v6354
        %v6747 = vpack.c.b16 %v6363, %v6355
        %v6748 = vpack.c.b16 %v6372, %v6364
        %v6749 = vpack.c.b16 %v6373, %v6365
        %v6750 = vpack.c.b16 %v6374, %v6366
        %v6751 = vpack.c.b16 %v6375, %v6367
        %v6752 = vpack.c.b16 %v6376, %v6368
        %v6753 = vpack.c.b16 %v6377, %v6369
        %v6754 = vpack.c.b16 %v6378, %v6370
        %v6755 = vpack.c.b16 %v6379, %v6371
        %v6756 = vpack.c.b16 %v6388, %v6380
        %v6757 = vpack.c.b16 %v6389, %v6381
        %v6758 = vpack.c.b16 %v6390, %v6382
        %v6759 = vpack.c.b16 %v6391, %v6383
        %v6760 = vpack.c.b16 %v6392, %v6384
        %v6761 = vpack.c.b16 %v6393, %v6385
        %v6762 = vpack.c.b16 %v6394, %v6386
        %v6763 = vpack.c.b16 %v6395, %v6387
        %v6764 = vpack.c.b16 %v6404, %v6396
        %v6765 = vpack.c.b16 %v6405, %v6397
        %v6766 = vpack.c.b16 %v6406, %v6398
        %v6767 = vpack.c.b16 %v6407, %v6399
        %v6768 = vpack.c.b16 %v6408, %v6400
        %v6769 = vpack.c.b16 %v6409, %v6401
        %v6770 = vpack.c.b16 %v6410, %v6402
        %v6771 = vpack.c.b16 %v6411, %v6403
        %v6772 = vpack.c.b16 %v6420, %v6412
        %v6773 = vpack.c.b16 %v6421, %v6413
        %v6774 = vpack.c.b16 %v6422, %v6414
        %v6775 = vpack.c.b16 %v6423, %v6415
        %v6776 = vpack.c.b16 %v6424, %v6416
        %v6777 = vpack.c.b16 %v6425, %v6417
        %v6778 = vpack.c.b16 %v6426, %v6418
        %v6779 = vpack.c.b16 %v6427, %v6419
        %v6780 = vpack.c.b16 %v6436, %v6428
        %v6781 = vpack.c.b16 %v6437, %v6429
        %v6782 = vpack.c.b16 %v6438, %v6430
        %v6783 = vpack.c.b16 %v6439, %v6431
        %v6784 = vpack.c.b16 %v6440, %v6432
        %v6785 = vpack.c.b16 %v6441, %v6433
        %v6786 = vpack.c.b16 %v6442, %v6434
        %v6787 = vpack.c.b16 %v6443, %v6435
        %v6788 = vpack.c.b16 %v6452, %v6444
        %v6789 = vpack.c.b16 %v6453, %v6445
        %v6790 = vpack.c.b16 %v6454, %v6446
        %v6791 = vpack.c.b16 %v6455, %v6447
        %v6792 = vpack.c.b16 %v6456, %v6448
        %v6793 = vpack.c.b16 %v6457, %v6449
        %v6794 = vpack.c.b16 %v6458, %v6450
        %v6795 = vpack.c.b16 %v6459, %v6451
        %v6796 = vpack.c.b16 %v6468, %v6460
        %v6797 = vpack.c.b16 %v6469, %v6461
        %v6798 = vpack.c.b16 %v6470, %v6462
        %v6799 = vpack.c.b16 %v6471, %v6463
        %v6800 = vpack.c.b16 %v6472, %v6464
        %v6801 = vpack.c.b16 %v6473, %v6465
        %v6802 = vpack.c.b16 %v6474, %v6466
        %v6803 = vpack.c.b16 %v6475, %v6467
        %v6804 = vpack.c.b16 %v6484, %v6476
        %v6805 = vpack.c.b16 %v6485, %v6477
        %v6806 = vpack.c.b16 %v6486, %v6478
        %v6807 = vpack.c.b16 %v6487, %v6479
        %v6808 = vpack.c.b16 %v6488, %v6480
        %v6809 = vpack.c.b16 %v6489, %v6481
        %v6810 = vpack.c.b16 %v6490, %v6482
        %v6811 = vpack.c.b16 %v6491, %v6483
        %v6812 = vpack.c.b16 %v6500, %v6492
        %v6813 = vpack.c.b16 %v6501, %v6493
        %v6814 = vpack.c.b16 %v6502, %v6494
        %v6815 = vpack.c.b16 %v6503, %v6495
        %v6816 = vpack.c.b16 %v6504, %v6496
        %v6817 = vpack.c.b16 %v6505, %v6497
        %v6818 = vpack.c.b16 %v6506, %v6498
        %v6819 = vpack.c.b16 %v6507, %v6499
        %v6820 = vpack.c.b16 %v6516, %v6508
        %v6821 = vpack.c.b16 %v6517, %v6509
        %v6822 = vpack.c.b16 %v6518, %v6510
        %v6823 = vpack.c.b16 %v6519, %v6511
        %v6824 = vpack.c.b16 %v6520, %v6512
        %v6825 = vpack.c.b16 %v6521, %v6513
        %v6826 = vpack.c.b16 %v6522, %v6514
        %v6827 = vpack.c.b16 %v6523, %v6515
        %v6828 = vpack.c.b16 %v6532, %v6524
        %v6829 = vpack.c.b16 %v6533, %v6525
        %v6830 = vpack.c.b16 %v6534, %v6526
        %v6831 = vpack.c.b16 %v6535, %v6527
        %v6832 = vpack.c.b16 %v6536, %v6528
        %v6833 = vpack.c.b16 %v6537, %v6529
        %v6834 = vpack.c.b16 %v6538, %v6530
        %v6835 = vpack.c.b16 %v6539, %v6531
        %v6836 = vpack.c.b16 %v6548, %v6540
        %v6837 = vpack.c.b16 %v6549, %v6541
        %v6838 = vpack.c.b16 %v6550, %v6542
        %v6839 = vpack.c.b16 %v6551, %v6543
        %v6840 = vpack.c.b16 %v6552, %v6544
        %v6841 = vpack.c.b16 %v6553, %v6545
        %v6842 = vpack.c.b16 %v6554, %v6546
        %v6843 = vpack.c.b16 %v6555, %v6547
        %v6844 = vpack.c.b16 %v6564, %v6556
        %v6845 = vpack.c.b16 %v6565, %v6557
        %v6846 = vpack.c.b16 %v6566, %v6558
        %v6847 = vpack.c.b16 %v6567, %v6559
        %v6848 = vpack.c.b16 %v6568, %v6560
        %v6849 = vpack.c.b16 %v6569, %v6561
        %v6850 = vpack.c.b16 %v6570, %v6562
        %v6851 = vpack.c.b16 %v6571, %v6563
        %v6852 = vpack.c.b16 %v6580, %v6572
        %v6853 = vpack.c.b16 %v6581, %v6573
        %v6854 = vpack.c.b16 %v6582, %v6574
        %v6855 = vpack.c.b16 %v6583, %v6575
        %v6856 = vpack.c.b16 %v6584, %v6576
        %v6857 = vpack.c.b16 %v6585, %v6577
        %v6858 = vpack.c.b16 %v6586, %v6578
        %v6859 = vpack.c.b16 %v6587, %v6579
        %v6860 = vpack.c.b16 %v6596, %v6588
        %v6861 = vpack.c.b16 %v6597, %v6589
        %v6862 = vpack.c.b16 %v6598, %v6590
        %v6863 = vpack.c.b16 %v6599, %v6591
        %v6864 = vpack.c.b16 %v6600, %v6592
        %v6865 = vpack.c.b16 %v6601, %v6593
        %v6866 = vpack.c.b16 %v6602, %v6594
        %v6867 = vpack.c.b16 %v6603, %v6595
        %v6868 = vpack.c.b16 %v6612, %v6604
        %v6869 = vpack.c.b16 %v6613, %v6605
        %v6870 = vpack.c.b16 %v6614, %v6606
        %v6871 = vpack.c.b16 %v6615, %v6607
        %v6872 = vpack.c.b16 %v6616, %v6608
        %v6873 = vpack.c.b16 %v6617, %v6609
        %v6874 = vpack.c.b16 %v6618, %v6610
        %v6875 = vpack.c.b16 %v6619, %v6611
        %v6876 = vpack.c.b16 %v6628, %v6620
        %v6877 = vpack.c.b16 %v6629, %v6621
        %v6878 = vpack.c.b16 %v6630, %v6622
        %v6879 = vpack.c.b16 %v6631, %v6623
        %v6880 = vpack.c.b16 %v6632, %v6624
        %v6881 = vpack.c.b16 %v6633, %v6625
        %v6882 = vpack.c.b16 %v6634, %v6626
        %v6883 = vpack.c.b16 %v6635, %v6627
        %v6884 = vpack.c.b16 %v6644, %v6636
        %v6885 = vpack.c.b16 %v6645, %v6637
        %v6886 = vpack.c.b16 %v6646, %v6638
        %v6887 = vpack.c.b16 %v6647, %v6639
        %v6888 = vpack.c.b16 %v6648, %v6640
        %v6889 = vpack.c.b16 %v6649, %v6641
        %v6890 = vpack.c.b16 %v6650, %v6642
        %v6891 = vpack.c.b16 %v6651, %v6643
        %v6892 = vpack.c.b16 %v6660, %v6652
        %v6893 = vpack.c.b16 %v6661, %v6653
        %v6894 = vpack.c.b16 %v6662, %v6654
        %v6895 = vpack.c.b16 %v6663, %v6655
        %v6896 = vpack.c.b16 %v6664, %v6656
        %v6897 = vpack.c.b16 %v6665, %v6657
        %v6898 = vpack.c.b16 %v6666, %v6658
        %v6899 = vpack.c.b16 %v6667, %v6659
        %v6900 = vpack.c.b16 %v6676, %v6668
        %v6901 = vpack.c.b16 %v6677, %v6669
        %v6902 = vpack.c.b16 %v6678, %v6670
        %v6903 = vpack.c.b16 %v6679, %v6671
        %v6904 = vpack.c.b16 %v6680, %v6672
        %v6905 = vpack.c.b16 %v6681, %v6673
        %v6906 = vpack.c.b16 %v6682, %v6674
        %v6907 = vpack.c.b16 %v6683, %v6675
        %v6908 = vpack.c.b16 %v6692, %v6684
        %v6909 = vpack.c.b16 %v6693, %v6685
        %v6910 = vpack.c.b16 %v6694, %v6686
        %v6911 = vpack.c.b16 %v6695, %v6687
        %v6912 = vpack.c.b16 %v6696, %v6688
        %v6913 = vpack.c.b16 %v6697, %v6689
        %v6914 = vpack.c.b16 %v6698, %v6690
        %v6915 = vpack.c.b16 %v6699, %v6691
        %v6916 = vpack.c.b16 %v6708, %v6700
        %v6917 = vpack.c.b16 %v6709, %v6701
        %v6918 = vpack.c.b16 %v6710, %v6702
        %v6919 = vpack.c.b16 %v6711, %v6703
        %v6920 = vpack.c.b16 %v6712, %v6704
        %v6921 = vpack.c.b16 %v6713, %v6705
        %v6922 = vpack.c.b16 %v6714, %v6706
        %v6923 = vpack.c.b16 %v6715, %v6707
        %v6924 = vpack.c.b16 %v6724, %v6716
        %v6925 = vpack.c.b16 %v6725, %v6717
        %v6926 = vpack.c.b16 %v6726, %v6718
        %v6927 = vpack.c.b16 %v6727, %v6719
        %v6928 = vpack.c.b16 %v6728, %v6720
        %v6929 = vpack.c.b16 %v6729, %v6721
        %v6930 = vpack.c.b16 %v6730, %v6722
        %v6931 = vpack.c.b16 %v6731, %v6723
        %v6932 = vpack.c.b16 %v6732, %v6732
        %v6933 = vpack.c.b16 %v6733, %v6733
        %v6934 = vpack.c.b16 %v6734, %v6734
        %v6935 = vpack.c.b16 %v6735, %v6735
        %v6936 = vpack.c.b16 %v6736, %v6736
        %v6937 = vpack.c.b16 %v6737, %v6737
        %v6938 = vpack.c.b16 %v6738, %v6738
        %v6939 = vpack.c.b16 %v6739, %v6739
        %v7133 = vsel %vm2417, %v6110, 0
        %v7136 = vsel %vm2421, %v6932, 0
        %v7139 = vsel %vm2421, %v6933, 0
        %v7142 = vsel %vm2421, %v6934, 0
        %v7145 = vsel %vm2421, %v6935, 0
        %v7148 = vsel %vm2421, %v6936, 0
        %v7151 = vsel %vm2421, %v6937, 0
        %v7154 = vsel %vm2421, %v6938, 0
        %v7157 = vsel %vm2421, %v6939, 0
        %7159 = vmatprep.subr.bf16.mxu0 %v6741
        %7160 = vmatpush1.bf16.msra.mxu0 %v6740
        %7161 = vmatprep.subr.bf16.mxu0 %v6749
        %7162 = vmatpush1.bf16.msra.mxu0 %v6748
        %7163 = vmatprep.subr.bf16.mxu0 %v6757
        %7164 = vmatpush1.bf16.msra.mxu0 %v6756
        %7165 = vmatprep.subr.bf16.mxu0 %v6765
        %7166 = vmatpush1.bf16.msra.mxu0 %v6764
        %7167 = vmatprep.subr.bf16.mxu0 %v6773
        %7168 = vmatpush1.bf16.msra.mxu0 %v6772
        %7169 = vmatprep.subr.bf16.mxu0 %v6781
        %7170 = vmatpush1.bf16.msra.mxu0 %v6780
        %7171 = vmatprep.subr.bf16.mxu0 %v6789
        %7172 = vmatpush1.bf16.msra.mxu0 %v6788
        %7173 = vmatprep.subr.bf16.mxu0 %v6797
        %7174 = vmatpush1.bf16.msra.mxu0 %v6796
        %7175 = vmatprep.subr.bf16.mxu0 %v6805
        %7176 = vmatpush1.bf16.msra.mxu0 %v6804
        %7177 = vmatprep.subr.bf16.mxu0 %v6813
        %7178 = vmatpush1.bf16.msra.mxu0 %v6812
        %7179 = vmatprep.subr.bf16.mxu0 %v6821
        %7180 = vmatpush1.bf16.msra.mxu0 %v6820
        %7181 = vmatprep.subr.bf16.mxu0 %v6829
        %7182 = vmatpush1.bf16.msra.mxu0 %v6828
        %7183 = vmatprep.subr.bf16.mxu0 %v6837
        %7184 = vmatpush1.bf16.msra.mxu0 %v6836
        %7185 = vmatprep.subr.bf16.mxu0 %v6845
        %7186 = vmatpush1.bf16.msra.mxu0 %v6844
        %7187 = vmatprep.subr.bf16.mxu0 %v6853
        %7188 = vmatpush1.bf16.msra.mxu0 %v6852
        %7189 = vmatprep.subr.bf16.mxu0 %v6861
        %7190 = vmatpush1.bf16.msra.mxu0 %v6860
        %7191 = vmatprep.mubr.bf16.mxu0 %v6108
        %7192 = vmatmul.mubr.bf16.gmra.mrb[0].mxu0 %v6107
        %v7193 = vpop.f32.mrb[0].mxu0
        %v7194 = vadd.f32 %v6115, %v7193
        %v7195 = vpop.f32.mrb[0].mxu0
        %v7196 = vadd.f32 %v6119, %v7195
        %v7197 = vpop.f32.mrb[0].mxu0
        %v7198 = vpop.f32.mrb[0].mxu0
        %7199 = vdwg.mxu0
        %7200 = vmatprep.subr.bf16.mxu0 %v6869
        %7201 = vmatpush1.bf16.msra.mxu0 %v6868
        %7202 = vmatprep.subr.bf16.mxu0 %v6877
        %7203 = vmatpush1.bf16.msra.mxu0 %v6876
        %7204 = vmatprep.subr.bf16.mxu0 %v6885
        %7205 = vmatpush1.bf16.msra.mxu0 %v6884
        %7206 = vmatprep.subr.bf16.mxu0 %v6893
        %7207 = vmatpush1.bf16.msra.mxu0 %v6892
        %7208 = vmatprep.subr.bf16.mxu0 %v6901
        %7209 = vmatpush1.bf16.msra.mxu0 %v6900
        %7210 = vmatprep.subr.bf16.mxu0 %v6909
        %7211 = vmatpush1.bf16.msra.mxu0 %v6908
        %7212 = vmatprep.subr.bf16.mxu0 %v6917
        %7213 = vmatpush1.bf16.msra.mxu0 %v6916
        %7214 = vmatprep.subr.bf16.mxu0 %v6925
        %7215 = vmatpush1.bf16.msra.mxu0 %v6924
        %7216 = vmatprep.subr.bf16.mxu0 %v7139
        %7217 = vmatpush1.bf16.msra.mxu0 %v7136
        %7218 = vmatprep.subr.bf16.mxu0 0
        %7219 = vmatpush1.bf16.msra.mxu0 0
        %7220 = vmatprep.subr.bf16.mxu0 0
        %7221 = vmatpush1.bf16.msra.mxu0 0
        %7222 = vmatprep.subr.bf16.mxu0 0
        %7223 = vmatpush1.bf16.msra.mxu0 0
        %7224 = vmatprep.subr.bf16.mxu0 0
        %7225 = vmatpush1.bf16.msra.mxu0 0
        %7226 = vmatprep.subr.bf16.mxu0 0
        %7227 = vmatpush1.bf16.msra.mxu0 0
        %7228 = vmatprep.subr.bf16.mxu0 0
        %7229 = vmatpush1.bf16.msra.mxu0 0
        %7230 = vmatprep.subr.bf16.mxu0 0
        %7231 = vmatpush1.bf16.msra.mxu0 0
        %7232 = vmatprep.mubr.bf16.mxu0 %v7133
        %7233 = vmatmul.mubr.bf16.gmra.mrb[0].mxu0 %v6109
        %v7234 = vpop.f32.mrb[0].mxu0
        %v7235 = vadd.f32 %v7194, %v7234
        %v7236 = vpop.f32.mrb[0].mxu0
        %v7237 = vadd.f32 %v7196, %v7236
        %v7238 = vpop.f32.mrb[0].mxu0
        %v7239 = vpop.f32.mrb[0].mxu0
        %7240 = vdwg.mxu0
        %7241 = vmatprep.subr.bf16.mxu0 %v6743
        %7242 = vmatpush1.bf16.msra.mxu0 %v6742
        %7243 = vmatprep.subr.bf16.mxu0 %v6751
        %7244 = vmatpush1.bf16.msra.mxu0 %v6750
        %7245 = vmatprep.subr.bf16.mxu0 %v6759
        %7246 = vmatpush1.bf16.msra.mxu0 %v6758
        %7247 = vmatprep.subr.bf16.mxu0 %v6767
        %7248 = vmatpush1.bf16.msra.mxu0 %v6766
        %7249 = vmatprep.subr.bf16.mxu0 %v6775
        %7250 = vmatpush1.bf16.msra.mxu0 %v6774
        %7251 = vmatprep.subr.bf16.mxu0 %v6783
        %7252 = vmatpush1.bf16.msra.mxu0 %v6782
        %7253 = vmatprep.subr.bf16.mxu0 %v6791
        %7254 = vmatpush1.bf16.msra.mxu0 %v6790
        %7255 = vmatprep.subr.bf16.mxu0 %v6799
        %7256 = vmatpush1.bf16.msra.mxu0 %v6798
        %7257 = vmatprep.subr.bf16.mxu0 %v6807
        %7258 = vmatpush1.bf16.msra.mxu0 %v6806
        %7259 = vmatprep.subr.bf16.mxu0 %v6815
        %7260 = vmatpush1.bf16.msra.mxu0 %v6814
        %7261 = vmatprep.subr.bf16.mxu0 %v6823
        %7262 = vmatpush1.bf16.msra.mxu0 %v6822
        %7263 = vmatprep.subr.bf16.mxu0 %v6831
        %7264 = vmatpush1.bf16.msra.mxu0 %v6830
        %7265 = vmatprep.subr.bf16.mxu0 %v6839
        %7266 = vmatpush1.bf16.msra.mxu0 %v6838
        %7267 = vmatprep.subr.bf16.mxu0 %v6847
        %7268 = vmatpush1.bf16.msra.mxu0 %v6846
        %7269 = vmatprep.subr.bf16.mxu0 %v6855
        %7270 = vmatpush1.bf16.msra.mxu0 %v6854
        %7271 = vmatprep.subr.bf16.mxu0 %v6863
        %7272 = vmatpush1.bf16.msra.mxu0 %v6862
        %7273 = vmatprep.mubr.bf16.mxu0 %v6108
        %7274 = vmatmul.mubr.bf16.gmra.mrb[0].mxu0 %v6107
        %v7275 = vpop.f32.mrb[0].mxu0
        %v7276 = vadd.f32 %v6123, %v7275
        %v7277 = vpop.f32.mrb[0].mxu0
        %v7278 = vadd.f32 %v6127, %v7277
        %v7279 = vpop.f32.mrb[0].mxu0
        %v7280 = vpop.f32.mrb[0].mxu0
        %7281 = vdwg.mxu0
        %7282 = vmatprep.subr.bf16.mxu0 %v6871
        %7283 = vmatpush1.bf16.msra.mxu0 %v6870
        %7284 = vmatprep.subr.bf16.mxu0 %v6879
        %7285 = vmatpush1.bf16.msra.mxu0 %v6878
        %7286 = vmatprep.subr.bf16.mxu0 %v6887
        %7287 = vmatpush1.bf16.msra.mxu0 %v6886
        %7288 = vmatprep.subr.bf16.mxu0 %v6895
        %7289 = vmatpush1.bf16.msra.mxu0 %v6894
        %7290 = vmatprep.subr.bf16.mxu0 %v6903
        %7291 = vmatpush1.bf16.msra.mxu0 %v6902
        %7292 = vmatprep.subr.bf16.mxu0 %v6911
        %7293 = vmatpush1.bf16.msra.mxu0 %v6910
        %7294 = vmatprep.subr.bf16.mxu0 %v6919
        %7295 = vmatpush1.bf16.msra.mxu0 %v6918
        %7296 = vmatprep.subr.bf16.mxu0 %v6927
        %7297 = vmatpush1.bf16.msra.mxu0 %v6926
        %7298 = vmatprep.subr.bf16.mxu0 %v7145
        %7299 = vmatpush1.bf16.msra.mxu0 %v7142
        %7300 = vmatprep.subr.bf16.mxu0 0
        %7301 = vmatpush1.bf16.msra.mxu0 0
        %7302 = vmatprep.subr.bf16.mxu0 0
        %7303 = vmatpush1.bf16.msra.mxu0 0
        %7304 = vmatprep.subr.bf16.mxu0 0
        %7305 = vmatpush1.bf16.msra.mxu0 0
        %7306 = vmatprep.subr.bf16.mxu0 0
        %7307 = vmatpush1.bf16.msra.mxu0 0
        %7308 = vmatprep.subr.bf16.mxu0 0
        %7309 = vmatpush1.bf16.msra.mxu0 0
        %7310 = vmatprep.subr.bf16.mxu0 0
        %7311 = vmatpush1.bf16.msra.mxu0 0
        %7312 = vmatprep.subr.bf16.mxu0 0
        %7313 = vmatpush1.bf16.msra.mxu0 0
        %7314 = vmatprep.mubr.bf16.mxu0 %v7133
        %7315 = vmatmul.mubr.bf16.gmra.mrb[0].mxu0 %v6109
        %v7316 = vpop.f32.mrb[0].mxu0
        %v7317 = vadd.f32 %v7276, %v7316
        %v7318 = vpop.f32.mrb[0].mxu0
        %v7319 = vadd.f32 %v7278, %v7318
        %v7320 = vpop.f32.mrb[0].mxu0
        %v7321 = vpop.f32.mrb[0].mxu0
        %7322 = vdwg.mxu0
        %7323 = vmatprep.subr.bf16.mxu0 %v6745
        %7324 = vmatpush1.bf16.msra.mxu0 %v6744
        %7325 = vmatprep.subr.bf16.mxu0 %v6753
        %7326 = vmatpush1.bf16.msra.mxu0 %v6752
        %7327 = vmatprep.subr.bf16.mxu0 %v6761
        %7328 = vmatpush1.bf16.msra.mxu0 %v6760
        %7329 = vmatprep.subr.bf16.mxu0 %v6769
        %7330 = vmatpush1.bf16.msra.mxu0 %v6768
        %7331 = vmatprep.subr.bf16.mxu0 %v6777
        %7332 = vmatpush1.bf16.msra.mxu0 %v6776
        %7333 = vmatprep.subr.bf16.mxu0 %v6785
        %7334 = vmatpush1.bf16.msra.mxu0 %v6784
        %7335 = vmatprep.subr.bf16.mxu0 %v6793
        %7336 = vmatpush1.bf16.msra.mxu0 %v6792
        %7337 = vmatprep.subr.bf16.mxu0 %v6801
        %7338 = vmatpush1.bf16.msra.mxu0 %v6800
        %7339 = vmatprep.subr.bf16.mxu0 %v6809
        %7340 = vmatpush1.bf16.msra.mxu0 %v6808
        %7341 = vmatprep.subr.bf16.mxu0 %v6817
        %7342 = vmatpush1.bf16.msra.mxu0 %v6816
        %7343 = vmatprep.subr.bf16.mxu0 %v6825
        %7344 = vmatpush1.bf16.msra.mxu0 %v6824
        %7345 = vmatprep.subr.bf16.mxu0 %v6833
        %7346 = vmatpush1.bf16.msra.mxu0 %v6832
        %7347 = vmatprep.subr.bf16.mxu0 %v6841
        %7348 = vmatpush1.bf16.msra.mxu0 %v6840
        %7349 = vmatprep.subr.bf16.mxu0 %v6849
        %7350 = vmatpush1.bf16.msra.mxu0 %v6848
        %7351 = vmatprep.subr.bf16.mxu0 %v6857
        %7352 = vmatpush1.bf16.msra.mxu0 %v6856
        %7353 = vmatprep.subr.bf16.mxu0 %v6865
        %7354 = vmatpush1.bf16.msra.mxu0 %v6864
        %7355 = vmatprep.mubr.bf16.mxu0 %v6108
        %7356 = vmatmul.mubr.bf16.gmra.mrb[0].mxu0 %v6107
        %v7357 = vpop.f32.mrb[0].mxu0
        %v7358 = vadd.f32 %v6131, %v7357
        %v7359 = vpop.f32.mrb[0].mxu0
        %v7360 = vadd.f32 %v6135, %v7359
        %v7361 = vpop.f32.mrb[0].mxu0
        %v7362 = vpop.f32.mrb[0].mxu0
        %7363 = vdwg.mxu0
        %7364 = vmatprep.subr.bf16.mxu0 %v6873
        %7365 = vmatpush1.bf16.msra.mxu0 %v6872
        %7366 = vmatprep.subr.bf16.mxu0 %v6881
        %7367 = vmatpush1.bf16.msra.mxu0 %v6880
        %7368 = vmatprep.subr.bf16.mxu0 %v6889
        %7369 = vmatpush1.bf16.msra.mxu0 %v6888
        %7370 = vmatprep.subr.bf16.mxu0 %v6897
        %7371 = vmatpush1.bf16.msra.mxu0 %v6896
        %7372 = vmatprep.subr.bf16.mxu0 %v6905
        %7373 = vmatpush1.bf16.msra.mxu0 %v6904
        %7374 = vmatprep.subr.bf16.mxu0 %v6913
        %7375 = vmatpush1.bf16.msra.mxu0 %v6912
        %7376 = vmatprep.subr.bf16.mxu0 %v6921
        %7377 = vmatpush1.bf16.msra.mxu0 %v6920
        %7378 = vmatprep.subr.bf16.mxu0 %v6929
        %7379 = vmatpush1.bf16.msra.mxu0 %v6928
        %7380 = vmatprep.subr.bf16.mxu0 %v7151
        %7381 = vmatpush1.bf16.msra.mxu0 %v7148
        %7382 = vmatprep.subr.bf16.mxu0 0
        %7383 = vmatpush1.bf16.msra.mxu0 0
        %7384 = vmatprep.subr.bf16.mxu0 0
        %7385 = vmatpush1.bf16.msra.mxu0 0
        %7386 = vmatprep.subr.bf16.mxu0 0
        %7387 = vmatpush1.bf16.msra.mxu0 0
        %7388 = vmatprep.subr.bf16.mxu0 0
        %7389 = vmatpush1.bf16.msra.mxu0 0
        %7390 = vmatprep.subr.bf16.mxu0 0
        %7391 = vmatpush1.bf16.msra.mxu0 0
        %7392 = vmatprep.subr.bf16.mxu0 0
        %7393 = vmatpush1.bf16.msra.mxu0 0
        %7394 = vmatprep.subr.bf16.mxu0 0
        %7395 = vmatpush1.bf16.msra.mxu0 0
        %7396 = vmatprep.mubr.bf16.mxu0 %v7133
        %7397 = vmatmul.mubr.bf16.gmra.mrb[0].mxu0 %v6109
        %v7398 = vpop.f32.mrb[0].mxu0
        %v7399 = vadd.f32 %v7358, %v7398
        %v7400 = vpop.f32.mrb[0].mxu0
        %v7401 = vadd.f32 %v7360, %v7400
        %v7402 = vpop.f32.mrb[0].mxu0
        %v7403 = vpop.f32.mrb[0].mxu0
        %7404 = vdwg.mxu0
        %7405 = vmatprep.subr.bf16.mxu0 %v6747
        %7406 = vmatpush1.bf16.msra.mxu0 %v6746
        %7407 = vmatprep.subr.bf16.mxu0 %v6755
        %7408 = vmatpush1.bf16.msra.mxu0 %v6754
        %7409 = vmatprep.subr.bf16.mxu0 %v6763
        %7410 = vmatpush1.bf16.msra.mxu0 %v6762
        %7411 = vmatprep.subr.bf16.mxu0 %v6771
        %7412 = vmatpush1.bf16.msra.mxu0 %v6770
        %7413 = vmatprep.subr.bf16.mxu0 %v6779
        %7414 = vmatpush1.bf16.msra.mxu0 %v6778
        %7415 = vmatprep.subr.bf16.mxu0 %v6787
        %7416 = vmatpush1.bf16.msra.mxu0 %v6786
        %7417 = vmatprep.subr.bf16.mxu0 %v6795
        %7418 = vmatpush1.bf16.msra.mxu0 %v6794
        %7419 = vmatprep.subr.bf16.mxu0 %v6803
        %7420 = vmatpush1.bf16.msra.mxu0 %v6802
        %7421 = vmatprep.subr.bf16.mxu0 %v6811
        %7422 = vmatpush1.bf16.msra.mxu0 %v6810
        %7423 = vmatprep.subr.bf16.mxu0 %v6819
        %7424 = vmatpush1.bf16.msra.mxu0 %v6818
        %7425 = vmatprep.subr.bf16.mxu0 %v6827
        %7426 = vmatpush1.bf16.msra.mxu0 %v6826
        %7427 = vmatprep.subr.bf16.mxu0 %v6835
        %7428 = vmatpush1.bf16.msra.mxu0 %v6834
        %7429 = vmatprep.subr.bf16.mxu0 %v6843
        %7430 = vmatpush1.bf16.msra.mxu0 %v6842
        %7431 = vmatprep.subr.bf16.mxu0 %v6851
        %7432 = vmatpush1.bf16.msra.mxu0 %v6850
        %7433 = vmatprep.subr.bf16.mxu0 %v6859
        %7434 = vmatpush1.bf16.msra.mxu0 %v6858
        %7435 = vmatprep.subr.bf16.mxu0 %v6867
        %7436 = vmatpush1.bf16.msra.mxu0 %v6866
        %7437 = vmatprep.mubr.bf16.mxu0 %v6108
        %7438 = vmatmul.mubr.bf16.gmra.mrb[0].mxu0 %v6107
        %v7439 = vpop.f32.mrb[0].mxu0
        %v7440 = vadd.f32 %v6139, %v7439
        %v7441 = vpop.f32.mrb[0].mxu0
        %v7442 = vadd.f32 %v6143, %v7441
        %v7443 = vpop.f32.mrb[0].mxu0
        %v7444 = vpop.f32.mrb[0].mxu0
        %7445 = vdwg.mxu0
        %7446 = vmatprep.subr.bf16.mxu0 %v6875
        %7447 = vmatpush1.bf16.msra.mxu0 %v6874
        %7448 = vmatprep.subr.bf16.mxu0 %v6883
        %7449 = vmatpush1.bf16.msra.mxu0 %v6882
        %7450 = vmatprep.subr.bf16.mxu0 %v6891
        %7451 = vmatpush1.bf16.msra.mxu0 %v6890
        %7452 = vmatprep.subr.bf16.mxu0 %v6899
        %7453 = vmatpush1.bf16.msra.mxu0 %v6898
        %7454 = vmatprep.subr.bf16.mxu0 %v6907
        %7455 = vmatpush1.bf16.msra.mxu0 %v6906
        %7456 = vmatprep.subr.bf16.mxu0 %v6915
        %7457 = vmatpush1.bf16.msra.mxu0 %v6914
        %7458 = vmatprep.subr.bf16.mxu0 %v6923
        %7459 = vmatpush1.bf16.msra.mxu0 %v6922
        %7460 = vmatprep.subr.bf16.mxu0 %v6931
        %7461 = vmatpush1.bf16.msra.mxu0 %v6930
        %7462 = vmatprep.subr.bf16.mxu0 %v7157
        %7463 = vmatpush1.bf16.msra.mxu0 %v7154
        %7464 = vmatprep.subr.bf16.mxu0 0
        %7465 = vmatpush1.bf16.msra.mxu0 0
        %7466 = vmatprep.subr.bf16.mxu0 0
        %7467 = vmatpush1.bf16.msra.mxu0 0
        %7468 = vmatprep.subr.bf16.mxu0 0
        %7469 = vmatpush1.bf16.msra.mxu0 0
        %7470 = vmatprep.subr.bf16.mxu0 0
        %7471 = vmatpush1.bf16.msra.mxu0 0
        %7472 = vmatprep.subr.bf16.mxu0 0
        %7473 = vmatpush1.bf16.msra.mxu0 0
        %7474 = vmatprep.subr.bf16.mxu0 0
        %7475 = vmatpush1.bf16.msra.mxu0 0
        %7476 = vmatprep.subr.bf16.mxu0 0
        %7477 = vmatpush1.bf16.msra.mxu0 0
        %7478 = vmatprep.mubr.bf16.mxu0 %v7133
        %7479 = vmatmul.mubr.bf16.gmra.mrb[0].mxu0 %v6109
        %v7480 = vpop.f32.mrb[0].mxu0
        %v7481 = vadd.f32 %v7440, %v7480
        %v7482 = vpop.f32.mrb[0].mxu0
        %v7483 = vadd.f32 %v7442, %v7482
        %v7484 = vpop.f32.mrb[0].mxu0
        %v7485 = vpop.f32.mrb[0].mxu0
        %7486 = vdwg.mxu0
        %v7487 = vmax.f32 %v7235, 0.0
        %v7488 = vmax.f32 %v7237, 0.0
        %v7489 = vmax.f32 %v7317, 0.0
        %v7490 = vmax.f32 %v7319, 0.0
        %v7491 = vmax.f32 %v7399, 0.0
        %v7492 = vmax.f32 %v7401, 0.0
        %v7493 = vmax.f32 %v7481, 0.0
        %v7494 = vmax.f32 %v7483, 0.0
        %v7495 = vunpack.c.l.s8.bf16 %v5581
        %v7496 = vunpack.c.l.s8.bf16 %v5582
        %v7497 = vunpack.c.l.s8.bf16 %v5583
        %v7498 = vunpack.c.l.s8.bf16 %v5584
        %v7499 = vunpack.c.l.s8.bf16 %v5585
        %v7500 = vunpack.c.l.s8.bf16 %v5586
        %v7501 = vunpack.c.l.s8.bf16 %v5587
        %v7502 = vunpack.c.l.s8.bf16 %v5588
        %v7503 = vunpack.c.h.s8.bf16 %v5581
        %v7504 = vunpack.c.h.s8.bf16 %v5582
        %v7505 = vunpack.c.h.s8.bf16 %v5583
        %v7506 = vunpack.c.h.s8.bf16 %v5584
        %v7507 = vunpack.c.h.s8.bf16 %v5585
        %v7508 = vunpack.c.h.s8.bf16 %v5586
        %v7509 = vunpack.c.h.s8.bf16 %v5587
        %v7510 = vunpack.c.h.s8.bf16 %v5588
        %v7511 = vunpack.c.l.s8.bf16 %v5589
        %v7512 = vunpack.c.l.s8.bf16 %v5590
        %v7513 = vunpack.c.l.s8.bf16 %v5591
        %v7514 = vunpack.c.l.s8.bf16 %v5592
        %v7515 = vunpack.c.l.s8.bf16 %v5593
        %v7516 = vunpack.c.l.s8.bf16 %v5594
        %v7517 = vunpack.c.l.s8.bf16 %v5595
        %v7518 = vunpack.c.l.s8.bf16 %v5596
        %v7519 = vunpack.c.h.s8.bf16 %v5589
        %v7520 = vunpack.c.h.s8.bf16 %v5590
        %v7521 = vunpack.c.h.s8.bf16 %v5591
        %v7522 = vunpack.c.h.s8.bf16 %v5592
        %v7523 = vunpack.c.h.s8.bf16 %v5593
        %v7524 = vunpack.c.h.s8.bf16 %v5594
        %v7525 = vunpack.c.h.s8.bf16 %v5595
        %v7526 = vunpack.c.h.s8.bf16 %v5596
        %v7527 = vunpack.c.l.s8.bf16 %v5597
        %v7528 = vunpack.c.l.s8.bf16 %v5598
        %v7529 = vunpack.c.l.s8.bf16 %v5599
        %v7530 = vunpack.c.l.s8.bf16 %v5600
        %v7531 = vunpack.c.l.s8.bf16 %v5601
        %v7532 = vunpack.c.l.s8.bf16 %v5602
        %v7533 = vunpack.c.l.s8.bf16 %v5603
        %v7534 = vunpack.c.l.s8.bf16 %v5604
        %v7535 = vunpack.c.h.s8.bf16 %v5597
        %v7536 = vunpack.c.h.s8.bf16 %v5598
        %v7537 = vunpack.c.h.s8.bf16 %v5599
        %v7538 = vunpack.c.h.s8.bf16 %v5600
        %v7539 = vunpack.c.h.s8.bf16 %v5601
        %v7540 = vunpack.c.h.s8.bf16 %v5602
        %v7541 = vunpack.c.h.s8.bf16 %v5603
        %v7542 = vunpack.c.h.s8.bf16 %v5604
        %v7543 = vunpack.c.l.s8.bf16 %v5605
        %v7544 = vunpack.c.l.s8.bf16 %v5606
        %v7545 = vunpack.c.l.s8.bf16 %v5607
        %v7546 = vunpack.c.l.s8.bf16 %v5608
        %v7547 = vunpack.c.l.s8.bf16 %v5609
        %v7548 = vunpack.c.l.s8.bf16 %v5610
        %v7549 = vunpack.c.l.s8.bf16 %v5611
        %v7550 = vunpack.c.l.s8.bf16 %v5612
        %v7551 = vunpack.c.h.s8.bf16 %v5605
        %v7552 = vunpack.c.h.s8.bf16 %v5606
        %v7553 = vunpack.c.h.s8.bf16 %v5607
        %v7554 = vunpack.c.h.s8.bf16 %v5608
        %v7555 = vunpack.c.h.s8.bf16 %v5609
        %v7556 = vunpack.c.h.s8.bf16 %v5610
        %v7557 = vunpack.c.h.s8.bf16 %v5611
        %v7558 = vunpack.c.h.s8.bf16 %v5612
        %v7559 = vunpack.c.l.s8.bf16 %v5613
        %v7560 = vunpack.c.l.s8.bf16 %v5614
        %v7561 = vunpack.c.l.s8.bf16 %v5615
        %v7562 = vunpack.c.l.s8.bf16 %v5616
        %v7563 = vunpack.c.l.s8.bf16 %v5617
        %v7564 = vunpack.c.l.s8.bf16 %v5618
        %v7565 = vunpack.c.l.s8.bf16 %v5619
        %v7566 = vunpack.c.l.s8.bf16 %v5620
        %v7567 = vunpack.c.h.s8.bf16 %v5613
        %v7568 = vunpack.c.h.s8.bf16 %v5614
        %v7569 = vunpack.c.h.s8.bf16 %v5615
        %v7570 = vunpack.c.h.s8.bf16 %v5616
        %v7571 = vunpack.c.h.s8.bf16 %v5617
        %v7572 = vunpack.c.h.s8.bf16 %v5618
        %v7573 = vunpack.c.h.s8.bf16 %v5619
        %v7574 = vunpack.c.h.s8.bf16 %v5620
        %v7575 = vunpack.c.l.s8.bf16 %v5621
        %v7576 = vunpack.c.l.s8.bf16 %v5622
        %v7577 = vunpack.c.l.s8.bf16 %v5623
        %v7578 = vunpack.c.l.s8.bf16 %v5624
        %v7579 = vunpack.c.l.s8.bf16 %v5625
        %v7580 = vunpack.c.l.s8.bf16 %v5626
        %v7581 = vunpack.c.l.s8.bf16 %v5627
        %v7582 = vunpack.c.l.s8.bf16 %v5628
        %v7583 = vunpack.c.h.s8.bf16 %v5621
        %v7584 = vunpack.c.h.s8.bf16 %v5622
        %v7585 = vunpack.c.h.s8.bf16 %v5623
        %v7586 = vunpack.c.h.s8.bf16 %v5624
        %v7587 = vunpack.c.h.s8.bf16 %v5625
        %v7588 = vunpack.c.h.s8.bf16 %v5626
        %v7589 = vunpack.c.h.s8.bf16 %v5627
        %v7590 = vunpack.c.h.s8.bf16 %v5628
        %v7591 = vunpack.c.l.s8.bf16 %v5629
        %v7592 = vunpack.c.l.s8.bf16 %v5630
        %v7593 = vunpack.c.l.s8.bf16 %v5631
        %v7594 = vunpack.c.l.s8.bf16 %v5632
        %v7595 = vunpack.c.l.s8.bf16 %v5633
        %v7596 = vunpack.c.l.s8.bf16 %v5634
        %v7597 = vunpack.c.l.s8.bf16 %v5635
        %v7598 = vunpack.c.l.s8.bf16 %v5636
        %v7599 = vunpack.c.h.s8.bf16 %v5629
        %v7600 = vunpack.c.h.s8.bf16 %v5630
        %v7601 = vunpack.c.h.s8.bf16 %v5631
        %v7602 = vunpack.c.h.s8.bf16 %v5632
        %v7603 = vunpack.c.h.s8.bf16 %v5633
        %v7604 = vunpack.c.h.s8.bf16 %v5634
        %v7605 = vunpack.c.h.s8.bf16 %v5635
        %v7606 = vunpack.c.h.s8.bf16 %v5636
        %v7607 = vunpack.c.l.s8.bf16 %v5637
        %v7608 = vunpack.c.l.s8.bf16 %v5638
        %v7609 = vunpack.c.l.s8.bf16 %v5639
        %v7610 = vunpack.c.l.s8.bf16 %v5640
        %v7611 = vunpack.c.l.s8.bf16 %v5641
        %v7612 = vunpack.c.l.s8.bf16 %v5642
        %v7613 = vunpack.c.l.s8.bf16 %v5643
        %v7614 = vunpack.c.l.s8.bf16 %v5644
        %v7615 = vunpack.c.h.s8.bf16 %v5637
        %v7616 = vunpack.c.h.s8.bf16 %v5638
        %v7617 = vunpack.c.h.s8.bf16 %v5639
        %v7618 = vunpack.c.h.s8.bf16 %v5640
        %v7619 = vunpack.c.h.s8.bf16 %v5641
        %v7620 = vunpack.c.h.s8.bf16 %v5642
        %v7621 = vunpack.c.h.s8.bf16 %v5643
        %v7622 = vunpack.c.h.s8.bf16 %v5644
        %v7623 = vunpack.c.l.s8.bf16 %v5645
        %v7624 = vunpack.c.l.s8.bf16 %v5646
        %v7625 = vunpack.c.l.s8.bf16 %v5647
        %v7626 = vunpack.c.l.s8.bf16 %v5648
        %v7627 = vunpack.c.l.s8.bf16 %v5649
        %v7628 = vunpack.c.l.s8.bf16 %v5650
        %v7629 = vunpack.c.l.s8.bf16 %v5651
        %v7630 = vunpack.c.l.s8.bf16 %v5652
        %v7631 = vunpack.c.h.s8.bf16 %v5645
        %v7632 = vunpack.c.h.s8.bf16 %v5646
        %v7633 = vunpack.c.h.s8.bf16 %v5647
        %v7634 = vunpack.c.h.s8.bf16 %v5648
        %v7635 = vunpack.c.h.s8.bf16 %v5649
        %v7636 = vunpack.c.h.s8.bf16 %v5650
        %v7637 = vunpack.c.h.s8.bf16 %v5651
        %v7638 = vunpack.c.h.s8.bf16 %v5652
        %v7639 = vunpack.c.l.s8.bf16 %v5653
        %v7640 = vunpack.c.l.s8.bf16 %v5654
        %v7641 = vunpack.c.l.s8.bf16 %v5655
        %v7642 = vunpack.c.l.s8.bf16 %v5656
        %v7643 = vunpack.c.l.s8.bf16 %v5657
        %v7644 = vunpack.c.l.s8.bf16 %v5658
        %v7645 = vunpack.c.l.s8.bf16 %v5659
        %v7646 = vunpack.c.l.s8.bf16 %v5660
        %v7647 = vunpack.c.h.s8.bf16 %v5653
        %v7648 = vunpack.c.h.s8.bf16 %v5654
        %v7649 = vunpack.c.h.s8.bf16 %v5655
        %v7650 = vunpack.c.h.s8.bf16 %v5656
        %v7651 = vunpack.c.h.s8.bf16 %v5657
        %v7652 = vunpack.c.h.s8.bf16 %v5658
        %v7653 = vunpack.c.h.s8.bf16 %v5659
        %v7654 = vunpack.c.h.s8.bf16 %v5660
        %v7655 = vunpack.c.l.s8.bf16 %v5661
        %v7656 = vunpack.c.l.s8.bf16 %v5662
        %v7657 = vunpack.c.l.s8.bf16 %v5663
        %v7658 = vunpack.c.l.s8.bf16 %v5664
        %v7659 = vunpack.c.l.s8.bf16 %v5665
        %v7660 = vunpack.c.l.s8.bf16 %v5666
        %v7661 = vunpack.c.l.s8.bf16 %v5667
        %v7662 = vunpack.c.l.s8.bf16 %v5668
        %v7663 = vunpack.c.h.s8.bf16 %v5661
        %v7664 = vunpack.c.h.s8.bf16 %v5662
        %v7665 = vunpack.c.h.s8.bf16 %v5663
        %v7666 = vunpack.c.h.s8.bf16 %v5664
        %v7667 = vunpack.c.h.s8.bf16 %v5665
        %v7668 = vunpack.c.h.s8.bf16 %v5666
        %v7669 = vunpack.c.h.s8.bf16 %v5667
        %v7670 = vunpack.c.h.s8.bf16 %v5668
        %v7671 = vunpack.c.l.s8.bf16 %v5669
        %v7672 = vunpack.c.l.s8.bf16 %v5670
        %v7673 = vunpack.c.l.s8.bf16 %v5671
        %v7674 = vunpack.c.l.s8.bf16 %v5672
        %v7675 = vunpack.c.l.s8.bf16 %v5673
        %v7676 = vunpack.c.l.s8.bf16 %v5674
        %v7677 = vunpack.c.l.s8.bf16 %v5675
        %v7678 = vunpack.c.l.s8.bf16 %v5676
        %v7679 = vunpack.c.h.s8.bf16 %v5669
        %v7680 = vunpack.c.h.s8.bf16 %v5670
        %v7681 = vunpack.c.h.s8.bf16 %v5671
        %v7682 = vunpack.c.h.s8.bf16 %v5672
        %v7683 = vunpack.c.h.s8.bf16 %v5673
        %v7684 = vunpack.c.h.s8.bf16 %v5674
        %v7685 = vunpack.c.h.s8.bf16 %v5675
        %v7686 = vunpack.c.h.s8.bf16 %v5676
        %v7687 = vunpack.c.l.s8.bf16 %v5677
        %v7688 = vunpack.c.l.s8.bf16 %v5678
        %v7689 = vunpack.c.l.s8.bf16 %v5679
        %v7690 = vunpack.c.l.s8.bf16 %v5680
        %v7691 = vunpack.c.l.s8.bf16 %v5681
        %v7692 = vunpack.c.l.s8.bf16 %v5682
        %v7693 = vunpack.c.l.s8.bf16 %v5683
        %v7694 = vunpack.c.l.s8.bf16 %v5684
        %v7695 = vunpack.c.h.s8.bf16 %v5677
        %v7696 = vunpack.c.h.s8.bf16 %v5678
        %v7697 = vunpack.c.h.s8.bf16 %v5679
        %v7698 = vunpack.c.h.s8.bf16 %v5680
        %v7699 = vunpack.c.h.s8.bf16 %v5681
        %v7700 = vunpack.c.h.s8.bf16 %v5682
        %v7701 = vunpack.c.h.s8.bf16 %v5683
        %v7702 = vunpack.c.h.s8.bf16 %v5684
        %v7703 = vunpack.c.l.s8.bf16 %v5685
        %v7704 = vunpack.c.l.s8.bf16 %v5686
        %v7705 = vunpack.c.l.s8.bf16 %v5687
        %v7706 = vunpack.c.l.s8.bf16 %v5688
        %v7707 = vunpack.c.l.s8.bf16 %v5689
        %v7708 = vunpack.c.l.s8.bf16 %v5690
        %v7709 = vunpack.c.l.s8.bf16 %v5691
        %v7710 = vunpack.c.l.s8.bf16 %v5692
        %v7711 = vunpack.c.h.s8.bf16 %v5685
        %v7712 = vunpack.c.h.s8.bf16 %v5686
        %v7713 = vunpack.c.h.s8.bf16 %v5687
        %v7714 = vunpack.c.h.s8.bf16 %v5688
        %v7715 = vunpack.c.h.s8.bf16 %v5689
        %v7716 = vunpack.c.h.s8.bf16 %v5690
        %v7717 = vunpack.c.h.s8.bf16 %v5691
        %v7718 = vunpack.c.h.s8.bf16 %v5692
        %v7719 = vunpack.c.l.s8.bf16 %v5693
        %v7720 = vunpack.c.l.s8.bf16 %v5694
        %v7721 = vunpack.c.l.s8.bf16 %v5695
        %v7722 = vunpack.c.l.s8.bf16 %v5696
        %v7723 = vunpack.c.l.s8.bf16 %v5697
        %v7724 = vunpack.c.l.s8.bf16 %v5698
        %v7725 = vunpack.c.l.s8.bf16 %v5699
        %v7726 = vunpack.c.l.s8.bf16 %v5700
        %v7727 = vunpack.c.h.s8.bf16 %v5693
        %v7728 = vunpack.c.h.s8.bf16 %v5694
        %v7729 = vunpack.c.h.s8.bf16 %v5695
        %v7730 = vunpack.c.h.s8.bf16 %v5696
        %v7731 = vunpack.c.h.s8.bf16 %v5697
        %v7732 = vunpack.c.h.s8.bf16 %v5698
        %v7733 = vunpack.c.h.s8.bf16 %v5699
        %v7734 = vunpack.c.h.s8.bf16 %v5700
        %v7735 = vunpack.c.l.s8.bf16 %v5701
        %v7736 = vunpack.c.l.s8.bf16 %v5702
        %v7737 = vunpack.c.l.s8.bf16 %v5703
        %v7738 = vunpack.c.l.s8.bf16 %v5704
        %v7739 = vunpack.c.l.s8.bf16 %v5705
        %v7740 = vunpack.c.l.s8.bf16 %v5706
        %v7741 = vunpack.c.l.s8.bf16 %v5707
        %v7742 = vunpack.c.l.s8.bf16 %v5708
        %v7743 = vunpack.c.h.s8.bf16 %v5701
        %v7744 = vunpack.c.h.s8.bf16 %v5702
        %v7745 = vunpack.c.h.s8.bf16 %v5703
        %v7746 = vunpack.c.h.s8.bf16 %v5704
        %v7747 = vunpack.c.h.s8.bf16 %v5705
        %v7748 = vunpack.c.h.s8.bf16 %v5706
        %v7749 = vunpack.c.h.s8.bf16 %v5707
        %v7750 = vunpack.c.h.s8.bf16 %v5708
        %v7751 = vunpack.c.l.s8.bf16 %v5709
        %v7752 = vunpack.c.l.s8.bf16 %v5710
        %v7753 = vunpack.c.l.s8.bf16 %v5711
        %v7754 = vunpack.c.l.s8.bf16 %v5712
        %v7755 = vunpack.c.l.s8.bf16 %v5713
        %v7756 = vunpack.c.l.s8.bf16 %v5714
        %v7757 = vunpack.c.l.s8.bf16 %v5715
        %v7758 = vunpack.c.l.s8.bf16 %v5716
        %v7759 = vunpack.c.h.s8.bf16 %v5709
        %v7760 = vunpack.c.h.s8.bf16 %v5710
        %v7761 = vunpack.c.h.s8.bf16 %v5711
        %v7762 = vunpack.c.h.s8.bf16 %v5712
        %v7763 = vunpack.c.h.s8.bf16 %v5713
        %v7764 = vunpack.c.h.s8.bf16 %v5714
        %v7765 = vunpack.c.h.s8.bf16 %v5715
        %v7766 = vunpack.c.h.s8.bf16 %v5716
        %v7767 = vunpack.c.l.s8.bf16 %v5717
        %v7768 = vunpack.c.l.s8.bf16 %v5718
        %v7769 = vunpack.c.l.s8.bf16 %v5719
        %v7770 = vunpack.c.l.s8.bf16 %v5720
        %v7771 = vunpack.c.l.s8.bf16 %v5721
        %v7772 = vunpack.c.l.s8.bf16 %v5722
        %v7773 = vunpack.c.l.s8.bf16 %v5723
        %v7774 = vunpack.c.l.s8.bf16 %v5724
        %v7775 = vunpack.c.h.s8.bf16 %v5717
        %v7776 = vunpack.c.h.s8.bf16 %v5718
        %v7777 = vunpack.c.h.s8.bf16 %v5719
        %v7778 = vunpack.c.h.s8.bf16 %v5720
        %v7779 = vunpack.c.h.s8.bf16 %v5721
        %v7780 = vunpack.c.h.s8.bf16 %v5722
        %v7781 = vunpack.c.h.s8.bf16 %v5723
        %v7782 = vunpack.c.h.s8.bf16 %v5724
        %v7783 = vunpack.c.l.s8.bf16 %v5725
        %v7784 = vunpack.c.l.s8.bf16 %v5726
        %v7785 = vunpack.c.l.s8.bf16 %v5727
        %v7786 = vunpack.c.l.s8.bf16 %v5728
        %v7787 = vunpack.c.l.s8.bf16 %v5729
        %v7788 = vunpack.c.l.s8.bf16 %v5730
        %v7789 = vunpack.c.l.s8.bf16 %v5731
        %v7790 = vunpack.c.l.s8.bf16 %v5732
        %v7791 = vunpack.c.h.s8.bf16 %v5725
        %v7792 = vunpack.c.h.s8.bf16 %v5726
        %v7793 = vunpack.c.h.s8.bf16 %v5727
        %v7794 = vunpack.c.h.s8.bf16 %v5728
        %v7795 = vunpack.c.h.s8.bf16 %v5729
        %v7796 = vunpack.c.h.s8.bf16 %v5730
        %v7797 = vunpack.c.h.s8.bf16 %v5731
        %v7798 = vunpack.c.h.s8.bf16 %v5732
        %v7799 = vunpack.c.l.s8.bf16 %v5733
        %v7800 = vunpack.c.l.s8.bf16 %v5734
        %v7801 = vunpack.c.l.s8.bf16 %v5735
        %v7802 = vunpack.c.l.s8.bf16 %v5736
        %v7803 = vunpack.c.l.s8.bf16 %v5737
        %v7804 = vunpack.c.l.s8.bf16 %v5738
        %v7805 = vunpack.c.l.s8.bf16 %v5739
        %v7806 = vunpack.c.l.s8.bf16 %v5740
        %v7807 = vunpack.c.h.s8.bf16 %v5733
        %v7808 = vunpack.c.h.s8.bf16 %v5734
        %v7809 = vunpack.c.h.s8.bf16 %v5735
        %v7810 = vunpack.c.h.s8.bf16 %v5736
        %v7811 = vunpack.c.h.s8.bf16 %v5737
        %v7812 = vunpack.c.h.s8.bf16 %v5738
        %v7813 = vunpack.c.h.s8.bf16 %v5739
        %v7814 = vunpack.c.h.s8.bf16 %v5740
        %v7815 = vunpack.c.l.s8.bf16 %v5741
        %v7816 = vunpack.c.l.s8.bf16 %v5742
        %v7817 = vunpack.c.l.s8.bf16 %v5743
        %v7818 = vunpack.c.l.s8.bf16 %v5744
        %v7819 = vunpack.c.l.s8.bf16 %v5745
        %v7820 = vunpack.c.l.s8.bf16 %v5746
        %v7821 = vunpack.c.l.s8.bf16 %v5747
        %v7822 = vunpack.c.l.s8.bf16 %v5748
        %v7823 = vunpack.c.h.s8.bf16 %v5741
        %v7824 = vunpack.c.h.s8.bf16 %v5742
        %v7825 = vunpack.c.h.s8.bf16 %v5743
        %v7826 = vunpack.c.h.s8.bf16 %v5744
        %v7827 = vunpack.c.h.s8.bf16 %v5745
        %v7828 = vunpack.c.h.s8.bf16 %v5746
        %v7829 = vunpack.c.h.s8.bf16 %v5747
        %v7830 = vunpack.c.h.s8.bf16 %v5748
        %v7831 = vunpack.c.l.s8.bf16 %v5749
        %v7832 = vunpack.c.l.s8.bf16 %v5750
        %v7833 = vunpack.c.l.s8.bf16 %v5751
        %v7834 = vunpack.c.l.s8.bf16 %v5752
        %v7835 = vunpack.c.l.s8.bf16 %v5753
        %v7836 = vunpack.c.l.s8.bf16 %v5754
        %v7837 = vunpack.c.l.s8.bf16 %v5755
        %v7838 = vunpack.c.l.s8.bf16 %v5756
        %v7839 = vunpack.c.h.s8.bf16 %v5749
        %v7840 = vunpack.c.h.s8.bf16 %v5750
        %v7841 = vunpack.c.h.s8.bf16 %v5751
        %v7842 = vunpack.c.h.s8.bf16 %v5752
        %v7843 = vunpack.c.h.s8.bf16 %v5753
        %v7844 = vunpack.c.h.s8.bf16 %v5754
        %v7845 = vunpack.c.h.s8.bf16 %v5755
        %v7846 = vunpack.c.h.s8.bf16 %v5756
        %v7847 = vunpack.c.l.s8.bf16 %v5757
        %v7848 = vunpack.c.l.s8.bf16 %v5758
        %v7849 = vunpack.c.l.s8.bf16 %v5759
        %v7850 = vunpack.c.l.s8.bf16 %v5760
        %v7851 = vunpack.c.l.s8.bf16 %v5761
        %v7852 = vunpack.c.l.s8.bf16 %v5762
        %v7853 = vunpack.c.l.s8.bf16 %v5763
        %v7854 = vunpack.c.l.s8.bf16 %v5764
        %v7855 = vunpack.c.h.s8.bf16 %v5757
        %v7856 = vunpack.c.h.s8.bf16 %v5758
        %v7857 = vunpack.c.h.s8.bf16 %v5759
        %v7858 = vunpack.c.h.s8.bf16 %v5760
        %v7859 = vunpack.c.h.s8.bf16 %v5761
        %v7860 = vunpack.c.h.s8.bf16 %v5762
        %v7861 = vunpack.c.h.s8.bf16 %v5763
        %v7862 = vunpack.c.h.s8.bf16 %v5764
        %v7863 = vunpack.c.l.s8.bf16 %v5765
        %v7864 = vunpack.c.l.s8.bf16 %v5766
        %v7865 = vunpack.c.l.s8.bf16 %v5767
        %v7866 = vunpack.c.l.s8.bf16 %v5768
        %v7867 = vunpack.c.l.s8.bf16 %v5769
        %v7868 = vunpack.c.l.s8.bf16 %v5770
        %v7869 = vunpack.c.l.s8.bf16 %v5771
        %v7870 = vunpack.c.l.s8.bf16 %v5772
        %v7871 = vunpack.c.h.s8.bf16 %v5765
        %v7872 = vunpack.c.h.s8.bf16 %v5766
        %v7873 = vunpack.c.h.s8.bf16 %v5767
        %v7874 = vunpack.c.h.s8.bf16 %v5768
        %v7875 = vunpack.c.h.s8.bf16 %v5769
        %v7876 = vunpack.c.h.s8.bf16 %v5770
        %v7877 = vunpack.c.h.s8.bf16 %v5771
        %v7878 = vunpack.c.h.s8.bf16 %v5772
        %v7879 = vunpack.c.l.s8.bf16 %v5773
        %v7880 = vunpack.c.l.s8.bf16 %v5774
        %v7881 = vunpack.c.l.s8.bf16 %v5775
        %v7882 = vunpack.c.l.s8.bf16 %v5776
        %v7883 = vunpack.c.l.s8.bf16 %v5777
        %v7884 = vunpack.c.l.s8.bf16 %v5778
        %v7885 = vunpack.c.l.s8.bf16 %v5779
        %v7886 = vunpack.c.l.s8.bf16 %v5780
        %v7887 = vunpack.c.h.s8.bf16 %v5773
        %v7888 = vunpack.c.h.s8.bf16 %v5774
        %v7889 = vunpack.c.h.s8.bf16 %v5775
        %v7890 = vunpack.c.h.s8.bf16 %v5776
        %v7891 = vunpack.c.h.s8.bf16 %v5777
        %v7892 = vunpack.c.h.s8.bf16 %v5778
        %v7893 = vunpack.c.h.s8.bf16 %v5779
        %v7894 = vunpack.c.h.s8.bf16 %v5780
        %v7895 = vunpack.c.l.s8.bf16 %v5781
        %v7896 = vunpack.c.l.s8.bf16 %v5782
        %v7897 = vunpack.c.l.s8.bf16 %v5783
        %v7898 = vunpack.c.l.s8.bf16 %v5784
        %v7899 = vunpack.c.l.s8.bf16 %v5785
        %v7900 = vunpack.c.l.s8.bf16 %v5786
        %v7901 = vunpack.c.l.s8.bf16 %v5787
        %v7902 = vunpack.c.l.s8.bf16 %v5788
        %v7903 = vunpack.c.h.s8.bf16 %v5781
        %v7904 = vunpack.c.h.s8.bf16 %v5782
        %v7905 = vunpack.c.h.s8.bf16 %v5783
        %v7906 = vunpack.c.h.s8.bf16 %v5784
        %v7907 = vunpack.c.h.s8.bf16 %v5785
        %v7908 = vunpack.c.h.s8.bf16 %v5786
        %v7909 = vunpack.c.h.s8.bf16 %v5787
        %v7910 = vunpack.c.h.s8.bf16 %v5788
        %v7911 = vunpack.c.l.s8.bf16 %v5789
        %v7912 = vunpack.c.l.s8.bf16 %v5790
        %v7913 = vunpack.c.l.s8.bf16 %v5791
        %v7914 = vunpack.c.l.s8.bf16 %v5792
        %v7915 = vunpack.c.l.s8.bf16 %v5793
        %v7916 = vunpack.c.l.s8.bf16 %v5794
        %v7917 = vunpack.c.l.s8.bf16 %v5795
        %v7918 = vunpack.c.l.s8.bf16 %v5796
        %v7919 = vunpack.c.h.s8.bf16 %v5789
        %v7920 = vunpack.c.h.s8.bf16 %v5790
        %v7921 = vunpack.c.h.s8.bf16 %v5791
        %v7922 = vunpack.c.h.s8.bf16 %v5792
        %v7923 = vunpack.c.h.s8.bf16 %v5793
        %v7924 = vunpack.c.h.s8.bf16 %v5794
        %v7925 = vunpack.c.h.s8.bf16 %v5795
        %v7926 = vunpack.c.h.s8.bf16 %v5796
        %v7927 = vunpack.c.l.s8.bf16 %v5797
        %v7928 = vunpack.c.l.s8.bf16 %v5798
        %v7929 = vunpack.c.l.s8.bf16 %v5799
        %v7930 = vunpack.c.l.s8.bf16 %v5800
        %v7931 = vunpack.c.l.s8.bf16 %v5801
        %v7932 = vunpack.c.l.s8.bf16 %v5802
        %v7933 = vunpack.c.l.s8.bf16 %v5803
        %v7934 = vunpack.c.l.s8.bf16 %v5804
        %v7935 = vunpack.c.h.s8.bf16 %v5797
        %v7936 = vunpack.c.h.s8.bf16 %v5798
        %v7937 = vunpack.c.h.s8.bf16 %v5799
        %v7938 = vunpack.c.h.s8.bf16 %v5800
        %v7939 = vunpack.c.h.s8.bf16 %v5801
        %v7940 = vunpack.c.h.s8.bf16 %v5802
        %v7941 = vunpack.c.h.s8.bf16 %v5803
        %v7942 = vunpack.c.h.s8.bf16 %v5804
        %v7943 = vunpack.c.l.s8.bf16 %v5805
        %v7944 = vunpack.c.l.s8.bf16 %v5806
        %v7945 = vunpack.c.l.s8.bf16 %v5807
        %v7946 = vunpack.c.l.s8.bf16 %v5808
        %v7947 = vunpack.c.l.s8.bf16 %v5809
        %v7948 = vunpack.c.l.s8.bf16 %v5810
        %v7949 = vunpack.c.l.s8.bf16 %v5811
        %v7950 = vunpack.c.l.s8.bf16 %v5812
        %v7951 = vunpack.c.h.s8.bf16 %v5805
        %v7952 = vunpack.c.h.s8.bf16 %v5806
        %v7953 = vunpack.c.h.s8.bf16 %v5807
        %v7954 = vunpack.c.h.s8.bf16 %v5808
        %v7955 = vunpack.c.h.s8.bf16 %v5809
        %v7956 = vunpack.c.h.s8.bf16 %v5810
        %v7957 = vunpack.c.h.s8.bf16 %v5811
        %v7958 = vunpack.c.h.s8.bf16 %v5812
        %v7959 = vunpack.c.l.s8.bf16 %v5813
        %v7960 = vunpack.c.l.s8.bf16 %v5814
        %v7961 = vunpack.c.l.s8.bf16 %v5815
        %v7962 = vunpack.c.l.s8.bf16 %v5816
        %v7963 = vunpack.c.l.s8.bf16 %v5817
        %v7964 = vunpack.c.l.s8.bf16 %v5818
        %v7965 = vunpack.c.l.s8.bf16 %v5819
        %v7966 = vunpack.c.l.s8.bf16 %v5820
        %v7967 = vunpack.c.h.s8.bf16 %v5813
        %v7968 = vunpack.c.h.s8.bf16 %v5814
        %v7969 = vunpack.c.h.s8.bf16 %v5815
        %v7970 = vunpack.c.h.s8.bf16 %v5816
        %v7971 = vunpack.c.h.s8.bf16 %v5817
        %v7972 = vunpack.c.h.s8.bf16 %v5818
        %v7973 = vunpack.c.h.s8.bf16 %v5819
        %v7974 = vunpack.c.h.s8.bf16 %v5820
        %v7975 = vunpack.c.l.s8.bf16 %v5821
        %v7976 = vunpack.c.l.s8.bf16 %v5822
        %v7977 = vunpack.c.l.s8.bf16 %v5823
        %v7978 = vunpack.c.l.s8.bf16 %v5824
        %v7979 = vunpack.c.l.s8.bf16 %v5825
        %v7980 = vunpack.c.l.s8.bf16 %v5826
        %v7981 = vunpack.c.l.s8.bf16 %v5827
        %v7982 = vunpack.c.l.s8.bf16 %v5828
        %v7983 = vunpack.c.h.s8.bf16 %v5821
        %v7984 = vunpack.c.h.s8.bf16 %v5822
        %v7985 = vunpack.c.h.s8.bf16 %v5823
        %v7986 = vunpack.c.h.s8.bf16 %v5824
        %v7987 = vunpack.c.h.s8.bf16 %v5825
        %v7988 = vunpack.c.h.s8.bf16 %v5826
        %v7989 = vunpack.c.h.s8.bf16 %v5827
        %v7990 = vunpack.c.h.s8.bf16 %v5828
        %v7991 = vunpack.c.l.s8.bf16 %v5829
        %v7992 = vunpack.c.l.s8.bf16 %v5830
        %v7993 = vunpack.c.l.s8.bf16 %v5831
        %v7994 = vunpack.c.l.s8.bf16 %v5832
        %v7995 = vunpack.c.l.s8.bf16 %v5833
        %v7996 = vunpack.c.l.s8.bf16 %v5834
        %v7997 = vunpack.c.l.s8.bf16 %v5835
        %v7998 = vunpack.c.l.s8.bf16 %v5836
        %v7999 = vunpack.c.h.s8.bf16 %v5829
        %v8000 = vunpack.c.h.s8.bf16 %v5830
        %v8001 = vunpack.c.h.s8.bf16 %v5831
        %v8002 = vunpack.c.h.s8.bf16 %v5832
        %v8003 = vunpack.c.h.s8.bf16 %v5833
        %v8004 = vunpack.c.h.s8.bf16 %v5834
        %v8005 = vunpack.c.h.s8.bf16 %v5835
        %v8006 = vunpack.c.h.s8.bf16 %v5836
        %v8007 = vpack.c.bf16 %v7487, %v7487
        %v8008 = vpack.c.bf16 %v7488, %v7488
        %v8009 = vpack.c.bf16 %v7489, %v7489
        %v8010 = vpack.c.bf16 %v7490, %v7490
        %v8011 = vpack.c.bf16 %v7491, %v7491
        %v8012 = vpack.c.bf16 %v7492, %v7492
        %v8013 = vpack.c.bf16 %v7493, %v7493
        %v8014 = vpack.c.bf16 %v7494, %v7494
        %8015 = vmatprep.subr.bf16.mxu0 %v7496
        %8016 = vmatpush1.bf16.msra.mxu0 %v7495
        %8017 = vmatprep.subr.bf16.mxu0 %v7504
        %8018 = vmatpush1.bf16.msra.mxu0 %v7503
        %8019 = vmatprep.subr.bf16.mxu0 %v7512
        %8020 = vmatpush1.bf16.msra.mxu0 %v7511
        %8021 = vmatprep.subr.bf16.mxu0 %v7520
        %8022 = vmatpush1.bf16.msra.mxu0 %v7519
        %8023 = vmatprep.subr.bf16.mxu0 %v7528
        %8024 = vmatpush1.bf16.msra.mxu0 %v7527
        %8025 = vmatprep.subr.bf16.mxu0 %v7536
        %8026 = vmatpush1.bf16.msra.mxu0 %v7535
        %8027 = vmatprep.subr.bf16.mxu0 %v7544
        %8028 = vmatpush1.bf16.msra.mxu0 %v7543
        %8029 = vmatprep.subr.bf16.mxu0 %v7552
        %8030 = vmatpush1.bf16.msra.mxu0 %v7551
        %8031 = vmatprep.subr.bf16.mxu0 %v7560
        %8032 = vmatpush1.bf16.msra.mxu0 %v7559
        %8033 = vmatprep.subr.bf16.mxu0 %v7568
        %8034 = vmatpush1.bf16.msra.mxu0 %v7567
        %8035 = vmatprep.subr.bf16.mxu0 %v7576
        %8036 = vmatpush1.bf16.msra.mxu0 %v7575
        %8037 = vmatprep.subr.bf16.mxu0 %v7584
        %8038 = vmatpush1.bf16.msra.mxu0 %v7583
        %8039 = vmatprep.subr.bf16.mxu0 %v7592
        %8040 = vmatpush1.bf16.msra.mxu0 %v7591
        %8041 = vmatprep.subr.bf16.mxu0 %v7600
        %8042 = vmatpush1.bf16.msra.mxu0 %v7599
        %8043 = vmatprep.subr.bf16.mxu0 %v7608
        %8044 = vmatpush1.bf16.msra.mxu0 %v7607
        %8045 = vmatprep.subr.bf16.mxu0 %v7616
        %8046 = vmatpush1.bf16.msra.mxu0 %v7615
        %8047 = vmatprep.mubr.bf16.mxu0 %v8008
        %8048 = vmatmul.mubr.bf16.gmra.mrb[0].mxu0 %v8007
        %v8049 = vpop.f32.mrb[0].mxu0
        %v8050 = vadd.f32 0.0, %v8049
        %v8051 = vpop.f32.mrb[0].mxu0
        %v8052 = vadd.f32 0.0, %v8051
        %v8053 = vpop.f32.mrb[0].mxu0
        %v8054 = vpop.f32.mrb[0].mxu0
        %8055 = vdwg.mxu0
        %8056 = vmatprep.subr.bf16.mxu0 %v7624
        %8057 = vmatpush1.bf16.msra.mxu0 %v7623
        %8058 = vmatprep.subr.bf16.mxu0 %v7632
        %8059 = vmatpush1.bf16.msra.mxu0 %v7631
        %8060 = vmatprep.subr.bf16.mxu0 %v7640
        %8061 = vmatpush1.bf16.msra.mxu0 %v7639
        %8062 = vmatprep.subr.bf16.mxu0 %v7648
        %8063 = vmatpush1.bf16.msra.mxu0 %v7647
        %8064 = vmatprep.subr.bf16.mxu0 %v7656
        %8065 = vmatpush1.bf16.msra.mxu0 %v7655
        %8066 = vmatprep.subr.bf16.mxu0 %v7664
        %8067 = vmatpush1.bf16.msra.mxu0 %v7663
        %8068 = vmatprep.subr.bf16.mxu0 %v7672
        %8069 = vmatpush1.bf16.msra.mxu0 %v7671
        %8070 = vmatprep.subr.bf16.mxu0 %v7680
        %8071 = vmatpush1.bf16.msra.mxu0 %v7679
        %8072 = vmatprep.subr.bf16.mxu0 %v7688
        %8073 = vmatpush1.bf16.msra.mxu0 %v7687
        %8074 = vmatprep.subr.bf16.mxu0 %v7696
        %8075 = vmatpush1.bf16.msra.mxu0 %v7695
        %8076 = vmatprep.subr.bf16.mxu0 %v7704
        %8077 = vmatpush1.bf16.msra.mxu0 %v7703
        %8078 = vmatprep.subr.bf16.mxu0 %v7712
        %8079 = vmatpush1.bf16.msra.mxu0 %v7711
        %8080 = vmatprep.subr.bf16.mxu0 %v7720
        %8081 = vmatpush1.bf16.msra.mxu0 %v7719
        %8082 = vmatprep.subr.bf16.mxu0 %v7728
        %8083 = vmatpush1.bf16.msra.mxu0 %v7727
        %8084 = vmatprep.subr.bf16.mxu0 %v7736
        %8085 = vmatpush1.bf16.msra.mxu0 %v7735
        %8086 = vmatprep.subr.bf16.mxu0 %v7744
        %8087 = vmatpush1.bf16.msra.mxu0 %v7743
        %8088 = vmatprep.mubr.bf16.mxu0 %v8010
        %8089 = vmatmul.mubr.bf16.gmra.mrb[0].mxu0 %v8009
        %v8090 = vpop.f32.mrb[0].mxu0
        %v8091 = vadd.f32 %v8050, %v8090
        %v8092 = vpop.f32.mrb[0].mxu0
        %v8093 = vadd.f32 %v8052, %v8092
        %v8094 = vpop.f32.mrb[0].mxu0
        %v8095 = vpop.f32.mrb[0].mxu0
        %8096 = vdwg.mxu0
        %8097 = vmatprep.subr.bf16.mxu0 %v7752
        %8098 = vmatpush1.bf16.msra.mxu0 %v7751
        %8099 = vmatprep.subr.bf16.mxu0 %v7760
        %8100 = vmatpush1.bf16.msra.mxu0 %v7759
        %8101 = vmatprep.subr.bf16.mxu0 %v7768
        %8102 = vmatpush1.bf16.msra.mxu0 %v7767
        %8103 = vmatprep.subr.bf16.mxu0 %v7776
        %8104 = vmatpush1.bf16.msra.mxu0 %v7775
        %8105 = vmatprep.subr.bf16.mxu0 %v7784
        %8106 = vmatpush1.bf16.msra.mxu0 %v7783
        %8107 = vmatprep.subr.bf16.mxu0 %v7792
        %8108 = vmatpush1.bf16.msra.mxu0 %v7791
        %8109 = vmatprep.subr.bf16.mxu0 %v7800
        %8110 = vmatpush1.bf16.msra.mxu0 %v7799
        %8111 = vmatprep.subr.bf16.mxu0 %v7808
        %8112 = vmatpush1.bf16.msra.mxu0 %v7807
        %8113 = vmatprep.subr.bf16.mxu0 %v7816
        %8114 = vmatpush1.bf16.msra.mxu0 %v7815
        %8115 = vmatprep.subr.bf16.mxu0 %v7824
        %8116 = vmatpush1.bf16.msra.mxu0 %v7823
        %8117 = vmatprep.subr.bf16.mxu0 %v7832
        %8118 = vmatpush1.bf16.msra.mxu0 %v7831
        %8119 = vmatprep.subr.bf16.mxu0 %v7840
        %8120 = vmatpush1.bf16.msra.mxu0 %v7839
        %8121 = vmatprep.subr.bf16.mxu0 %v7848
        %8122 = vmatpush1.bf16.msra.mxu0 %v7847
        %8123 = vmatprep.subr.bf16.mxu0 %v7856
        %8124 = vmatpush1.bf16.msra.mxu0 %v7855
        %8125 = vmatprep.subr.bf16.mxu0 %v7864
        %8126 = vmatpush1.bf16.msra.mxu0 %v7863
        %8127 = vmatprep.subr.bf16.mxu0 %v7872
        %8128 = vmatpush1.bf16.msra.mxu0 %v7871
        %8129 = vmatprep.mubr.bf16.mxu0 %v8012
        %8130 = vmatmul.mubr.bf16.gmra.mrb[0].mxu0 %v8011
        %v8131 = vpop.f32.mrb[0].mxu0
        %v8132 = vadd.f32 %v8091, %v8131
        %v8133 = vpop.f32.mrb[0].mxu0
        %v8134 = vadd.f32 %v8093, %v8133
        %v8135 = vpop.f32.mrb[0].mxu0
        %v8136 = vpop.f32.mrb[0].mxu0
        %8137 = vdwg.mxu0
        %8138 = vmatprep.subr.bf16.mxu0 %v7880
        %8139 = vmatpush1.bf16.msra.mxu0 %v7879
        %8140 = vmatprep.subr.bf16.mxu0 %v7888
        %8141 = vmatpush1.bf16.msra.mxu0 %v7887
        %8142 = vmatprep.subr.bf16.mxu0 %v7896
        %8143 = vmatpush1.bf16.msra.mxu0 %v7895
        %8144 = vmatprep.subr.bf16.mxu0 %v7904
        %8145 = vmatpush1.bf16.msra.mxu0 %v7903
        %8146 = vmatprep.subr.bf16.mxu0 %v7912
        %8147 = vmatpush1.bf16.msra.mxu0 %v7911
        %8148 = vmatprep.subr.bf16.mxu0 %v7920
        %8149 = vmatpush1.bf16.msra.mxu0 %v7919
        %8150 = vmatprep.subr.bf16.mxu0 %v7928
        %8151 = vmatpush1.bf16.msra.mxu0 %v7927
        %8152 = vmatprep.subr.bf16.mxu0 %v7936
        %8153 = vmatpush1.bf16.msra.mxu0 %v7935
        %8154 = vmatprep.subr.bf16.mxu0 %v7944
        %8155 = vmatpush1.bf16.msra.mxu0 %v7943
        %8156 = vmatprep.subr.bf16.mxu0 %v7952
        %8157 = vmatpush1.bf16.msra.mxu0 %v7951
        %8158 = vmatprep.subr.bf16.mxu0 %v7960
        %8159 = vmatpush1.bf16.msra.mxu0 %v7959
        %8160 = vmatprep.subr.bf16.mxu0 %v7968
        %8161 = vmatpush1.bf16.msra.mxu0 %v7967
        %8162 = vmatprep.subr.bf16.mxu0 %v7976
        %8163 = vmatpush1.bf16.msra.mxu0 %v7975
        %8164 = vmatprep.subr.bf16.mxu0 %v7984
        %8165 = vmatpush1.bf16.msra.mxu0 %v7983
        %8166 = vmatprep.subr.bf16.mxu0 %v7992
        %8167 = vmatpush1.bf16.msra.mxu0 %v7991
        %8168 = vmatprep.subr.bf16.mxu0 %v8000
        %8169 = vmatpush1.bf16.msra.mxu0 %v7999
        %8170 = vmatprep.mubr.bf16.mxu0 %v8014
        %8171 = vmatmul.mubr.bf16.gmra.mrb[0].mxu0 %v8013
        %v8172 = vpop.f32.mrb[0].mxu0
        %v8173 = vadd.f32 %v8132, %v8172
        %v8174 = vpop.f32.mrb[0].mxu0
        %v8175 = vadd.f32 %v8134, %v8174
        %v8176 = vpop.f32.mrb[0].mxu0
        %v8177 = vpop.f32.mrb[0].mxu0
        %8178 = vdwg.mxu0
        %8179 = vmatprep.subr.bf16.mxu0 %v7498
        %8180 = vmatpush1.bf16.msra.mxu0 %v7497
        %8181 = vmatprep.subr.bf16.mxu0 %v7506
        %8182 = vmatpush1.bf16.msra.mxu0 %v7505
        %8183 = vmatprep.subr.bf16.mxu0 %v7514
        %8184 = vmatpush1.bf16.msra.mxu0 %v7513
        %8185 = vmatprep.subr.bf16.mxu0 %v7522
        %8186 = vmatpush1.bf16.msra.mxu0 %v7521
        %8187 = vmatprep.subr.bf16.mxu0 %v7530
        %8188 = vmatpush1.bf16.msra.mxu0 %v7529
        %8189 = vmatprep.subr.bf16.mxu0 %v7538
        %8190 = vmatpush1.bf16.msra.mxu0 %v7537
        %8191 = vmatprep.subr.bf16.mxu0 %v7546
        %8192 = vmatpush1.bf16.msra.mxu0 %v7545
        %8193 = vmatprep.subr.bf16.mxu0 %v7554
        %8194 = vmatpush1.bf16.msra.mxu0 %v7553
        %8195 = vmatprep.subr.bf16.mxu0 %v7562
        %8196 = vmatpush1.bf16.msra.mxu0 %v7561
        %8197 = vmatprep.subr.bf16.mxu0 %v7570
        %8198 = vmatpush1.bf16.msra.mxu0 %v7569
        %8199 = vmatprep.subr.bf16.mxu0 %v7578
        %8200 = vmatpush1.bf16.msra.mxu0 %v7577
        %8201 = vmatprep.subr.bf16.mxu0 %v7586
        %8202 = vmatpush1.bf16.msra.mxu0 %v7585
        %8203 = vmatprep.subr.bf16.mxu0 %v7594
        %8204 = vmatpush1.bf16.msra.mxu0 %v7593
        %8205 = vmatprep.subr.bf16.mxu0 %v7602
        %8206 = vmatpush1.bf16.msra.mxu0 %v7601
        %8207 = vmatprep.subr.bf16.mxu0 %v7610
        %8208 = vmatpush1.bf16.msra.mxu0 %v7609
        %8209 = vmatprep.subr.bf16.mxu0 %v7618
        %8210 = vmatpush1.bf16.msra.mxu0 %v7617
        %8211 = vmatprep.mubr.bf16.mxu0 %v8008
        %8212 = vmatmul.mubr.bf16.gmra.mrb[0].mxu0 %v8007
        %v8213 = vpop.f32.mrb[0].mxu0
        %v8214 = vadd.f32 0.0, %v8213
        %v8215 = vpop.f32.mrb[0].mxu0
        %v8216 = vadd.f32 0.0, %v8215
        %v8217 = vpop.f32.mrb[0].mxu0
        %v8218 = vpop.f32.mrb[0].mxu0
        %8219 = vdwg.mxu0
        %8220 = vmatprep.subr.bf16.mxu0 %v7626
        %8221 = vmatpush1.bf16.msra.mxu0 %v7625
        %8222 = vmatprep.subr.bf16.mxu0 %v7634
        %8223 = vmatpush1.bf16.msra.mxu0 %v7633
        %8224 = vmatprep.subr.bf16.mxu0 %v7642
        %8225 = vmatpush1.bf16.msra.mxu0 %v7641
        %8226 = vmatprep.subr.bf16.mxu0 %v7650
        %8227 = vmatpush1.bf16.msra.mxu0 %v7649
        %8228 = vmatprep.subr.bf16.mxu0 %v7658
        %8229 = vmatpush1.bf16.msra.mxu0 %v7657
        %8230 = vmatprep.subr.bf16.mxu0 %v7666
        %8231 = vmatpush1.bf16.msra.mxu0 %v7665
        %8232 = vmatprep.subr.bf16.mxu0 %v7674
        %8233 = vmatpush1.bf16.msra.mxu0 %v7673
        %8234 = vmatprep.subr.bf16.mxu0 %v7682
        %8235 = vmatpush1.bf16.msra.mxu0 %v7681
        %8236 = vmatprep.subr.bf16.mxu0 %v7690
        %8237 = vmatpush1.bf16.msra.mxu0 %v7689
        %8238 = vmatprep.subr.bf16.mxu0 %v7698
        %8239 = vmatpush1.bf16.msra.mxu0 %v7697
        %8240 = vmatprep.subr.bf16.mxu0 %v7706
        %8241 = vmatpush1.bf16.msra.mxu0 %v7705
        %8242 = vmatprep.subr.bf16.mxu0 %v7714
        %8243 = vmatpush1.bf16.msra.mxu0 %v7713
        %8244 = vmatprep.subr.bf16.mxu0 %v7722
        %8245 = vmatpush1.bf16.msra.mxu0 %v7721
        %8246 = vmatprep.subr.bf16.mxu0 %v7730
        %8247 = vmatpush1.bf16.msra.mxu0 %v7729
        %8248 = vmatprep.subr.bf16.mxu0 %v7738
        %8249 = vmatpush1.bf16.msra.mxu0 %v7737
        %8250 = vmatprep.subr.bf16.mxu0 %v7746
        %8251 = vmatpush1.bf16.msra.mxu0 %v7745
        %8252 = vmatprep.mubr.bf16.mxu0 %v8010
        %8253 = vmatmul.mubr.bf16.gmra.mrb[0].mxu0 %v8009
        %v8254 = vpop.f32.mrb[0].mxu0
        %v8255 = vadd.f32 %v8214, %v8254
        %v8256 = vpop.f32.mrb[0].mxu0
        %v8257 = vadd.f32 %v8216, %v8256
        %v8258 = vpop.f32.mrb[0].mxu0
        %v8259 = vpop.f32.mrb[0].mxu0
        %8260 = vdwg.mxu0
        %8261 = vmatprep.subr.bf16.mxu0 %v7754
        %8262 = vmatpush1.bf16.msra.mxu0 %v7753
        %8263 = vmatprep.subr.bf16.mxu0 %v7762
        %8264 = vmatpush1.bf16.msra.mxu0 %v7761
        %8265 = vmatprep.subr.bf16.mxu0 %v7770
        %8266 = vmatpush1.bf16.msra.mxu0 %v7769
        %8267 = vmatprep.subr.bf16.mxu0 %v7778
        %8268 = vmatpush1.bf16.msra.mxu0 %v7777
        %8269 = vmatprep.subr.bf16.mxu0 %v7786
        %8270 = vmatpush1.bf16.msra.mxu0 %v7785
        %8271 = vmatprep.subr.bf16.mxu0 %v7794
        %8272 = vmatpush1.bf16.msra.mxu0 %v7793
        %8273 = vmatprep.subr.bf16.mxu0 %v7802
        %8274 = vmatpush1.bf16.msra.mxu0 %v7801
        %8275 = vmatprep.subr.bf16.mxu0 %v7810
        %8276 = vmatpush1.bf16.msra.mxu0 %v7809
        %8277 = vmatprep.subr.bf16.mxu0 %v7818
        %8278 = vmatpush1.bf16.msra.mxu0 %v7817
        %8279 = vmatprep.subr.bf16.mxu0 %v7826
        %8280 = vmatpush1.bf16.msra.mxu0 %v7825
        %8281 = vmatprep.subr.bf16.mxu0 %v7834
        %8282 = vmatpush1.bf16.msra.mxu0 %v7833
        %8283 = vmatprep.subr.bf16.mxu0 %v7842
        %8284 = vmatpush1.bf16.msra.mxu0 %v7841
        %8285 = vmatprep.subr.bf16.mxu0 %v7850
        %8286 = vmatpush1.bf16.msra.mxu0 %v7849
        %8287 = vmatprep.subr.bf16.mxu0 %v7858
        %8288 = vmatpush1.bf16.msra.mxu0 %v7857
        %8289 = vmatprep.subr.bf16.mxu0 %v7866
        %8290 = vmatpush1.bf16.msra.mxu0 %v7865
        %8291 = vmatprep.subr.bf16.mxu0 %v7874
        %8292 = vmatpush1.bf16.msra.mxu0 %v7873
        %8293 = vmatprep.mubr.bf16.mxu0 %v8012
        %8294 = vmatmul.mubr.bf16.gmra.mrb[0].mxu0 %v8011
        %v8295 = vpop.f32.mrb[0].mxu0
        %v8296 = vadd.f32 %v8255, %v8295
        %v8297 = vpop.f32.mrb[0].mxu0
        %v8298 = vadd.f32 %v8257, %v8297
        %v8299 = vpop.f32.mrb[0].mxu0
        %v8300 = vpop.f32.mrb[0].mxu0
        %8301 = vdwg.mxu0
        %8302 = vmatprep.subr.bf16.mxu0 %v7882
        %8303 = vmatpush1.bf16.msra.mxu0 %v7881
        %8304 = vmatprep.subr.bf16.mxu0 %v7890
        %8305 = vmatpush1.bf16.msra.mxu0 %v7889
        %8306 = vmatprep.subr.bf16.mxu0 %v7898
        %8307 = vmatpush1.bf16.msra.mxu0 %v7897
        %8308 = vmatprep.subr.bf16.mxu0 %v7906
        %8309 = vmatpush1.bf16.msra.mxu0 %v7905
        %8310 = vmatprep.subr.bf16.mxu0 %v7914
        %8311 = vmatpush1.bf16.msra.mxu0 %v7913
        %8312 = vmatprep.subr.bf16.mxu0 %v7922
        %8313 = vmatpush1.bf16.msra.mxu0 %v7921
        %8314 = vmatprep.subr.bf16.mxu0 %v7930
        %8315 = vmatpush1.bf16.msra.mxu0 %v7929
        %8316 = vmatprep.subr.bf16.mxu0 %v7938
        %8317 = vmatpush1.bf16.msra.mxu0 %v7937
        %8318 = vmatprep.subr.bf16.mxu0 %v7946
        %8319 = vmatpush1.bf16.msra.mxu0 %v7945
        %8320 = vmatprep.subr.bf16.mxu0 %v7954
        %8321 = vmatpush1.bf16.msra.mxu0 %v7953
        %8322 = vmatprep.subr.bf16.mxu0 %v7962
        %8323 = vmatpush1.bf16.msra.mxu0 %v7961
        %8324 = vmatprep.subr.bf16.mxu0 %v7970
        %8325 = vmatpush1.bf16.msra.mxu0 %v7969
        %8326 = vmatprep.subr.bf16.mxu0 %v7978
        %8327 = vmatpush1.bf16.msra.mxu0 %v7977
        %8328 = vmatprep.subr.bf16.mxu0 %v7986
        %8329 = vmatpush1.bf16.msra.mxu0 %v7985
        %8330 = vmatprep.subr.bf16.mxu0 %v7994
        %8331 = vmatpush1.bf16.msra.mxu0 %v7993
        %8332 = vmatprep.subr.bf16.mxu0 %v8002
        %8333 = vmatpush1.bf16.msra.mxu0 %v8001
        %8334 = vmatprep.mubr.bf16.mxu0 %v8014
        %8335 = vmatmul.mubr.bf16.gmra.mrb[0].mxu0 %v8013
        %v8336 = vpop.f32.mrb[0].mxu0
        %v8337 = vadd.f32 %v8296, %v8336
        %v8338 = vpop.f32.mrb[0].mxu0
        %v8339 = vadd.f32 %v8298, %v8338
        %v8340 = vpop.f32.mrb[0].mxu0
        %v8341 = vpop.f32.mrb[0].mxu0
        %8342 = vdwg.mxu0
        %8343 = vmatprep.subr.bf16.mxu0 %v7500
        %8344 = vmatpush1.bf16.msra.mxu0 %v7499
        %8345 = vmatprep.subr.bf16.mxu0 %v7508
        %8346 = vmatpush1.bf16.msra.mxu0 %v7507
        %8347 = vmatprep.subr.bf16.mxu0 %v7516
        %8348 = vmatpush1.bf16.msra.mxu0 %v7515
        %8349 = vmatprep.subr.bf16.mxu0 %v7524
        %8350 = vmatpush1.bf16.msra.mxu0 %v7523
        %8351 = vmatprep.subr.bf16.mxu0 %v7532
        %8352 = vmatpush1.bf16.msra.mxu0 %v7531
        %8353 = vmatprep.subr.bf16.mxu0 %v7540
        %8354 = vmatpush1.bf16.msra.mxu0 %v7539
        %8355 = vmatprep.subr.bf16.mxu0 %v7548
        %8356 = vmatpush1.bf16.msra.mxu0 %v7547
        %8357 = vmatprep.subr.bf16.mxu0 %v7556
        %8358 = vmatpush1.bf16.msra.mxu0 %v7555
        %8359 = vmatprep.subr.bf16.mxu0 %v7564
        %8360 = vmatpush1.bf16.msra.mxu0 %v7563
        %8361 = vmatprep.subr.bf16.mxu0 %v7572
        %8362 = vmatpush1.bf16.msra.mxu0 %v7571
        %8363 = vmatprep.subr.bf16.mxu0 %v7580
        %8364 = vmatpush1.bf16.msra.mxu0 %v7579
        %8365 = vmatprep.subr.bf16.mxu0 %v7588
        %8366 = vmatpush1.bf16.msra.mxu0 %v7587
        %8367 = vmatprep.subr.bf16.mxu0 %v7596
        %8368 = vmatpush1.bf16.msra.mxu0 %v7595
        %8369 = vmatprep.subr.bf16.mxu0 %v7604
        %8370 = vmatpush1.bf16.msra.mxu0 %v7603
        %8371 = vmatprep.subr.bf16.mxu0 %v7612
        %8372 = vmatpush1.bf16.msra.mxu0 %v7611
        %8373 = vmatprep.subr.bf16.mxu0 %v7620
        %8374 = vmatpush1.bf16.msra.mxu0 %v7619
        %8375 = vmatprep.mubr.bf16.mxu0 %v8008
        %8376 = vmatmul.mubr.bf16.gmra.mrb[0].mxu0 %v8007
        %v8377 = vpop.f32.mrb[0].mxu0
        %v8378 = vadd.f32 0.0, %v8377
        %v8379 = vpop.f32.mrb[0].mxu0
        %v8380 = vadd.f32 0.0, %v8379
        %v8381 = vpop.f32.mrb[0].mxu0
        %v8382 = vpop.f32.mrb[0].mxu0
        %8383 = vdwg.mxu0
        %8384 = vmatprep.subr.bf16.mxu0 %v7628
        %8385 = vmatpush1.bf16.msra.mxu0 %v7627
        %8386 = vmatprep.subr.bf16.mxu0 %v7636
        %8387 = vmatpush1.bf16.msra.mxu0 %v7635
        %8388 = vmatprep.subr.bf16.mxu0 %v7644
        %8389 = vmatpush1.bf16.msra.mxu0 %v7643
        %8390 = vmatprep.subr.bf16.mxu0 %v7652
        %8391 = vmatpush1.bf16.msra.mxu0 %v7651
        %8392 = vmatprep.subr.bf16.mxu0 %v7660
        %8393 = vmatpush1.bf16.msra.mxu0 %v7659
        %8394 = vmatprep.subr.bf16.mxu0 %v7668
        %8395 = vmatpush1.bf16.msra.mxu0 %v7667
        %8396 = vmatprep.subr.bf16.mxu0 %v7676
        %8397 = vmatpush1.bf16.msra.mxu0 %v7675
        %8398 = vmatprep.subr.bf16.mxu0 %v7684
        %8399 = vmatpush1.bf16.msra.mxu0 %v7683
        %8400 = vmatprep.subr.bf16.mxu0 %v7692
        %8401 = vmatpush1.bf16.msra.mxu0 %v7691
        %8402 = vmatprep.subr.bf16.mxu0 %v7700
        %8403 = vmatpush1.bf16.msra.mxu0 %v7699
        %8404 = vmatprep.subr.bf16.mxu0 %v7708
        %8405 = vmatpush1.bf16.msra.mxu0 %v7707
        %8406 = vmatprep.subr.bf16.mxu0 %v7716
        %8407 = vmatpush1.bf16.msra.mxu0 %v7715
        %8408 = vmatprep.subr.bf16.mxu0 %v7724
        %8409 = vmatpush1.bf16.msra.mxu0 %v7723
        %8410 = vmatprep.subr.bf16.mxu0 %v7732
        %8411 = vmatpush1.bf16.msra.mxu0 %v7731
        %8412 = vmatprep.subr.bf16.mxu0 %v7740
        %8413 = vmatpush1.bf16.msra.mxu0 %v7739
        %8414 = vmatprep.subr.bf16.mxu0 %v7748
        %8415 = vmatpush1.bf16.msra.mxu0 %v7747
        %8416 = vmatprep.mubr.bf16.mxu0 %v8010
        %8417 = vmatmul.mubr.bf16.gmra.mrb[0].mxu0 %v8009
        %v8418 = vpop.f32.mrb[0].mxu0
        %v8419 = vadd.f32 %v8378, %v8418
        %v8420 = vpop.f32.mrb[0].mxu0
        %v8421 = vadd.f32 %v8380, %v8420
        %v8422 = vpop.f32.mrb[0].mxu0
        %v8423 = vpop.f32.mrb[0].mxu0
        %8424 = vdwg.mxu0
        %8425 = vmatprep.subr.bf16.mxu0 %v7756
        %8426 = vmatpush1.bf16.msra.mxu0 %v7755
        %8427 = vmatprep.subr.bf16.mxu0 %v7764
        %8428 = vmatpush1.bf16.msra.mxu0 %v7763
        %8429 = vmatprep.subr.bf16.mxu0 %v7772
        %8430 = vmatpush1.bf16.msra.mxu0 %v7771
        %8431 = vmatprep.subr.bf16.mxu0 %v7780
        %8432 = vmatpush1.bf16.msra.mxu0 %v7779
        %8433 = vmatprep.subr.bf16.mxu0 %v7788
        %8434 = vmatpush1.bf16.msra.mxu0 %v7787
        %8435 = vmatprep.subr.bf16.mxu0 %v7796
        %8436 = vmatpush1.bf16.msra.mxu0 %v7795
        %8437 = vmatprep.subr.bf16.mxu0 %v7804
        %8438 = vmatpush1.bf16.msra.mxu0 %v7803
        %8439 = vmatprep.subr.bf16.mxu0 %v7812
        %8440 = vmatpush1.bf16.msra.mxu0 %v7811
        %8441 = vmatprep.subr.bf16.mxu0 %v7820
        %8442 = vmatpush1.bf16.msra.mxu0 %v7819
        %8443 = vmatprep.subr.bf16.mxu0 %v7828
        %8444 = vmatpush1.bf16.msra.mxu0 %v7827
        %8445 = vmatprep.subr.bf16.mxu0 %v7836
        %8446 = vmatpush1.bf16.msra.mxu0 %v7835
        %8447 = vmatprep.subr.bf16.mxu0 %v7844
        %8448 = vmatpush1.bf16.msra.mxu0 %v7843
        %8449 = vmatprep.subr.bf16.mxu0 %v7852
        %8450 = vmatpush1.bf16.msra.mxu0 %v7851
        %8451 = vmatprep.subr.bf16.mxu0 %v7860
        %8452 = vmatpush1.bf16.msra.mxu0 %v7859
        %8453 = vmatprep.subr.bf16.mxu0 %v7868
        %8454 = vmatpush1.bf16.msra.mxu0 %v7867
        %8455 = vmatprep.subr.bf16.mxu0 %v7876
        %8456 = vmatpush1.bf16.msra.mxu0 %v7875
        %8457 = vmatprep.mubr.bf16.mxu0 %v8012
        %8458 = vmatmul.mubr.bf16.gmra.mrb[0].mxu0 %v8011
        %v8459 = vpop.f32.mrb[0].mxu0
        %v8460 = vadd.f32 %v8419, %v8459
        %v8461 = vpop.f32.mrb[0].mxu0
        %v8462 = vadd.f32 %v8421, %v8461
        %v8463 = vpop.f32.mrb[0].mxu0
        %v8464 = vpop.f32.mrb[0].mxu0
        %8465 = vdwg.mxu0
        %8466 = vmatprep.subr.bf16.mxu0 %v7884
        %8467 = vmatpush1.bf16.msra.mxu0 %v7883
        %8468 = vmatprep.subr.bf16.mxu0 %v7892
        %8469 = vmatpush1.bf16.msra.mxu0 %v7891
        %8470 = vmatprep.subr.bf16.mxu0 %v7900
        %8471 = vmatpush1.bf16.msra.mxu0 %v7899
        %8472 = vmatprep.subr.bf16.mxu0 %v7908
        %8473 = vmatpush1.bf16.msra.mxu0 %v7907
        %8474 = vmatprep.subr.bf16.mxu0 %v7916
        %8475 = vmatpush1.bf16.msra.mxu0 %v7915
        %8476 = vmatprep.subr.bf16.mxu0 %v7924
        %8477 = vmatpush1.bf16.msra.mxu0 %v7923
        %8478 = vmatprep.subr.bf16.mxu0 %v7932
        %8479 = vmatpush1.bf16.msra.mxu0 %v7931
        %8480 = vmatprep.subr.bf16.mxu0 %v7940
        %8481 = vmatpush1.bf16.msra.mxu0 %v7939
        %8482 = vmatprep.subr.bf16.mxu0 %v7948
        %8483 = vmatpush1.bf16.msra.mxu0 %v7947
        %8484 = vmatprep.subr.bf16.mxu0 %v7956
        %8485 = vmatpush1.bf16.msra.mxu0 %v7955
        %8486 = vmatprep.subr.bf16.mxu0 %v7964
        %8487 = vmatpush1.bf16.msra.mxu0 %v7963
        %8488 = vmatprep.subr.bf16.mxu0 %v7972
        %8489 = vmatpush1.bf16.msra.mxu0 %v7971
        %8490 = vmatprep.subr.bf16.mxu0 %v7980
        %8491 = vmatpush1.bf16.msra.mxu0 %v7979
        %8492 = vmatprep.subr.bf16.mxu0 %v7988
        %8493 = vmatpush1.bf16.msra.mxu0 %v7987
        %8494 = vmatprep.subr.bf16.mxu0 %v7996
        %8495 = vmatpush1.bf16.msra.mxu0 %v7995
        %8496 = vmatprep.subr.bf16.mxu0 %v8004
        %8497 = vmatpush1.bf16.msra.mxu0 %v8003
        %8498 = vmatprep.mubr.bf16.mxu0 %v8014
        %8499 = vmatmul.mubr.bf16.gmra.mrb[0].mxu0 %v8013
        %v8500 = vpop.f32.mrb[0].mxu0
        %v8501 = vadd.f32 %v8460, %v8500
        %v8502 = vpop.f32.mrb[0].mxu0
        %v8503 = vadd.f32 %v8462, %v8502
        %v8504 = vpop.f32.mrb[0].mxu0
        %v8505 = vpop.f32.mrb[0].mxu0
        %8506 = vdwg.mxu0
        %8507 = vmatprep.subr.bf16.mxu0 %v7502
        %8508 = vmatpush1.bf16.msra.mxu0 %v7501
        %8509 = vmatprep.subr.bf16.mxu0 %v7510
        %8510 = vmatpush1.bf16.msra.mxu0 %v7509
        %8511 = vmatprep.subr.bf16.mxu0 %v7518
        %8512 = vmatpush1.bf16.msra.mxu0 %v7517
        %8513 = vmatprep.subr.bf16.mxu0 %v7526
        %8514 = vmatpush1.bf16.msra.mxu0 %v7525
        %8515 = vmatprep.subr.bf16.mxu0 %v7534
        %8516 = vmatpush1.bf16.msra.mxu0 %v7533
        %8517 = vmatprep.subr.bf16.mxu0 %v7542
        %8518 = vmatpush1.bf16.msra.mxu0 %v7541
        %8519 = vmatprep.subr.bf16.mxu0 %v7550
        %8520 = vmatpush1.bf16.msra.mxu0 %v7549
        %8521 = vmatprep.subr.bf16.mxu0 %v7558
        %8522 = vmatpush1.bf16.msra.mxu0 %v7557
        %8523 = vmatprep.subr.bf16.mxu0 %v7566
        %8524 = vmatpush1.bf16.msra.mxu0 %v7565
        %8525 = vmatprep.subr.bf16.mxu0 %v7574
        %8526 = vmatpush1.bf16.msra.mxu0 %v7573
        %8527 = vmatprep.subr.bf16.mxu0 %v7582
        %8528 = vmatpush1.bf16.msra.mxu0 %v7581
        %8529 = vmatprep.subr.bf16.mxu0 %v7590
        %8530 = vmatpush1.bf16.msra.mxu0 %v7589
        %8531 = vmatprep.subr.bf16.mxu0 %v7598
        %8532 = vmatpush1.bf16.msra.mxu0 %v7597
        %8533 = vmatprep.subr.bf16.mxu0 %v7606
        %8534 = vmatpush1.bf16.msra.mxu0 %v7605
        %8535 = vmatprep.subr.bf16.mxu0 %v7614
        %8536 = vmatpush1.bf16.msra.mxu0 %v7613
        %8537 = vmatprep.subr.bf16.mxu0 %v7622
        %8538 = vmatpush1.bf16.msra.mxu0 %v7621
        %8539 = vmatprep.mubr.bf16.mxu0 %v8008
        %8540 = vmatmul.mubr.bf16.gmra.mrb[0].mxu0 %v8007
        %v8541 = vpop.f32.mrb[0].mxu0
        %v8542 = vadd.f32 0.0, %v8541
        %v8543 = vpop.f32.mrb[0].mxu0
        %v8544 = vadd.f32 0.0, %v8543
        %v8545 = vpop.f32.mrb[0].mxu0
        %v8546 = vpop.f32.mrb[0].mxu0
        %8547 = vdwg.mxu0
        %8548 = vmatprep.subr.bf16.mxu0 %v7630
        %8549 = vmatpush1.bf16.msra.mxu0 %v7629
        %8550 = vmatprep.subr.bf16.mxu0 %v7638
        %8551 = vmatpush1.bf16.msra.mxu0 %v7637
        %8552 = vmatprep.subr.bf16.mxu0 %v7646
        %8553 = vmatpush1.bf16.msra.mxu0 %v7645
        %8554 = vmatprep.subr.bf16.mxu0 %v7654
        %8555 = vmatpush1.bf16.msra.mxu0 %v7653
        %8556 = vmatprep.subr.bf16.mxu0 %v7662
        %8557 = vmatpush1.bf16.msra.mxu0 %v7661
        %8558 = vmatprep.subr.bf16.mxu0 %v7670
        %8559 = vmatpush1.bf16.msra.mxu0 %v7669
        %8560 = vmatprep.subr.bf16.mxu0 %v7678
        %8561 = vmatpush1.bf16.msra.mxu0 %v7677
        %8562 = vmatprep.subr.bf16.mxu0 %v7686
        %8563 = vmatpush1.bf16.msra.mxu0 %v7685
        %8564 = vmatprep.subr.bf16.mxu0 %v7694
        %8565 = vmatpush1.bf16.msra.mxu0 %v7693
        %8566 = vmatprep.subr.bf16.mxu0 %v7702
        %8567 = vmatpush1.bf16.msra.mxu0 %v7701
        %8568 = vmatprep.subr.bf16.mxu0 %v7710
        %8569 = vmatpush1.bf16.msra.mxu0 %v7709
        %8570 = vmatprep.subr.bf16.mxu0 %v7718
        %8571 = vmatpush1.bf16.msra.mxu0 %v7717
        %8572 = vmatprep.subr.bf16.mxu0 %v7726
        %8573 = vmatpush1.bf16.msra.mxu0 %v7725
        %8574 = vmatprep.subr.bf16.mxu0 %v7734
        %8575 = vmatpush1.bf16.msra.mxu0 %v7733
        %8576 = vmatprep.subr.bf16.mxu0 %v7742
        %8577 = vmatpush1.bf16.msra.mxu0 %v7741
        %8578 = vmatprep.subr.bf16.mxu0 %v7750
        %8579 = vmatpush1.bf16.msra.mxu0 %v7749
        %8580 = vmatprep.mubr.bf16.mxu0 %v8010
        %8581 = vmatmul.mubr.bf16.gmra.mrb[0].mxu0 %v8009
        %v8582 = vpop.f32.mrb[0].mxu0
        %v8583 = vadd.f32 %v8542, %v8582
        %v8584 = vpop.f32.mrb[0].mxu0
        %v8585 = vadd.f32 %v8544, %v8584
        %v8586 = vpop.f32.mrb[0].mxu0
        %v8587 = vpop.f32.mrb[0].mxu0
        %8588 = vdwg.mxu0
        %8589 = vmatprep.subr.bf16.mxu0 %v7758
        %8590 = vmatpush1.bf16.msra.mxu0 %v7757
        %8591 = vmatprep.subr.bf16.mxu0 %v7766
        %8592 = vmatpush1.bf16.msra.mxu0 %v7765
        %8593 = vmatprep.subr.bf16.mxu0 %v7774
        %8594 = vmatpush1.bf16.msra.mxu0 %v7773
        %8595 = vmatprep.subr.bf16.mxu0 %v7782
        %8596 = vmatpush1.bf16.msra.mxu0 %v7781
        %8597 = vmatprep.subr.bf16.mxu0 %v7790
        %8598 = vmatpush1.bf16.msra.mxu0 %v7789
        %8599 = vmatprep.subr.bf16.mxu0 %v7798
        %8600 = vmatpush1.bf16.msra.mxu0 %v7797
        %8601 = vmatprep.subr.bf16.mxu0 %v7806
        %8602 = vmatpush1.bf16.msra.mxu0 %v7805
        %8603 = vmatprep.subr.bf16.mxu0 %v7814
        %8604 = vmatpush1.bf16.msra.mxu0 %v7813
        %8605 = vmatprep.subr.bf16.mxu0 %v7822
        %8606 = vmatpush1.bf16.msra.mxu0 %v7821
        %8607 = vmatprep.subr.bf16.mxu0 %v7830
        %8608 = vmatpush1.bf16.msra.mxu0 %v7829
        %8609 = vmatprep.subr.bf16.mxu0 %v7838
        %8610 = vmatpush1.bf16.msra.mxu0 %v7837
        %8611 = vmatprep.subr.bf16.mxu0 %v7846
        %8612 = vmatpush1.bf16.msra.mxu0 %v7845
        %8613 = vmatprep.subr.bf16.mxu0 %v7854
        %8614 = vmatpush1.bf16.msra.mxu0 %v7853
        %8615 = vmatprep.subr.bf16.mxu0 %v7862
        %8616 = vmatpush1.bf16.msra.mxu0 %v7861
        %8617 = vmatprep.subr.bf16.mxu0 %v7870
        %8618 = vmatpush1.bf16.msra.mxu0 %v7869
        %8619 = vmatprep.subr.bf16.mxu0 %v7878
        %8620 = vmatpush1.bf16.msra.mxu0 %v7877
        %8621 = vmatprep.mubr.bf16.mxu0 %v8012
        %8622 = vmatmul.mubr.bf16.gmra.mrb[0].mxu0 %v8011
        %v8623 = vpop.f32.mrb[0].mxu0
        %v8624 = vadd.f32 %v8583, %v8623
        %v8625 = vpop.f32.mrb[0].mxu0
        %v8626 = vadd.f32 %v8585, %v8625
        %v8627 = vpop.f32.mrb[0].mxu0
        %v8628 = vpop.f32.mrb[0].mxu0
        %8629 = vdwg.mxu0
        %8630 = vmatprep.subr.bf16.mxu0 %v7886
        %8631 = vmatpush1.bf16.msra.mxu0 %v7885
        %8632 = vmatprep.subr.bf16.mxu0 %v7894
        %8633 = vmatpush1.bf16.msra.mxu0 %v7893
        %8634 = vmatprep.subr.bf16.mxu0 %v7902
        %8635 = vmatpush1.bf16.msra.mxu0 %v7901
        %8636 = vmatprep.subr.bf16.mxu0 %v7910
        %8637 = vmatpush1.bf16.msra.mxu0 %v7909
        %8638 = vmatprep.subr.bf16.mxu0 %v7918
        %8639 = vmatpush1.bf16.msra.mxu0 %v7917
        %8640 = vmatprep.subr.bf16.mxu0 %v7926
        %8641 = vmatpush1.bf16.msra.mxu0 %v7925
        %8642 = vmatprep.subr.bf16.mxu0 %v7934
        %8643 = vmatpush1.bf16.msra.mxu0 %v7933
        %8644 = vmatprep.subr.bf16.mxu0 %v7942
        %8645 = vmatpush1.bf16.msra.mxu0 %v7941
        %8646 = vmatprep.subr.bf16.mxu0 %v7950
        %8647 = vmatpush1.bf16.msra.mxu0 %v7949
        %8648 = vmatprep.subr.bf16.mxu0 %v7958
        %8649 = vmatpush1.bf16.msra.mxu0 %v7957
        %8650 = vmatprep.subr.bf16.mxu0 %v7966
        %8651 = vmatpush1.bf16.msra.mxu0 %v7965
        %8652 = vmatprep.subr.bf16.mxu0 %v7974
        %8653 = vmatpush1.bf16.msra.mxu0 %v7973
        %8654 = vmatprep.subr.bf16.mxu0 %v7982
        %8655 = vmatpush1.bf16.msra.mxu0 %v7981
        %8656 = vmatprep.subr.bf16.mxu0 %v7990
        %8657 = vmatpush1.bf16.msra.mxu0 %v7989
        %8658 = vmatprep.subr.bf16.mxu0 %v7998
        %8659 = vmatpush1.bf16.msra.mxu0 %v7997
        %8660 = vmatprep.subr.bf16.mxu0 %v8006
        %8661 = vmatpush1.bf16.msra.mxu0 %v8005
        %8662 = vmatprep.mubr.bf16.mxu0 %v8014
        %8663 = vmatmul.mubr.bf16.gmra.mrb[0].mxu0 %v8013
        %v8664 = vpop.f32.mrb[0].mxu0
        %v8665 = vadd.f32 %v8624, %v8664
        %v8666 = vpop.f32.mrb[0].mxu0
        %v8667 = vadd.f32 %v8626, %v8666
        %v8668 = vpop.f32.mrb[0].mxu0
        %v8669 = vpop.f32.mrb[0].mxu0
        %8670 = vdwg.mxu0
        %v8672 = vlaneseq
        %v8673 = vshrl.u32 %v8672, 7
        %v8674 = vsub.s32 0, %v8673
        %v8675 = vrot.slane %v5838, %v8674
        %v8676 = vlaneseq
        %v8677 = vshrl.u32 %v8676, 7
        %v8678 = vsub.s32 1, %v8677
        %v8679 = vrot.slane %v5838, %v8678
        %v8680 = vlaneseq
        %v8681 = vshrl.u32 %v8680, 7
        %v8682 = vsub.s32 2, %v8681
        %v8683 = vrot.slane %v5838, %v8682
        %v8684 = vlaneseq
        %v8685 = vshrl.u32 %v8684, 7
        %v8686 = vsub.s32 3, %v8685
        %v8687 = vrot.slane %v5838, %v8686
        %v8688 = vlaneseq
        %v8689 = vshrl.u32 %v8688, 7
        %v8690 = vsub.s32 4, %v8689
        %v8691 = vrot.slane %v5838, %v8690
        %v8692 = vlaneseq
        %v8693 = vshrl.u32 %v8692, 7
        %v8694 = vsub.s32 5, %v8693
        %v8695 = vrot.slane %v5838, %v8694
        %v8696 = vlaneseq
        %v8697 = vshrl.u32 %v8696, 7
        %v8698 = vsub.s32 6, %v8697
        %v8699 = vrot.slane %v5838, %v8698
        %v8700 = vlaneseq
        %v8701 = vshrl.u32 %v8700, 7
        %v8702 = vsub.s32 7, %v8701
        %v8703 = vrot.slane %v5838, %v8702
        %v8712 = vmul.f32 %v8173, %v8675
        %v8713 = vmul.f32 %v8175, %v8679
        %v8714 = vmul.f32 %v8337, %v8683
        %v8715 = vmul.f32 %v8339, %v8687
        %v8716 = vmul.f32 %v8501, %v8691
        %v8717 = vmul.f32 %v8503, %v8695
        %v8718 = vmul.f32 %v8665, %v8699
        %v8719 = vmul.f32 %v8667, %v8703
        %v8721 = vlaneseq
        %v8722 = vshrl.u32 %v8721, 7
        %v8723 = vsub.s32 0, %v8722
        %v8724 = vrot.slane %v5840, %v8723
        %v8725 = vlaneseq
        %v8726 = vshrl.u32 %v8725, 7
        %v8727 = vsub.s32 1, %v8726
        %v8728 = vrot.slane %v5840, %v8727
        %v8729 = vlaneseq
        %v8730 = vshrl.u32 %v8729, 7
        %v8731 = vsub.s32 2, %v8730
        %v8732 = vrot.slane %v5840, %v8731
        %v8733 = vlaneseq
        %v8734 = vshrl.u32 %v8733, 7
        %v8735 = vsub.s32 3, %v8734
        %v8736 = vrot.slane %v5840, %v8735
        %v8737 = vlaneseq
        %v8738 = vshrl.u32 %v8737, 7
        %v8739 = vsub.s32 4, %v8738
        %v8740 = vrot.slane %v5840, %v8739
        %v8741 = vlaneseq
        %v8742 = vshrl.u32 %v8741, 7
        %v8743 = vsub.s32 5, %v8742
        %v8744 = vrot.slane %v5840, %v8743
        %v8745 = vlaneseq
        %v8746 = vshrl.u32 %v8745, 7
        %v8747 = vsub.s32 6, %v8746
        %v8748 = vrot.slane %v5840, %v8747
        %v8749 = vlaneseq
        %v8750 = vshrl.u32 %v8749, 7
        %v8751 = vsub.s32 7, %v8750
        %v8752 = vrot.slane %v5840, %v8751
        %v8761 = vadd.f32 %v8712, %v8724
        %v8762 = vadd.f32 %v8713, %v8728
        %v8763 = vadd.f32 %v8714, %v8732
        %v8764 = vadd.f32 %v8715, %v8736
        %v8765 = vadd.f32 %v8716, %v8740
        %v8766 = vadd.f32 %v8717, %v8744
        %v8767 = vadd.f32 %v8718, %v8748
        %v8768 = vadd.f32 %v8719, %v8752
        %v8769 = vmax.f32 %v8761, 0.0
        %v8770 = vmax.f32 %v8762, 0.0
        %v8771 = vmax.f32 %v8763, 0.0
        %v8772 = vmax.f32 %v8764, 0.0
        %v8773 = vmax.f32 %v8765, 0.0
        %v8774 = vmax.f32 %v8766, 0.0
        %v8775 = vmax.f32 %v8767, 0.0
        %v8776 = vmax.f32 %v8768, 0.0
        %v8777 = vpack.c.bf16 %v8769, %v8769
        %v8778 = vpack.c.bf16 %v8770, %v8770
        %v8779 = vpack.c.bf16 %v8771, %v8771
        %v8780 = vpack.c.bf16 %v8772, %v8772
        %v8781 = vpack.c.bf16 %v8773, %v8773
        %v8782 = vpack.c.bf16 %v8774, %v8774
        %v8783 = vpack.c.bf16 %v8775, %v8775
        %v8784 = vpack.c.bf16 %v8776, %v8776
        %v8785 = vunpack.c.l.s8.bf16 %v5842
        %v8786 = vunpack.c.l.s8.bf16 %v5843
        %v8787 = vunpack.c.l.s8.bf16 %v5844
        %v8788 = vunpack.c.l.s8.bf16 %v5845
        %v8789 = vunpack.c.h.s8.bf16 %v5842
        %v8790 = vunpack.c.h.s8.bf16 %v5843
        %v8791 = vunpack.c.h.s8.bf16 %v5844
        %v8792 = vunpack.c.h.s8.bf16 %v5845
        %v8793 = vunpack.c.l.s8.bf16 %v5846
        %v8794 = vunpack.c.l.s8.bf16 %v5847
        %v8795 = vunpack.c.l.s8.bf16 %v5848
        %v8796 = vunpack.c.l.s8.bf16 %v5849
        %v8797 = vunpack.c.h.s8.bf16 %v5846
        %v8798 = vunpack.c.h.s8.bf16 %v5847
        %v8799 = vunpack.c.h.s8.bf16 %v5848
        %v8800 = vunpack.c.h.s8.bf16 %v5849
        %v8801 = vunpack.c.l.s8.bf16 %v5850
        %v8802 = vunpack.c.l.s8.bf16 %v5851
        %v8803 = vunpack.c.l.s8.bf16 %v5852
        %v8804 = vunpack.c.l.s8.bf16 %v5853
        %v8805 = vunpack.c.h.s8.bf16 %v5850
        %v8806 = vunpack.c.h.s8.bf16 %v5851
        %v8807 = vunpack.c.h.s8.bf16 %v5852
        %v8808 = vunpack.c.h.s8.bf16 %v5853
        %v8809 = vunpack.c.l.s8.bf16 %v5854
        %v8810 = vunpack.c.l.s8.bf16 %v5855
        %v8811 = vunpack.c.l.s8.bf16 %v5856
        %v8812 = vunpack.c.l.s8.bf16 %v5857
        %v8813 = vunpack.c.h.s8.bf16 %v5854
        %v8814 = vunpack.c.h.s8.bf16 %v5855
        %v8815 = vunpack.c.h.s8.bf16 %v5856
        %v8816 = vunpack.c.h.s8.bf16 %v5857
        %v8817 = vunpack.c.l.s8.bf16 %v5858
        %v8818 = vunpack.c.l.s8.bf16 %v5859
        %v8819 = vunpack.c.l.s8.bf16 %v5860
        %v8820 = vunpack.c.l.s8.bf16 %v5861
        %v8821 = vunpack.c.h.s8.bf16 %v5858
        %v8822 = vunpack.c.h.s8.bf16 %v5859
        %v8823 = vunpack.c.h.s8.bf16 %v5860
        %v8824 = vunpack.c.h.s8.bf16 %v5861
        %v8825 = vunpack.c.l.s8.bf16 %v5862
        %v8826 = vunpack.c.l.s8.bf16 %v5863
        %v8827 = vunpack.c.l.s8.bf16 %v5864
        %v8828 = vunpack.c.l.s8.bf16 %v5865
        %v8829 = vunpack.c.h.s8.bf16 %v5862
        %v8830 = vunpack.c.h.s8.bf16 %v5863
        %v8831 = vunpack.c.h.s8.bf16 %v5864
        %v8832 = vunpack.c.h.s8.bf16 %v5865
        %v8833 = vunpack.c.l.s8.bf16 %v5866
        %v8834 = vunpack.c.l.s8.bf16 %v5867
        %v8835 = vunpack.c.l.s8.bf16 %v5868
        %v8836 = vunpack.c.l.s8.bf16 %v5869
        %v8837 = vunpack.c.h.s8.bf16 %v5866
        %v8838 = vunpack.c.h.s8.bf16 %v5867
        %v8839 = vunpack.c.h.s8.bf16 %v5868
        %v8840 = vunpack.c.h.s8.bf16 %v5869
        %v8841 = vunpack.c.l.s8.bf16 %v5870
        %v8842 = vunpack.c.l.s8.bf16 %v5871
        %v8843 = vunpack.c.l.s8.bf16 %v5872
        %v8844 = vunpack.c.l.s8.bf16 %v5873
        %v8845 = vunpack.c.h.s8.bf16 %v5870
        %v8846 = vunpack.c.h.s8.bf16 %v5871
        %v8847 = vunpack.c.h.s8.bf16 %v5872
        %v8848 = vunpack.c.h.s8.bf16 %v5873
        %v8849 = vunpack.c.l.s8.bf16 %v5874
        %v8850 = vunpack.c.l.s8.bf16 %v5875
        %v8851 = vunpack.c.l.s8.bf16 %v5876
        %v8852 = vunpack.c.l.s8.bf16 %v5877
        %v8853 = vunpack.c.h.s8.bf16 %v5874
        %v8854 = vunpack.c.h.s8.bf16 %v5875
        %v8855 = vunpack.c.h.s8.bf16 %v5876
        %v8856 = vunpack.c.h.s8.bf16 %v5877
        %v8857 = vunpack.c.l.s8.bf16 %v5878
        %v8858 = vunpack.c.l.s8.bf16 %v5879
        %v8859 = vunpack.c.l.s8.bf16 %v5880
        %v8860 = vunpack.c.l.s8.bf16 %v5881
        %v8861 = vunpack.c.h.s8.bf16 %v5878
        %v8862 = vunpack.c.h.s8.bf16 %v5879
        %v8863 = vunpack.c.h.s8.bf16 %v5880
        %v8864 = vunpack.c.h.s8.bf16 %v5881
        %v8865 = vunpack.c.l.s8.bf16 %v5882
        %v8866 = vunpack.c.l.s8.bf16 %v5883
        %v8867 = vunpack.c.l.s8.bf16 %v5884
        %v8868 = vunpack.c.l.s8.bf16 %v5885
        %v8869 = vunpack.c.h.s8.bf16 %v5882
        %v8870 = vunpack.c.h.s8.bf16 %v5883
        %v8871 = vunpack.c.h.s8.bf16 %v5884
        %v8872 = vunpack.c.h.s8.bf16 %v5885
        %v8873 = vunpack.c.l.s8.bf16 %v5886
        %v8874 = vunpack.c.l.s8.bf16 %v5887
        %v8875 = vunpack.c.l.s8.bf16 %v5888
        %v8876 = vunpack.c.l.s8.bf16 %v5889
        %v8877 = vunpack.c.h.s8.bf16 %v5886
        %v8878 = vunpack.c.h.s8.bf16 %v5887
        %v8879 = vunpack.c.h.s8.bf16 %v5888
        %v8880 = vunpack.c.h.s8.bf16 %v5889
        %v8881 = vunpack.c.l.s8.bf16 %v5890
        %v8882 = vunpack.c.l.s8.bf16 %v5891
        %v8883 = vunpack.c.l.s8.bf16 %v5892
        %v8884 = vunpack.c.l.s8.bf16 %v5893
        %v8885 = vunpack.c.h.s8.bf16 %v5890
        %v8886 = vunpack.c.h.s8.bf16 %v5891
        %v8887 = vunpack.c.h.s8.bf16 %v5892
        %v8888 = vunpack.c.h.s8.bf16 %v5893
        %v8889 = vunpack.c.l.s8.bf16 %v5894
        %v8890 = vunpack.c.l.s8.bf16 %v5895
        %v8891 = vunpack.c.l.s8.bf16 %v5896
        %v8892 = vunpack.c.l.s8.bf16 %v5897
        %v8893 = vunpack.c.h.s8.bf16 %v5894
        %v8894 = vunpack.c.h.s8.bf16 %v5895
        %v8895 = vunpack.c.h.s8.bf16 %v5896
        %v8896 = vunpack.c.h.s8.bf16 %v5897
        %v8897 = vunpack.c.l.s8.bf16 %v5898
        %v8898 = vunpack.c.l.s8.bf16 %v5899
        %v8899 = vunpack.c.l.s8.bf16 %v5900
        %v8900 = vunpack.c.l.s8.bf16 %v5901
        %v8901 = vunpack.c.h.s8.bf16 %v5898
        %v8902 = vunpack.c.h.s8.bf16 %v5899
        %v8903 = vunpack.c.h.s8.bf16 %v5900
        %v8904 = vunpack.c.h.s8.bf16 %v5901
        %v8905 = vunpack.c.l.s8.bf16 %v5902
        %v8906 = vunpack.c.l.s8.bf16 %v5903
        %v8907 = vunpack.c.l.s8.bf16 %v5904
        %v8908 = vunpack.c.l.s8.bf16 %v5905
        %v8909 = vunpack.c.h.s8.bf16 %v5902
        %v8910 = vunpack.c.h.s8.bf16 %v5903
        %v8911 = vunpack.c.h.s8.bf16 %v5904
        %v8912 = vunpack.c.h.s8.bf16 %v5905
        %v8913 = vunpack.c.l.s8.bf16 %v5906
        %v8914 = vunpack.c.l.s8.bf16 %v5907
        %v8915 = vunpack.c.l.s8.bf16 %v5908
        %v8916 = vunpack.c.l.s8.bf16 %v5909
        %v8917 = vunpack.c.h.s8.bf16 %v5906
        %v8918 = vunpack.c.h.s8.bf16 %v5907
        %v8919 = vunpack.c.h.s8.bf16 %v5908
        %v8920 = vunpack.c.h.s8.bf16 %v5909
        %v8921 = vunpack.c.l.s8.bf16 %v5910
        %v8922 = vunpack.c.l.s8.bf16 %v5911
        %v8923 = vunpack.c.l.s8.bf16 %v5912
        %v8924 = vunpack.c.l.s8.bf16 %v5913
        %v8925 = vunpack.c.h.s8.bf16 %v5910
        %v8926 = vunpack.c.h.s8.bf16 %v5911
        %v8927 = vunpack.c.h.s8.bf16 %v5912
        %v8928 = vunpack.c.h.s8.bf16 %v5913
        %v8929 = vunpack.c.l.s8.bf16 %v5914
        %v8930 = vunpack.c.l.s8.bf16 %v5915
        %v8931 = vunpack.c.l.s8.bf16 %v5916
        %v8932 = vunpack.c.l.s8.bf16 %v5917
        %v8933 = vunpack.c.h.s8.bf16 %v5914
        %v8934 = vunpack.c.h.s8.bf16 %v5915
        %v8935 = vunpack.c.h.s8.bf16 %v5916
        %v8936 = vunpack.c.h.s8.bf16 %v5917
        %v8937 = vunpack.c.l.s8.bf16 %v5918
        %v8938 = vunpack.c.l.s8.bf16 %v5919
        %v8939 = vunpack.c.l.s8.bf16 %v5920
        %v8940 = vunpack.c.l.s8.bf16 %v5921
        %v8941 = vunpack.c.h.s8.bf16 %v5918
        %v8942 = vunpack.c.h.s8.bf16 %v5919
        %v8943 = vunpack.c.h.s8.bf16 %v5920
        %v8944 = vunpack.c.h.s8.bf16 %v5921
        %v8945 = vunpack.c.l.s8.bf16 %v5922
        %v8946 = vunpack.c.l.s8.bf16 %v5923
        %v8947 = vunpack.c.l.s8.bf16 %v5924
        %v8948 = vunpack.c.l.s8.bf16 %v5925
        %v8949 = vunpack.c.h.s8.bf16 %v5922
        %v8950 = vunpack.c.h.s8.bf16 %v5923
        %v8951 = vunpack.c.h.s8.bf16 %v5924
        %v8952 = vunpack.c.h.s8.bf16 %v5925
        %v8953 = vunpack.c.l.s8.bf16 %v5926
        %v8954 = vunpack.c.l.s8.bf16 %v5927
        %v8955 = vunpack.c.l.s8.bf16 %v5928
        %v8956 = vunpack.c.l.s8.bf16 %v5929
        %v8957 = vunpack.c.h.s8.bf16 %v5926
        %v8958 = vunpack.c.h.s8.bf16 %v5927
        %v8959 = vunpack.c.h.s8.bf16 %v5928
        %v8960 = vunpack.c.h.s8.bf16 %v5929
        %v8961 = vunpack.c.l.s8.bf16 %v5930
        %v8962 = vunpack.c.l.s8.bf16 %v5931
        %v8963 = vunpack.c.l.s8.bf16 %v5932
        %v8964 = vunpack.c.l.s8.bf16 %v5933
        %v8965 = vunpack.c.h.s8.bf16 %v5930
        %v8966 = vunpack.c.h.s8.bf16 %v5931
        %v8967 = vunpack.c.h.s8.bf16 %v5932
        %v8968 = vunpack.c.h.s8.bf16 %v5933
        %v8969 = vunpack.c.l.s8.bf16 %v5934
        %v8970 = vunpack.c.l.s8.bf16 %v5935
        %v8971 = vunpack.c.l.s8.bf16 %v5936
        %v8972 = vunpack.c.l.s8.bf16 %v5937
        %v8973 = vunpack.c.h.s8.bf16 %v5934
        %v8974 = vunpack.c.h.s8.bf16 %v5935
        %v8975 = vunpack.c.h.s8.bf16 %v5936
        %v8976 = vunpack.c.h.s8.bf16 %v5937
        %v8977 = vunpack.c.l.s8.bf16 %v5938
        %v8978 = vunpack.c.l.s8.bf16 %v5939
        %v8979 = vunpack.c.l.s8.bf16 %v5940
        %v8980 = vunpack.c.l.s8.bf16 %v5941
        %v8981 = vunpack.c.h.s8.bf16 %v5938
        %v8982 = vunpack.c.h.s8.bf16 %v5939
        %v8983 = vunpack.c.h.s8.bf16 %v5940
        %v8984 = vunpack.c.h.s8.bf16 %v5941
        %v8985 = vunpack.c.l.s8.bf16 %v5942
        %v8986 = vunpack.c.l.s8.bf16 %v5943
        %v8987 = vunpack.c.l.s8.bf16 %v5944
        %v8988 = vunpack.c.l.s8.bf16 %v5945
        %v8989 = vunpack.c.h.s8.bf16 %v5942
        %v8990 = vunpack.c.h.s8.bf16 %v5943
        %v8991 = vunpack.c.h.s8.bf16 %v5944
        %v8992 = vunpack.c.h.s8.bf16 %v5945
        %v8993 = vunpack.c.l.s8.bf16 %v5946
        %v8994 = vunpack.c.l.s8.bf16 %v5947
        %v8995 = vunpack.c.l.s8.bf16 %v5948
        %v8996 = vunpack.c.l.s8.bf16 %v5949
        %v8997 = vunpack.c.h.s8.bf16 %v5946
        %v8998 = vunpack.c.h.s8.bf16 %v5947
        %v8999 = vunpack.c.h.s8.bf16 %v5948
        %v9000 = vunpack.c.h.s8.bf16 %v5949
        %v9001 = vunpack.c.l.s8.bf16 %v5950
        %v9002 = vunpack.c.l.s8.bf16 %v5951
        %v9003 = vunpack.c.l.s8.bf16 %v5952
        %v9004 = vunpack.c.l.s8.bf16 %v5953
        %v9005 = vunpack.c.h.s8.bf16 %v5950
        %v9006 = vunpack.c.h.s8.bf16 %v5951
        %v9007 = vunpack.c.h.s8.bf16 %v5952
        %v9008 = vunpack.c.h.s8.bf16 %v5953
        %v9009 = vunpack.c.l.s8.bf16 %v5954
        %v9010 = vunpack.c.l.s8.bf16 %v5955
        %v9011 = vunpack.c.l.s8.bf16 %v5956
        %v9012 = vunpack.c.l.s8.bf16 %v5957
        %v9013 = vunpack.c.h.s8.bf16 %v5954
        %v9014 = vunpack.c.h.s8.bf16 %v5955
        %v9015 = vunpack.c.h.s8.bf16 %v5956
        %v9016 = vunpack.c.h.s8.bf16 %v5957
        %v9017 = vunpack.c.l.s8.bf16 %v5958
        %v9018 = vunpack.c.l.s8.bf16 %v5959
        %v9019 = vunpack.c.l.s8.bf16 %v5960
        %v9020 = vunpack.c.l.s8.bf16 %v5961
        %v9021 = vunpack.c.h.s8.bf16 %v5958
        %v9022 = vunpack.c.h.s8.bf16 %v5959
        %v9023 = vunpack.c.h.s8.bf16 %v5960
        %v9024 = vunpack.c.h.s8.bf16 %v5961
        %v9025 = vunpack.c.l.s8.bf16 %v5962
        %v9026 = vunpack.c.l.s8.bf16 %v5963
        %v9027 = vunpack.c.l.s8.bf16 %v5964
        %v9028 = vunpack.c.l.s8.bf16 %v5965
        %v9029 = vunpack.c.h.s8.bf16 %v5962
        %v9030 = vunpack.c.h.s8.bf16 %v5963
        %v9031 = vunpack.c.h.s8.bf16 %v5964
        %v9032 = vunpack.c.h.s8.bf16 %v5965
        %v9033 = vunpack.c.l.s8.bf16 %v5966
        %v9034 = vunpack.c.l.s8.bf16 %v5967
        %v9035 = vunpack.c.l.s8.bf16 %v5968
        %v9036 = vunpack.c.l.s8.bf16 %v5969
        %v9037 = vunpack.c.h.s8.bf16 %v5966
        %v9038 = vunpack.c.h.s8.bf16 %v5967
        %v9039 = vunpack.c.h.s8.bf16 %v5968
        %v9040 = vunpack.c.h.s8.bf16 %v5969
        %v9041 = vunpack.c.l.s8.bf16 %v5975
        %v9042 = vunpack.c.l.s8.bf16 %v5976
        %v9043 = vunpack.c.l.s8.bf16 %v5977
        %v9044 = vunpack.c.l.s8.bf16 %v5978
        %v9045 = vunpack.c.h.s8.bf16 %v5975
        %v9046 = vunpack.c.h.s8.bf16 %v5976
        %v9047 = vunpack.c.h.s8.bf16 %v5977
        %v9048 = vunpack.c.h.s8.bf16 %v5978
        %v9049 = vunpack.c.l.s8.bf16 %v5979
        %v9050 = vunpack.c.l.s8.bf16 %v5980
        %v9051 = vunpack.c.l.s8.bf16 %v5981
        %v9052 = vunpack.c.l.s8.bf16 %v5982
        %v9053 = vunpack.c.h.s8.bf16 %v5979
        %v9054 = vunpack.c.h.s8.bf16 %v5980
        %v9055 = vunpack.c.h.s8.bf16 %v5981
        %v9056 = vunpack.c.h.s8.bf16 %v5982
        %v9057 = vunpack.c.l.s8.bf16 %v5983
        %v9058 = vunpack.c.l.s8.bf16 %v5984
        %v9059 = vunpack.c.l.s8.bf16 %v5985
        %v9060 = vunpack.c.l.s8.bf16 %v5986
        %v9061 = vunpack.c.h.s8.bf16 %v5983
        %v9062 = vunpack.c.h.s8.bf16 %v5984
        %v9063 = vunpack.c.h.s8.bf16 %v5985
        %v9064 = vunpack.c.h.s8.bf16 %v5986
        %v9065 = vunpack.c.l.s8.bf16 %v5987
        %v9066 = vunpack.c.l.s8.bf16 %v5988
        %v9067 = vunpack.c.l.s8.bf16 %v5989
        %v9068 = vunpack.c.l.s8.bf16 %v5990
        %v9069 = vunpack.c.h.s8.bf16 %v5987
        %v9070 = vunpack.c.h.s8.bf16 %v5988
        %v9071 = vunpack.c.h.s8.bf16 %v5989
        %v9072 = vunpack.c.h.s8.bf16 %v5990
        %v9073 = vunpack.c.l.s8.bf16 %v5991
        %v9074 = vunpack.c.l.s8.bf16 %v5992
        %v9075 = vunpack.c.l.s8.bf16 %v5993
        %v9076 = vunpack.c.l.s8.bf16 %v5994
        %v9077 = vunpack.c.h.s8.bf16 %v5991
        %v9078 = vunpack.c.h.s8.bf16 %v5992
        %v9079 = vunpack.c.h.s8.bf16 %v5993
        %v9080 = vunpack.c.h.s8.bf16 %v5994
        %v9081 = vunpack.c.l.s8.bf16 %v5995
        %v9082 = vunpack.c.l.s8.bf16 %v5996
        %v9083 = vunpack.c.l.s8.bf16 %v5997
        %v9084 = vunpack.c.l.s8.bf16 %v5998
        %v9085 = vunpack.c.h.s8.bf16 %v5995
        %v9086 = vunpack.c.h.s8.bf16 %v5996
        %v9087 = vunpack.c.h.s8.bf16 %v5997
        %v9088 = vunpack.c.h.s8.bf16 %v5998
        %v9089 = vunpack.c.l.s8.bf16 %v5999
        %v9090 = vunpack.c.l.s8.bf16 %v6000
        %v9091 = vunpack.c.l.s8.bf16 %v6001
        %v9092 = vunpack.c.l.s8.bf16 %v6002
        %v9093 = vunpack.c.h.s8.bf16 %v5999
        %v9094 = vunpack.c.h.s8.bf16 %v6000
        %v9095 = vunpack.c.h.s8.bf16 %v6001
        %v9096 = vunpack.c.h.s8.bf16 %v6002
        %v9097 = vunpack.c.l.s8.bf16 %v6003
        %v9098 = vunpack.c.l.s8.bf16 %v6004
        %v9099 = vunpack.c.l.s8.bf16 %v6005
        %v9100 = vunpack.c.l.s8.bf16 %v6006
        %v9101 = vunpack.c.h.s8.bf16 %v6003
        %v9102 = vunpack.c.h.s8.bf16 %v6004
        %v9103 = vunpack.c.h.s8.bf16 %v6005
        %v9104 = vunpack.c.h.s8.bf16 %v6006
        %v9105 = vunpack.c.l.s8.bf16 %v6007
        %v9106 = vunpack.c.l.s8.bf16 %v6008
        %v9107 = vunpack.c.l.s8.bf16 %v6009
        %v9108 = vunpack.c.l.s8.bf16 %v6010
        %v9109 = vunpack.c.h.s8.bf16 %v6007
        %v9110 = vunpack.c.h.s8.bf16 %v6008
        %v9111 = vunpack.c.h.s8.bf16 %v6009
        %v9112 = vunpack.c.h.s8.bf16 %v6010
        %v9113 = vunpack.c.l.s8.bf16 %v6011
        %v9114 = vunpack.c.l.s8.bf16 %v6012
        %v9115 = vunpack.c.l.s8.bf16 %v6013
        %v9116 = vunpack.c.l.s8.bf16 %v6014
        %v9117 = vunpack.c.h.s8.bf16 %v6011
        %v9118 = vunpack.c.h.s8.bf16 %v6012
        %v9119 = vunpack.c.h.s8.bf16 %v6013
        %v9120 = vunpack.c.h.s8.bf16 %v6014
        %v9121 = vunpack.c.l.s8.bf16 %v6015
        %v9122 = vunpack.c.l.s8.bf16 %v6016
        %v9123 = vunpack.c.l.s8.bf16 %v6017
        %v9124 = vunpack.c.l.s8.bf16 %v6018
        %v9125 = vunpack.c.h.s8.bf16 %v6015
        %v9126 = vunpack.c.h.s8.bf16 %v6016
        %v9127 = vunpack.c.h.s8.bf16 %v6017
        %v9128 = vunpack.c.h.s8.bf16 %v6018
        %v9129 = vunpack.c.l.s8.bf16 %v6019
        %v9130 = vunpack.c.l.s8.bf16 %v6020
        %v9131 = vunpack.c.l.s8.bf16 %v6021
        %v9132 = vunpack.c.l.s8.bf16 %v6022
        %v9133 = vunpack.c.h.s8.bf16 %v6019
        %v9134 = vunpack.c.h.s8.bf16 %v6020
        %v9135 = vunpack.c.h.s8.bf16 %v6021
        %v9136 = vunpack.c.h.s8.bf16 %v6022
        %v9137 = vunpack.c.l.s8.bf16 %v6023
        %v9138 = vunpack.c.l.s8.bf16 %v6024
        %v9139 = vunpack.c.l.s8.bf16 %v6025
        %v9140 = vunpack.c.l.s8.bf16 %v6026
        %v9141 = vunpack.c.h.s8.bf16 %v6023
        %v9142 = vunpack.c.h.s8.bf16 %v6024
        %v9143 = vunpack.c.h.s8.bf16 %v6025
        %v9144 = vunpack.c.h.s8.bf16 %v6026
        %v9145 = vunpack.c.l.s8.bf16 %v6027
        %v9146 = vunpack.c.l.s8.bf16 %v6028
        %v9147 = vunpack.c.l.s8.bf16 %v6029
        %v9148 = vunpack.c.l.s8.bf16 %v6030
        %v9149 = vunpack.c.h.s8.bf16 %v6027
        %v9150 = vunpack.c.h.s8.bf16 %v6028
        %v9151 = vunpack.c.h.s8.bf16 %v6029
        %v9152 = vunpack.c.h.s8.bf16 %v6030
        %v9153 = vunpack.c.l.s8.bf16 %v6031
        %v9154 = vunpack.c.l.s8.bf16 %v6032
        %v9155 = vunpack.c.l.s8.bf16 %v6033
        %v9156 = vunpack.c.l.s8.bf16 %v6034
        %v9157 = vunpack.c.h.s8.bf16 %v6031
        %v9158 = vunpack.c.h.s8.bf16 %v6032
        %v9159 = vunpack.c.h.s8.bf16 %v6033
        %v9160 = vunpack.c.h.s8.bf16 %v6034
        %v9161 = vunpack.c.l.s8.bf16 %v6035
        %v9162 = vunpack.c.l.s8.bf16 %v6036
        %v9163 = vunpack.c.l.s8.bf16 %v6037
        %v9164 = vunpack.c.l.s8.bf16 %v6038
        %v9165 = vunpack.c.h.s8.bf16 %v6035
        %v9166 = vunpack.c.h.s8.bf16 %v6036
        %v9167 = vunpack.c.h.s8.bf16 %v6037
        %v9168 = vunpack.c.h.s8.bf16 %v6038
        %v9169 = vunpack.c.l.s8.bf16 %v6039
        %v9170 = vunpack.c.l.s8.bf16 %v6040
        %v9171 = vunpack.c.l.s8.bf16 %v6041
        %v9172 = vunpack.c.l.s8.bf16 %v6042
        %v9173 = vunpack.c.h.s8.bf16 %v6039
        %v9174 = vunpack.c.h.s8.bf16 %v6040
        %v9175 = vunpack.c.h.s8.bf16 %v6041
        %v9176 = vunpack.c.h.s8.bf16 %v6042
        %v9177 = vunpack.c.l.s8.bf16 %v6043
        %v9178 = vunpack.c.l.s8.bf16 %v6044
        %v9179 = vunpack.c.l.s8.bf16 %v6045
        %v9180 = vunpack.c.l.s8.bf16 %v6046
        %v9181 = vunpack.c.h.s8.bf16 %v6043
        %v9182 = vunpack.c.h.s8.bf16 %v6044
        %v9183 = vunpack.c.h.s8.bf16 %v6045
        %v9184 = vunpack.c.h.s8.bf16 %v6046
        %v9185 = vunpack.c.l.s8.bf16 %v6047
        %v9186 = vunpack.c.l.s8.bf16 %v6048
        %v9187 = vunpack.c.l.s8.bf16 %v6049
        %v9188 = vunpack.c.l.s8.bf16 %v6050
        %v9189 = vunpack.c.h.s8.bf16 %v6047
        %v9190 = vunpack.c.h.s8.bf16 %v6048
        %v9191 = vunpack.c.h.s8.bf16 %v6049
        %v9192 = vunpack.c.h.s8.bf16 %v6050
        %v9193 = vunpack.c.l.s8.bf16 %v6051
        %v9194 = vunpack.c.l.s8.bf16 %v6052
        %v9195 = vunpack.c.l.s8.bf16 %v6053
        %v9196 = vunpack.c.l.s8.bf16 %v6054
        %v9197 = vunpack.c.h.s8.bf16 %v6051
        %v9198 = vunpack.c.h.s8.bf16 %v6052
        %v9199 = vunpack.c.h.s8.bf16 %v6053
        %v9200 = vunpack.c.h.s8.bf16 %v6054
        %v9201 = vunpack.c.l.s8.bf16 %v6055
        %v9202 = vunpack.c.l.s8.bf16 %v6056
        %v9203 = vunpack.c.l.s8.bf16 %v6057
        %v9204 = vunpack.c.l.s8.bf16 %v6058
        %v9205 = vunpack.c.h.s8.bf16 %v6055
        %v9206 = vunpack.c.h.s8.bf16 %v6056
        %v9207 = vunpack.c.h.s8.bf16 %v6057
        %v9208 = vunpack.c.h.s8.bf16 %v6058
        %v9209 = vunpack.c.l.s8.bf16 %v6059
        %v9210 = vunpack.c.l.s8.bf16 %v6060
        %v9211 = vunpack.c.l.s8.bf16 %v6061
        %v9212 = vunpack.c.l.s8.bf16 %v6062
        %v9213 = vunpack.c.h.s8.bf16 %v6059
        %v9214 = vunpack.c.h.s8.bf16 %v6060
        %v9215 = vunpack.c.h.s8.bf16 %v6061
        %v9216 = vunpack.c.h.s8.bf16 %v6062
        %v9217 = vunpack.c.l.s8.bf16 %v6063
        %v9218 = vunpack.c.l.s8.bf16 %v6064
        %v9219 = vunpack.c.l.s8.bf16 %v6065
        %v9220 = vunpack.c.l.s8.bf16 %v6066
        %v9221 = vunpack.c.h.s8.bf16 %v6063
        %v9222 = vunpack.c.h.s8.bf16 %v6064
        %v9223 = vunpack.c.h.s8.bf16 %v6065
        %v9224 = vunpack.c.h.s8.bf16 %v6066
        %v9225 = vunpack.c.l.s8.bf16 %v6067
        %v9226 = vunpack.c.l.s8.bf16 %v6068
        %v9227 = vunpack.c.l.s8.bf16 %v6069
        %v9228 = vunpack.c.l.s8.bf16 %v6070
        %v9229 = vunpack.c.h.s8.bf16 %v6067
        %v9230 = vunpack.c.h.s8.bf16 %v6068
        %v9231 = vunpack.c.h.s8.bf16 %v6069
        %v9232 = vunpack.c.h.s8.bf16 %v6070
        %v9233 = vunpack.c.l.s8.bf16 %v6071
        %v9234 = vunpack.c.l.s8.bf16 %v6072
        %v9235 = vunpack.c.l.s8.bf16 %v6073
        %v9236 = vunpack.c.l.s8.bf16 %v6074
        %v9237 = vunpack.c.h.s8.bf16 %v6071
        %v9238 = vunpack.c.h.s8.bf16 %v6072
        %v9239 = vunpack.c.h.s8.bf16 %v6073
        %v9240 = vunpack.c.h.s8.bf16 %v6074
        %v9241 = vunpack.c.l.s8.bf16 %v6075
        %v9242 = vunpack.c.l.s8.bf16 %v6076
        %v9243 = vunpack.c.l.s8.bf16 %v6077
        %v9244 = vunpack.c.l.s8.bf16 %v6078
        %v9245 = vunpack.c.h.s8.bf16 %v6075
        %v9246 = vunpack.c.h.s8.bf16 %v6076
        %v9247 = vunpack.c.h.s8.bf16 %v6077
        %v9248 = vunpack.c.h.s8.bf16 %v6078
        %v9249 = vunpack.c.l.s8.bf16 %v6079
        %v9250 = vunpack.c.l.s8.bf16 %v6080
        %v9251 = vunpack.c.l.s8.bf16 %v6081
        %v9252 = vunpack.c.l.s8.bf16 %v6082
        %v9253 = vunpack.c.h.s8.bf16 %v6079
        %v9254 = vunpack.c.h.s8.bf16 %v6080
        %v9255 = vunpack.c.h.s8.bf16 %v6081
        %v9256 = vunpack.c.h.s8.bf16 %v6082
        %v9257 = vunpack.c.l.s8.bf16 %v6083
        %v9258 = vunpack.c.l.s8.bf16 %v6084
        %v9259 = vunpack.c.l.s8.bf16 %v6085
        %v9260 = vunpack.c.l.s8.bf16 %v6086
        %v9261 = vunpack.c.h.s8.bf16 %v6083
        %v9262 = vunpack.c.h.s8.bf16 %v6084
        %v9263 = vunpack.c.h.s8.bf16 %v6085
        %v9264 = vunpack.c.h.s8.bf16 %v6086
        %v9265 = vunpack.c.l.s8.bf16 %v6087
        %v9266 = vunpack.c.l.s8.bf16 %v6088
        %v9267 = vunpack.c.l.s8.bf16 %v6089
        %v9268 = vunpack.c.l.s8.bf16 %v6090
        %v9269 = vunpack.c.h.s8.bf16 %v6087
        %v9270 = vunpack.c.h.s8.bf16 %v6088
        %v9271 = vunpack.c.h.s8.bf16 %v6089
        %v9272 = vunpack.c.h.s8.bf16 %v6090
        %v9273 = vunpack.c.l.s8.bf16 %v6091
        %v9274 = vunpack.c.l.s8.bf16 %v6092
        %v9275 = vunpack.c.l.s8.bf16 %v6093
        %v9276 = vunpack.c.l.s8.bf16 %v6094
        %v9277 = vunpack.c.h.s8.bf16 %v6091
        %v9278 = vunpack.c.h.s8.bf16 %v6092
        %v9279 = vunpack.c.h.s8.bf16 %v6093
        %v9280 = vunpack.c.h.s8.bf16 %v6094
        %v9281 = vunpack.c.l.s8.bf16 %v6095
        %v9282 = vunpack.c.l.s8.bf16 %v6096
        %v9283 = vunpack.c.l.s8.bf16 %v6097
        %v9284 = vunpack.c.l.s8.bf16 %v6098
        %v9285 = vunpack.c.h.s8.bf16 %v6095
        %v9286 = vunpack.c.h.s8.bf16 %v6096
        %v9287 = vunpack.c.h.s8.bf16 %v6097
        %v9288 = vunpack.c.h.s8.bf16 %v6098
        %v9289 = vunpack.c.l.s8.bf16 %v6099
        %v9290 = vunpack.c.l.s8.bf16 %v6100
        %v9291 = vunpack.c.l.s8.bf16 %v6101
        %v9292 = vunpack.c.l.s8.bf16 %v6102
        %v9293 = vunpack.c.h.s8.bf16 %v6099
        %v9294 = vunpack.c.h.s8.bf16 %v6100
        %v9295 = vunpack.c.h.s8.bf16 %v6101
        %v9296 = vunpack.c.h.s8.bf16 %v6102
        %9297 = vmatprep.subr.bf16.mxu0 %v8786
        %9298 = vmatpush1.bf16.msra.mxu0 %v8785
        %9299 = vmatprep.subr.bf16.mxu0 %v8790
        %9300 = vmatpush1.bf16.msra.mxu0 %v8789
        %9301 = vmatprep.subr.bf16.mxu0 %v8794
        %9302 = vmatpush1.bf16.msra.mxu0 %v8793
        %9303 = vmatprep.subr.bf16.mxu0 %v8798
        %9304 = vmatpush1.bf16.msra.mxu0 %v8797
        %9305 = vmatprep.subr.bf16.mxu0 %v8802
        %9306 = vmatpush1.bf16.msra.mxu0 %v8801
        %9307 = vmatprep.subr.bf16.mxu0 %v8806
        %9308 = vmatpush1.bf16.msra.mxu0 %v8805
        %9309 = vmatprep.subr.bf16.mxu0 %v8810
        %9310 = vmatpush1.bf16.msra.mxu0 %v8809
        %9311 = vmatprep.subr.bf16.mxu0 %v8814
        %9312 = vmatpush1.bf16.msra.mxu0 %v8813
        %9313 = vmatprep.subr.bf16.mxu0 %v8818
        %9314 = vmatpush1.bf16.msra.mxu0 %v8817
        %9315 = vmatprep.subr.bf16.mxu0 %v8822
        %9316 = vmatpush1.bf16.msra.mxu0 %v8821
        %9317 = vmatprep.subr.bf16.mxu0 %v8826
        %9318 = vmatpush1.bf16.msra.mxu0 %v8825
        %9319 = vmatprep.subr.bf16.mxu0 %v8830
        %9320 = vmatpush1.bf16.msra.mxu0 %v8829
        %9321 = vmatprep.subr.bf16.mxu0 %v8834
        %9322 = vmatpush1.bf16.msra.mxu0 %v8833
        %9323 = vmatprep.subr.bf16.mxu0 %v8838
        %9324 = vmatpush1.bf16.msra.mxu0 %v8837
        %9325 = vmatprep.subr.bf16.mxu0 %v8842
        %9326 = vmatpush1.bf16.msra.mxu0 %v8841
        %9327 = vmatprep.subr.bf16.mxu0 %v8846
        %9328 = vmatpush1.bf16.msra.mxu0 %v8845
        %9329 = vmatprep.mubr.bf16.mxu0 %v8778
        %9330 = vmatmul.mubr.bf16.gmra.mrb[0].mxu0 %v8777
        %v9331 = vpop.f32.mrb[0].mxu0
        %v9332 = vadd.f32 0.0, %v9331
        %v9333 = vpop.f32.mrb[0].mxu0
        %v9334 = vadd.f32 0.0, %v9333
        %v9335 = vpop.f32.mrb[0].mxu0
        %v9336 = vpop.f32.mrb[0].mxu0
        %9337 = vdwg.mxu0
        %9338 = vmatprep.subr.bf16.mxu0 %v8850
        %9339 = vmatpush1.bf16.msra.mxu0 %v8849
        %9340 = vmatprep.subr.bf16.mxu0 %v8854
        %9341 = vmatpush1.bf16.msra.mxu0 %v8853
        %9342 = vmatprep.subr.bf16.mxu0 %v8858
        %9343 = vmatpush1.bf16.msra.mxu0 %v8857
        %9344 = vmatprep.subr.bf16.mxu0 %v8862
        %9345 = vmatpush1.bf16.msra.mxu0 %v8861
        %9346 = vmatprep.subr.bf16.mxu0 %v8866
        %9347 = vmatpush1.bf16.msra.mxu0 %v8865
        %9348 = vmatprep.subr.bf16.mxu0 %v8870
        %9349 = vmatpush1.bf16.msra.mxu0 %v8869
        %9350 = vmatprep.subr.bf16.mxu0 %v8874
        %9351 = vmatpush1.bf16.msra.mxu0 %v8873
        %9352 = vmatprep.subr.bf16.mxu0 %v8878
        %9353 = vmatpush1.bf16.msra.mxu0 %v8877
        %9354 = vmatprep.subr.bf16.mxu0 %v8882
        %9355 = vmatpush1.bf16.msra.mxu0 %v8881
        %9356 = vmatprep.subr.bf16.mxu0 %v8886
        %9357 = vmatpush1.bf16.msra.mxu0 %v8885
        %9358 = vmatprep.subr.bf16.mxu0 %v8890
        %9359 = vmatpush1.bf16.msra.mxu0 %v8889
        %9360 = vmatprep.subr.bf16.mxu0 %v8894
        %9361 = vmatpush1.bf16.msra.mxu0 %v8893
        %9362 = vmatprep.subr.bf16.mxu0 %v8898
        %9363 = vmatpush1.bf16.msra.mxu0 %v8897
        %9364 = vmatprep.subr.bf16.mxu0 %v8902
        %9365 = vmatpush1.bf16.msra.mxu0 %v8901
        %9366 = vmatprep.subr.bf16.mxu0 %v8906
        %9367 = vmatpush1.bf16.msra.mxu0 %v8905
        %9368 = vmatprep.subr.bf16.mxu0 %v8910
        %9369 = vmatpush1.bf16.msra.mxu0 %v8909
        %9370 = vmatprep.mubr.bf16.mxu0 %v8780
        %9371 = vmatmul.mubr.bf16.gmra.mrb[0].mxu0 %v8779
        %v9372 = vpop.f32.mrb[0].mxu0
        %v9373 = vadd.f32 %v9332, %v9372
        %v9374 = vpop.f32.mrb[0].mxu0
        %v9375 = vadd.f32 %v9334, %v9374
        %v9376 = vpop.f32.mrb[0].mxu0
        %v9377 = vpop.f32.mrb[0].mxu0
        %9378 = vdwg.mxu0
        %9379 = vmatprep.subr.bf16.mxu0 %v8914
        %9380 = vmatpush1.bf16.msra.mxu0 %v8913
        %9381 = vmatprep.subr.bf16.mxu0 %v8918
        %9382 = vmatpush1.bf16.msra.mxu0 %v8917
        %9383 = vmatprep.subr.bf16.mxu0 %v8922
        %9384 = vmatpush1.bf16.msra.mxu0 %v8921
        %9385 = vmatprep.subr.bf16.mxu0 %v8926
        %9386 = vmatpush1.bf16.msra.mxu0 %v8925
        %9387 = vmatprep.subr.bf16.mxu0 %v8930
        %9388 = vmatpush1.bf16.msra.mxu0 %v8929
        %9389 = vmatprep.subr.bf16.mxu0 %v8934
        %9390 = vmatpush1.bf16.msra.mxu0 %v8933
        %9391 = vmatprep.subr.bf16.mxu0 %v8938
        %9392 = vmatpush1.bf16.msra.mxu0 %v8937
        %9393 = vmatprep.subr.bf16.mxu0 %v8942
        %9394 = vmatpush1.bf16.msra.mxu0 %v8941
        %9395 = vmatprep.subr.bf16.mxu0 %v8946
        %9396 = vmatpush1.bf16.msra.mxu0 %v8945
        %9397 = vmatprep.subr.bf16.mxu0 %v8950
        %9398 = vmatpush1.bf16.msra.mxu0 %v8949
        %9399 = vmatprep.subr.bf16.mxu0 %v8954
        %9400 = vmatpush1.bf16.msra.mxu0 %v8953
        %9401 = vmatprep.subr.bf16.mxu0 %v8958
        %9402 = vmatpush1.bf16.msra.mxu0 %v8957
        %9403 = vmatprep.subr.bf16.mxu0 %v8962
        %9404 = vmatpush1.bf16.msra.mxu0 %v8961
        %9405 = vmatprep.subr.bf16.mxu0 %v8966
        %9406 = vmatpush1.bf16.msra.mxu0 %v8965
        %9407 = vmatprep.subr.bf16.mxu0 %v8970
        %9408 = vmatpush1.bf16.msra.mxu0 %v8969
        %9409 = vmatprep.subr.bf16.mxu0 %v8974
        %9410 = vmatpush1.bf16.msra.mxu0 %v8973
        %9411 = vmatprep.mubr.bf16.mxu0 %v8782
        %9412 = vmatmul.mubr.bf16.gmra.mrb[0].mxu0 %v8781
        %v9413 = vpop.f32.mrb[0].mxu0
        %v9414 = vadd.f32 %v9373, %v9413
        %v9415 = vpop.f32.mrb[0].mxu0
        %v9416 = vadd.f32 %v9375, %v9415
        %v9417 = vpop.f32.mrb[0].mxu0
        %v9418 = vpop.f32.mrb[0].mxu0
        %9419 = vdwg.mxu0
        %9420 = vmatprep.subr.bf16.mxu0 %v8978
        %9421 = vmatpush1.bf16.msra.mxu0 %v8977
        %9422 = vmatprep.subr.bf16.mxu0 %v8982
        %9423 = vmatpush1.bf16.msra.mxu0 %v8981
        %9424 = vmatprep.subr.bf16.mxu0 %v8986
        %9425 = vmatpush1.bf16.msra.mxu0 %v8985
        %9426 = vmatprep.subr.bf16.mxu0 %v8990
        %9427 = vmatpush1.bf16.msra.mxu0 %v8989
        %9428 = vmatprep.subr.bf16.mxu0 %v8994
        %9429 = vmatpush1.bf16.msra.mxu0 %v8993
        %9430 = vmatprep.subr.bf16.mxu0 %v8998
        %9431 = vmatpush1.bf16.msra.mxu0 %v8997
        %9432 = vmatprep.subr.bf16.mxu0 %v9002
        %9433 = vmatpush1.bf16.msra.mxu0 %v9001
        %9434 = vmatprep.subr.bf16.mxu0 %v9006
        %9435 = vmatpush1.bf16.msra.mxu0 %v9005
        %9436 = vmatprep.subr.bf16.mxu0 %v9010
        %9437 = vmatpush1.bf16.msra.mxu0 %v9009
        %9438 = vmatprep.subr.bf16.mxu0 %v9014
        %9439 = vmatpush1.bf16.msra.mxu0 %v9013
        %9440 = vmatprep.subr.bf16.mxu0 %v9018
        %9441 = vmatpush1.bf16.msra.mxu0 %v9017
        %9442 = vmatprep.subr.bf16.mxu0 %v9022
        %9443 = vmatpush1.bf16.msra.mxu0 %v9021
        %9444 = vmatprep.subr.bf16.mxu0 %v9026
        %9445 = vmatpush1.bf16.msra.mxu0 %v9025
        %9446 = vmatprep.subr.bf16.mxu0 %v9030
        %9447 = vmatpush1.bf16.msra.mxu0 %v9029
        %9448 = vmatprep.subr.bf16.mxu0 %v9034
        %9449 = vmatpush1.bf16.msra.mxu0 %v9033
        %9450 = vmatprep.subr.bf16.mxu0 %v9038
        %9451 = vmatpush1.bf16.msra.mxu0 %v9037
        %9452 = vmatprep.mubr.bf16.mxu0 %v8784
        %9453 = vmatmul.mubr.bf16.gmra.mrb[0].mxu0 %v8783
        %v9454 = vpop.f32.mrb[0].mxu0
        %v9455 = vadd.f32 %v9414, %v9454
        %v9456 = vpop.f32.mrb[0].mxu0
        %v9457 = vadd.f32 %v9416, %v9456
        %v9458 = vpop.f32.mrb[0].mxu0
        %v9459 = vpop.f32.mrb[0].mxu0
        %9460 = vdwg.mxu0
        %9461 = vmatprep.subr.bf16.mxu0 %v8788
        %9462 = vmatpush1.bf16.msra.mxu0 %v8787
        %9463 = vmatprep.subr.bf16.mxu0 %v8792
        %9464 = vmatpush1.bf16.msra.mxu0 %v8791
        %9465 = vmatprep.subr.bf16.mxu0 %v8796
        %9466 = vmatpush1.bf16.msra.mxu0 %v8795
        %9467 = vmatprep.subr.bf16.mxu0 %v8800
        %9468 = vmatpush1.bf16.msra.mxu0 %v8799
        %9469 = vmatprep.subr.bf16.mxu0 %v8804
        %9470 = vmatpush1.bf16.msra.mxu0 %v8803
        %9471 = vmatprep.subr.bf16.mxu0 %v8808
        %9472 = vmatpush1.bf16.msra.mxu0 %v8807
        %9473 = vmatprep.subr.bf16.mxu0 %v8812
        %9474 = vmatpush1.bf16.msra.mxu0 %v8811
        %9475 = vmatprep.subr.bf16.mxu0 %v8816
        %9476 = vmatpush1.bf16.msra.mxu0 %v8815
        %9477 = vmatprep.subr.bf16.mxu0 %v8820
        %9478 = vmatpush1.bf16.msra.mxu0 %v8819
        %9479 = vmatprep.subr.bf16.mxu0 %v8824
        %9480 = vmatpush1.bf16.msra.mxu0 %v8823
        %9481 = vmatprep.subr.bf16.mxu0 %v8828
        %9482 = vmatpush1.bf16.msra.mxu0 %v8827
        %9483 = vmatprep.subr.bf16.mxu0 %v8832
        %9484 = vmatpush1.bf16.msra.mxu0 %v8831
        %9485 = vmatprep.subr.bf16.mxu0 %v8836
        %9486 = vmatpush1.bf16.msra.mxu0 %v8835
        %9487 = vmatprep.subr.bf16.mxu0 %v8840
        %9488 = vmatpush1.bf16.msra.mxu0 %v8839
        %9489 = vmatprep.subr.bf16.mxu0 %v8844
        %9490 = vmatpush1.bf16.msra.mxu0 %v8843
        %9491 = vmatprep.subr.bf16.mxu0 %v8848
        %9492 = vmatpush1.bf16.msra.mxu0 %v8847
        %9493 = vmatprep.mubr.bf16.mxu0 %v8778
        %9494 = vmatmul.mubr.bf16.gmra.mrb[0].mxu0 %v8777
        %v9495 = vpop.f32.mrb[0].mxu0
        %v9496 = vadd.f32 0.0, %v9495
        %v9497 = vpop.f32.mrb[0].mxu0
        %v9498 = vadd.f32 0.0, %v9497
        %v9499 = vpop.f32.mrb[0].mxu0
        %v9500 = vpop.f32.mrb[0].mxu0
        %9501 = vdwg.mxu0
        %9502 = vmatprep.subr.bf16.mxu0 %v8852
        %9503 = vmatpush1.bf16.msra.mxu0 %v8851
        %9504 = vmatprep.subr.bf16.mxu0 %v8856
        %9505 = vmatpush1.bf16.msra.mxu0 %v8855
        %9506 = vmatprep.subr.bf16.mxu0 %v8860
        %9507 = vmatpush1.bf16.msra.mxu0 %v8859
        %9508 = vmatprep.subr.bf16.mxu0 %v8864
        %9509 = vmatpush1.bf16.msra.mxu0 %v8863
        %9510 = vmatprep.subr.bf16.mxu0 %v8868
        %9511 = vmatpush1.bf16.msra.mxu0 %v8867
        %9512 = vmatprep.subr.bf16.mxu0 %v8872
        %9513 = vmatpush1.bf16.msra.mxu0 %v8871
        %9514 = vmatprep.subr.bf16.mxu0 %v8876
        %9515 = vmatpush1.bf16.msra.mxu0 %v8875
        %9516 = vmatprep.subr.bf16.mxu0 %v8880
        %9517 = vmatpush1.bf16.msra.mxu0 %v8879
        %9518 = vmatprep.subr.bf16.mxu0 %v8884
        %9519 = vmatpush1.bf16.msra.mxu0 %v8883
        %9520 = vmatprep.subr.bf16.mxu0 %v8888
        %9521 = vmatpush1.bf16.msra.mxu0 %v8887
        %9522 = vmatprep.subr.bf16.mxu0 %v8892
        %9523 = vmatpush1.bf16.msra.mxu0 %v8891
        %9524 = vmatprep.subr.bf16.mxu0 %v8896
        %9525 = vmatpush1.bf16.msra.mxu0 %v8895
        %9526 = vmatprep.subr.bf16.mxu0 %v8900
        %9527 = vmatpush1.bf16.msra.mxu0 %v8899
        %9528 = vmatprep.subr.bf16.mxu0 %v8904
        %9529 = vmatpush1.bf16.msra.mxu0 %v8903
        %9530 = vmatprep.subr.bf16.mxu0 %v8908
        %9531 = vmatpush1.bf16.msra.mxu0 %v8907
        %9532 = vmatprep.subr.bf16.mxu0 %v8912
        %9533 = vmatpush1.bf16.msra.mxu0 %v8911
        %9534 = vmatprep.mubr.bf16.mxu0 %v8780
        %9535 = vmatmul.mubr.bf16.gmra.mrb[0].mxu0 %v8779
        %v9536 = vpop.f32.mrb[0].mxu0
        %v9537 = vadd.f32 %v9496, %v9536
        %v9538 = vpop.f32.mrb[0].mxu0
        %v9539 = vadd.f32 %v9498, %v9538
        %v9540 = vpop.f32.mrb[0].mxu0
        %v9541 = vpop.f32.mrb[0].mxu0
        %9542 = vdwg.mxu0
        %9543 = vmatprep.subr.bf16.mxu0 %v8916
        %9544 = vmatpush1.bf16.msra.mxu0 %v8915
        %9545 = vmatprep.subr.bf16.mxu0 %v8920
        %9546 = vmatpush1.bf16.msra.mxu0 %v8919
        %9547 = vmatprep.subr.bf16.mxu0 %v8924
        %9548 = vmatpush1.bf16.msra.mxu0 %v8923
        %9549 = vmatprep.subr.bf16.mxu0 %v8928
        %9550 = vmatpush1.bf16.msra.mxu0 %v8927
        %9551 = vmatprep.subr.bf16.mxu0 %v8932
        %9552 = vmatpush1.bf16.msra.mxu0 %v8931
        %9553 = vmatprep.subr.bf16.mxu0 %v8936
        %9554 = vmatpush1.bf16.msra.mxu0 %v8935
        %9555 = vmatprep.subr.bf16.mxu0 %v8940
        %9556 = vmatpush1.bf16.msra.mxu0 %v8939
        %9557 = vmatprep.subr.bf16.mxu0 %v8944
        %9558 = vmatpush1.bf16.msra.mxu0 %v8943
        %9559 = vmatprep.subr.bf16.mxu0 %v8948
        %9560 = vmatpush1.bf16.msra.mxu0 %v8947
        %9561 = vmatprep.subr.bf16.mxu0 %v8952
        %9562 = vmatpush1.bf16.msra.mxu0 %v8951
        %9563 = vmatprep.subr.bf16.mxu0 %v8956
        %9564 = vmatpush1.bf16.msra.mxu0 %v8955
        %9565 = vmatprep.subr.bf16.mxu0 %v8960
        %9566 = vmatpush1.bf16.msra.mxu0 %v8959
        %9567 = vmatprep.subr.bf16.mxu0 %v8964
        %9568 = vmatpush1.bf16.msra.mxu0 %v8963
        %9569 = vmatprep.subr.bf16.mxu0 %v8968
        %9570 = vmatpush1.bf16.msra.mxu0 %v8967
        %9571 = vmatprep.subr.bf16.mxu0 %v8972
        %9572 = vmatpush1.bf16.msra.mxu0 %v8971
        %9573 = vmatprep.subr.bf16.mxu0 %v8976
        %9574 = vmatpush1.bf16.msra.mxu0 %v8975
        %9575 = vmatprep.mubr.bf16.mxu0 %v8782
        %9576 = vmatmul.mubr.bf16.gmra.mrb[0].mxu0 %v8781
        %v9577 = vpop.f32.mrb[0].mxu0
        %v9578 = vadd.f32 %v9537, %v9577
        %v9579 = vpop.f32.mrb[0].mxu0
        %v9580 = vadd.f32 %v9539, %v9579
        %v9581 = vpop.f32.mrb[0].mxu0
        %v9582 = vpop.f32.mrb[0].mxu0
        %9583 = vdwg.mxu0
        %9584 = vmatprep.subr.bf16.mxu0 %v8980
        %9585 = vmatpush1.bf16.msra.mxu0 %v8979
        %9586 = vmatprep.subr.bf16.mxu0 %v8984
        %9587 = vmatpush1.bf16.msra.mxu0 %v8983
        %9588 = vmatprep.subr.bf16.mxu0 %v8988
        %9589 = vmatpush1.bf16.msra.mxu0 %v8987
        %9590 = vmatprep.subr.bf16.mxu0 %v8992
        %9591 = vmatpush1.bf16.msra.mxu0 %v8991
        %9592 = vmatprep.subr.bf16.mxu0 %v8996
        %9593 = vmatpush1.bf16.msra.mxu0 %v8995
        %9594 = vmatprep.subr.bf16.mxu0 %v9000
        %9595 = vmatpush1.bf16.msra.mxu0 %v8999
        %9596 = vmatprep.subr.bf16.mxu0 %v9004
        %9597 = vmatpush1.bf16.msra.mxu0 %v9003
        %9598 = vmatprep.subr.bf16.mxu0 %v9008
        %9599 = vmatpush1.bf16.msra.mxu0 %v9007
        %9600 = vmatprep.subr.bf16.mxu0 %v9012
        %9601 = vmatpush1.bf16.msra.mxu0 %v9011
        %9602 = vmatprep.subr.bf16.mxu0 %v9016
        %9603 = vmatpush1.bf16.msra.mxu0 %v9015
        %9604 = vmatprep.subr.bf16.mxu0 %v9020
        %9605 = vmatpush1.bf16.msra.mxu0 %v9019
        %9606 = vmatprep.subr.bf16.mxu0 %v9024
        %9607 = vmatpush1.bf16.msra.mxu0 %v9023
        %9608 = vmatprep.subr.bf16.mxu0 %v9028
        %9609 = vmatpush1.bf16.msra.mxu0 %v9027
        %9610 = vmatprep.subr.bf16.mxu0 %v9032
        %9611 = vmatpush1.bf16.msra.mxu0 %v9031
        %9612 = vmatprep.subr.bf16.mxu0 %v9036
        %9613 = vmatpush1.bf16.msra.mxu0 %v9035
        %9614 = vmatprep.subr.bf16.mxu0 %v9040
        %9615 = vmatpush1.bf16.msra.mxu0 %v9039
        %9616 = vmatprep.mubr.bf16.mxu0 %v8784
        %9617 = vmatmul.mubr.bf16.gmra.mrb[0].mxu0 %v8783
        %v9618 = vpop.f32.mrb[0].mxu0
        %v9619 = vadd.f32 %v9578, %v9618
        %v9620 = vpop.f32.mrb[0].mxu0
        %v9621 = vadd.f32 %v9580, %v9620
        %v9622 = vpop.f32.mrb[0].mxu0
        %v9623 = vpop.f32.mrb[0].mxu0
        %9624 = vdwg.mxu0
        %v9626 = vlaneseq
        %v9627 = vshrl.u32 %v9626, 7
        %v9628 = vsub.s32 0, %v9627
        %v9629 = vrot.slane %v5971, %v9628
        %v9630 = vlaneseq
        %v9631 = vshrl.u32 %v9630, 7
        %v9632 = vsub.s32 1, %v9631
        %v9633 = vrot.slane %v5971, %v9632
        %v9634 = vlaneseq
        %v9635 = vshrl.u32 %v9634, 7
        %v9636 = vsub.s32 2, %v9635
        %v9637 = vrot.slane %v5971, %v9636
        %v9638 = vlaneseq
        %v9639 = vshrl.u32 %v9638, 7
        %v9640 = vsub.s32 3, %v9639
        %v9641 = vrot.slane %v5971, %v9640
        %v9646 = vmul.f32 %v9455, %v9629
        %v9647 = vmul.f32 %v9457, %v9633
        %v9648 = vmul.f32 %v9619, %v9637
        %v9649 = vmul.f32 %v9621, %v9641
        %v9651 = vlaneseq
        %v9652 = vshrl.u32 %v9651, 7
        %v9653 = vsub.s32 0, %v9652
        %v9654 = vrot.slane %v5973, %v9653
        %v9655 = vlaneseq
        %v9656 = vshrl.u32 %v9655, 7
        %v9657 = vsub.s32 1, %v9656
        %v9658 = vrot.slane %v5973, %v9657
        %v9659 = vlaneseq
        %v9660 = vshrl.u32 %v9659, 7
        %v9661 = vsub.s32 2, %v9660
        %v9662 = vrot.slane %v5973, %v9661
        %v9663 = vlaneseq
        %v9664 = vshrl.u32 %v9663, 7
        %v9665 = vsub.s32 3, %v9664
        %v9666 = vrot.slane %v5973, %v9665
        %v9671 = vadd.f32 %v9646, %v9654
        %v9672 = vadd.f32 %v9647, %v9658
        %v9673 = vadd.f32 %v9648, %v9662
        %v9674 = vadd.f32 %v9649, %v9666
        %v9675 = vtanh.pop %v9671
        %v9676 = vtanh.pop %v9672
        %v9677 = vtanh.pop %v9673
        %v9678 = vtanh.pop %v9674
        %9679 = vmatprep.subr.bf16.mxu0 %v9042
        %9680 = vmatpush1.bf16.msra.mxu0 %v9041
        %9681 = vmatprep.subr.bf16.mxu0 %v9046
        %9682 = vmatpush1.bf16.msra.mxu0 %v9045
        %9683 = vmatprep.subr.bf16.mxu0 %v9050
        %9684 = vmatpush1.bf16.msra.mxu0 %v9049
        %9685 = vmatprep.subr.bf16.mxu0 %v9054
        %9686 = vmatpush1.bf16.msra.mxu0 %v9053
        %9687 = vmatprep.subr.bf16.mxu0 %v9058
        %9688 = vmatpush1.bf16.msra.mxu0 %v9057
        %9689 = vmatprep.subr.bf16.mxu0 %v9062
        %9690 = vmatpush1.bf16.msra.mxu0 %v9061
        %9691 = vmatprep.subr.bf16.mxu0 %v9066
        %9692 = vmatpush1.bf16.msra.mxu0 %v9065
        %9693 = vmatprep.subr.bf16.mxu0 %v9070
        %9694 = vmatpush1.bf16.msra.mxu0 %v9069
        %9695 = vmatprep.subr.bf16.mxu0 %v9074
        %9696 = vmatpush1.bf16.msra.mxu0 %v9073
        %9697 = vmatprep.subr.bf16.mxu0 %v9078
        %9698 = vmatpush1.bf16.msra.mxu0 %v9077
        %9699 = vmatprep.subr.bf16.mxu0 %v9082
        %9700 = vmatpush1.bf16.msra.mxu0 %v9081
        %9701 = vmatprep.subr.bf16.mxu0 %v9086
        %9702 = vmatpush1.bf16.msra.mxu0 %v9085
        %9703 = vmatprep.subr.bf16.mxu0 %v9090
        %9704 = vmatpush1.bf16.msra.mxu0 %v9089
        %9705 = vmatprep.subr.bf16.mxu0 %v9094
        %9706 = vmatpush1.bf16.msra.mxu0 %v9093
        %9707 = vmatprep.subr.bf16.mxu0 %v9098
        %9708 = vmatpush1.bf16.msra.mxu0 %v9097
        %9709 = vmatprep.subr.bf16.mxu0 %v9102
        %9710 = vmatpush1.bf16.msra.mxu0 %v9101
        %9711 = vmatprep.mubr.bf16.mxu0 %v8778
        %9712 = vmatmul.mubr.bf16.gmra.mrb[0].mxu0 %v8777
        %v9713 = vpop.f32.mrb[0].mxu0
        %v9714 = vadd.f32 0.0, %v9713
        %v9715 = vpop.f32.mrb[0].mxu0
        %v9716 = vadd.f32 0.0, %v9715
        %v9717 = vpop.f32.mrb[0].mxu0
        %v9718 = vpop.f32.mrb[0].mxu0
        %9719 = vdwg.mxu0
        %9720 = vmatprep.subr.bf16.mxu0 %v9106
        %9721 = vmatpush1.bf16.msra.mxu0 %v9105
        %9722 = vmatprep.subr.bf16.mxu0 %v9110
        %9723 = vmatpush1.bf16.msra.mxu0 %v9109
        %9724 = vmatprep.subr.bf16.mxu0 %v9114
        %9725 = vmatpush1.bf16.msra.mxu0 %v9113
        %9726 = vmatprep.subr.bf16.mxu0 %v9118
        %9727 = vmatpush1.bf16.msra.mxu0 %v9117
        %9728 = vmatprep.subr.bf16.mxu0 %v9122
        %9729 = vmatpush1.bf16.msra.mxu0 %v9121
        %9730 = vmatprep.subr.bf16.mxu0 %v9126
        %9731 = vmatpush1.bf16.msra.mxu0 %v9125
        %9732 = vmatprep.subr.bf16.mxu0 %v9130
        %9733 = vmatpush1.bf16.msra.mxu0 %v9129
        %9734 = vmatprep.subr.bf16.mxu0 %v9134
        %9735 = vmatpush1.bf16.msra.mxu0 %v9133
        %9736 = vmatprep.subr.bf16.mxu0 %v9138
        %9737 = vmatpush1.bf16.msra.mxu0 %v9137
        %9738 = vmatprep.subr.bf16.mxu0 %v9142
        %9739 = vmatpush1.bf16.msra.mxu0 %v9141
        %9740 = vmatprep.subr.bf16.mxu0 %v9146
        %9741 = vmatpush1.bf16.msra.mxu0 %v9145
        %9742 = vmatprep.subr.bf16.mxu0 %v9150
        %9743 = vmatpush1.bf16.msra.mxu0 %v9149
        %9744 = vmatprep.subr.bf16.mxu0 %v9154
        %9745 = vmatpush1.bf16.msra.mxu0 %v9153
        %9746 = vmatprep.subr.bf16.mxu0 %v9158
        %9747 = vmatpush1.bf16.msra.mxu0 %v9157
        %9748 = vmatprep.subr.bf16.mxu0 %v9162
        %9749 = vmatpush1.bf16.msra.mxu0 %v9161
        %9750 = vmatprep.subr.bf16.mxu0 %v9166
        %9751 = vmatpush1.bf16.msra.mxu0 %v9165
        %9752 = vmatprep.mubr.bf16.mxu0 %v8780
        %9753 = vmatmul.mubr.bf16.gmra.mrb[0].mxu0 %v8779
        %v9754 = vpop.f32.mrb[0].mxu0
        %v9755 = vadd.f32 %v9714, %v9754
        %v9756 = vpop.f32.mrb[0].mxu0
        %v9757 = vadd.f32 %v9716, %v9756
        %v9758 = vpop.f32.mrb[0].mxu0
        %v9759 = vpop.f32.mrb[0].mxu0
        %9760 = vdwg.mxu0
        %9761 = vmatprep.subr.bf16.mxu0 %v9170
        %9762 = vmatpush1.bf16.msra.mxu0 %v9169
        %9763 = vmatprep.subr.bf16.mxu0 %v9174
        %9764 = vmatpush1.bf16.msra.mxu0 %v9173
        %9765 = vmatprep.subr.bf16.mxu0 %v9178
        %9766 = vmatpush1.bf16.msra.mxu0 %v9177
        %9767 = vmatprep.subr.bf16.mxu0 %v9182
        %9768 = vmatpush1.bf16.msra.mxu0 %v9181
        %9769 = vmatprep.subr.bf16.mxu0 %v9186
        %9770 = vmatpush1.bf16.msra.mxu0 %v9185
        %9771 = vmatprep.subr.bf16.mxu0 %v9190
        %9772 = vmatpush1.bf16.msra.mxu0 %v9189
        %9773 = vmatprep.subr.bf16.mxu0 %v9194
        %9774 = vmatpush1.bf16.msra.mxu0 %v9193
        %9775 = vmatprep.subr.bf16.mxu0 %v9198
        %9776 = vmatpush1.bf16.msra.mxu0 %v9197
        %9777 = vmatprep.subr.bf16.mxu0 %v9202
        %9778 = vmatpush1.bf16.msra.mxu0 %v9201
        %9779 = vmatprep.subr.bf16.mxu0 %v9206
        %9780 = vmatpush1.bf16.msra.mxu0 %v9205
        %9781 = vmatprep.subr.bf16.mxu0 %v9210
        %9782 = vmatpush1.bf16.msra.mxu0 %v9209
        %9783 = vmatprep.subr.bf16.mxu0 %v9214
        %9784 = vmatpush1.bf16.msra.mxu0 %v9213
        %9785 = vmatprep.subr.bf16.mxu0 %v9218
        %9786 = vmatpush1.bf16.msra.mxu0 %v9217
        %9787 = vmatprep.subr.bf16.mxu0 %v9222
        %9788 = vmatpush1.bf16.msra.mxu0 %v9221
        %9789 = vmatprep.subr.bf16.mxu0 %v9226
        %9790 = vmatpush1.bf16.msra.mxu0 %v9225
        %9791 = vmatprep.subr.bf16.mxu0 %v9230
        %9792 = vmatpush1.bf16.msra.mxu0 %v9229
        %9793 = vmatprep.mubr.bf16.mxu0 %v8782
        %9794 = vmatmul.mubr.bf16.gmra.mrb[0].mxu0 %v8781
        %v9795 = vpop.f32.mrb[0].mxu0
        %v9796 = vadd.f32 %v9755, %v9795
        %v9797 = vpop.f32.mrb[0].mxu0
        %v9798 = vadd.f32 %v9757, %v9797
        %v9799 = vpop.f32.mrb[0].mxu0
        %v9800 = vpop.f32.mrb[0].mxu0
        %9801 = vdwg.mxu0
        %9802 = vmatprep.subr.bf16.mxu0 %v9234
        %9803 = vmatpush1.bf16.msra.mxu0 %v9233
        %9804 = vmatprep.subr.bf16.mxu0 %v9238
        %9805 = vmatpush1.bf16.msra.mxu0 %v9237
        %9806 = vmatprep.subr.bf16.mxu0 %v9242
        %9807 = vmatpush1.bf16.msra.mxu0 %v9241
        %9808 = vmatprep.subr.bf16.mxu0 %v9246
        %9809 = vmatpush1.bf16.msra.mxu0 %v9245
        %9810 = vmatprep.subr.bf16.mxu0 %v9250
        %9811 = vmatpush1.bf16.msra.mxu0 %v9249
        %9812 = vmatprep.subr.bf16.mxu0 %v9254
        %9813 = vmatpush1.bf16.msra.mxu0 %v9253
        %9814 = vmatprep.subr.bf16.mxu0 %v9258
        %9815 = vmatpush1.bf16.msra.mxu0 %v9257
        %9816 = vmatprep.subr.bf16.mxu0 %v9262
        %9817 = vmatpush1.bf16.msra.mxu0 %v9261
        %9818 = vmatprep.subr.bf16.mxu0 %v9266
        %9819 = vmatpush1.bf16.msra.mxu0 %v9265
        %9820 = vmatprep.subr.bf16.mxu0 %v9270
        %9821 = vmatpush1.bf16.msra.mxu0 %v9269
        %9822 = vmatprep.subr.bf16.mxu0 %v9274
        %9823 = vmatpush1.bf16.msra.mxu0 %v9273
        %9824 = vmatprep.subr.bf16.mxu0 %v9278
        %9825 = vmatpush1.bf16.msra.mxu0 %v9277
        %9826 = vmatprep.subr.bf16.mxu0 %v9282
        %9827 = vmatpush1.bf16.msra.mxu0 %v9281
        %9828 = vmatprep.subr.bf16.mxu0 %v9286
        %9829 = vmatpush1.bf16.msra.mxu0 %v9285
        %9830 = vmatprep.subr.bf16.mxu0 %v9290
        %9831 = vmatpush1.bf16.msra.mxu0 %v9289
        %9832 = vmatprep.subr.bf16.mxu0 %v9294
        %9833 = vmatpush1.bf16.msra.mxu0 %v9293
        %9834 = vmatprep.mubr.bf16.mxu0 %v8784
        %9835 = vmatmul.mubr.bf16.gmra.mrb[0].mxu0 %v8783
        %v9836 = vpop.f32.mrb[0].mxu0
        %v9837 = vadd.f32 %v9796, %v9836
        %v9838 = vpop.f32.mrb[0].mxu0
        %v9839 = vadd.f32 %v9798, %v9838
        %v9840 = vpop.f32.mrb[0].mxu0
        %v9841 = vpop.f32.mrb[0].mxu0
        %9842 = vdwg.mxu0
        %9843 = vmatprep.subr.bf16.mxu0 %v9044
        %9844 = vmatpush1.bf16.msra.mxu0 %v9043
        %9845 = vmatprep.subr.bf16.mxu0 %v9048
        %9846 = vmatpush1.bf16.msra.mxu0 %v9047
        %9847 = vmatprep.subr.bf16.mxu0 %v9052
        %9848 = vmatpush1.bf16.msra.mxu0 %v9051
        %9849 = vmatprep.subr.bf16.mxu0 %v9056
        %9850 = vmatpush1.bf16.msra.mxu0 %v9055
        %9851 = vmatprep.subr.bf16.mxu0 %v9060
        %9852 = vmatpush1.bf16.msra.mxu0 %v9059
        %9853 = vmatprep.subr.bf16.mxu0 %v9064
        %9854 = vmatpush1.bf16.msra.mxu0 %v9063
        %9855 = vmatprep.subr.bf16.mxu0 %v9068
        %9856 = vmatpush1.bf16.msra.mxu0 %v9067
        %9857 = vmatprep.subr.bf16.mxu0 %v9072
        %9858 = vmatpush1.bf16.msra.mxu0 %v9071
        %9859 = vmatprep.subr.bf16.mxu0 %v9076
        %9860 = vmatpush1.bf16.msra.mxu0 %v9075
        %9861 = vmatprep.subr.bf16.mxu0 %v9080
        %9862 = vmatpush1.bf16.msra.mxu0 %v9079
        %9863 = vmatprep.subr.bf16.mxu0 %v9084
        %9864 = vmatpush1.bf16.msra.mxu0 %v9083
        %9865 = vmatprep.subr.bf16.mxu0 %v9088
        %9866 = vmatpush1.bf16.msra.mxu0 %v9087
        %9867 = vmatprep.subr.bf16.mxu0 %v9092
        %9868 = vmatpush1.bf16.msra.mxu0 %v9091
        %9869 = vmatprep.subr.bf16.mxu0 %v9096
        %9870 = vmatpush1.bf16.msra.mxu0 %v9095
        %9871 = vmatprep.subr.bf16.mxu0 %v9100
        %9872 = vmatpush1.bf16.msra.mxu0 %v9099
        %9873 = vmatprep.subr.bf16.mxu0 %v9104
        %9874 = vmatpush1.bf16.msra.mxu0 %v9103
        %9875 = vmatprep.mubr.bf16.mxu0 %v8778
        %9876 = vmatmul.mubr.bf16.gmra.mrb[0].mxu0 %v8777
        %v9877 = vpop.f32.mrb[0].mxu0
        %v9878 = vadd.f32 0.0, %v9877
        %v9879 = vpop.f32.mrb[0].mxu0
        %v9880 = vadd.f32 0.0, %v9879
        %v9881 = vpop.f32.mrb[0].mxu0
        %v9882 = vpop.f32.mrb[0].mxu0
        %9883 = vdwg.mxu0
        %9884 = vmatprep.subr.bf16.mxu0 %v9108
        %9885 = vmatpush1.bf16.msra.mxu0 %v9107
        %9886 = vmatprep.subr.bf16.mxu0 %v9112
        %9887 = vmatpush1.bf16.msra.mxu0 %v9111
        %9888 = vmatprep.subr.bf16.mxu0 %v9116
        %9889 = vmatpush1.bf16.msra.mxu0 %v9115
        %9890 = vmatprep.subr.bf16.mxu0 %v9120
        %9891 = vmatpush1.bf16.msra.mxu0 %v9119
        %9892 = vmatprep.subr.bf16.mxu0 %v9124
        %9893 = vmatpush1.bf16.msra.mxu0 %v9123
        %9894 = vmatprep.subr.bf16.mxu0 %v9128
        %9895 = vmatpush1.bf16.msra.mxu0 %v9127
        %9896 = vmatprep.subr.bf16.mxu0 %v9132
        %9897 = vmatpush1.bf16.msra.mxu0 %v9131
        %9898 = vmatprep.subr.bf16.mxu0 %v9136
        %9899 = vmatpush1.bf16.msra.mxu0 %v9135
        %9900 = vmatprep.subr.bf16.mxu0 %v9140
        %9901 = vmatpush1.bf16.msra.mxu0 %v9139
        %9902 = vmatprep.subr.bf16.mxu0 %v9144
        %9903 = vmatpush1.bf16.msra.mxu0 %v9143
        %9904 = vmatprep.subr.bf16.mxu0 %v9148
        %9905 = vmatpush1.bf16.msra.mxu0 %v9147
        %9906 = vmatprep.subr.bf16.mxu0 %v9152
        %9907 = vmatpush1.bf16.msra.mxu0 %v9151
        %9908 = vmatprep.subr.bf16.mxu0 %v9156
        %9909 = vmatpush1.bf16.msra.mxu0 %v9155
        %9910 = vmatprep.subr.bf16.mxu0 %v9160
        %9911 = vmatpush1.bf16.msra.mxu0 %v9159
        %9912 = vmatprep.subr.bf16.mxu0 %v9164
        %9913 = vmatpush1.bf16.msra.mxu0 %v9163
        %9914 = vmatprep.subr.bf16.mxu0 %v9168
        %9915 = vmatpush1.bf16.msra.mxu0 %v9167
        %9916 = vmatprep.mubr.bf16.mxu0 %v8780
        %9917 = vmatmul.mubr.bf16.gmra.mrb[0].mxu0 %v8779
        %v9918 = vpop.f32.mrb[0].mxu0
        %v9919 = vadd.f32 %v9878, %v9918
        %v9920 = vpop.f32.mrb[0].mxu0
        %v9921 = vadd.f32 %v9880, %v9920
        %v9922 = vpop.f32.mrb[0].mxu0
        %v9923 = vpop.f32.mrb[0].mxu0
        %9924 = vdwg.mxu0
        %9925 = vmatprep.subr.bf16.mxu0 %v9172
        %9926 = vmatpush1.bf16.msra.mxu0 %v9171
        %9927 = vmatprep.subr.bf16.mxu0 %v9176
        %9928 = vmatpush1.bf16.msra.mxu0 %v9175
        %9929 = vmatprep.subr.bf16.mxu0 %v9180
        %9930 = vmatpush1.bf16.msra.mxu0 %v9179
        %9931 = vmatprep.subr.bf16.mxu0 %v9184
        %9932 = vmatpush1.bf16.msra.mxu0 %v9183
        %9933 = vmatprep.subr.bf16.mxu0 %v9188
        %9934 = vmatpush1.bf16.msra.mxu0 %v9187
        %9935 = vmatprep.subr.bf16.mxu0 %v9192
        %9936 = vmatpush1.bf16.msra.mxu0 %v9191
        %9937 = vmatprep.subr.bf16.mxu0 %v9196
        %9938 = vmatpush1.bf16.msra.mxu0 %v9195
        %9939 = vmatprep.subr.bf16.mxu0 %v9200
        %9940 = vmatpush1.bf16.msra.mxu0 %v9199
        %9941 = vmatprep.subr.bf16.mxu0 %v9204
        %9942 = vmatpush1.bf16.msra.mxu0 %v9203
        %9943 = vmatprep.subr.bf16.mxu0 %v9208
        %9944 = vmatpush1.bf16.msra.mxu0 %v9207
        %9945 = vmatprep.subr.bf16.mxu0 %v9212
        %9946 = vmatpush1.bf16.msra.mxu0 %v9211
        %9947 = vmatprep.subr.bf16.mxu0 %v9216
        %9948 = vmatpush1.bf16.msra.mxu0 %v9215
        %9949 = vmatprep.subr.bf16.mxu0 %v9220
        %9950 = vmatpush1.bf16.msra.mxu0 %v9219
        %9951 = vmatprep.subr.bf16.mxu0 %v9224
        %9952 = vmatpush1.bf16.msra.mxu0 %v9223
        %9953 = vmatprep.subr.bf16.mxu0 %v9228
        %9954 = vmatpush1.bf16.msra.mxu0 %v9227
        %9955 = vmatprep.subr.bf16.mxu0 %v9232
        %9956 = vmatpush1.bf16.msra.mxu0 %v9231
        %9957 = vmatprep.mubr.bf16.mxu0 %v8782
        %9958 = vmatmul.mubr.bf16.gmra.mrb[0].mxu0 %v8781
        %v9959 = vpop.f32.mrb[0].mxu0
        %v9960 = vadd.f32 %v9919, %v9959
        %v9961 = vpop.f32.mrb[0].mxu0
        %v9962 = vadd.f32 %v9921, %v9961
        %v9963 = vpop.f32.mrb[0].mxu0
        %v9964 = vpop.f32.mrb[0].mxu0
        %9965 = vdwg.mxu0
        %9966 = vmatprep.subr.bf16.mxu0 %v9236
        %9967 = vmatpush1.bf16.msra.mxu0 %v9235
        %9968 = vmatprep.subr.bf16.mxu0 %v9240
        %9969 = vmatpush1.bf16.msra.mxu0 %v9239
        %9970 = vmatprep.subr.bf16.mxu0 %v9244
        %9971 = vmatpush1.bf16.msra.mxu0 %v9243
        %9972 = vmatprep.subr.bf16.mxu0 %v9248
        %9973 = vmatpush1.bf16.msra.mxu0 %v9247
        %9974 = vmatprep.subr.bf16.mxu0 %v9252
        %9975 = vmatpush1.bf16.msra.mxu0 %v9251
        %9976 = vmatprep.subr.bf16.mxu0 %v9256
        %9977 = vmatpush1.bf16.msra.mxu0 %v9255
        %9978 = vmatprep.subr.bf16.mxu0 %v9260
        %9979 = vmatpush1.bf16.msra.mxu0 %v9259
        %9980 = vmatprep.subr.bf16.mxu0 %v9264
        %9981 = vmatpush1.bf16.msra.mxu0 %v9263
        %9982 = vmatprep.subr.bf16.mxu0 %v9268
        %9983 = vmatpush1.bf16.msra.mxu0 %v9267
        %9984 = vmatprep.subr.bf16.mxu0 %v9272
        %9985 = vmatpush1.bf16.msra.mxu0 %v9271
        %9986 = vmatprep.subr.bf16.mxu0 %v9276
        %9987 = vmatpush1.bf16.msra.mxu0 %v9275
        %9988 = vmatprep.subr.bf16.mxu0 %v9280
        %9989 = vmatpush1.bf16.msra.mxu0 %v9279
        %9990 = vmatprep.subr.bf16.mxu0 %v9284
        %9991 = vmatpush1.bf16.msra.mxu0 %v9283
        %9992 = vmatprep.subr.bf16.mxu0 %v9288
        %9993 = vmatpush1.bf16.msra.mxu0 %v9287
        %9994 = vmatprep.subr.bf16.mxu0 %v9292
        %9995 = vmatpush1.bf16.msra.mxu0 %v9291
        %9996 = vmatprep.subr.bf16.mxu0 %v9296
        %9997 = vmatpush1.bf16.msra.mxu0 %v9295
        %9998 = vmatprep.mubr.bf16.mxu0 %v8784
        %9999 = vmatmul.mubr.bf16.gmra.mrb[0].mxu0 %v8783
        %v10000 = vpop.f32.mrb[0].mxu0
        %v10001 = vadd.f32 %v9960, %v10000
        %v10002 = vpop.f32.mrb[0].mxu0
        %v10003 = vadd.f32 %v9962, %v10002
        %v10004 = vpop.f32.mrb[0].mxu0
        %v10005 = vpop.f32.mrb[0].mxu0
        %10006 = vdwg.mxu0
        %v10008 = vlaneseq
        %v10009 = vshrl.u32 %v10008, 7
        %v10010 = vsub.s32 0, %v10009
        %v10011 = vrot.slane %v6104, %v10010
        %v10012 = vlaneseq
        %v10013 = vshrl.u32 %v10012, 7
        %v10014 = vsub.s32 1, %v10013
        %v10015 = vrot.slane %v6104, %v10014
        %v10016 = vlaneseq
        %v10017 = vshrl.u32 %v10016, 7
        %v10018 = vsub.s32 2, %v10017
        %v10019 = vrot.slane %v6104, %v10018
        %v10020 = vlaneseq
        %v10021 = vshrl.u32 %v10020, 7
        %v10022 = vsub.s32 3, %v10021
        %v10023 = vrot.slane %v6104, %v10022
        %v10028 = vmul.f32 %v9837, %v10011
        %v10029 = vmul.f32 %v9839, %v10015
        %v10030 = vmul.f32 %v10001, %v10019
        %v10031 = vmul.f32 %v10003, %v10023
        %v10033 = vlaneseq
        %v10034 = vshrl.u32 %v10033, 7
        %v10035 = vsub.s32 0, %v10034
        %v10036 = vrot.slane %v6106, %v10035
        %v10037 = vlaneseq
        %v10038 = vshrl.u32 %v10037, 7
        %v10039 = vsub.s32 1, %v10038
        %v10040 = vrot.slane %v6106, %v10039
        %v10041 = vlaneseq
        %v10042 = vshrl.u32 %v10041, 7
        %v10043 = vsub.s32 2, %v10042
        %v10044 = vrot.slane %v6106, %v10043
        %v10045 = vlaneseq
        %v10046 = vshrl.u32 %v10045, 7
        %v10047 = vsub.s32 3, %v10046
        %v10048 = vrot.slane %v6106, %v10047
        %v10053 = vadd.f32 %v10028, %v10036
        %v10054 = vadd.f32 %v10029, %v10040
        %v10055 = vadd.f32 %v10030, %v10044
        %v10056 = vadd.f32 %v10031, %v10048
        %v10057 = vld [vmem:[#allocation12] sm:$0xff]
        %v10058 = vld [vmem:[#allocation12 + $0x8] sm:$0xff]
        %v10059 = vld [vmem:[#allocation12 + $0x10] sm:$0xff]
        %v10060 = vld [vmem:[#allocation12 + $0x18] sm:$0xff]
        %v10061 = vmul.f32 %v9675, 1.442695
        %v10062 = vpow.pop %v10061
        %v10063 = vmul.f32 %v9676, 1.442695
        %v10064 = vpow.pop %v10063
        %v10065 = vmul.f32 %v9677, 1.442695
        %v10066 = vpow.pop %v10065
        %v10067 = vmul.f32 %v9678, 1.442695
        %v10068 = vpow.pop %v10067
        %v10069 = vmul.f32 %v10057, %v10062
        %v10070 = vmul.f32 %v10058, %v10064
        %v10071 = vmul.f32 %v10059, %v10066
        %v10072 = vmul.f32 %v10060, %v10068
        %v10073 = vadd.f32 %v10069, %v10053
        %v10074 = vadd.f32 %v10070, %v10054
        %v10075 = vadd.f32 %v10071, %v10055
        %v10076 = vadd.f32 %v10072, %v10056
        %10077 = vst [vmem:[#allocation12] sm:$0xff] %v10073
        %10078 = vst [vmem:[#allocation12 + $0x8] sm:$0xff] %v10074
        %10079 = vst [vmem:[#allocation12 + $0x10] sm:$0xff] %v10075
        %10080 = vst.msk [vmem:[#allocation12 + $0x18] sm:$0xff] %vm2417, %v10076
        %v10081 = vld [vmem:[#allocation15] sm:$0xff]
        %v10082 = vadd.f32 %v9675, %v9676
        %v10083 = vadd.f32 %v10082, %v9677
        %v10084 = vsel %vm2417, %v9678, 0.0
        %v10085 = vadd.f32 %v10083, %v10084
        %10086 = vadd.xlane.f32.xlu0 %v10085
        %v10087 = vpop.xlane.xlu0 %10086
        %v10088 = vadd.f32 %v10081, %v10087
        %10089 = vst [vmem:[#allocation15] sm:$0xff] %v10088
        // Predicated region
        $region93: #{tpu_custom_call.1} parent=59 // pred_check
          %p10090 = pneg %p291
        $region94: #{tpu_custom_call.1} parent=59 // pred_check_branch
          %10092 = sbr.rel (%p10090) target = $region96
        $region95: #{tpu_custom_call.1} parent=59 // pred_region
          %s10094 = ssub.s32 512, 512
          %10095 = vsyncadd [#allocation4], %s10094
          %s10097 = sshll.u32 [#allocation12], 4
          %s10098 = int_to_ptr.vmem [resolvable:$true] %s10097
          %10100 = dma.vmem_to_hbm [thread:$0]  %s10098, 512, %s10, [#allocation4]
        $region96: #{tpu_custom_call.1} parent=59 // pred_fallthru
          _
        // Predicated region
        $region97: #{tpu_custom_call.1} parent=59 // pred_check
          %p10101 = pneg %p312
        $region98: #{tpu_custom_call.1} parent=59 // pred_check_branch
          %10103 = sbr.rel (%p10101) target = $region100
        $region99: #{tpu_custom_call.1} parent=59 // pred_region
          %s10105 = ssub.s32 512, 512
          %10106 = vsyncadd [#allocation14], %s10105
          %s10108 = sshll.u32 [#allocation13], 4
          %s10109 = int_to_ptr.vmem [resolvable:$true] %s10108
          %10111 = dma.vmem_to_hbm [thread:$0]  %s10109, 512, %s11, [#allocation14]
        $region100: #{tpu_custom_call.1} parent=59 // pred_fallthru
          _
        // Predicated region
        $region101: #{tpu_custom_call.1} parent=59 // pred_check
          %p10112 = pneg %p333
        $region102: #{tpu_custom_call.1} parent=59 // pred_check_branch
          %10114 = sbr.rel (%p10112) target = $region104
        $region103: #{tpu_custom_call.1} parent=59 // pred_region
          %s10116 = ssub.s32 128, 128
          %10117 = vsyncadd [#allocation14], %s10116
          %s10119 = sshll.u32 [#allocation15], 4
          %s10120 = int_to_ptr.vmem [resolvable:$true] %s10119
          %10122 = dma.vmem_to_hbm [thread:$0]  %s10120, 128, %s12, [#allocation14]
        $region104: #{tpu_custom_call.1} parent=59 // pred_fallthru
          _
        // Predicated region
        $region105: #{tpu_custom_call.1} parent=59 // pred_check
          %p10123 = pneg %p291
        $region106: #{tpu_custom_call.1} parent=59 // pred_check_branch
          %10125 = sbr.rel (%p10123) target = $region108
        $region107: #{tpu_custom_call.1} parent=59 // pred_region
          %10126 = dma.done [#allocation4], 512
        $region108: #{tpu_custom_call.1} parent=59 // pred_fallthru
          _
        // Predicated region
        $region109: #{tpu_custom_call.1} parent=59 // pred_check
          %p10127 = pneg %p312
        $region110: #{tpu_custom_call.1} parent=59 // pred_check_branch
          %10129 = sbr.rel (%p10127) target = $region112
        $region111: #{tpu_custom_call.1} parent=59 // pred_region
          %10130 = dma.done [#allocation14], 512
        $region112: #{tpu_custom_call.1} parent=59 // pred_fallthru
          _
        // Predicated region
        $region113: #{tpu_custom_call.1} parent=59 // pred_check
          %p10131 = pneg %p333
        $region114: #{tpu_custom_call.1} parent=59 // pred_check_branch
          %10133 = sbr.rel (%p10131) target = $region116
        $region115: #{tpu_custom_call.1} parent=59 // pred_region
          %10134 = dma.done [#allocation14], 128
        $region116: #{tpu_custom_call.1} parent=59 // pred_fallthru
          _
      $region60: #{tpu_custom_call.1} parent=5 // pred_fallthru
        _
      %p10135 = scmp.le.s32.totalorder 2, %s23
      // Predicated region
      $region117: #{tpu_custom_call.1} parent=5 // pred_check
        %p10136 = pneg %p10135
      $region118: #{tpu_custom_call.1} parent=5 // pred_check_branch
        %10138 = sbr.rel (%p10136) target = $region120
      $region119: #{tpu_custom_call.1} parent=5 // pred_region
        %s10139 = ssub.s32 %s23, 2
      $region120: #{tpu_custom_call.1} parent=5 // pred_fallthru
        _
    $region6: #{tpu_custom_call.1} parent=1 // loop_footer
      %s27 = sadd.s32 1, %s23
    $region7: #{tpu_custom_call.1} parent=1 // loop_footer_branch
      %22 = sbr.rel target = $region3
    $region8: #{tpu_custom_call.1} parent=1 // loop_exit
      _
    %10140 = vsyncpa [#allocation3], 1
    %s10141 = scalar_lea.sflag [#allocation3], 1
    %10142 = vsyncpa %s10141, 1
    %10143 = vsyncpa [#allocation6], 1
    %10144 = vsyncpa [#allocation4], 1
    %s10145 = scalar_lea.sflag [#allocation4], 1
    %10146 = vsyncpa %s10145, 1
    %10147 = vsyncpa [#allocation14], 1

</llo_original>
